<compile_context>
chip_gen: v5e
topology: v5e:2x2
jax: 0.10.0
libtpu: 0.0.40
codegen_flags: <defaults>
</compile_context>

<pallas_src>
import math
import numpy as np

import jax
import jax.numpy as jnp
from jax.experimental import pallas as pl
from jax.experimental.pallas import tpu as pltpu


# ----------------------------------------------------------------------------
# Graph construction (numpy, parameter setup only)
# ----------------------------------------------------------------------------
def get_hop_distance(num_node, edge, max_hop=1):
    A = np.zeros((num_node, num_node))
    for i, j in edge:
        A[j, i] = 1
        A[i, j] = 1
    hop_dis = np.zeros((num_node, num_node)) + np.inf
    transfer_mat = [np.linalg.matrix_power(A, d) for d in range(max_hop + 1)]
    arrive_mat = np.stack(transfer_mat) > 0
    for d in range(max_hop, -1, -1):
        hop_dis[arrive_mat[d]] = d
    return hop_dis


def normalize_digraph(A):
    Dl = np.sum(A, 0)
    num_node = A.shape[0]
    Dn = np.zeros((num_node, num_node))
    for i in range(num_node):
        if Dl[i] > 0:
            Dn[i, i] = Dl[i] ** (-1)
    return np.dot(A, Dn)


def build_graph_A():
    """'mmfit' layout, 'spatial' strategy, max_hop=1 -> A of shape (3, 17, 17)."""
    num_node = 17
    self_link = [(i, i) for i in range(num_node)]
    neighbor_link = [[1, 0], [2, 1], [3, 2], [4, 0], [5, 4], [6, 5], [7, 0],
                     [8, 7], [9, 8], [10, 9], [11, 8], [12, 11], [13, 12],
                     [14, 8], [15, 14], [16, 15]]
    edge = self_link + [tuple(e) for e in neighbor_link]
    center = 0
    max_hop = 1
    hop_dis = get_hop_distance(num_node, edge, max_hop=max_hop)
    valid_hop = range(0, max_hop + 1)
    adjacency = np.zeros((num_node, num_node))
    for hop in valid_hop:
        adjacency[hop_dis == hop] = 1
    norm_adj = normalize_digraph(adjacency)
    A = []
    for hop in valid_hop:
        a_root = np.zeros((num_node, num_node))
        a_close = np.zeros((num_node, num_node))
        a_further = np.zeros((num_node, num_node))
        for i in range(num_node):
            for j in range(num_node):
                if hop_dis[j, i] == hop:
                    if hop_dis[j, center] == hop_dis[i, center]:
                        a_root[j, i] = norm_adj[j, i]
                    elif hop_dis[j, center] > hop_dis[i, center]:
                        a_close[j, i] = norm_adj[j, i]
                    else:
                        a_further[j, i] = norm_adj[j, i]
        if hop == 0:
            A.append(a_root)
        else:
            A.append(a_root + a_close)
            A.append(a_further)
    return np.stack(A).astype(np.float32)


# ----------------------------------------------------------------------------
# Pallas kernels
# ----------------------------------------------------------------------------
def _mm_bias_kernel(a_ref, w_ref, b_ref, o_ref):
    """o = a @ w + b   (bf16 MXU inputs, f32 accumulate, bias fused in epilogue)."""
    a = a_ref[...].astype(jnp.bfloat16)
    w = w_ref[...].astype(jnp.bfloat16)
    acc = jnp.dot(a, w, preferred_element_type=jnp.float32)
    o_ref[...] = acc + b_ref[...]


def matmul_bias(a, w, b):
    """a: (M, K) @ w: (K, N) + b: (N,) -> (M, N), f32 output.

    K and N stay whole (they are small); M is covered by at most two row
    blocks so both v7x TensorCores get work.  The last row block may be a
    partial block (no M padding / slicing round-trip)."""
    M, K = a.shape
    N = w.shape[1]
    if M >= 256:
        row_block = ((M + 1) // 2 + 7) // 8 * 8      # two 8-aligned blocks
    else:
        row_block = M                                 # single full block
    grid = pl.cdiv(M, row_block)
    return pl.pallas_call(
        _mm_bias_kernel,
        out_shape=jax.ShapeDtypeStruct((M, N), jnp.float32),
        grid=(grid,),
        in_specs=[pl.BlockSpec((row_block, K), lambda i: (i, 0)),
                  pl.BlockSpec((K, N), lambda i: (0, 0)),
                  pl.BlockSpec((1, N), lambda i: (0, 0))],
        out_specs=pl.BlockSpec((row_block, N), lambda i: (i, 0)),
        compiler_params=pltpu.CompilerParams(dimension_semantics=("parallel",)),
    )(a, w, b.reshape(1, N))


def _bmm_kernel(x_ref, a_ref, o_ref):
    # x_ref: (BB, T, W), a_ref: (BB, W, U) -> o_ref: (BB, T, U)
    o_ref[...] = jnp.einsum(
        'ntw,nwu->ntu',
        x_ref[...].astype(jnp.bfloat16),
        a_ref[...].astype(jnp.bfloat16),
        preferred_element_type=jnp.float32)


def batched_matmul(x, a, bb=64):
    """Batched (N, T, W) @ (N, W, U) -> (N, T, U) with coarse BB-sized blocks."""
    Nb, T, W = x.shape
    U = a.shape[2]
    bb = min(bb, Nb)
    grid = pl.cdiv(Nb, bb)
    return pl.pallas_call(
        _bmm_kernel,
        out_shape=jax.ShapeDtypeStruct((Nb, T, U), jnp.float32),
        grid=(grid,),
        in_specs=[pl.BlockSpec((bb, T, W), lambda i: (i, 0, 0)),
                  pl.BlockSpec((bb, W, U), lambda i: (i, 0, 0))],
        out_specs=pl.BlockSpec((bb, T, U), lambda i: (i, 0, 0)),
        compiler_params=pltpu.CompilerParams(dimension_semantics=("parallel",)),
    )(x, a)


def temporal_conv_cl(h, wt, bt, kernel_size, stride, dilation):
    """(K,1) temporal conv on a channels-last slab as K shifted in-VMEM matmuls.

    h: (B, T, V, C_in), wt: (C_out, C_in, K), bt: (C_out,) -> (B, T_out, V, C_out)
    Padding matches the PyTorch TemporalConv; temporal stride is applied by
    subsampling the stride-1 result (a pointwise/temporal conv commutes with it).
    """
    B, T, V, C = h.shape
    Cout, _, K = wt.shape
    pad = (K + (K - 1) * (dilation - 1) - 1) // 2
    hp = jnp.pad(h, ((0, 0), (pad, pad), (0, 0), (0, 0)))
    Tp = T + 2 * pad
    T1 = Tp - dilation * (K - 1)                       # stride-1 output length
    x2d = hp.reshape(B, Tp * V, C)
    wk = jnp.transpose(wt, (2, 1, 0)).reshape(K * C, Cout)   # rows = (k, c_in)

    def kern(x_ref, w_ref, b_ref, o_ref):
        acc = None
        for k in range(K):                              # static, unrolled taps
            xs = x_ref[0, pl.ds(k * dilation * V, T1 * V), :].astype(jnp.bfloat16)
            wkk = w_ref[k * C:(k + 1) * C, :].astype(jnp.bfloat16)
            part = jnp.dot(xs, wkk, preferred_element_type=jnp.float32)
            acc = part if acc is None else acc + part
        o_ref[0] = acc + b_ref[...]

    out = pl.pallas_call(
        kern,
        out_shape=jax.ShapeDtypeStruct((B, T1 * V, Cout), jnp.float32),
        grid=(B,),
        in_specs=[pl.BlockSpec((1, Tp * V, C), lambda i: (i, 0, 0)),
                  pl.BlockSpec((K * C, Cout), lambda i: (0, 0)),
                  pl.BlockSpec((1, Cout), lambda i: (0, 0))],
        out_specs=pl.BlockSpec((1, T1 * V, Cout), lambda i: (i, 0, 0)),
        compiler_params=pltpu.CompilerParams(dimension_semantics=("parallel",)),
    )(x2d, wk, bt.reshape(1, Cout))
    out = out.reshape(B, T1, V, Cout)
    if stride > 1:
        out = out[:, ::stride]
    return out


# ----------------------------------------------------------------------------
# XLA glue (elementwise / reductions around the Pallas matmuls)
# ----------------------------------------------------------------------------
def bn_cl(x, gamma, beta, eps=1e-5):
    """BatchNorm2d with per-forward batch statistics, channels-last (..., C)."""
    axes = tuple(range(x.ndim - 1))
    mean = jnp.mean(x, axis=axes, keepdims=True)
    var = jnp.mean(jnp.square(x - mean), axis=axes, keepdims=True)
    return (x - mean) * jax.lax.rsqrt(var + eps) * gamma + beta


def maxpool_t_cl(x, k=3, stride=1, pad=1):
    B, T, V, C = x.shape
    xp = jnp.pad(x, ((0, 0), (pad, pad), (0, 0), (0, 0)),
                 constant_values=-jnp.inf)
    T_out = (T + 2 * pad - k) // stride + 1
    idx = jnp.arange(T_out)[:, None] * stride + jnp.arange(k)[None, :]
    return jnp.max(xp[:, idx], axis=2)


# ----------------------------------------------------------------------------
# Module forwards (channels-last internally)
# ----------------------------------------------------------------------------
def unit_gcn_forward(p, x_l):
    """unit_gcn with its 3 CTR-GC subsets fused.  x_l: (B, T, V, C_in)."""
    B, T, V, Cin = x_l.shape
    A = p['PA']                           # (S, V, V)
    S, R, C = p['S'], p['rel'], p['cout']
    alpha = p['alpha']

    x_slab = x_l.reshape(B * T * V, Cin)
    # mean over T hoisted before conv1/conv2 (valid: 1x1 conv is affine)
    xm_slab = jnp.mean(x_l, axis=1).reshape(B * V, Cin)

    # conv1/conv2 of all subsets in one matmul: cols = [w1_0|w2_0|w1_1|w2_1|...]
    x12 = matmul_bias(xm_slab, p['w12'], p['b12']).reshape(B, V, S, 2, R)
    # d[b, u, v, s, r] = tanh(x1_s[b,u,r] - x2_s[b,v,r])
    d = jnp.tanh(x12[:, :, None, :, 0, :] - x12[:, None, :, :, 1, :])
    d_slab = d.reshape(B * V * V, S * R)

    # conv4 of all subsets via a block-diagonal weight -> cols = (s, c)
    x4 = matmul_bias(d_slab, p['w4bd'], p['b4']).reshape(B, V, V, S, C)  # [b,u,v,s,c]
    # conv3 of all subsets in one matmul -> cols = (s, c)
    x3 = matmul_bias(x_slab, p['w3'], p['b3']).reshape(B, T, V, S, C)    # [b,t,v,s,c]

    # attention att[b,c,s,v,u] = alpha * conv4(d)[b,c,u,v] + A[s,u,v];
    # the subset axis is folded into the contraction axis w = (s, v).
    attr = alpha * jnp.transpose(x4, (0, 4, 3, 2, 1)) \
        + jnp.swapaxes(A, 1, 2)[None, None]
    attr = attr.reshape(B * C, S * V, V)
    x3r = jnp.transpose(x3, (0, 4, 1, 3, 2)).reshape(B * C, T, S * V)

    y = batched_matmul(x3r, attr)                               # (B*C, T, U)
    y = jnp.transpose(y.reshape(B, C, T, V), (0, 2, 3, 1))      # (B, T, U, C)

    y = bn_cl(y, p['bn_g'], p['bn_b'])
    if p['down'] is not None:
        dwn = matmul_bias(x_slab, p['down']['w'], p['down']['b']).reshape(B, T, V, C)
        dwn = bn_cl(dwn, p['down']['bn_g'], p['down']['bn_b'])
    else:
        dwn = x_l
    return jax.nn.relu(y + dwn)


def mstcn_forward(p, x_l, stride):
    """MultiScale_TemporalConv (residual=False inside TCN_GCN_unit)."""
    B, T, V, C = x_l.shape
    bc = p['bc']
    nd = len(p['dilations'])
    x_slab = x_l.reshape(B * T * V, C)

    # all four branch 1x1 convs in one matmul (lane-dense output)
    h_all = matmul_bias(x_slab, p['w1_all'], p['b1_all']).reshape(B, T, V, -1)

    outs = []
    for i, (bp, dil) in enumerate(zip(p['branches_dil'], p['dilations'])):
        h = h_all[..., i * bc:(i + 1) * bc]
        h = jax.nn.relu(bn_cl(h, bp['bn1_g'], bp['bn1_b']))
        h = temporal_conv_cl(h, bp['wt'], bp['bt'], p['ks'], stride, dil)
        h = bn_cl(h, bp['bn2_g'], bp['bn2_b'])
        outs.append(h)
    # maxpool branch
    bp = p['branch_pool']
    h = h_all[..., nd * bc:(nd + 1) * bc]
    h = jax.nn.relu(bn_cl(h, bp['bn1_g'], bp['bn1_b']))
    h = maxpool_t_cl(h, k=3, stride=stride, pad=1)
    h = bn_cl(h, bp['bn2_g'], bp['bn2_b'])
    outs.append(h)
    # strided 1x1 branch (pointwise conv commutes with the temporal subsample)
    bp = p['branch_1x1']
    h = h_all[..., (nd + 1) * bc:(nd + 2) * bc]
    if stride > 1:
        h = h[:, ::stride]
    h = bn_cl(h, bp['bn1_g'], bp['bn1_b'])
    outs.append(h)
    return jnp.concatenate(outs, axis=-1)


def tcn_gcn_unit_forward(p, x):
    """x: (B, C_in, T, V) NCHW  ->  (B, C_out, T_out, V) NCHW."""
    x_l = jnp.transpose(x, (0, 2, 3, 1))          # channels-last once, at the boundary
    g = unit_gcn_forward(p['gcn'], x_l)
    t = mstcn_forward(p['tcn'], g, p['stride'])
    if p['residual'] == 'zero':
        r = 0.0
    elif p['residual'] == 'identity':
        r = x_l
    else:                                          # unit_tcn(kernel_size=1, stride)
        xs = x_l[:, ::p['stride']] if p['stride'] > 1 else x_l
        Bs, Ts, Vs, Cin = xs.shape
        r = matmul_bias(xs.reshape(Bs * Ts * Vs, Cin),
                        p['res']['w'], p['res']['b']).reshape(Bs, Ts, Vs, -1)
        r = bn_cl(r, p['res']['bn_g'], p['res']['bn_b'])
    y = jax.nn.relu(t + r)
    return jnp.transpose(y, (0, 3, 1, 2))


# ----------------------------------------------------------------------------
# Deterministic parameter initialization (mirrors conv_init / bn_init)
# ----------------------------------------------------------------------------
class KeyGen:
    def __init__(self, key):
        self.key = key

    def __call__(self):
        self.key, sub = jax.random.split(self.key)
        return sub


def kaiming_conv(kg, c_out, c_in, k=1):
    fan_out = c_out * k
    shape = (c_out, c_in) if k == 1 else (c_out, c_in, k)
    w = jax.random.normal(kg(), shape, jnp.float32) * math.sqrt(2.0 / fan_out)
    b = jnp.zeros((c_out,), jnp.float32)
    return w, b


def init_ctrgc(kg, cin, cout):
    rel = 8 if cin in (3, 9) else cin // 8
    w1, b1 = kaiming_conv(kg, rel, cin)
    w2, b2 = kaiming_conv(kg, rel, cin)
    w3, b3 = kaiming_conv(kg, cout, cin)
    w4, b4 = kaiming_conv(kg, cout, rel)
    return dict(w1=w1, b1=b1, w2=w2, b2=b2, w3=w3, b3=b3, w4=w4, b4=b4, rel=rel)


def init_unit_gcn(kg, cin, cout, A):
    S = A.shape[0]
    convs = [init_ctrgc(kg, cin, cout) for _ in range(S)]
    rel = convs[0]['rel']
    # fused matmul weights (matmul orientation (K, N)), built once at init
    w12 = jnp.concatenate(
        [jnp.concatenate([c['w1'].T, c['w2'].T], axis=1) for c in convs], axis=1)
    b12 = jnp.concatenate(
        [jnp.concatenate([c['b1'], c['b2']]) for c in convs])
    w3 = jnp.concatenate([c['w3'].T for c in convs], axis=1)
    b3 = jnp.concatenate([c['b3'] for c in convs])
    w4bd = jnp.zeros((S * rel, S * cout), jnp.float32)
    for s, c in enumerate(convs):
        w4bd = w4bd.at[s * rel:(s + 1) * rel, s * cout:(s + 1) * cout].set(c['w4'].T)
    b4 = jnp.concatenate([c['b4'] for c in convs])

    down = None
    if cin != cout:
        dw, db = kaiming_conv(kg, cout, cin)
        down = dict(w=dw.T, b=db,
                    bn_g=jnp.ones((cout,), jnp.float32),
                    bn_b=jnp.zeros((cout,), jnp.float32))
    return dict(w12=w12, b12=b12, w3=w3, b3=b3, w4bd=w4bd, b4=b4, down=down,
                PA=jnp.asarray(A, jnp.float32),
                alpha=jnp.zeros((), jnp.float32),
                S=S, rel=rel, cout=cout,
                bn_g=jnp.full((cout,), 1e-6, jnp.float32),   # bn_init(self.bn, 1e-6)
                bn_b=jnp.zeros((cout,), jnp.float32))


def init_mstcn(kg, cin, cout, kernel_size=5, dilations=(1, 2)):
    nb = len(dilations) + 2
    bc = cout // nb
    ones = jnp.ones((bc,), jnp.float32)
    zeros = jnp.zeros((bc,), jnp.float32)
    branches_dil, w1_list, b1_list = [], [], []
    for _ in dilations:
        w1, b1 = kaiming_conv(kg, bc, cin)
        wt, bt = kaiming_conv(kg, bc, bc, k=kernel_size)
        branches_dil.append(dict(bn1_g=ones, bn1_b=zeros, wt=wt, bt=bt,
                                 bn2_g=ones, bn2_b=zeros))
        w1_list.append(w1.T); b1_list.append(b1)
    w1, b1 = kaiming_conv(kg, bc, cin)                         # maxpool branch
    branch_pool = dict(bn1_g=ones, bn1_b=zeros, bn2_g=ones, bn2_b=zeros)
    w1_list.append(w1.T); b1_list.append(b1)
    w1, b1 = kaiming_conv(kg, bc, cin)                         # strided 1x1 branch
    branch_1x1 = dict(bn1_g=ones, bn1_b=zeros)
    w1_list.append(w1.T); b1_list.append(b1)
    return dict(w1_all=jnp.concatenate(w1_list, axis=1),
                b1_all=jnp.concatenate(b1_list),
                branches_dil=branches_dil, branch_pool=branch_pool,
                branch_1x1=branch_1x1, dilations=tuple(dilations),
                ks=kernel_size, bc=bc)


def init_tcn_gcn_unit(kg, cin, cout, A, stride=1, residual=True,
                      kernel_size=5, dilations=(1, 2)):
    p = dict(gcn=init_unit_gcn(kg, cin, cout, A),
             tcn=init_mstcn(kg, cout, cout, kernel_size, dilations),
             stride=stride)
    if not residual:
        p['residual'], p['res'] = 'zero', None
    elif cin == cout and stride == 1:
        p['residual'], p['res'] = 'identity', None
    else:
        w, b = kaiming_conv(kg, cout, cin)
        p['residual'] = 'conv'
        p['res'] = dict(w=w.T, b=b,
                        bn_g=jnp.ones((cout,), jnp.float32),
                        bn_b=jnp.zeros((cout,), jnp.float32))
    return p


# ----------------------------------------------------------------------------
# Main
# ----------------------------------------------------------------------------
if __name__ == "__main__":
    # Small shapes consistent with the module: (batch*person)=2, C_in=3,
    # T=16 frames, V=17 joints ('mmfit' graph), out_channels=64, stride=1.
    B, Cin, T, V = 2, 3, 16, 17
    Cout, stride = 64, 1

    A = build_graph_A()                                         # (3, 17, 17)
    kg = KeyGen(jax.random.PRNGKey(0))
    params = init_tcn_gcn_unit(kg, Cin, Cout, A, stride=stride, residual=True)

    x = jax.random.normal(jax.random.PRNGKey(0), (B, Cin, T, V), jnp.float32)

    fwd = jax.jit(lambda inp: tcn_gcn_unit_forward(params, inp))
    out = jax.block_until_ready(fwd(x))

    T_out = (T - 1) // stride + 1
    assert out.shape == (B, Cout, T_out, V), out.shape
    assert bool(jnp.all(jnp.isfinite(out)))
    print("KERNEL_OK")
</pallas_src>

<mosaic_0001>
module attributes {stable_mosaic.version = 11 : i64} {
  func.func @_mm_bias_kernel(%arg0: i32, %arg1: memref<34x3xf32, #tpu.memory_space<vmem>>, %arg2: memref<3x48xf32, #tpu.memory_space<vmem>>, %arg3: memref<1x48xf32, #tpu.memory_space<vmem>>, %arg4: memref<34x48xf32, #tpu.memory_space<vmem>>) attributes {dimension_semantics = [#tpu.dimension_semantics<parallel>], iteration_bounds = array<i64: 1>, scalar_prefetch = 0 : i64, scratch_operands = 0 : i64, tpu.core_type = #tpu.core_type<tc>, window_params = [{transform_indices = @transform_0, window_bounds = array<i64: 34, 3>}, {pipeline_mode = #tpu.pipeline_mode<synchronous>, transform_indices = @transform_1, window_bounds = array<i64: 3, 48>}, {pipeline_mode = #tpu.pipeline_mode<synchronous>, transform_indices = @transform_2, window_bounds = array<i64: 1, 48>}, {transform_indices = @transform_3, window_bounds = array<i64: 34, 48>}]} {
    %c0 = arith.constant 0 : index
    %c0_0 = arith.constant 0 : index
    %0 = vector.load %arg1[%c0, %c0_0] : memref<34x3xf32, #tpu.memory_space<vmem>>, vector<34x3xf32>
    %1 = arith.truncf %0 : vector<34x3xf32> to vector<34x3xbf16>
    %c0_1 = arith.constant 0 : index
    %c0_2 = arith.constant 0 : index
    %2 = vector.load %arg2[%c0_1, %c0_2] : memref<3x48xf32, #tpu.memory_space<vmem>>, vector<3x48xf32>
    %3 = arith.truncf %2 : vector<3x48xf32> to vector<3x48xbf16>
    %cst = arith.constant dense<0.000000e+00> : vector<34x48xf32>
    %4 = tpu.matmul %1, %3, %cst {dimension_numbers = #tpu.dot_dimension_numbers<[1], [0], [0], [1], [0, 0, 1, 1], [], []>} : vector<34x3xbf16>, vector<3x48xbf16>, vector<34x48xf32> -> vector<34x48xf32>
    %c0_3 = arith.constant 0 : index
    %c0_4 = arith.constant 0 : index
    %5 = vector.load %arg3[%c0_3, %c0_4] : memref<1x48xf32, #tpu.memory_space<vmem>>, vector<1x48xf32>
    %6 = vector.broadcast %5 : vector<1x48xf32> to vector<34x48xf32>
    %7 = arith.addf %4, %6 : vector<34x48xf32>
    %c0_5 = arith.constant 0 : index
    %c0_6 = arith.constant 0 : index
    %8 = vector.load %arg4[%c0_5, %c0_6] : memref<34x48xf32, #tpu.memory_space<vmem>>, vector<34x48xf32>
    tpu.vector_store %arg4[%c0_5, %c0_6], %7 {strides = array<i32>} : memref<34x48xf32, #tpu.memory_space<vmem>>, vector<34x48xf32>,
    return
  }
  func.func @transform_0(%arg0: i32) -> (i32, i32) {
    %c0_i32 = arith.constant 0 : i32
    %c0_i32_0 = arith.constant 0 : i32
    return %arg0, %c0_i32 : i32, i32
  }
  func.func @transform_1(%arg0: i32) -> (i32, i32) {
    %c0_i32 = arith.constant 0 : i32
    %c0_i32_0 = arith.constant 0 : i32
    %c0_i32_1 = arith.constant 0 : i32
    return %c0_i32, %c0_i32_0 : i32, i32
  }
  func.func @transform_2(%arg0: i32) -> (i32, i32) {
    %c0_i32 = arith.constant 0 : i32
    %c0_i32_0 = arith.constant 0 : i32
    %c0_i32_1 = arith.constant 0 : i32
    return %c0_i32, %c0_i32_0 : i32, i32
  }
  func.func @transform_3(%arg0: i32) -> (i32, i32) {
    %c0_i32 = arith.constant 0 : i32
    %c0_i32_0 = arith.constant 0 : i32
    return %arg0, %c0_i32 : i32, i32
  }
}

module attributes {stable_mosaic.version = 11 : i64} {
  func.func @_mm_bias_kernel(%arg0: i32, %arg1: memref<296x24xf32, #tpu.memory_space<vmem>>, %arg2: memref<24x192xf32, #tpu.memory_space<vmem>>, %arg3: memref<1x192xf32, #tpu.memory_space<vmem>>, %arg4: memref<296x192xf32, #tpu.memory_space<vmem>>) attributes {dimension_semantics = [#tpu.dimension_semantics<parallel>], iteration_bounds = array<i64: 2>, scalar_prefetch = 0 : i64, scratch_operands = 0 : i64, tpu.core_type = #tpu.core_type<tc>, window_params = [{transform_indices = @transform_0, window_bounds = array<i64: 296, 24>}, {pipeline_mode = #tpu.pipeline_mode<synchronous>, transform_indices = @transform_1, window_bounds = array<i64: 24, 192>}, {pipeline_mode = #tpu.pipeline_mode<synchronous>, transform_indices = @transform_2, window_bounds = array<i64: 1, 192>}, {transform_indices = @transform_3, window_bounds = array<i64: 296, 192>}]} {
    %c0 = arith.constant 0 : index
    %c0_0 = arith.constant 0 : index
    %0 = vector.load %arg1[%c0, %c0_0] : memref<296x24xf32, #tpu.memory_space<vmem>>, vector<296x24xf32>
    %1 = arith.truncf %0 : vector<296x24xf32> to vector<296x24xbf16>
    %c0_1 = arith.constant 0 : index
    %c0_2 = arith.constant 0 : index
    %2 = vector.load %arg2[%c0_1, %c0_2] : memref<24x192xf32, #tpu.memory_space<vmem>>, vector<24x192xf32>
    %3 = arith.truncf %2 : vector<24x192xf32> to vector<24x192xbf16>
    %cst = arith.constant dense<0.000000e+00> : vector<296x192xf32>
    %4 = tpu.matmul %1, %3, %cst {dimension_numbers = #tpu.dot_dimension_numbers<[1], [0], [0], [1], [0, 0, 1, 1], [], []>} : vector<296x24xbf16>, vector<24x192xbf16>, vector<296x192xf32> -> vector<296x192xf32>
    %c0_3 = arith.constant 0 : index
    %c0_4 = arith.constant 0 : index
    %5 = vector.load %arg3[%c0_3, %c0_4] : memref<1x192xf32, #tpu.memory_space<vmem>>, vector<1x192xf32>
    %6 = vector.broadcast %5 : vector<1x192xf32> to vector<296x192xf32>
    %7 = arith.addf %4, %6 : vector<296x192xf32>
    %c0_5 = arith.constant 0 : index
    %c0_6 = arith.constant 0 : index
    %8 = vector.load %arg4[%c0_5, %c0_6] : memref<296x192xf32, #tpu.memory_space<vmem>>, vector<296x192xf32>
    tpu.vector_store %arg4[%c0_5, %c0_6], %7 {strides = array<i32>} : memref<296x192xf32, #tpu.memory_space<vmem>>, vector<296x192xf32>,
    return
  }
  func.func @transform_0(%arg0: i32) -> (i32, i32) {
    %c0_i32 = arith.constant 0 : i32
    %c0_i32_0 = arith.constant 0 : i32
    return %arg0, %c0_i32 : i32, i32
  }
  func.func @transform_1(%arg0: i32) -> (i32, i32) {
    %c0_i32 = arith.constant 0 : i32
    %c0_i32_0 = arith.constant 0 : i32
    %c0_i32_1 = arith.constant 0 : i32
    return %c0_i32, %c0_i32_0 : i32, i32
  }
  func.func @transform_2(%arg0: i32) -> (i32, i32) {
    %c0_i32 = arith.constant 0 : i32
    %c0_i32_0 = arith.constant 0 : i32
    %c0_i32_1 = arith.constant 0 : i32
    return %c0_i32, %c0_i32_0 : i32, i32
  }
  func.func @transform_3(%arg0: i32) -> (i32, i32) {
    %c0_i32 = arith.constant 0 : i32
    %c0_i32_0 = arith.constant 0 : i32
    return %arg0, %c0_i32 : i32, i32
  }
}

module attributes {stable_mosaic.version = 11 : i64} {
  func.func @_mm_bias_kernel(%arg0: i32, %arg1: memref<272x3xf32, #tpu.memory_space<vmem>>, %arg2: memref<3x192xf32, #tpu.memory_space<vmem>>, %arg3: memref<1x192xf32, #tpu.memory_space<vmem>>, %arg4: memref<272x192xf32, #tpu.memory_space<vmem>>) attributes {dimension_semantics = [#tpu.dimension_semantics<parallel>], iteration_bounds = array<i64: 2>, scalar_prefetch = 0 : i64, scratch_operands = 0 : i64, tpu.core_type = #tpu.core_type<tc>, window_params = [{transform_indices = @transform_0, window_bounds = array<i64: 272, 3>}, {pipeline_mode = #tpu.pipeline_mode<synchronous>, transform_indices = @transform_1, window_bounds = array<i64: 3, 192>}, {pipeline_mode = #tpu.pipeline_mode<synchronous>, transform_indices = @transform_2, window_bounds = array<i64: 1, 192>}, {transform_indices = @transform_3, window_bounds = array<i64: 272, 192>}]} {
    %c0 = arith.constant 0 : index
    %c0_0 = arith.constant 0 : index
    %0 = vector.load %arg1[%c0, %c0_0] : memref<272x3xf32, #tpu.memory_space<vmem>>, vector<272x3xf32>
    %1 = arith.truncf %0 : vector<272x3xf32> to vector<272x3xbf16>
    %c0_1 = arith.constant 0 : index
    %c0_2 = arith.constant 0 : index
    %2 = vector.load %arg2[%c0_1, %c0_2] : memref<3x192xf32, #tpu.memory_space<vmem>>, vector<3x192xf32>
    %3 = arith.truncf %2 : vector<3x192xf32> to vector<3x192xbf16>
    %cst = arith.constant dense<0.000000e+00> : vector<272x192xf32>
    %4 = tpu.matmul %1, %3, %cst {dimension_numbers = #tpu.dot_dimension_numbers<[1], [0], [0], [1], [0, 0, 1, 1], [], []>} : vector<272x3xbf16>, vector<3x192xbf16>, vector<272x192xf32> -> vector<272x192xf32>
    %c0_3 = arith.constant 0 : index
    %c0_4 = arith.constant 0 : index
    %5 = vector.load %arg3[%c0_3, %c0_4] : memref<1x192xf32, #tpu.memory_space<vmem>>, vector<1x192xf32>
    %6 = vector.broadcast %5 : vector<1x192xf32> to vector<272x192xf32>
    %7 = arith.addf %4, %6 : vector<272x192xf32>
    %c0_5 = arith.constant 0 : index
    %c0_6 = arith.constant 0 : index
    %8 = vector.load %arg4[%c0_5, %c0_6] : memref<272x192xf32, #tpu.memory_space<vmem>>, vector<272x192xf32>
    tpu.vector_store %arg4[%c0_5, %c0_6], %7 {strides = array<i32>} : memref<272x192xf32, #tpu.memory_space<vmem>>, vector<272x192xf32>,
    return
  }
  func.func @transform_0(%arg0: i32) -> (i32, i32) {
    %c0_i32 = arith.constant 0 : i32
    %c0_i32_0 = arith.constant 0 : i32
    return %arg0, %c0_i32 : i32, i32
  }
  func.func @transform_1(%arg0: i32) -> (i32, i32) {
    %c0_i32 = arith.constant 0 : i32
    %c0_i32_0 = arith.constant 0 : i32
    %c0_i32_1 = arith.constant 0 : i32
    return %c0_i32, %c0_i32_0 : i32, i32
  }
  func.func @transform_2(%arg0: i32) -> (i32, i32) {
    %c0_i32 = arith.constant 0 : i32
    %c0_i32_0 = arith.constant 0 : i32
    %c0_i32_1 = arith.constant 0 : i32
    return %c0_i32, %c0_i32_0 : i32, i32
  }
  func.func @transform_3(%arg0: i32) -> (i32, i32) {
    %c0_i32 = arith.constant 0 : i32
    %c0_i32_0 = arith.constant 0 : i32
    return %arg0, %c0_i32 : i32, i32
  }
}

module attributes {stable_mosaic.version = 11 : i64} {
  func.func @_bmm_kernel(%arg0: i32, %arg1: memref<64x16x51xf32, #tpu.memory_space<vmem>>, %arg2: memref<64x51x17xf32, #tpu.memory_space<vmem>>, %arg3: memref<64x16x17xf32, #tpu.memory_space<vmem>>) attributes {dimension_semantics = [#tpu.dimension_semantics<parallel>], iteration_bounds = array<i64: 2>, scalar_prefetch = 0 : i64, scratch_operands = 0 : i64, tpu.core_type = #tpu.core_type<tc>, window_params = [{transform_indices = @transform_0, window_bounds = array<i64: 64, 16, 51>}, {transform_indices = @transform_1, window_bounds = array<i64: 64, 51, 17>}, {transform_indices = @transform_2, window_bounds = array<i64: 64, 16, 17>}]} {
    %c0 = arith.constant 0 : index
    %c0_0 = arith.constant 0 : index
    %c0_1 = arith.constant 0 : index
    %0 = vector.load %arg1[%c0, %c0_0, %c0_1] : memref<64x16x51xf32, #tpu.memory_space<vmem>>, vector<64x16x51xf32>
    %1 = arith.truncf %0 : vector<64x16x51xf32> to vector<64x16x51xbf16>
    %c0_2 = arith.constant 0 : index
    %c0_3 = arith.constant 0 : index
    %c0_4 = arith.constant 0 : index
    %2 = vector.load %arg2[%c0_2, %c0_3, %c0_4] : memref<64x51x17xf32, #tpu.memory_space<vmem>>, vector<64x51x17xf32>
    %3 = arith.truncf %2 : vector<64x51x17xf32> to vector<64x51x17xbf16>
    "tpu.trace_start"() <{level = 10 : i32, message = "ntw,nwu->ntu"}> : () -> ()
    %cst = arith.constant dense<0.000000e+00> : vector<64x16x17xf32>
    %4 = tpu.matmul %1, %3, %cst {dimension_numbers = #tpu.dot_dimension_numbers<[2], [1], [1], [2], [0, 0, 0, 1, 1, 2], [0], [0]>} : vector<64x16x51xbf16>, vector<64x51x17xbf16>, vector<64x16x17xf32> -> vector<64x16x17xf32>
    "tpu.trace_stop"() : () -> ()
    %c0_5 = arith.constant 0 : index
    %c0_6 = arith.constant 0 : index
    %c0_7 = arith.constant 0 : index
    %5 = vector.load %arg3[%c0_5, %c0_6, %c0_7] : memref<64x16x17xf32, #tpu.memory_space<vmem>>, vector<64x16x17xf32>
    tpu.vector_store %arg3[%c0_5, %c0_6, %c0_7], %4 {strides = array<i32>} : memref<64x16x17xf32, #tpu.memory_space<vmem>>, vector<64x16x17xf32>,
    return
  }
  func.func @transform_0(%arg0: i32) -> (i32, i32, i32) {
    %c0_i32 = arith.constant 0 : i32
    %c0_i32_0 = arith.constant 0 : i32
    %c0_i32_1 = arith.constant 0 : i32
    return %arg0, %c0_i32, %c0_i32_0 : i32, i32, i32
  }
  func.func @transform_1(%arg0: i32) -> (i32, i32, i32) {
    %c0_i32 = arith.constant 0 : i32
    %c0_i32_0 = arith.constant 0 : i32
    %c0_i32_1 = arith.constant 0 : i32
    return %arg0, %c0_i32, %c0_i32_0 : i32, i32, i32
  }
  func.func @transform_2(%arg0: i32) -> (i32, i32, i32) {
    %c0_i32 = arith.constant 0 : i32
    %c0_i32_0 = arith.constant 0 : i32
    %c0_i32_1 = arith.constant 0 : i32
    return %arg0, %c0_i32, %c0_i32_0 : i32, i32, i32
  }
}

module attributes {stable_mosaic.version = 11 : i64} {
  func.func @_mm_bias_kernel(%arg0: i32, %arg1: memref<272x3xf32, #tpu.memory_space<vmem>>, %arg2: memref<3x64xf32, #tpu.memory_space<vmem>>, %arg3: memref<1x64xf32, #tpu.memory_space<vmem>>, %arg4: memref<272x64xf32, #tpu.memory_space<vmem>>) attributes {dimension_semantics = [#tpu.dimension_semantics<parallel>], iteration_bounds = array<i64: 2>, scalar_prefetch = 0 : i64, scratch_operands = 0 : i64, tpu.core_type = #tpu.core_type<tc>, window_params = [{transform_indices = @transform_0, window_bounds = array<i64: 272, 3>}, {pipeline_mode = #tpu.pipeline_mode<synchronous>, transform_indices = @transform_1, window_bounds = array<i64: 3, 64>}, {pipeline_mode = #tpu.pipeline_mode<synchronous>, transform_indices = @transform_2, window_bounds = array<i64: 1, 64>}, {transform_indices = @transform_3, window_bounds = array<i64: 272, 64>}]} {
    %c0 = arith.constant 0 : index
    %c0_0 = arith.constant 0 : index
    %0 = vector.load %arg1[%c0, %c0_0] : memref<272x3xf32, #tpu.memory_space<vmem>>, vector<272x3xf32>
    %1 = arith.truncf %0 : vector<272x3xf32> to vector<272x3xbf16>
    %c0_1 = arith.constant 0 : index
    %c0_2 = arith.constant 0 : index
    %2 = vector.load %arg2[%c0_1, %c0_2] : memref<3x64xf32, #tpu.memory_space<vmem>>, vector<3x64xf32>
    %3 = arith.truncf %2 : vector<3x64xf32> to vector<3x64xbf16>
    %cst = arith.constant dense<0.000000e+00> : vector<272x64xf32>
    %4 = tpu.matmul %1, %3, %cst {dimension_numbers = #tpu.dot_dimension_numbers<[1], [0], [0], [1], [0, 0, 1, 1], [], []>} : vector<272x3xbf16>, vector<3x64xbf16>, vector<272x64xf32> -> vector<272x64xf32>
    %c0_3 = arith.constant 0 : index
    %c0_4 = arith.constant 0 : index
    %5 = vector.load %arg3[%c0_3, %c0_4] : memref<1x64xf32, #tpu.memory_space<vmem>>, vector<1x64xf32>
    %6 = vector.broadcast %5 : vector<1x64xf32> to vector<272x64xf32>
    %7 = arith.addf %4, %6 : vector<272x64xf32>
    %c0_5 = arith.constant 0 : index
    %c0_6 = arith.constant 0 : index
    %8 = vector.load %arg4[%c0_5, %c0_6] : memref<272x64xf32, #tpu.memory_space<vmem>>, vector<272x64xf32>
    tpu.vector_store %arg4[%c0_5, %c0_6], %7 {strides = array<i32>} : memref<272x64xf32, #tpu.memory_space<vmem>>, vector<272x64xf32>,
    return
  }
  func.func @transform_0(%arg0: i32) -> (i32, i32) {
    %c0_i32 = arith.constant 0 : i32
    %c0_i32_0 = arith.constant 0 : i32
    return %arg0, %c0_i32 : i32, i32
  }
  func.func @transform_1(%arg0: i32) -> (i32, i32) {
    %c0_i32 = arith.constant 0 : i32
    %c0_i32_0 = arith.constant 0 : i32
    %c0_i32_1 = arith.constant 0 : i32
    return %c0_i32, %c0_i32_0 : i32, i32
  }
  func.func @transform_2(%arg0: i32) -> (i32, i32) {
    %c0_i32 = arith.constant 0 : i32
    %c0_i32_0 = arith.constant 0 : i32
    %c0_i32_1 = arith.constant 0 : i32
    return %c0_i32, %c0_i32_0 : i32, i32
  }
  func.func @transform_3(%arg0: i32) -> (i32, i32) {
    %c0_i32 = arith.constant 0 : i32
    %c0_i32_0 = arith.constant 0 : i32
    return %arg0, %c0_i32 : i32, i32
  }
}

module attributes {stable_mosaic.version = 11 : i64} {
  func.func @_mm_bias_kernel(%arg0: i32, %arg1: memref<272x64xf32, #tpu.memory_space<vmem>>, %arg2: memref<64x64xf32, #tpu.memory_space<vmem>>, %arg3: memref<1x64xf32, #tpu.memory_space<vmem>>, %arg4: memref<272x64xf32, #tpu.memory_space<vmem>>) attributes {dimension_semantics = [#tpu.dimension_semantics<parallel>], iteration_bounds = array<i64: 2>, scalar_prefetch = 0 : i64, scratch_operands = 0 : i64, tpu.core_type = #tpu.core_type<tc>, window_params = [{transform_indices = @transform_0, window_bounds = array<i64: 272, 64>}, {pipeline_mode = #tpu.pipeline_mode<synchronous>, transform_indices = @transform_1, window_bounds = array<i64: 64, 64>}, {pipeline_mode = #tpu.pipeline_mode<synchronous>, transform_indices = @transform_2, window_bounds = array<i64: 1, 64>}, {transform_indices = @transform_3, window_bounds = array<i64: 272, 64>}]} {
    %c0 = arith.constant 0 : index
    %c0_0 = arith.constant 0 : index
    %0 = vector.load %arg1[%c0, %c0_0] : memref<272x64xf32, #tpu.memory_space<vmem>>, vector<272x64xf32>
    %1 = arith.truncf %0 : vector<272x64xf32> to vector<272x64xbf16>
    %c0_1 = arith.constant 0 : index
    %c0_2 = arith.constant 0 : index
    %2 = vector.load %arg2[%c0_1, %c0_2] : memref<64x64xf32, #tpu.memory_space<vmem>>, vector<64x64xf32>
    %3 = arith.truncf %2 : vector<64x64xf32> to vector<64x64xbf16>
    %cst = arith.constant dense<0.000000e+00> : vector<272x64xf32>
    %4 = tpu.matmul %1, %3, %cst {dimension_numbers = #tpu.dot_dimension_numbers<[1], [0], [0], [1], [0, 0, 1, 1], [], []>} : vector<272x64xbf16>, vector<64x64xbf16>, vector<272x64xf32> -> vector<272x64xf32>
    %c0_3 = arith.constant 0 : index
    %c0_4 = arith.constant 0 : index
    %5 = vector.load %arg3[%c0_3, %c0_4] : memref<1x64xf32, #tpu.memory_space<vmem>>, vector<1x64xf32>
    %6 = vector.broadcast %5 : vector<1x64xf32> to vector<272x64xf32>
    %7 = arith.addf %4, %6 : vector<272x64xf32>
    %c0_5 = arith.constant 0 : index
    %c0_6 = arith.constant 0 : index
    %8 = vector.load %arg4[%c0_5, %c0_6] : memref<272x64xf32, #tpu.memory_space<vmem>>, vector<272x64xf32>
    tpu.vector_store %arg4[%c0_5, %c0_6], %7 {strides = array<i32>} : memref<272x64xf32, #tpu.memory_space<vmem>>, vector<272x64xf32>,
    return
  }
  func.func @transform_0(%arg0: i32) -> (i32, i32) {
    %c0_i32 = arith.constant 0 : i32
    %c0_i32_0 = arith.constant 0 : i32
    return %arg0, %c0_i32 : i32, i32
  }
  func.func @transform_1(%arg0: i32) -> (i32, i32) {
    %c0_i32 = arith.constant 0 : i32
    %c0_i32_0 = arith.constant 0 : i32
    %c0_i32_1 = arith.constant 0 : i32
    return %c0_i32, %c0_i32_0 : i32, i32
  }
  func.func @transform_2(%arg0: i32) -> (i32, i32) {
    %c0_i32 = arith.constant 0 : i32
    %c0_i32_0 = arith.constant 0 : i32
    %c0_i32_1 = arith.constant 0 : i32
    return %c0_i32, %c0_i32_0 : i32, i32
  }
  func.func @transform_3(%arg0: i32) -> (i32, i32) {
    %c0_i32 = arith.constant 0 : i32
    %c0_i32_0 = arith.constant 0 : i32
    return %arg0, %c0_i32 : i32, i32
  }
}

module attributes {stable_mosaic.version = 11 : i64} {
  func.func @kern(%arg0: i32, %arg1: memref<1x340x16xf32, #tpu.memory_space<vmem>>, %arg2: memref<80x16xf32, #tpu.memory_space<vmem>>, %arg3: memref<1x16xf32, #tpu.memory_space<vmem>>, %arg4: memref<1x272x16xf32, #tpu.memory_space<vmem>>) attributes {dimension_semantics = [#tpu.dimension_semantics<parallel>], iteration_bounds = array<i64: 2>, scalar_prefetch = 0 : i64, scratch_operands = 0 : i64, tpu.core_type = #tpu.core_type<tc>, window_params = [{transform_indices = @transform_0, window_bounds = array<i64: 1, 340, 16>}, {pipeline_mode = #tpu.pipeline_mode<synchronous>, transform_indices = @transform_1, window_bounds = array<i64: 80, 16>}, {pipeline_mode = #tpu.pipeline_mode<synchronous>, transform_indices = @transform_2, window_bounds = array<i64: 1, 16>}, {transform_indices = @transform_3, window_bounds = array<i64: 1, 272, 16>}]} {
    %c0 = arith.constant 0 : index
    %c0_0 = arith.constant 0 : index
    %c0_1 = arith.constant 0 : index
    %0 = vector.load %arg1[%c0, %c0_0, %c0_1] : memref<1x340x16xf32, #tpu.memory_space<vmem>>, vector<1x272x16xf32>
    %1 = vector.shape_cast %0 : vector<1x272x16xf32> to vector<272x16xf32>
    %2 = arith.truncf %1 : vector<272x16xf32> to vector<272x16xbf16>
    %c0_2 = arith.constant 0 : index
    %c0_3 = arith.constant 0 : index
    %3 = vector.load %arg2[%c0_2, %c0_3] : memref<80x16xf32, #tpu.memory_space<vmem>>, vector<16x16xf32>
    %4 = arith.truncf %3 : vector<16x16xf32> to vector<16x16xbf16>
    %cst = arith.constant dense<0.000000e+00> : vector<272x16xf32>
    %5 = tpu.matmul %2, %4, %cst {dimension_numbers = #tpu.dot_dimension_numbers<[1], [0], [0], [1], [0, 0, 1, 1], [], []>} : vector<272x16xbf16>, vector<16x16xbf16>, vector<272x16xf32> -> vector<272x16xf32>
    %c0_4 = arith.constant 0 : index
    %c17 = arith.constant 17 : index
    %c0_5 = arith.constant 0 : index
    %6 = vector.load %arg1[%c0_4, %c17, %c0_5] : memref<1x340x16xf32, #tpu.memory_space<vmem>>, vector<1x272x16xf32>
    %7 = vector.shape_cast %6 : vector<1x272x16xf32> to vector<272x16xf32>
    %8 = arith.truncf %7 : vector<272x16xf32> to vector<272x16xbf16>
    %c16 = arith.constant 16 : index
    %c0_6 = arith.constant 0 : index
    %9 = vector.load %arg2[%c16, %c0_6] : memref<80x16xf32, #tpu.memory_space<vmem>>, vector<16x16xf32>
    %10 = arith.truncf %9 : vector<16x16xf32> to vector<16x16xbf16>
    %cst_7 = arith.constant dense<0.000000e+00> : vector<272x16xf32>
    %11 = tpu.matmul %8, %10, %cst_7 {dimension_numbers = #tpu.dot_dimension_numbers<[1], [0], [0], [1], [0, 0, 1, 1], [], []>} : vector<272x16xbf16>, vector<16x16xbf16>, vector<272x16xf32> -> vector<272x16xf32>
    %12 = arith.addf %5, %11 : vector<272x16xf32>
    %c0_8 = arith.constant 0 : index
    %c34 = arith.constant 34 : index
    %c0_9 = arith.constant 0 : index
    %13 = vector.load %arg1[%c0_8, %c34, %c0_9] : memref<1x340x16xf32, #tpu.memory_space<vmem>>, vector<1x272x16xf32>
    %14 = vector.shape_cast %13 : vector<1x272x16xf32> to vector<272x16xf32>
    %15 = arith.truncf %14 : vector<272x16xf32> to vector<272x16xbf16>
    %c32 = arith.constant 32 : index
    %c0_10 = arith.constant 0 : index
    %16 = vector.load %arg2[%c32, %c0_10] : memref<80x16xf32, #tpu.memory_space<vmem>>, vector<16x16xf32>
    %17 = arith.truncf %16 : vector<16x16xf32> to vector<16x16xbf16>
    %cst_11 = arith.constant dense<0.000000e+00> : vector<272x16xf32>
    %18 = tpu.matmul %15, %17, %cst_11 {dimension_numbers = #tpu.dot_dimension_numbers<[1], [0], [0], [1], [0, 0, 1, 1], [], []>} : vector<272x16xbf16>, vector<16x16xbf16>, vector<272x16xf32> -> vector<272x16xf32>
    %19 = arith.addf %12, %18 : vector<272x16xf32>
    %c0_12 = arith.constant 0 : index
    %c51 = arith.constant 51 : index
    %c0_13 = arith.constant 0 : index
    %20 = vector.load %arg1[%c0_12, %c51, %c0_13] : memref<1x340x16xf32, #tpu.memory_space<vmem>>, vector<1x272x16xf32>
    %21 = vector.shape_cast %20 : vector<1x272x16xf32> to vector<272x16xf32>
    %22 = arith.truncf %21 : vector<272x16xf32> to vector<272x16xbf16>
    %c48 = arith.constant 48 : index
    %c0_14 = arith.constant 0 : index
    %23 = vector.load %arg2[%c48, %c0_14] : memref<80x16xf32, #tpu.memory_space<vmem>>, vector<16x16xf32>
    %24 = arith.truncf %23 : vector<16x16xf32> to vector<16x16xbf16>
    %cst_15 = arith.constant dense<0.000000e+00> : vector<272x16xf32>
    %25 = tpu.matmul %22, %24, %cst_15 {dimension_numbers = #tpu.dot_dimension_numbers<[1], [0], [0], [1], [0, 0, 1, 1], [], []>} : vector<272x16xbf16>, vector<16x16xbf16>, vector<272x16xf32> -> vector<272x16xf32>
    %26 = arith.addf %19, %25 : vector<272x16xf32>
    %c0_16 = arith.constant 0 : index
    %c68 = arith.constant 68 : index
    %c0_17 = arith.constant 0 : index
    %27 = vector.load %arg1[%c0_16, %c68, %c0_17] : memref<1x340x16xf32, #tpu.memory_space<vmem>>, vector<1x272x16xf32>
    %28 = vector.shape_cast %27 : vector<1x272x16xf32> to vector<272x16xf32>
    %29 = arith.truncf %28 : vector<272x16xf32> to vector<272x16xbf16>
    %c64 = arith.constant 64 : index
    %c0_18 = arith.constant 0 : index
    %30 = vector.load %arg2[%c64, %c0_18] : memref<80x16xf32, #tpu.memory_space<vmem>>, vector<16x16xf32>
    %31 = arith.truncf %30 : vector<16x16xf32> to vector<16x16xbf16>
    %cst_19 = arith.constant dense<0.000000e+00> : vector<272x16xf32>
    %32 = tpu.matmul %29, %31, %cst_19 {dimension_numbers = #tpu.dot_dimension_numbers<[1], [0], [0], [1], [0, 0, 1, 1], [], []>} : vector<272x16xbf16>, vector<16x16xbf16>, vector<272x16xf32> -> vector<272x16xf32>
    %33 = arith.addf %26, %32 : vector<272x16xf32>
    %c0_20 = arith.constant 0 : index
    %c0_21 = arith.constant 0 : index
    %34 = vector.load %arg3[%c0_20, %c0_21] : memref<1x16xf32, #tpu.memory_space<vmem>>, vector<1x16xf32>
    %35 = vector.broadcast %34 : vector<1x16xf32> to vector<272x16xf32>
    %36 = arith.addf %33, %35 : vector<272x16xf32>
    %c0_22 = arith.constant 0 : index
    %c0_23 = arith.constant 0 : index
    %c0_24 = arith.constant 0 : index
    %37 = vector.load %arg4[%c0_22, %c0_23, %c0_24] : memref<1x272x16xf32, #tpu.memory_space<vmem>>, vector<1x272x16xf32>
    %38 = vector.shape_cast %37 : vector<1x272x16xf32> to vector<272x16xf32>
    %39 = vector.shape_cast %36 : vector<272x16xf32> to vector<1x272x16xf32>
    tpu.vector_store %arg4[%c0_22, %c0_23, %c0_24], %39 {strides = array<i32>} : memref<1x272x16xf32, #tpu.memory_space<vmem>>, vector<1x272x16xf32>,
    return
  }
  func.func @transform_0(%arg0: i32) -> (i32, i32, i32) {
    %c0_i32 = arith.constant 0 : i32
    %c0_i32_0 = arith.constant 0 : i32
    %c0_i32_1 = arith.constant 0 : i32
    return %arg0, %c0_i32, %c0_i32_0 : i32, i32, i32
  }
  func.func @transform_1(%arg0: i32) -> (i32, i32) {
    %c0_i32 = arith.constant 0 : i32
    %c0_i32_0 = arith.constant 0 : i32
    %c0_i32_1 = arith.constant 0 : i32
    return %c0_i32, %c0_i32_0 : i32, i32
  }
  func.func @transform_2(%arg0: i32) -> (i32, i32) {
    %c0_i32 = arith.constant 0 : i32
    %c0_i32_0 = arith.constant 0 : i32
    %c0_i32_1 = arith.constant 0 : i32
    return %c0_i32, %c0_i32_0 : i32, i32
  }
  func.func @transform_3(%arg0: i32) -> (i32, i32, i32) {
    %c0_i32 = arith.constant 0 : i32
    %c0_i32_0 = arith.constant 0 : i32
    %c0_i32_1 = arith.constant 0 : i32
    return %arg0, %c0_i32, %c0_i32_0 : i32, i32, i32
  }
}

module attributes {stable_mosaic.version = 11 : i64} {
  func.func @kern(%arg0: i32, %arg1: memref<1x408x16xf32, #tpu.memory_space<vmem>>, %arg2: memref<80x16xf32, #tpu.memory_space<vmem>>, %arg3: memref<1x16xf32, #tpu.memory_space<vmem>>, %arg4: memref<1x272x16xf32, #tpu.memory_space<vmem>>) attributes {dimension_semantics = [#tpu.dimension_semantics<parallel>], iteration_bounds = array<i64: 2>, scalar_prefetch = 0 : i64, scratch_operands = 0 : i64, tpu.core_type = #tpu.core_type<tc>, window_params = [{transform_indices = @transform_0, window_bounds = array<i64: 1, 408, 16>}, {pipeline_mode = #tpu.pipeline_mode<synchronous>, transform_indices = @transform_1, window_bounds = array<i64: 80, 16>}, {pipeline_mode = #tpu.pipeline_mode<synchronous>, transform_indices = @transform_2, window_bounds = array<i64: 1, 16>}, {transform_indices = @transform_3, window_bounds = array<i64: 1, 272, 16>}]} {
    %c0 = arith.constant 0 : index
    %c0_0 = arith.constant 0 : index
    %c0_1 = arith.constant 0 : index
    %0 = vector.load %arg1[%c0, %c0_0, %c0_1] : memref<1x408x16xf32, #tpu.memory_space<vmem>>, vector<1x272x16xf32>
    %1 = vector.shape_cast %0 : vector<1x272x16xf32> to vector<272x16xf32>
    %2 = arith.truncf %1 : vector<272x16xf32> to vector<272x16xbf16>
    %c0_2 = arith.constant 0 : index
    %c0_3 = arith.constant 0 : index
    %3 = vector.load %arg2[%c0_2, %c0_3] : memref<80x16xf32, #tpu.memory_space<vmem>>, vector<16x16xf32>
    %4 = arith.truncf %3 : vector<16x16xf32> to vector<16x16xbf16>
    %cst = arith.constant dense<0.000000e+00> : vector<272x16xf32>
    %5 = tpu.matmul %2, %4, %cst {dimension_numbers = #tpu.dot_dimension_numbers<[1], [0], [0], [1], [0, 0, 1, 1], [], []>} : vector<272x16xbf16>, vector<16x16xbf16>, vector<272x16xf32> -> vector<272x16xf32>
    %c0_4 = arith.constant 0 : index
    %c34 = arith.constant 34 : index
    %c0_5 = arith.constant 0 : index
    %6 = vector.load %arg1[%c0_4, %c34, %c0_5] : memref<1x408x16xf32, #tpu.memory_space<vmem>>, vector<1x272x16xf32>
    %7 = vector.shape_cast %6 : vector<1x272x16xf32> to vector<272x16xf32>
    %8 = arith.truncf %7 : vector<272x16xf32> to vector<272x16xbf16>
    %c16 = arith.constant 16 : index
    %c0_6 = arith.constant 0 : index
    %9 = vector.load %arg2[%c16, %c0_6] : memref<80x16xf32, #tpu.memory_space<vmem>>, vector<16x16xf32>
    %10 = arith.truncf %9 : vector<16x16xf32> to vector<16x16xbf16>
    %cst_7 = arith.constant dense<0.000000e+00> : vector<272x16xf32>
    %11 = tpu.matmul %8, %10, %cst_7 {dimension_numbers = #tpu.dot_dimension_numbers<[1], [0], [0], [1], [0, 0, 1, 1], [], []>} : vector<272x16xbf16>, vector<16x16xbf16>, vector<272x16xf32> -> vector<272x16xf32>
    %12 = arith.addf %5, %11 : vector<272x16xf32>
    %c0_8 = arith.constant 0 : index
    %c68 = arith.constant 68 : index
    %c0_9 = arith.constant 0 : index
    %13 = vector.load %arg1[%c0_8, %c68, %c0_9] : memref<1x408x16xf32, #tpu.memory_space<vmem>>, vector<1x272x16xf32>
    %14 = vector.shape_cast %13 : vector<1x272x16xf32> to vector<272x16xf32>
    %15 = arith.truncf %14 : vector<272x16xf32> to vector<272x16xbf16>
    %c32 = arith.constant 32 : index
    %c0_10 = arith.constant 0 : index
    %16 = vector.load %arg2[%c32, %c0_10] : memref<80x16xf32, #tpu.memory_space<vmem>>, vector<16x16xf32>
    %17 = arith.truncf %16 : vector<16x16xf32> to vector<16x16xbf16>
    %cst_11 = arith.constant dense<0.000000e+00> : vector<272x16xf32>
    %18 = tpu.matmul %15, %17, %cst_11 {dimension_numbers = #tpu.dot_dimension_numbers<[1], [0], [0], [1], [0, 0, 1, 1], [], []>} : vector<272x16xbf16>, vector<16x16xbf16>, vector<272x16xf32> -> vector<272x16xf32>
    %19 = arith.addf %12, %18 : vector<272x16xf32>
    %c0_12 = arith.constant 0 : index
    %c102 = arith.constant 102 : index
    %c0_13 = arith.constant 0 : index
    %20 = vector.load %arg1[%c0_12, %c102, %c0_13] : memref<1x408x16xf32, #tpu.memory_space<vmem>>, vector<1x272x16xf32>
    %21 = vector.shape_cast %20 : vector<1x272x16xf32> to vector<272x16xf32>
    %22 = arith.truncf %21 : vector<272x16xf32> to vector<272x16xbf16>
    %c48 = arith.constant 48 : index
    %c0_14 = arith.constant 0 : index
    %23 = vector.load %arg2[%c48, %c0_14] : memref<80x16xf32, #tpu.memory_space<vmem>>, vector<16x16xf32>
    %24 = arith.truncf %23 : vector<16x16xf32> to vector<16x16xbf16>
    %cst_15 = arith.constant dense<0.000000e+00> : vector<272x16xf32>
    %25 = tpu.matmul %22, %24, %cst_15 {dimension_numbers = #tpu.dot_dimension_numbers<[1], [0], [0], [1], [0, 0, 1, 1], [], []>} : vector<272x16xbf16>, vector<16x16xbf16>, vector<272x16xf32> -> vector<272x16xf32>
    %26 = arith.addf %19, %25 : vector<272x16xf32>
    %c0_16 = arith.constant 0 : index
    %c136 = arith.constant 136 : index
    %c0_17 = arith.constant 0 : index
    %27 = vector.load %arg1[%c0_16, %c136, %c0_17] : memref<1x408x16xf32, #tpu.memory_space<vmem>>, vector<1x272x16xf32>
    %28 = vector.shape_cast %27 : vector<1x272x16xf32> to vector<272x16xf32>
    %29 = arith.truncf %28 : vector<272x16xf32> to vector<272x16xbf16>
    %c64 = arith.constant 64 : index
    %c0_18 = arith.constant 0 : index
    %30 = vector.load %arg2[%c64, %c0_18] : memref<80x16xf32, #tpu.memory_space<vmem>>, vector<16x16xf32>
    %31 = arith.truncf %30 : vector<16x16xf32> to vector<16x16xbf16>
    %cst_19 = arith.constant dense<0.000000e+00> : vector<272x16xf32>
    %32 = tpu.matmul %29, %31, %cst_19 {dimension_numbers = #tpu.dot_dimension_numbers<[1], [0], [0], [1], [0, 0, 1, 1], [], []>} : vector<272x16xbf16>, vector<16x16xbf16>, vector<272x16xf32> -> vector<272x16xf32>
    %33 = arith.addf %26, %32 : vector<272x16xf32>
    %c0_20 = arith.constant 0 : index
    %c0_21 = arith.constant 0 : index
    %34 = vector.load %arg3[%c0_20, %c0_21] : memref<1x16xf32, #tpu.memory_space<vmem>>, vector<1x16xf32>
    %35 = vector.broadcast %34 : vector<1x16xf32> to vector<272x16xf32>
    %36 = arith.addf %33, %35 : vector<272x16xf32>
    %c0_22 = arith.constant 0 : index
    %c0_23 = arith.constant 0 : index
    %c0_24 = arith.constant 0 : index
    %37 = vector.load %arg4[%c0_22, %c0_23, %c0_24] : memref<1x272x16xf32, #tpu.memory_space<vmem>>, vector<1x272x16xf32>
    %38 = vector.shape_cast %37 : vector<1x272x16xf32> to vector<272x16xf32>
    %39 = vector.shape_cast %36 : vector<272x16xf32> to vector<1x272x16xf32>
    tpu.vector_store %arg4[%c0_22, %c0_23, %c0_24], %39 {strides = array<i32>} : memref<1x272x16xf32, #tpu.memory_space<vmem>>, vector<1x272x16xf32>,
    return
  }
  func.func @transform_0(%arg0: i32) -> (i32, i32, i32) {
    %c0_i32 = arith.constant 0 : i32
    %c0_i32_0 = arith.constant 0 : i32
    %c0_i32_1 = arith.constant 0 : i32
    return %arg0, %c0_i32, %c0_i32_0 : i32, i32, i32
  }
  func.func @transform_1(%arg0: i32) -> (i32, i32) {
    %c0_i32 = arith.constant 0 : i32
    %c0_i32_0 = arith.constant 0 : i32
    %c0_i32_1 = arith.constant 0 : i32
    return %c0_i32, %c0_i32_0 : i32, i32
  }
  func.func @transform_2(%arg0: i32) -> (i32, i32) {
    %c0_i32 = arith.constant 0 : i32
    %c0_i32_0 = arith.constant 0 : i32
    %c0_i32_1 = arith.constant 0 : i32
    return %c0_i32, %c0_i32_0 : i32, i32
  }
  func.func @transform_3(%arg0: i32) -> (i32, i32, i32) {
    %c0_i32 = arith.constant 0 : i32
    %c0_i32_0 = arith.constant 0 : i32
    %c0_i32_1 = arith.constant 0 : i32
    return %arg0, %c0_i32, %c0_i32_0 : i32, i32, i32
  }
}

</mosaic_0001>

<llo_original>
// kernel: _lambda_.9
$region0: #{_lambda_.9}
  #allocation0 [shape = 'u32[]', space=smem, size = 0x4, offset = 0x4, fixed_abs, tag = 'smem constant byte address 0x4 - core index']
  #allocation1 [shape = 'u32[72,128]{1,0:T(1,128)}', space=vmem, size = 0x9000, scoped, tag = 'internal scratch']
  %s0 = inlined_call_operand.vmem [shape: f32[34,3], index: 0, kind: input, shape index: {}]
  %s1 = inlined_call_operand.hbm [shape: f32[3,48], index: 1, kind: input, shape index: {}]
  %s2 = inlined_call_operand.vmem [shape: f32[1,48], index: 2, kind: input, shape index: {}]
  %s3 = inlined_call_operand.vmem [shape: f32[34,48], index: 3, kind: output, shape index: {}]
  %s4 = sld [smem:[#allocation0]]
  $region26: #{_lambda_.9} parent=0
    _
  %s6 = ssub.s32 1, %s4
  %s7 = scalar_select 0, %s6, %s4
  $region1: #{_lambda_.9} parent=0
    #allocation2 [shape = 'u8[2048]{0}', space=vmem, size = 0x800, scoped, tag = 'input window, operand 1, single buffered']
    #allocation3 [shape = 's32[1]{0}', space=sflag, size = 0x4, scoped, tag = 'scoped memory for _lambda_.9']
    %8 = vsyncpa [#allocation3], 0
    // Predicated region
    $region2: #{_lambda_.9} parent=1 // pred_check
      _
    $region3: #{_lambda_.9} parent=1 // pred_check_branch
      %10 = sbr.rel (0) target = $region5
    $region4: #{_lambda_.9} parent=1 // pred_region
      _
    $region5: #{_lambda_.9} parent=1 // pred_fallthru
      _
    // Predicated region
    $region6: #{_lambda_.9} parent=1 // pred_check
      _
    $region7: #{_lambda_.9} parent=1 // pred_check_branch
      %12 = sbr.rel (0) target = $region9
    $region8: #{_lambda_.9} parent=1 // pred_region
      %14 = vsyncadd [#allocation3], 0
      %s16 = sshll.u32 %s1, 4
      %s17 = int_to_ptr.hbm [resolvable:$true] %s16
      %s18 = sshll.u32 [#allocation2], 4
      %s19 = int_to_ptr.vmem [resolvable:$true] %s18
      %21 = dma.hbm_to_vmem [thread:$0]  %s17, 64, %s19, [#allocation3]
    $region9: #{_lambda_.9} parent=1 // pred_fallthru
      _
    // Predicated region
    $region10: #{_lambda_.9} parent=1 // pred_check
      _
    $region11: #{_lambda_.9} parent=1 // pred_check_branch
      %23 = sbr.rel (0) target = $region13
    $region12: #{_lambda_.9} parent=1 // pred_region
      _
    $region13: #{_lambda_.9} parent=1 // pred_fallthru
      _
    // Predicated region
    $region14: #{_lambda_.9} parent=1 // pred_check
      _
    $region15: #{_lambda_.9} parent=1 // pred_check_branch
      %25 = sbr.rel (0) target = $region17
    $region16: #{_lambda_.9} parent=1 // pred_region
      %27 = dma.done [#allocation3], 64
    $region17: #{_lambda_.9} parent=1 // pred_fallthru
      _
    %v29 = vld [vmem:[%s0] sm:$0xff]
    %v30 = vld [vmem:[%s0 + $0x8] sm:$0xff]
    %v31 = vld [vmem:[%s0 + $0x10] sm:$0xff]
    %v32 = vld [vmem:[%s0 + $0x18] sm:$0xff]
    %v33 = vld [vmem:[%s0 + $0x20] sm:$0x3]
    %v34 = vpack.c.bf16 %v30, %v29
    %v35 = vpack.c.bf16 %v32, %v31
    %v36 = vpack.c.bf16 %v33, %v33
    %v37 = vld [vmem:[#allocation2] sm:$0x7]
    %v38 = vpack.c.bf16 %v37, %v37
    %v39 = vld [vmem:[%s2] sm:$0x1]
    %v41 = vperm.slane %v39, 0
    %vm43 = vcmask 23552
    %v45 = vsel %vm43, %v34, 0
    %v48 = vsel %vm43, %v35, 0
    %v51 = vsel %vm43, %v36, 0
    %vm53 = vcmask 1040384
    %vm54 = vcmask 1041408
    %v55 = vsel %vm53, 4294967295, 65535
    %v56 = vsel %vm54, %v55, 0
    %v58 = vand.u32 %v38, %v56
    %60 = vmatpush.bf16.msra.mxu0 0
    %61 = vmatpush.bf16.msra.mxu0 0
    %62 = vmatpush.bf16.msra.mxu0 0
    %63 = vmatpush.bf16.msra.mxu0 0
    %64 = vmatpush.bf16.msra.mxu0 0
    %65 = vmatpush.bf16.msra.mxu0 0
    %66 = vmatpush.bf16.msra.mxu0 0
    %67 = vmatpush.bf16.msra.mxu0 %v58
    %68 = vmatmul.bf16.gmra.mxu0 %v45
    %v69 = vpop.f32.mrf.mxu0
    %v70 = vadd.f32 %v41, %v69
    %v71 = vpop.f32.mrf.mxu0
    %v72 = vadd.f32 %v41, %v71
    %73 = vmatmul.bf16.gmra.mxu0 %v48
    %v74 = vpop.f32.mrf.mxu0
    %v75 = vadd.f32 %v41, %v74
    %v76 = vpop.f32.mrf.mxu0
    %v77 = vadd.f32 %v41, %v76
    %78 = vmatmul.bf16.gmra.mxu0 %v51
    %v79 = vpop.f32.mrf.mxu0
    %v80 = vadd.f32 %v41, %v79
    %v81 = vpop.f32.mrf.mxu0
    %82 = vdwg.mxu0
    %vm83 = vcmask 392192
    %84 = vst.msk [vmem:[%s3] sm:$0xff] %vm83, %v70
    %85 = vst.msk [vmem:[%s3 + $0x8] sm:$0xff] %vm83, %v72
    %86 = vst.msk [vmem:[%s3 + $0x10] sm:$0xff] %vm83, %v75
    %87 = vst.msk [vmem:[%s3 + $0x18] sm:$0xff] %vm83, %v77
    %vm88 = vcmask 386048
    %89 = vst.msk [vmem:[%s3 + $0x20] sm:$0x3] %vm88, %v80
    // Predicated region
    $region18: #{_lambda_.9} parent=1 // pred_check
      _
    $region19: #{_lambda_.9} parent=1 // pred_check_branch
      %91 = sbr.rel (0) target = $region21
    $region20: #{_lambda_.9} parent=1 // pred_region
      _
    $region21: #{_lambda_.9} parent=1 // pred_fallthru
      _
    // Predicated region
    $region22: #{_lambda_.9} parent=1 // pred_check
      _
    $region23: #{_lambda_.9} parent=1 // pred_check_branch
      %93 = sbr.rel (0) target = $region25
    $region24: #{_lambda_.9} parent=1 // pred_region
      _
    $region25: #{_lambda_.9} parent=1 // pred_fallthru
      _
    %94 = vsyncpa [#allocation3], 1

// kernel: _lambda_.10
$region0: #{_lambda_.10}
  #allocation0 [shape = 'u32[]', space=smem, size = 0x4, offset = 0x4, fixed_abs, tag = 'smem constant byte address 0x4 - core index']
  #allocation1 [shape = 'u32[72,128]{1,0:T(1,128)}', space=vmem, size = 0x9000, scoped, tag = 'internal scratch']
  %s0 = inlined_call_operand.vmem [shape: f32[578,24], index: 0, kind: input, shape index: {}]
  %s1 = inlined_call_operand.vmem [shape: f32[24,192], index: 1, kind: input, shape index: {}]
  %s2 = inlined_call_operand.vmem [shape: f32[1,192], index: 2, kind: input, shape index: {}]
  %s3 = inlined_call_operand.vmem [shape: f32[578,192], index: 3, kind: output, shape index: {}]
  %s4 = sld [smem:[#allocation0]]
  $region71: #{_lambda_.10} parent=0
    _
  %s6 = ssub.s32 1, %s4
  %s7 = scalar_select 0, %s6, %s4
  $region1: #{_lambda_.10} parent=0
    #allocation2 [shape = 'u8[606208]{0}', space=vmem, size = 0x94000, scoped, tag = 'output window, operand 0']
    loop: start=0, step=1, limit=4
    $region2: #{_lambda_.10} parent=1 // loop_pre_header
      _
    $region3: #{_lambda_.10} parent=1 // loop_header
      %s9 = sphi 0, %s13
      %p10 = scmp.ge.s32.totalorder %s9, 4
      %s19 = sphi 0, %s21
      %s22 = sphi 0, %s19
      %s23 = sphi 0, %s22
      %s39 = sphi 0, %s23
      %s43 = sphi 0, %s43
      %s45 = sphi 0, %s43
      %s46 = sphi 0, %s45
      %s60 = sphi 0, %s46
      %s64 = sphi 0, %s64
      %s66 = sphi 0, %s64
      %s67 = sphi 0, %s66
      %s81 = sphi 0, %s67
      %s87 = sphi 0, %s89
      %s90 = sphi 0, %s87
      %s91 = sphi 0, %s90
      %s107 = sphi 0, %s91
    $region4: #{_lambda_.10} parent=1 // loop_header_branch
      %12 = sbr.rel (%p10) target = $region8
    $region5: #{_lambda_.10} parent=1 // loop_body
      %s14 = ssub.s32 %s9, 1
      %s15 = ssub.s32 %s9, 2
      %s16 = sadd.s32 %s9, 1
      %s17 = ssub.s32 %s9, %s16
      %p18 = scmp.eq.s32.totalorder %s17, 0
      %s20 = sadd.s32 %s19, 1
      %s21 = scalar_select %p18, %s19, %s20
      %p24 = pneg %p18
      %p25 = scmp.eq.s32.totalorder %s9, 1
      %p26 = por %p24, %p25
      %p27 = scmp.ne.s32.totalorder %s19, %s22
      %p28 = scmp.eq.s32.totalorder %s9, 0
      %p29 = por %p27, %p28
      %p30 = scmp.ne.s32.totalorder %s19, %s22
      %p31 = scmp.eq.s32.totalorder %s14, 1
      %p32 = por %p30, %p31
      %p33 = scmp.ne.s32.totalorder %s22, %s23
      %p34 = scmp.eq.s32.totalorder %s14, 0
      %p35 = por %p33, %p34
      %p36 = scmp.ne.s32.totalorder %s22, %s23
      %p37 = scmp.eq.s32.totalorder %s15, 1
      %p38 = por %p36, %p37
      %p40 = scmp.ne.s32.totalorder %s23, %s39
      %p41 = scmp.eq.s32.totalorder %s15, 0
      %p42 = por %p40, %p41
      %s44 = sadd.s32 %s43, 1
      %p47 = scmp.eq.s32.totalorder %s9, 1
      %p48 = scmp.ne.s32.totalorder %s43, %s45
      %p49 = scmp.eq.s32.totalorder %s9, 0
      %p50 = por %p48, %p49
      %p51 = scmp.ne.s32.totalorder %s43, %s45
      %p52 = scmp.eq.s32.totalorder %s14, 1
      %p53 = por %p51, %p52
      %p54 = scmp.ne.s32.totalorder %s45, %s46
      %p55 = scmp.eq.s32.totalorder %s14, 0
      %p56 = por %p54, %p55
      %p57 = scmp.ne.s32.totalorder %s45, %s46
      %p58 = scmp.eq.s32.totalorder %s15, 1
      %p59 = por %p57, %p58
      %p61 = scmp.ne.s32.totalorder %s46, %s60
      %p62 = scmp.eq.s32.totalorder %s15, 0
      %p63 = por %p61, %p62
      %s65 = sadd.s32 %s64, 1
      %p68 = scmp.eq.s32.totalorder %s9, 1
      %p69 = scmp.ne.s32.totalorder %s64, %s66
      %p70 = scmp.eq.s32.totalorder %s9, 0
      %p71 = por %p69, %p70
      %p72 = scmp.ne.s32.totalorder %s64, %s66
      %p73 = scmp.eq.s32.totalorder %s14, 1
      %p74 = por %p72, %p73
      %p75 = scmp.ne.s32.totalorder %s66, %s67
      %p76 = scmp.eq.s32.totalorder %s14, 0
      %p77 = por %p75, %p76
      %p78 = scmp.ne.s32.totalorder %s66, %s67
      %p79 = scmp.eq.s32.totalorder %s15, 1
      %p80 = por %p78, %p79
      %p82 = scmp.ne.s32.totalorder %s67, %s81
      %p83 = scmp.eq.s32.totalorder %s15, 0
      %p84 = por %p82, %p83
      %s85 = ssub.s32 %s9, %s16
      %p86 = scmp.eq.s32.totalorder %s85, 0
      %s88 = sadd.s32 %s87, 1
      %s89 = scalar_select %p86, %s87, %s88
      %p92 = pneg %p86
      %p93 = scmp.eq.s32.totalorder %s9, 1
      %p94 = por %p92, %p93
      %p95 = scmp.ne.s32.totalorder %s87, %s90
      %p96 = scmp.eq.s32.totalorder %s9, 0
      %p97 = por %p95, %p96
      %p98 = scmp.ne.s32.totalorder %s87, %s90
      %p99 = scmp.eq.s32.totalorder %s14, 1
      %p100 = por %p98, %p99
      %p101 = scmp.ne.s32.totalorder %s90, %s91
      %p102 = scmp.eq.s32.totalorder %s14, 0
      %p103 = por %p101, %p102
      %p104 = scmp.ne.s32.totalorder %s90, %s91
      %p105 = scmp.eq.s32.totalorder %s15, 1
      %p106 = por %p104, %p105
      %p108 = scmp.ne.s32.totalorder %s91, %s107
      %p109 = scmp.eq.s32.totalorder %s15, 0
      %p110 = por %p108, %p109
      %p111 = scmp.le.s32.totalorder 1, %s9
      %p112 = scmp.lt.s32.totalorder %s9, 3
      %p113 = pnand %p111, %p112
      %p114 = pneg %p113
      // Predicated region
      $region9: #{_lambda_.10} parent=5 // pred_check
        _
      $region10: #{_lambda_.10} parent=5 // pred_check_branch
        %116 = sbr.rel (%p113) target = $region12
      $region11: #{_lambda_.10} parent=5 // pred_region
        %s117 = ssub.s32 %s9, 1
        // Predicated region
        $region13: #{_lambda_.10} parent=11 // pred_check
          %p118 = pneg %p56
        $region14: #{_lambda_.10} parent=11 // pred_check_branch
          %120 = sbr.rel (%p118) target = $region16
        $region15: #{_lambda_.10} parent=11 // pred_region
          _
        $region16: #{_lambda_.10} parent=11 // pred_fallthru
          _
        // Predicated region
        $region17: #{_lambda_.10} parent=11 // pred_check
          %p121 = pneg %p77
        $region18: #{_lambda_.10} parent=11 // pred_check_branch
          %123 = sbr.rel (%p121) target = $region20
        $region19: #{_lambda_.10} parent=11 // pred_region
          _
        $region20: #{_lambda_.10} parent=11 // pred_fallthru
          _
      $region12: #{_lambda_.10} parent=5 // pred_fallthru
        _
      %p124 = scmp.lt.s32.totalorder %s9, 2
      // Predicated region
      $region21: #{_lambda_.10} parent=5 // pred_check
        %p125 = pneg %p124
      $region22: #{_lambda_.10} parent=5 // pred_check_branch
        %127 = sbr.rel (%p125) target = $region24
      $region23: #{_lambda_.10} parent=5 // pred_region
        // Predicated region
        $region25: #{_lambda_.10} parent=23 // pred_check
          %p128 = pneg %p29
        $region26: #{_lambda_.10} parent=23 // pred_check_branch
          %130 = sbr.rel (%p128) target = $region28
        $region27: #{_lambda_.10} parent=23 // pred_region
          %s131 = smul.u32 37, %s9
          %s132 = ssub.s32 73, %s131
          %p133 = scmp.lt.s32.totalorder %s132, 37
          %s134 = scalar_select %p133, %s132, 37
          %s135 = smul.u32 8, %s134
          %p136 = scmp.lt.s32.totalorder %s131, 72
          %s137 = scalar_select %p136, %s131, 72
          %s138 = smul.addr %s137, 8
          %s139 = scalar_lea.vmem %s0, %s138
          %s140 = smul.u32 37, %s9
          %s141 = ssub.s32 73, %s140
          %p142 = scmp.lt.s32.totalorder %s141, 37
          %s143 = scalar_select %p142, %s141, 37
          %s144 = smul.u32 8, %s143
        $region28: #{_lambda_.10} parent=23 // pred_fallthru
          _
      $region24: #{_lambda_.10} parent=5 // pred_fallthru
        _
      %p145 = scmp.le.s32.totalorder 1, %s9
      %p146 = scmp.lt.s32.totalorder %s9, 3
      %p147 = pnand %p145, %p146
      %p148 = pneg %p147
      // Predicated region
      $region29: #{_lambda_.10} parent=5 // pred_check
        _
      $region30: #{_lambda_.10} parent=5 // pred_check_branch
        %150 = sbr.rel (%p147) target = $region32
      $region31: #{_lambda_.10} parent=5 // pred_region
        %s151 = ssub.s32 %s9, 1
        %s152 = smul.u32 37, %s14
        %s153 = ssub.s32 73, %s152
        %p154 = scmp.lt.s32.totalorder %s153, 37
        %s155 = scalar_select %p154, %s153, 37
        %s156 = smul.u32 8, %s155
        %p157 = scmp.lt.s32.totalorder %s152, 72
        %s158 = scalar_select %p157, %s152, 72
        %s159 = smul.addr %s158, 8
        %s160 = scalar_lea.vmem %s0, %s159
        %p161 = pneg %p35
        %p162 = pneg %p32
        %p163 = pneg %p56
        %p164 = pneg %p53
        %p165 = pneg %p77
        %p166 = pneg %p74
        %p167 = pneg %p103
        %p168 = pneg %p100
        %s169 = sand.u32 %s90, 1
        %s170 = sand.u32 %s90, 1
        %s171 = smul.addr %s170, 592
        %s172 = scalar_lea.vmem [#allocation2], %s171
        %s173 = smul.u32 37, %s14
        %s174 = ssub.s32 73, %s173
        %p175 = scmp.lt.s32.totalorder %s174, 37
        %s176 = scalar_select %p175, %s174, 37
        %s177 = smul.u32 8, %s176
        %p178 = scmp.lt.s32.totalorder %s173, 72
        %s179 = scalar_select %p178, %s173, 72
        %s180 = smul.addr %s179, 8
        %s181 = scalar_lea.vmem %s0, %s180
        %s182 = smul.u32 37, %s14
        %s183 = ssub.s32 73, %s182
        %p184 = scmp.lt.s32.totalorder %s183, 37
        %s185 = scalar_select %p184, %s183, 37
        %s186 = smul.u32 8, %s185
        %s187 = smul.u32 37, %s14
        %s188 = ssub.s32 73, %s187
        %p189 = scmp.lt.s32.totalorder %s188, 37
        %s190 = scalar_select %p189, %s188, 37
        %s191 = smul.u32 8, %s190
        %s192 = smul.u32 %s191, 2
        %v194 = vld [vmem:[%s181] sm:$0xff]
        %v195 = vld [vmem:[%s181 + $0x8] sm:$0xff]
        %v196 = vld [vmem:[%s181 + $0x10] sm:$0xff]
        %v197 = vld [vmem:[%s181 + $0x18] sm:$0xff]
        %v198 = vld [vmem:[%s181 + $0x20] sm:$0xff]
        %v199 = vld [vmem:[%s181 + $0x28] sm:$0xff]
        %v200 = vld [vmem:[%s181 + $0x30] sm:$0xff]
        %v201 = vld [vmem:[%s181 + $0x38] sm:$0xff]
        %v202 = vld [vmem:[%s181 + $0x40] sm:$0xff]
        %v203 = vld [vmem:[%s181 + $0x48] sm:$0xff]
        %v204 = vld [vmem:[%s181 + $0x50] sm:$0xff]
        %v205 = vld [vmem:[%s181 + $0x58] sm:$0xff]
        %v206 = vld [vmem:[%s181 + $0x60] sm:$0xff]
        %v207 = vld [vmem:[%s181 + $0x68] sm:$0xff]
        %v208 = vld [vmem:[%s181 + $0x70] sm:$0xff]
        %v209 = vld [vmem:[%s181 + $0x78] sm:$0xff]
        %v210 = vld [vmem:[%s181 + $0x80] sm:$0xff]
        %v211 = vld [vmem:[%s181 + $0x88] sm:$0xff]
        %v212 = vld [vmem:[%s181 + $0x90] sm:$0xff]
        %v213 = vld [vmem:[%s181 + $0x98] sm:$0xff]
        %v214 = vld [vmem:[%s181 + $0xa0] sm:$0xff]
        %v215 = vld [vmem:[%s181 + $0xa8] sm:$0xff]
        %v216 = vld [vmem:[%s181 + $0xb0] sm:$0xff]
        %v217 = vld [vmem:[%s181 + $0xb8] sm:$0xff]
        %v218 = vld [vmem:[%s181 + $0xc0] sm:$0xff]
        %v219 = vld [vmem:[%s181 + $0xc8] sm:$0xff]
        %v220 = vld [vmem:[%s181 + $0xd0] sm:$0xff]
        %v221 = vld [vmem:[%s181 + $0xd8] sm:$0xff]
        %v222 = vld [vmem:[%s181 + $0xe0] sm:$0xff]
        %v223 = vld [vmem:[%s181 + $0xe8] sm:$0xff]
        %v224 = vld [vmem:[%s181 + $0xf0] sm:$0xff]
        %v225 = vld [vmem:[%s181 + $0xf8] sm:$0xff]
        %v226 = vld [vmem:[%s181 + $0x100] sm:$0xff]
        %v227 = vld [vmem:[%s181 + $0x108] sm:$0xff]
        %v228 = vld [vmem:[%s181 + $0x110] sm:$0xff]
        %v229 = vld [vmem:[%s181 + $0x118] sm:$0xff]
        %v230 = vld [vmem:[%s181 + $0x120] sm:$0xff]
        %v231 = vpack.c.bf16 %v195, %v194
        %v232 = vpack.c.bf16 %v197, %v196
        %v233 = vpack.c.bf16 %v199, %v198
        %v234 = vpack.c.bf16 %v201, %v200
        %v235 = vpack.c.bf16 %v203, %v202
        %v236 = vpack.c.bf16 %v205, %v204
        %v237 = vpack.c.bf16 %v207, %v206
        %v238 = vpack.c.bf16 %v209, %v208
        %v239 = vpack.c.bf16 %v211, %v210
        %v240 = vpack.c.bf16 %v213, %v212
        %v241 = vpack.c.bf16 %v215, %v214
        %v242 = vpack.c.bf16 %v217, %v216
        %v243 = vpack.c.bf16 %v219, %v218
        %v244 = vpack.c.bf16 %v221, %v220
        %v245 = vpack.c.bf16 %v223, %v222
        %v246 = vpack.c.bf16 %v225, %v224
        %v247 = vpack.c.bf16 %v227, %v226
        %v248 = vpack.c.bf16 %v229, %v228
        %v249 = vpack.c.bf16 %v230, %v230
        %v250 = vld [vmem:[%s1] sm:$0xff]
        %v251 = vld [vmem:[%s1 + $0x8] sm:$0xff]
        %v252 = vld [vmem:[%s1 + $0x10] sm:$0xff]
        %v253 = vld [vmem:[%s1 + $0x18] sm:$0xff]
        %v254 = vld [vmem:[%s1 + $0x20] sm:$0xff]
        %v255 = vld [vmem:[%s1 + $0x28] sm:$0xff]
        %v256 = vpack.c.bf16 %v252, %v250
        %v257 = vpack.c.bf16 %v253, %v251
        %v258 = vpack.c.bf16 %v254, %v254
        %v259 = vpack.c.bf16 %v255, %v255
        %v260 = vld [vmem:[%s2] sm:$0x3]
        %v262 = vperm.slane %v260, 0
        %v263 = vperm.slane %v260, 1
        %vm266 = vcmask 195584
        %v268 = vsel %vm266, %v231, 0
        %v271 = vsel %vm266, %v232, 0
        %v274 = vsel %vm266, %v233, 0
        %v277 = vsel %vm266, %v234, 0
        %v280 = vsel %vm266, %v235, 0
        %v283 = vsel %vm266, %v236, 0
        %v286 = vsel %vm266, %v237, 0
        %v289 = vsel %vm266, %v238, 0
        %v292 = vsel %vm266, %v239, 0
        %v295 = vsel %vm266, %v240, 0
        %v298 = vsel %vm266, %v241, 0
        %v301 = vsel %vm266, %v242, 0
        %v304 = vsel %vm266, %v243, 0
        %v307 = vsel %vm266, %v244, 0
        %v310 = vsel %vm266, %v245, 0
        %v313 = vsel %vm266, %v246, 0
        %v316 = vsel %vm266, %v247, 0
        %v319 = vsel %vm266, %v248, 0
        %v322 = vsel %vm266, %v249, 0
        %vm324 = vcmask 1043456
        %v326 = vsel %vm324, %v258, 0
        %v329 = vsel %vm324, %v259, 0
        %331 = vmatpush.bf16.msra.mxu0 0
        %332 = vmatpush.bf16.msra.mxu0 0
        %333 = vmatpush.bf16.msra.mxu0 0
        %334 = vmatpush.bf16.msra.mxu0 0
        %335 = vmatpush.bf16.msra.mxu0 0
        %336 = vmatpush.bf16.msra.mxu0 0
        %337 = vmatpush.bf16.msra.mxu0 %v326
        %338 = vmatpush.bf16.msra.mxu0 %v256
        %339 = vmatmul.bf16.gmra.mxu0 %v268
        %v340 = vpop.f32.mrf.mxu0
        %v341 = vadd.f32 %v262, %v340
        %v342 = vpop.f32.mrf.mxu0
        %v343 = vadd.f32 %v262, %v342
        %344 = vmatmul.bf16.gmra.mxu0 %v271
        %v345 = vpop.f32.mrf.mxu0
        %v346 = vadd.f32 %v262, %v345
        %v347 = vpop.f32.mrf.mxu0
        %v348 = vadd.f32 %v262, %v347
        %349 = vmatmul.bf16.gmra.mxu0 %v274
        %v350 = vpop.f32.mrf.mxu0
        %v351 = vadd.f32 %v262, %v350
        %v352 = vpop.f32.mrf.mxu0
        %v353 = vadd.f32 %v262, %v352
        %354 = vmatmul.bf16.gmra.mxu0 %v277
        %v355 = vpop.f32.mrf.mxu0
        %v356 = vadd.f32 %v262, %v355
        %v357 = vpop.f32.mrf.mxu0
        %v358 = vadd.f32 %v262, %v357
        %359 = vmatmul.bf16.gmra.mxu0 %v280
        %v360 = vpop.f32.mrf.mxu0
        %v361 = vadd.f32 %v262, %v360
        %v362 = vpop.f32.mrf.mxu0
        %v363 = vadd.f32 %v262, %v362
        %364 = vmatmul.bf16.gmra.mxu0 %v283
        %v365 = vpop.f32.mrf.mxu0
        %v366 = vadd.f32 %v262, %v365
        %v367 = vpop.f32.mrf.mxu0
        %v368 = vadd.f32 %v262, %v367
        %369 = vmatmul.bf16.gmra.mxu0 %v286
        %v370 = vpop.f32.mrf.mxu0
        %v371 = vadd.f32 %v262, %v370
        %v372 = vpop.f32.mrf.mxu0
        %v373 = vadd.f32 %v262, %v372
        %374 = vmatmul.bf16.gmra.mxu0 %v289
        %v375 = vpop.f32.mrf.mxu0
        %v376 = vadd.f32 %v262, %v375
        %v377 = vpop.f32.mrf.mxu0
        %v378 = vadd.f32 %v262, %v377
        %379 = vmatmul.bf16.gmra.mxu0 %v292
        %v380 = vpop.f32.mrf.mxu0
        %v381 = vadd.f32 %v262, %v380
        %v382 = vpop.f32.mrf.mxu0
        %v383 = vadd.f32 %v262, %v382
        %384 = vmatmul.bf16.gmra.mxu0 %v295
        %v385 = vpop.f32.mrf.mxu0
        %v386 = vadd.f32 %v262, %v385
        %v387 = vpop.f32.mrf.mxu0
        %v388 = vadd.f32 %v262, %v387
        %389 = vmatmul.bf16.gmra.mxu0 %v298
        %v390 = vpop.f32.mrf.mxu0
        %v391 = vadd.f32 %v262, %v390
        %v392 = vpop.f32.mrf.mxu0
        %v393 = vadd.f32 %v262, %v392
        %394 = vmatmul.bf16.gmra.mxu0 %v301
        %v395 = vpop.f32.mrf.mxu0
        %v396 = vadd.f32 %v262, %v395
        %v397 = vpop.f32.mrf.mxu0
        %v398 = vadd.f32 %v262, %v397
        %399 = vmatmul.bf16.gmra.mxu0 %v304
        %v400 = vpop.f32.mrf.mxu0
        %v401 = vadd.f32 %v262, %v400
        %v402 = vpop.f32.mrf.mxu0
        %v403 = vadd.f32 %v262, %v402
        %404 = vmatmul.bf16.gmra.mxu0 %v307
        %v405 = vpop.f32.mrf.mxu0
        %v406 = vadd.f32 %v262, %v405
        %v407 = vpop.f32.mrf.mxu0
        %v408 = vadd.f32 %v262, %v407
        %409 = vmatmul.bf16.gmra.mxu0 %v310
        %v410 = vpop.f32.mrf.mxu0
        %v411 = vadd.f32 %v262, %v410
        %v412 = vpop.f32.mrf.mxu0
        %v413 = vadd.f32 %v262, %v412
        %414 = vmatmul.bf16.gmra.mxu0 %v313
        %v415 = vpop.f32.mrf.mxu0
        %v416 = vadd.f32 %v262, %v415
        %v417 = vpop.f32.mrf.mxu0
        %v418 = vadd.f32 %v262, %v417
        %419 = vmatmul.bf16.gmra.mxu0 %v316
        %v420 = vpop.f32.mrf.mxu0
        %v421 = vadd.f32 %v262, %v420
        %v422 = vpop.f32.mrf.mxu0
        %v423 = vadd.f32 %v262, %v422
        %424 = vmatmul.bf16.gmra.mxu0 %v319
        %v425 = vpop.f32.mrf.mxu0
        %v426 = vadd.f32 %v262, %v425
        %v427 = vpop.f32.mrf.mxu0
        %v428 = vadd.f32 %v262, %v427
        %429 = vmatmul.bf16.gmra.mxu0 %v322
        %v430 = vpop.f32.mrf.mxu0
        %v431 = vadd.f32 %v262, %v430
        %v432 = vpop.f32.mrf.mxu0
        %433 = vdwg.mxu0
        %434 = vmatpush.bf16.msra.mxu0 0
        %435 = vmatpush.bf16.msra.mxu0 0
        %436 = vmatpush.bf16.msra.mxu0 0
        %437 = vmatpush.bf16.msra.mxu0 0
        %438 = vmatpush.bf16.msra.mxu0 0
        %439 = vmatpush.bf16.msra.mxu0 0
        %440 = vmatpush.bf16.msra.mxu0 %v329
        %441 = vmatpush.bf16.msra.mxu0 %v257
        %442 = vmatmul.bf16.gmra.mxu0 %v268
        %v443 = vpop.f32.mrf.mxu0
        %v444 = vadd.f32 %v263, %v443
        %v445 = vpop.f32.mrf.mxu0
        %v446 = vadd.f32 %v263, %v445
        %447 = vmatmul.bf16.gmra.mxu0 %v271
        %v448 = vpop.f32.mrf.mxu0
        %v449 = vadd.f32 %v263, %v448
        %v450 = vpop.f32.mrf.mxu0
        %v451 = vadd.f32 %v263, %v450
        %452 = vmatmul.bf16.gmra.mxu0 %v274
        %v453 = vpop.f32.mrf.mxu0
        %v454 = vadd.f32 %v263, %v453
        %v455 = vpop.f32.mrf.mxu0
        %v456 = vadd.f32 %v263, %v455
        %457 = vmatmul.bf16.gmra.mxu0 %v277
        %v458 = vpop.f32.mrf.mxu0
        %v459 = vadd.f32 %v263, %v458
        %v460 = vpop.f32.mrf.mxu0
        %v461 = vadd.f32 %v263, %v460
        %462 = vmatmul.bf16.gmra.mxu0 %v280
        %v463 = vpop.f32.mrf.mxu0
        %v464 = vadd.f32 %v263, %v463
        %v465 = vpop.f32.mrf.mxu0
        %v466 = vadd.f32 %v263, %v465
        %467 = vmatmul.bf16.gmra.mxu0 %v283
        %v468 = vpop.f32.mrf.mxu0
        %v469 = vadd.f32 %v263, %v468
        %v470 = vpop.f32.mrf.mxu0
        %v471 = vadd.f32 %v263, %v470
        %472 = vmatmul.bf16.gmra.mxu0 %v286
        %v473 = vpop.f32.mrf.mxu0
        %v474 = vadd.f32 %v263, %v473
        %v475 = vpop.f32.mrf.mxu0
        %v476 = vadd.f32 %v263, %v475
        %477 = vmatmul.bf16.gmra.mxu0 %v289
        %v478 = vpop.f32.mrf.mxu0
        %v479 = vadd.f32 %v263, %v478
        %v480 = vpop.f32.mrf.mxu0
        %v481 = vadd.f32 %v263, %v480
        %482 = vmatmul.bf16.gmra.mxu0 %v292
        %v483 = vpop.f32.mrf.mxu0
        %v484 = vadd.f32 %v263, %v483
        %v485 = vpop.f32.mrf.mxu0
        %v486 = vadd.f32 %v263, %v485
        %487 = vmatmul.bf16.gmra.mxu0 %v295
        %v488 = vpop.f32.mrf.mxu0
        %v489 = vadd.f32 %v263, %v488
        %v490 = vpop.f32.mrf.mxu0
        %v491 = vadd.f32 %v263, %v490
        %492 = vmatmul.bf16.gmra.mxu0 %v298
        %v493 = vpop.f32.mrf.mxu0
        %v494 = vadd.f32 %v263, %v493
        %v495 = vpop.f32.mrf.mxu0
        %v496 = vadd.f32 %v263, %v495
        %497 = vmatmul.bf16.gmra.mxu0 %v301
        %v498 = vpop.f32.mrf.mxu0
        %v499 = vadd.f32 %v263, %v498
        %v500 = vpop.f32.mrf.mxu0
        %v501 = vadd.f32 %v263, %v500
        %502 = vmatmul.bf16.gmra.mxu0 %v304
        %v503 = vpop.f32.mrf.mxu0
        %v504 = vadd.f32 %v263, %v503
        %v505 = vpop.f32.mrf.mxu0
        %v506 = vadd.f32 %v263, %v505
        %507 = vmatmul.bf16.gmra.mxu0 %v307
        %v508 = vpop.f32.mrf.mxu0
        %v509 = vadd.f32 %v263, %v508
        %v510 = vpop.f32.mrf.mxu0
        %v511 = vadd.f32 %v263, %v510
        %512 = vmatmul.bf16.gmra.mxu0 %v310
        %v513 = vpop.f32.mrf.mxu0
        %v514 = vadd.f32 %v263, %v513
        %v515 = vpop.f32.mrf.mxu0
        %v516 = vadd.f32 %v263, %v515
        %517 = vmatmul.bf16.gmra.mxu0 %v313
        %v518 = vpop.f32.mrf.mxu0
        %v519 = vadd.f32 %v263, %v518
        %v520 = vpop.f32.mrf.mxu0
        %v521 = vadd.f32 %v263, %v520
        %522 = vmatmul.bf16.gmra.mxu0 %v316
        %v523 = vpop.f32.mrf.mxu0
        %v524 = vadd.f32 %v263, %v523
        %v525 = vpop.f32.mrf.mxu0
        %v526 = vadd.f32 %v263, %v525
        %527 = vmatmul.bf16.gmra.mxu0 %v319
        %v528 = vpop.f32.mrf.mxu0
        %v529 = vadd.f32 %v263, %v528
        %v530 = vpop.f32.mrf.mxu0
        %v531 = vadd.f32 %v263, %v530
        %532 = vmatmul.bf16.gmra.mxu0 %v322
        %v533 = vpop.f32.mrf.mxu0
        %v534 = vadd.f32 %v263, %v533
        %v535 = vpop.f32.mrf.mxu0
        %536 = vdwg.mxu0
        %537 = vst [vmem:[%s172] sm:$0xff] %v341
        %vm538 = vcmask 523264
        %539 = vst.msk [vmem:[%s172 + $0x8] sm:$0xff] %vm538, %v444
        %540 = vst [vmem:[%s172 + $0x10] sm:$0xff] %v343
        %541 = vst.msk [vmem:[%s172 + $0x18] sm:$0xff] %vm538, %v446
        %542 = vst [vmem:[%s172 + $0x20] sm:$0xff] %v346
        %543 = vst.msk [vmem:[%s172 + $0x28] sm:$0xff] %vm538, %v449
        %544 = vst [vmem:[%s172 + $0x30] sm:$0xff] %v348
        %545 = vst.msk [vmem:[%s172 + $0x38] sm:$0xff] %vm538, %v451
        %546 = vst [vmem:[%s172 + $0x40] sm:$0xff] %v351
        %547 = vst.msk [vmem:[%s172 + $0x48] sm:$0xff] %vm538, %v454
        %548 = vst [vmem:[%s172 + $0x50] sm:$0xff] %v353
        %549 = vst.msk [vmem:[%s172 + $0x58] sm:$0xff] %vm538, %v456
        %550 = vst [vmem:[%s172 + $0x60] sm:$0xff] %v356
        %551 = vst.msk [vmem:[%s172 + $0x68] sm:$0xff] %vm538, %v459
        %552 = vst [vmem:[%s172 + $0x70] sm:$0xff] %v358
        %553 = vst.msk [vmem:[%s172 + $0x78] sm:$0xff] %vm538, %v461
        %554 = vst [vmem:[%s172 + $0x80] sm:$0xff] %v361
        %555 = vst.msk [vmem:[%s172 + $0x88] sm:$0xff] %vm538, %v464
        %556 = vst [vmem:[%s172 + $0x90] sm:$0xff] %v363
        %557 = vst.msk [vmem:[%s172 + $0x98] sm:$0xff] %vm538, %v466
        %558 = vst [vmem:[%s172 + $0xa0] sm:$0xff] %v366
        %559 = vst.msk [vmem:[%s172 + $0xa8] sm:$0xff] %vm538, %v469
        %560 = vst [vmem:[%s172 + $0xb0] sm:$0xff] %v368
        %561 = vst.msk [vmem:[%s172 + $0xb8] sm:$0xff] %vm538, %v471
        %562 = vst [vmem:[%s172 + $0xc0] sm:$0xff] %v371
        %563 = vst.msk [vmem:[%s172 + $0xc8] sm:$0xff] %vm538, %v474
        %564 = vst [vmem:[%s172 + $0xd0] sm:$0xff] %v373
        %565 = vst.msk [vmem:[%s172 + $0xd8] sm:$0xff] %vm538, %v476
        %566 = vst [vmem:[%s172 + $0xe0] sm:$0xff] %v376
        %567 = vst.msk [vmem:[%s172 + $0xe8] sm:$0xff] %vm538, %v479
        %568 = vst [vmem:[%s172 + $0xf0] sm:$0xff] %v378
        %569 = vst.msk [vmem:[%s172 + $0xf8] sm:$0xff] %vm538, %v481
        %570 = vst [vmem:[%s172 + $0x100] sm:$0xff] %v381
        %571 = vst.msk [vmem:[%s172 + $0x108] sm:$0xff] %vm538, %v484
        %572 = vst [vmem:[%s172 + $0x110] sm:$0xff] %v383
        %573 = vst.msk [vmem:[%s172 + $0x118] sm:$0xff] %vm538, %v486
        %574 = vst [vmem:[%s172 + $0x120] sm:$0xff] %v386
        %575 = vst.msk [vmem:[%s172 + $0x128] sm:$0xff] %vm538, %v489
        %576 = vst [vmem:[%s172 + $0x130] sm:$0xff] %v388
        %577 = vst.msk [vmem:[%s172 + $0x138] sm:$0xff] %vm538, %v491
        %578 = vst [vmem:[%s172 + $0x140] sm:$0xff] %v391
        %579 = vst.msk [vmem:[%s172 + $0x148] sm:$0xff] %vm538, %v494
        %580 = vst [vmem:[%s172 + $0x150] sm:$0xff] %v393
        %581 = vst.msk [vmem:[%s172 + $0x158] sm:$0xff] %vm538, %v496
        %582 = vst [vmem:[%s172 + $0x160] sm:$0xff] %v396
        %583 = vst.msk [vmem:[%s172 + $0x168] sm:$0xff] %vm538, %v499
        %584 = vst [vmem:[%s172 + $0x170] sm:$0xff] %v398
        %585 = vst.msk [vmem:[%s172 + $0x178] sm:$0xff] %vm538, %v501
        %586 = vst [vmem:[%s172 + $0x180] sm:$0xff] %v401
        %587 = vst.msk [vmem:[%s172 + $0x188] sm:$0xff] %vm538, %v504
        %588 = vst [vmem:[%s172 + $0x190] sm:$0xff] %v403
        %589 = vst.msk [vmem:[%s172 + $0x198] sm:$0xff] %vm538, %v506
        %590 = vst [vmem:[%s172 + $0x1a0] sm:$0xff] %v406
        %591 = vst.msk [vmem:[%s172 + $0x1a8] sm:$0xff] %vm538, %v509
        %592 = vst [vmem:[%s172 + $0x1b0] sm:$0xff] %v408
        %593 = vst.msk [vmem:[%s172 + $0x1b8] sm:$0xff] %vm538, %v511
        %594 = vst [vmem:[%s172 + $0x1c0] sm:$0xff] %v411
        %595 = vst.msk [vmem:[%s172 + $0x1c8] sm:$0xff] %vm538, %v514
        %596 = vst [vmem:[%s172 + $0x1d0] sm:$0xff] %v413
        %597 = vst.msk [vmem:[%s172 + $0x1d8] sm:$0xff] %vm538, %v516
        %598 = vst [vmem:[%s172 + $0x1e0] sm:$0xff] %v416
        %599 = vst.msk [vmem:[%s172 + $0x1e8] sm:$0xff] %vm538, %v519
        %600 = vst [vmem:[%s172 + $0x1f0] sm:$0xff] %v418
        %601 = vst.msk [vmem:[%s172 + $0x1f8] sm:$0xff] %vm538, %v521
        %602 = vst [vmem:[%s172 + $0x200] sm:$0xff] %v421
        %603 = vst.msk [vmem:[%s172 + $0x208] sm:$0xff] %vm538, %v524
        %604 = vst [vmem:[%s172 + $0x210] sm:$0xff] %v423
        %605 = vst.msk [vmem:[%s172 + $0x218] sm:$0xff] %vm538, %v526
        %606 = vst [vmem:[%s172 + $0x220] sm:$0xff] %v426
        %607 = vst.msk [vmem:[%s172 + $0x228] sm:$0xff] %vm538, %v529
        %608 = vst [vmem:[%s172 + $0x230] sm:$0xff] %v428
        %609 = vst.msk [vmem:[%s172 + $0x238] sm:$0xff] %vm538, %v531
        %610 = vst [vmem:[%s172 + $0x240] sm:$0xff] %v431
        %611 = vst.msk [vmem:[%s172 + $0x248] sm:$0xff] %vm538, %v534
        %s612 = sand.u32 %s90, 1
        %s613 = sand.u32 %s90, 1
        %s614 = smul.addr %s613, 592
        %s615 = scalar_lea.vmem [#allocation2], %s614
        // Predicated region
        $region33: #{_lambda_.10} parent=31 // pred_check
          %p616 = pneg %p100
        $region34: #{_lambda_.10} parent=31 // pred_check_branch
          %618 = sbr.rel (%p616) target = $region36
        $region35: #{_lambda_.10} parent=31 // pred_region
          %s619 = smul.u32 37, %s14
          %s620 = ssub.s32 73, %s619
          %p621 = scmp.lt.s32.totalorder %s620, 37
          %s622 = scalar_select %p621, %s620, 37
          %s623 = smul.u32 8, %s622
          %s624 = smul.u32 %s623, 2
          %p625 = scmp.ne.s32.totalorder 0, %s624
          %s626 = smul.addr %s619, 2
          %s627 = smul.addr %s626, 8
          %s628 = scalar_lea.vmem %s3, %s627
          // Predicated region
          $region37: #{_lambda_.10} parent=35 // pred_check
            %p629 = pneg %p625
          $region38: #{_lambda_.10} parent=35 // pred_check_branch
            %631 = sbr.rel (%p629) target = $region40
          $region39: #{_lambda_.10} parent=35 // pred_region
            // Predicated region
            $region41: #{_lambda_.10} parent=39 // pred_check
              _
            $region42: #{_lambda_.10} parent=39 // pred_check_branch
              %633 = sbr.rel (0) target = $region44
            $region43: #{_lambda_.10} parent=39 // pred_region
              %s634 = sshrl.u32 %s622, 4
              // While loop
              $region45: #{_lambda_.10} parent=43 // loop_pre_header
                _
              $region46: #{_lambda_.10} parent=43 // loop_header
                %s636 = sphi 0, %s638
                %p637 = scmp.ge.s32.totalorder %s636, %s634
                %s641 = sphi 0, %s710
                %s642 = sphi %s615, %s713
                %s643 = sphi %s628, %s714
              $region47: #{_lambda_.10} parent=43 // loop_header_branch
                %640 = sbr.rel (%p637) target = $region51
              $region48: #{_lambda_.10} parent=43 // loop_body
                %v644 = vld [vmem:[%s642] sm:$0xff]
                %645 = vst [vmem:[%s643] sm:$0xff] %v644
                %v646 = vld [vmem:[%s642 + $0x10] sm:$0xff]
                %647 = vst [vmem:[%s643 + $0x10] sm:$0xff] %v646
                %v648 = vld [vmem:[%s642 + $0x20] sm:$0xff]
                %649 = vst [vmem:[%s643 + $0x20] sm:$0xff] %v648
                %v650 = vld [vmem:[%s642 + $0x30] sm:$0xff]
                %651 = vst [vmem:[%s643 + $0x30] sm:$0xff] %v650
                %v652 = vld [vmem:[%s642 + $0x40] sm:$0xff]
                %653 = vst [vmem:[%s643 + $0x40] sm:$0xff] %v652
                %v654 = vld [vmem:[%s642 + $0x50] sm:$0xff]
                %655 = vst [vmem:[%s643 + $0x50] sm:$0xff] %v654
                %v656 = vld [vmem:[%s642 + $0x60] sm:$0xff]
                %657 = vst [vmem:[%s643 + $0x60] sm:$0xff] %v656
                %v658 = vld [vmem:[%s642 + $0x70] sm:$0xff]
                %659 = vst [vmem:[%s643 + $0x70] sm:$0xff] %v658
                %v660 = vld [vmem:[%s642 + $0x80] sm:$0xff]
                %661 = vst [vmem:[%s643 + $0x80] sm:$0xff] %v660
                %v662 = vld [vmem:[%s642 + $0x90] sm:$0xff]
                %663 = vst [vmem:[%s643 + $0x90] sm:$0xff] %v662
                %v664 = vld [vmem:[%s642 + $0xa0] sm:$0xff]
                %665 = vst [vmem:[%s643 + $0xa0] sm:$0xff] %v664
                %v666 = vld [vmem:[%s642 + $0xb0] sm:$0xff]
                %667 = vst [vmem:[%s643 + $0xb0] sm:$0xff] %v666
                %v668 = vld [vmem:[%s642 + $0xc0] sm:$0xff]
                %669 = vst [vmem:[%s643 + $0xc0] sm:$0xff] %v668
                %v670 = vld [vmem:[%s642 + $0xd0] sm:$0xff]
                %671 = vst [vmem:[%s643 + $0xd0] sm:$0xff] %v670
                %v672 = vld [vmem:[%s642 + $0xe0] sm:$0xff]
                %673 = vst [vmem:[%s643 + $0xe0] sm:$0xff] %v672
                %v674 = vld [vmem:[%s642 + $0xf0] sm:$0xff]
                %675 = vst [vmem:[%s643 + $0xf0] sm:$0xff] %v674
                %v676 = vld [vmem:[%s642 + $0x8] sm:$0xff]
                %677 = vst [vmem:[%s643 + $0x8] sm:$0xff] %v676
                %v678 = vld [vmem:[%s642 + $0x18] sm:$0xff]
                %679 = vst [vmem:[%s643 + $0x18] sm:$0xff] %v678
                %v680 = vld [vmem:[%s642 + $0x28] sm:$0xff]
                %681 = vst [vmem:[%s643 + $0x28] sm:$0xff] %v680
                %v682 = vld [vmem:[%s642 + $0x38] sm:$0xff]
                %683 = vst [vmem:[%s643 + $0x38] sm:$0xff] %v682
                %v684 = vld [vmem:[%s642 + $0x48] sm:$0xff]
                %685 = vst [vmem:[%s643 + $0x48] sm:$0xff] %v684
                %v686 = vld [vmem:[%s642 + $0x58] sm:$0xff]
                %687 = vst [vmem:[%s643 + $0x58] sm:$0xff] %v686
                %v688 = vld [vmem:[%s642 + $0x68] sm:$0xff]
                %689 = vst [vmem:[%s643 + $0x68] sm:$0xff] %v688
                %v690 = vld [vmem:[%s642 + $0x78] sm:$0xff]
                %691 = vst [vmem:[%s643 + $0x78] sm:$0xff] %v690
                %v692 = vld [vmem:[%s642 + $0x88] sm:$0xff]
                %693 = vst [vmem:[%s643 + $0x88] sm:$0xff] %v692
                %v694 = vld [vmem:[%s642 + $0x98] sm:$0xff]
                %695 = vst [vmem:[%s643 + $0x98] sm:$0xff] %v694
                %v696 = vld [vmem:[%s642 + $0xa8] sm:$0xff]
                %697 = vst [vmem:[%s643 + $0xa8] sm:$0xff] %v696
                %v698 = vld [vmem:[%s642 + $0xb8] sm:$0xff]
                %699 = vst [vmem:[%s643 + $0xb8] sm:$0xff] %v698
                %v700 = vld [vmem:[%s642 + $0xc8] sm:$0xff]
                %701 = vst [vmem:[%s643 + $0xc8] sm:$0xff] %v700
                %v702 = vld [vmem:[%s642 + $0xd8] sm:$0xff]
                %703 = vst [vmem:[%s643 + $0xd8] sm:$0xff] %v702
                %v704 = vld [vmem:[%s642 + $0xe8] sm:$0xff]
                %705 = vst [vmem:[%s643 + $0xe8] sm:$0xff] %v704
                %v706 = vld [vmem:[%s642 + $0xf8] sm:$0xff]
                %707 = vst [vmem:[%s643 + $0xf8] sm:$0xff] %v706
                %s708 = sadd.s32 1, %s641
                %p709 = scmp.ge.s32.totalorder %s708, %s634
                %s710 = scalar_select %p709, 0, %s708
                %s711 = smul.u32 %s710, 256
                %s712 = smul.u32 %s710, 256
                %s713 = scalar_lea.vmem %s615, %s711 [#allocation2]
                %s714 = scalar_lea.vmem %s628, %s712
              $region49: #{_lambda_.10} parent=43 // loop_footer
                %s638 = sadd.s32 %s636, 1
              $region50: #{_lambda_.10} parent=43 // loop_footer_branch
                %635 = sbr.rel target = $region46
              $region51: #{_lambda_.10} parent=43 // loop_exit
                _
              %s715 = sshrl.u32 %s622, 4
              %s716 = sand.u32 %s622, 15
              %s717 = smul.u32 %s715, 16
              %s718 = smul.u32 16, %s717
              %s719 = scalar_lea.vmem %s615, %s718 [#allocation2]
              %s720 = smul.u32 16, %s717
              %s721 = scalar_lea.vmem %s628, %s720
              // While loop
              $region52: #{_lambda_.10} parent=43 // loop_pre_header
                _
              $region53: #{_lambda_.10} parent=43 // loop_header
                %s723 = sphi 0, %s725
                %p724 = scmp.ge.s32.totalorder %s723, %s716
                %s728 = sphi 0, %s737
                %s729 = sphi %s719, %s740
                %s730 = sphi %s721, %s741
              $region54: #{_lambda_.10} parent=43 // loop_header_branch
                %727 = sbr.rel (%p724) target = $region58
              $region55: #{_lambda_.10} parent=43 // loop_body
                %v731 = vld [vmem:[%s729] sm:$0xff]
                %732 = vst [vmem:[%s730] sm:$0xff] %v731
                %v733 = vld [vmem:[%s729 + $0x8] sm:$0xff]
                %734 = vst [vmem:[%s730 + $0x8] sm:$0xff] %v733
                %s735 = sadd.s32 1, %s728
                %p736 = scmp.ge.s32.totalorder %s735, %s716
                %s737 = scalar_select %p736, 0, %s735
                %s738 = smul.u32 %s737, 16
                %s739 = smul.u32 %s737, 16
                %s740 = scalar_lea.vmem %s719, %s738 [#allocation2]
                %s741 = scalar_lea.vmem %s721, %s739
              $region56: #{_lambda_.10} parent=43 // loop_footer
                %s725 = sadd.s32 %s723, 1
              $region57: #{_lambda_.10} parent=43 // loop_footer_branch
                %722 = sbr.rel target = $region53
              $region58: #{_lambda_.10} parent=43 // loop_exit
                _
            $region44: #{_lambda_.10} parent=39 // pred_fallthru
              _
            // Predicated region
            $region59: #{_lambda_.10} parent=39 // pred_check
              _
            $region60: #{_lambda_.10} parent=39 // pred_check_branch
              %743 = sbr.rel target = $region62
            $region61: #{_lambda_.10} parent=39 // pred_region
              _
            $region62: #{_lambda_.10} parent=39 // pred_fallthru
              _
          $region40: #{_lambda_.10} parent=35 // pred_fallthru
            _
          %744 = vnop
        $region36: #{_lambda_.10} parent=31 // pred_fallthru
          _
      $region32: #{_lambda_.10} parent=5 // pred_fallthru
        _
      %p745 = scmp.le.s32.totalorder 2, %s9
      // Predicated region
      $region63: #{_lambda_.10} parent=5 // pred_check
        %p746 = pneg %p745
      $region64: #{_lambda_.10} parent=5 // pred_check_branch
        %748 = sbr.rel (%p746) target = $region66
      $region65: #{_lambda_.10} parent=5 // pred_region
        %s749 = ssub.s32 %s9, 2
        // Predicated region
        $region67: #{_lambda_.10} parent=65 // pred_check
          %p750 = pneg %p106
        $region68: #{_lambda_.10} parent=65 // pred_check_branch
          %752 = sbr.rel (%p750) target = $region70
        $region69: #{_lambda_.10} parent=65 // pred_region
          %s753 = sand.u32 %s91, 1
          %s754 = sand.u32 %s91, 1
          %s755 = smul.addr %s754, 592
          %s756 = scalar_lea.vmem [#allocation2], %s755
        $region70: #{_lambda_.10} parent=65 // pred_fallthru
          _
      $region66: #{_lambda_.10} parent=5 // pred_fallthru
        _
    $region6: #{_lambda_.10} parent=1 // loop_footer
      %s13 = sadd.s32 1, %s9
    $region7: #{_lambda_.10} parent=1 // loop_footer_branch
      %8 = sbr.rel target = $region3
    $region8: #{_lambda_.10} parent=1 // loop_exit
      _

// kernel: _lambda_.11
$region0: #{_lambda_.11}
  #allocation0 [shape = 'u32[]', space=smem, size = 0x4, offset = 0x4, fixed_abs, tag = 'smem constant byte address 0x4 - core index']
  #allocation1 [shape = 'u32[72,128]{1,0:T(1,128)}', space=vmem, size = 0x9000, scoped, tag = 'internal scratch']
  %s0 = inlined_call_operand.vmem [shape: f32[544,3], index: 0, kind: input, shape index: {}]
  %s1 = inlined_call_operand.vmem [shape: f32[3,192], index: 1, kind: input, shape index: {}]
  %s2 = inlined_call_operand.vmem [shape: f32[1,192], index: 2, kind: input, shape index: {}]
  %s3 = inlined_call_operand.vmem [shape: f32[544,192], index: 3, kind: output, shape index: {}]
  %s4 = sld [smem:[#allocation0]]
  $region45: #{_lambda_.11} parent=0
    _
  %s6 = ssub.s32 1, %s4
  %s7 = scalar_select 0, %s6, %s4
  loop: start=0, step=1, limit=4
  $region2: #{_lambda_.11} parent=0 // loop_pre_header
    _
  $region3: #{_lambda_.11} parent=0 // loop_header
    %s9 = sphi 0, %s13
    %p10 = scmp.ge.s32.totalorder %s9, 4
    %s19 = sphi 0, %s21
    %s22 = sphi 0, %s19
    %s23 = sphi 0, %s22
    %s39 = sphi 0, %s23
    %s43 = sphi 0, %s43
    %s45 = sphi 0, %s43
    %s46 = sphi 0, %s45
    %s60 = sphi 0, %s46
    %s64 = sphi 0, %s64
    %s66 = sphi 0, %s64
    %s67 = sphi 0, %s66
    %s81 = sphi 0, %s67
    %s87 = sphi 0, %s89
    %s90 = sphi 0, %s87
    %s91 = sphi 0, %s90
    %s107 = sphi 0, %s91
  $region4: #{_lambda_.11} parent=0 // loop_header_branch
    %12 = sbr.rel (%p10) target = $region8
  $region5: #{_lambda_.11} parent=0 // loop_body
    %s14 = ssub.s32 %s9, 1
    %s15 = ssub.s32 %s9, 2
    %s16 = sadd.s32 %s9, 1
    %s17 = ssub.s32 %s9, %s16
    %p18 = scmp.eq.s32.totalorder %s17, 0
    %s20 = sadd.s32 %s19, 1
    %s21 = scalar_select %p18, %s19, %s20
    %p24 = pneg %p18
    %p25 = scmp.eq.s32.totalorder %s9, 1
    %p26 = por %p24, %p25
    %p27 = scmp.ne.s32.totalorder %s19, %s22
    %p28 = scmp.eq.s32.totalorder %s9, 0
    %p29 = por %p27, %p28
    %p30 = scmp.ne.s32.totalorder %s19, %s22
    %p31 = scmp.eq.s32.totalorder %s14, 1
    %p32 = por %p30, %p31
    %p33 = scmp.ne.s32.totalorder %s22, %s23
    %p34 = scmp.eq.s32.totalorder %s14, 0
    %p35 = por %p33, %p34
    %p36 = scmp.ne.s32.totalorder %s22, %s23
    %p37 = scmp.eq.s32.totalorder %s15, 1
    %p38 = por %p36, %p37
    %p40 = scmp.ne.s32.totalorder %s23, %s39
    %p41 = scmp.eq.s32.totalorder %s15, 0
    %p42 = por %p40, %p41
    %s44 = sadd.s32 %s43, 1
    %p47 = scmp.eq.s32.totalorder %s9, 1
    %p48 = scmp.ne.s32.totalorder %s43, %s45
    %p49 = scmp.eq.s32.totalorder %s9, 0
    %p50 = por %p48, %p49
    %p51 = scmp.ne.s32.totalorder %s43, %s45
    %p52 = scmp.eq.s32.totalorder %s14, 1
    %p53 = por %p51, %p52
    %p54 = scmp.ne.s32.totalorder %s45, %s46
    %p55 = scmp.eq.s32.totalorder %s14, 0
    %p56 = por %p54, %p55
    %p57 = scmp.ne.s32.totalorder %s45, %s46
    %p58 = scmp.eq.s32.totalorder %s15, 1
    %p59 = por %p57, %p58
    %p61 = scmp.ne.s32.totalorder %s46, %s60
    %p62 = scmp.eq.s32.totalorder %s15, 0
    %p63 = por %p61, %p62
    %s65 = sadd.s32 %s64, 1
    %p68 = scmp.eq.s32.totalorder %s9, 1
    %p69 = scmp.ne.s32.totalorder %s64, %s66
    %p70 = scmp.eq.s32.totalorder %s9, 0
    %p71 = por %p69, %p70
    %p72 = scmp.ne.s32.totalorder %s64, %s66
    %p73 = scmp.eq.s32.totalorder %s14, 1
    %p74 = por %p72, %p73
    %p75 = scmp.ne.s32.totalorder %s66, %s67
    %p76 = scmp.eq.s32.totalorder %s14, 0
    %p77 = por %p75, %p76
    %p78 = scmp.ne.s32.totalorder %s66, %s67
    %p79 = scmp.eq.s32.totalorder %s15, 1
    %p80 = por %p78, %p79
    %p82 = scmp.ne.s32.totalorder %s67, %s81
    %p83 = scmp.eq.s32.totalorder %s15, 0
    %p84 = por %p82, %p83
    %s85 = ssub.s32 %s9, %s16
    %p86 = scmp.eq.s32.totalorder %s85, 0
    %s88 = sadd.s32 %s87, 1
    %s89 = scalar_select %p86, %s87, %s88
    %p92 = pneg %p86
    %p93 = scmp.eq.s32.totalorder %s9, 1
    %p94 = por %p92, %p93
    %p95 = scmp.ne.s32.totalorder %s87, %s90
    %p96 = scmp.eq.s32.totalorder %s9, 0
    %p97 = por %p95, %p96
    %p98 = scmp.ne.s32.totalorder %s87, %s90
    %p99 = scmp.eq.s32.totalorder %s14, 1
    %p100 = por %p98, %p99
    %p101 = scmp.ne.s32.totalorder %s90, %s91
    %p102 = scmp.eq.s32.totalorder %s14, 0
    %p103 = por %p101, %p102
    %p104 = scmp.ne.s32.totalorder %s90, %s91
    %p105 = scmp.eq.s32.totalorder %s15, 1
    %p106 = por %p104, %p105
    %p108 = scmp.ne.s32.totalorder %s91, %s107
    %p109 = scmp.eq.s32.totalorder %s15, 0
    %p110 = por %p108, %p109
    %p111 = scmp.le.s32.totalorder 1, %s9
    %p112 = scmp.lt.s32.totalorder %s9, 3
    %p113 = pnand %p111, %p112
    %p114 = pneg %p113
    // Predicated region
    $region9: #{_lambda_.11} parent=5 // pred_check
      _
    $region10: #{_lambda_.11} parent=5 // pred_check_branch
      %116 = sbr.rel (%p113) target = $region12
    $region11: #{_lambda_.11} parent=5 // pred_region
      %s117 = ssub.s32 %s9, 1
      // Predicated region
      $region13: #{_lambda_.11} parent=11 // pred_check
        %p118 = pneg %p56
      $region14: #{_lambda_.11} parent=11 // pred_check_branch
        %120 = sbr.rel (%p118) target = $region16
      $region15: #{_lambda_.11} parent=11 // pred_region
        _
      $region16: #{_lambda_.11} parent=11 // pred_fallthru
        _
      // Predicated region
      $region17: #{_lambda_.11} parent=11 // pred_check
        %p121 = pneg %p77
      $region18: #{_lambda_.11} parent=11 // pred_check_branch
        %123 = sbr.rel (%p121) target = $region20
      $region19: #{_lambda_.11} parent=11 // pred_region
        _
      $region20: #{_lambda_.11} parent=11 // pred_fallthru
        _
    $region12: #{_lambda_.11} parent=5 // pred_fallthru
      _
    %p124 = scmp.lt.s32.totalorder %s9, 2
    // Predicated region
    $region21: #{_lambda_.11} parent=5 // pred_check
      %p125 = pneg %p124
    $region22: #{_lambda_.11} parent=5 // pred_check_branch
      %127 = sbr.rel (%p125) target = $region24
    $region23: #{_lambda_.11} parent=5 // pred_region
      // Predicated region
      $region25: #{_lambda_.11} parent=23 // pred_check
        %p128 = pneg %p29
      $region26: #{_lambda_.11} parent=23 // pred_check_branch
        %130 = sbr.rel (%p128) target = $region28
      $region27: #{_lambda_.11} parent=23 // pred_region
        %s131 = smul.u32 34, %s9
        %p132 = scmp.lt.s32.totalorder %s131, 67
        %s133 = scalar_select %p132, %s131, 67
        %s134 = smul.addr %s133, 8
        %s135 = scalar_lea.vmem %s0, %s134
        %s136 = smul.u32 34, %s9
      $region28: #{_lambda_.11} parent=23 // pred_fallthru
        _
    $region24: #{_lambda_.11} parent=5 // pred_fallthru
      _
    %p137 = scmp.le.s32.totalorder 1, %s9
    %p138 = scmp.lt.s32.totalorder %s9, 3
    %p139 = pnand %p137, %p138
    %p140 = pneg %p139
    // Predicated region
    $region29: #{_lambda_.11} parent=5 // pred_check
      _
    $region30: #{_lambda_.11} parent=5 // pred_check_branch
      %142 = sbr.rel (%p139) target = $region32
    $region31: #{_lambda_.11} parent=5 // pred_region
      %s143 = ssub.s32 %s9, 1
      %s144 = smul.u32 34, %s14
      %p145 = scmp.lt.s32.totalorder %s144, 67
      %s146 = scalar_select %p145, %s144, 67
      %s147 = smul.addr %s146, 8
      %s148 = scalar_lea.vmem %s0, %s147
      %p149 = pneg %p35
      %p150 = pneg %p32
      %p151 = pneg %p56
      %p152 = pneg %p53
      %p153 = pneg %p77
      %p154 = pneg %p74
      %p155 = pneg %p103
      %p156 = pneg %p100
      %s157 = smul.u32 34, %s14
      %p158 = scmp.lt.s32.totalorder %s157, 67
      %s159 = scalar_select %p158, %s157, 67
      %s160 = smul.addr %s159, 2
      %s161 = smul.addr %s160, 8
      %s162 = scalar_lea.vmem %s3, %s161
      %s163 = smul.u32 34, %s14
      %p164 = scmp.lt.s32.totalorder %s163, 67
      %s165 = scalar_select %p164, %s163, 67
      %s166 = smul.addr %s165, 8
      %s167 = scalar_lea.vmem %s0, %s166
      %s168 = smul.u32 34, %s14
      %s169 = smul.u32 34, %s14
      %p170 = scmp.lt.s32.totalorder %s169, 67
      %s171 = scalar_select %p170, %s169, 67
      %s172 = smul.addr %s171, 2
      %s173 = smul.addr %s172, 8
      %s174 = scalar_lea.vmem %s3, %s173
      %s175 = smul.u32 34, %s14
      %v177 = vld [vmem:[%s167] sm:$0xff]
      %v178 = vld [vmem:[%s167 + $0x8] sm:$0xff]
      %v179 = vld [vmem:[%s167 + $0x10] sm:$0xff]
      %v180 = vld [vmem:[%s167 + $0x18] sm:$0xff]
      %v181 = vld [vmem:[%s167 + $0x20] sm:$0xff]
      %v182 = vld [vmem:[%s167 + $0x28] sm:$0xff]
      %v183 = vld [vmem:[%s167 + $0x30] sm:$0xff]
      %v184 = vld [vmem:[%s167 + $0x38] sm:$0xff]
      %v185 = vld [vmem:[%s167 + $0x40] sm:$0xff]
      %v186 = vld [vmem:[%s167 + $0x48] sm:$0xff]
      %v187 = vld [vmem:[%s167 + $0x50] sm:$0xff]
      %v188 = vld [vmem:[%s167 + $0x58] sm:$0xff]
      %v189 = vld [vmem:[%s167 + $0x60] sm:$0xff]
      %v190 = vld [vmem:[%s167 + $0x68] sm:$0xff]
      %v191 = vld [vmem:[%s167 + $0x70] sm:$0xff]
      %v192 = vld [vmem:[%s167 + $0x78] sm:$0xff]
      %v193 = vld [vmem:[%s167 + $0x80] sm:$0xff]
      %v194 = vld [vmem:[%s167 + $0x88] sm:$0xff]
      %v195 = vld [vmem:[%s167 + $0x90] sm:$0xff]
      %v196 = vld [vmem:[%s167 + $0x98] sm:$0xff]
      %v197 = vld [vmem:[%s167 + $0xa0] sm:$0xff]
      %v198 = vld [vmem:[%s167 + $0xa8] sm:$0xff]
      %v199 = vld [vmem:[%s167 + $0xb0] sm:$0xff]
      %v200 = vld [vmem:[%s167 + $0xb8] sm:$0xff]
      %v201 = vld [vmem:[%s167 + $0xc0] sm:$0xff]
      %v202 = vld [vmem:[%s167 + $0xc8] sm:$0xff]
      %v203 = vld [vmem:[%s167 + $0xd0] sm:$0xff]
      %v204 = vld [vmem:[%s167 + $0xd8] sm:$0xff]
      %v205 = vld [vmem:[%s167 + $0xe0] sm:$0xff]
      %v206 = vld [vmem:[%s167 + $0xe8] sm:$0xff]
      %v207 = vld [vmem:[%s167 + $0xf0] sm:$0xff]
      %v208 = vld [vmem:[%s167 + $0xf8] sm:$0xff]
      %v209 = vld [vmem:[%s167 + $0x100] sm:$0xff]
      %v210 = vld [vmem:[%s167 + $0x108] sm:$0xff]
      %v211 = vpack.c.bf16 %v178, %v177
      %v212 = vpack.c.bf16 %v180, %v179
      %v213 = vpack.c.bf16 %v182, %v181
      %v214 = vpack.c.bf16 %v184, %v183
      %v215 = vpack.c.bf16 %v186, %v185
      %v216 = vpack.c.bf16 %v188, %v187
      %v217 = vpack.c.bf16 %v190, %v189
      %v218 = vpack.c.bf16 %v192, %v191
      %v219 = vpack.c.bf16 %v194, %v193
      %v220 = vpack.c.bf16 %v196, %v195
      %v221 = vpack.c.bf16 %v198, %v197
      %v222 = vpack.c.bf16 %v200, %v199
      %v223 = vpack.c.bf16 %v202, %v201
      %v224 = vpack.c.bf16 %v204, %v203
      %v225 = vpack.c.bf16 %v206, %v205
      %v226 = vpack.c.bf16 %v208, %v207
      %v227 = vpack.c.bf16 %v210, %v209
      %v228 = vld [vmem:[%s1] sm:$0x77]
      %230 = vst [vmem:[#allocation1] ss:$2 sm:$0xff] %v228
      %v231 = vld.sshfl [vmem:[#allocation1] sm:$0xff pattern:$0x75316420]
      %v232 = vld.sshfl [vmem:[#allocation1 + $0x8] sm:$0xff pattern:$0x75316420]
      %v235 = vpack.c.bf16 %v231, %v231
      %v236 = vpack.c.bf16 %v232, %v232
      %v237 = vld [vmem:[%s2] sm:$0x3]
      %v239 = vperm.slane %v237, 0
      %v240 = vperm.slane %v237, 1
      %vm243 = vcmask 23552
      %v245 = vsel %vm243, %v211, 0
      %v248 = vsel %vm243, %v212, 0
      %v251 = vsel %vm243, %v213, 0
      %v254 = vsel %vm243, %v214, 0
      %v257 = vsel %vm243, %v215, 0
      %v260 = vsel %vm243, %v216, 0
      %v263 = vsel %vm243, %v217, 0
      %v266 = vsel %vm243, %v218, 0
      %v269 = vsel %vm243, %v219, 0
      %v272 = vsel %vm243, %v220, 0
      %v275 = vsel %vm243, %v221, 0
      %v278 = vsel %vm243, %v222, 0
      %v281 = vsel %vm243, %v223, 0
      %v284 = vsel %vm243, %v224, 0
      %v287 = vsel %vm243, %v225, 0
      %v290 = vsel %vm243, %v226, 0
      %v293 = vsel %vm243, %v227, 0
      %vm295 = vcmask 1040384
      %vm296 = vcmask 1041408
      %v297 = vsel %vm295, 4294967295, 65535
      %v298 = vsel %vm296, %v297, 0
      %v300 = vand.u32 %v235, %v298
      %v303 = vand.u32 %v236, %v298
      %305 = vmatpush.bf16.msra.mxu0 0
      %306 = vmatpush.bf16.msra.mxu0 0
      %307 = vmatpush.bf16.msra.mxu0 0
      %308 = vmatpush.bf16.msra.mxu0 0
      %309 = vmatpush.bf16.msra.mxu0 0
      %310 = vmatpush.bf16.msra.mxu0 0
      %311 = vmatpush.bf16.msra.mxu0 0
      %312 = vmatpush.bf16.msra.mxu0 %v300
      %313 = vmatmul.bf16.gmra.mxu0 %v245
      %v314 = vpop.f32.mrf.mxu0
      %v315 = vadd.f32 %v239, %v314
      %v316 = vpop.f32.mrf.mxu0
      %v317 = vadd.f32 %v239, %v316
      %318 = vmatmul.bf16.gmra.mxu0 %v248
      %v319 = vpop.f32.mrf.mxu0
      %v320 = vadd.f32 %v239, %v319
      %v321 = vpop.f32.mrf.mxu0
      %v322 = vadd.f32 %v239, %v321
      %323 = vmatmul.bf16.gmra.mxu0 %v251
      %v324 = vpop.f32.mrf.mxu0
      %v325 = vadd.f32 %v239, %v324
      %v326 = vpop.f32.mrf.mxu0
      %v327 = vadd.f32 %v239, %v326
      %328 = vmatmul.bf16.gmra.mxu0 %v254
      %v329 = vpop.f32.mrf.mxu0
      %v330 = vadd.f32 %v239, %v329
      %v331 = vpop.f32.mrf.mxu0
      %v332 = vadd.f32 %v239, %v331
      %333 = vmatmul.bf16.gmra.mxu0 %v257
      %v334 = vpop.f32.mrf.mxu0
      %v335 = vadd.f32 %v239, %v334
      %v336 = vpop.f32.mrf.mxu0
      %v337 = vadd.f32 %v239, %v336
      %338 = vmatmul.bf16.gmra.mxu0 %v260
      %v339 = vpop.f32.mrf.mxu0
      %v340 = vadd.f32 %v239, %v339
      %v341 = vpop.f32.mrf.mxu0
      %v342 = vadd.f32 %v239, %v341
      %343 = vmatmul.bf16.gmra.mxu0 %v263
      %v344 = vpop.f32.mrf.mxu0
      %v345 = vadd.f32 %v239, %v344
      %v346 = vpop.f32.mrf.mxu0
      %v347 = vadd.f32 %v239, %v346
      %348 = vmatmul.bf16.gmra.mxu0 %v266
      %v349 = vpop.f32.mrf.mxu0
      %v350 = vadd.f32 %v239, %v349
      %v351 = vpop.f32.mrf.mxu0
      %v352 = vadd.f32 %v239, %v351
      %353 = vmatmul.bf16.gmra.mxu0 %v269
      %v354 = vpop.f32.mrf.mxu0
      %v355 = vadd.f32 %v239, %v354
      %v356 = vpop.f32.mrf.mxu0
      %v357 = vadd.f32 %v239, %v356
      %358 = vmatmul.bf16.gmra.mxu0 %v272
      %v359 = vpop.f32.mrf.mxu0
      %v360 = vadd.f32 %v239, %v359
      %v361 = vpop.f32.mrf.mxu0
      %v362 = vadd.f32 %v239, %v361
      %363 = vmatmul.bf16.gmra.mxu0 %v275
      %v364 = vpop.f32.mrf.mxu0
      %v365 = vadd.f32 %v239, %v364
      %v366 = vpop.f32.mrf.mxu0
      %v367 = vadd.f32 %v239, %v366
      %368 = vmatmul.bf16.gmra.mxu0 %v278
      %v369 = vpop.f32.mrf.mxu0
      %v370 = vadd.f32 %v239, %v369
      %v371 = vpop.f32.mrf.mxu0
      %v372 = vadd.f32 %v239, %v371
      %373 = vmatmul.bf16.gmra.mxu0 %v281
      %v374 = vpop.f32.mrf.mxu0
      %v375 = vadd.f32 %v239, %v374
      %v376 = vpop.f32.mrf.mxu0
      %v377 = vadd.f32 %v239, %v376
      %378 = vmatmul.bf16.gmra.mxu0 %v284
      %v379 = vpop.f32.mrf.mxu0
      %v380 = vadd.f32 %v239, %v379
      %v381 = vpop.f32.mrf.mxu0
      %v382 = vadd.f32 %v239, %v381
      %383 = vmatmul.bf16.gmra.mxu0 %v287
      %v384 = vpop.f32.mrf.mxu0
      %v385 = vadd.f32 %v239, %v384
      %v386 = vpop.f32.mrf.mxu0
      %v387 = vadd.f32 %v239, %v386
      %388 = vmatmul.bf16.gmra.mxu0 %v290
      %v389 = vpop.f32.mrf.mxu0
      %v390 = vadd.f32 %v239, %v389
      %v391 = vpop.f32.mrf.mxu0
      %v392 = vadd.f32 %v239, %v391
      %393 = vmatmul.bf16.gmra.mxu0 %v293
      %v394 = vpop.f32.mrf.mxu0
      %v395 = vadd.f32 %v239, %v394
      %v396 = vpop.f32.mrf.mxu0
      %v397 = vadd.f32 %v239, %v396
      %398 = vdwg.mxu0
      %399 = vmatpush.bf16.msra.mxu0 0
      %400 = vmatpush.bf16.msra.mxu0 0
      %401 = vmatpush.bf16.msra.mxu0 0
      %402 = vmatpush.bf16.msra.mxu0 0
      %403 = vmatpush.bf16.msra.mxu0 0
      %404 = vmatpush.bf16.msra.mxu0 0
      %405 = vmatpush.bf16.msra.mxu0 0
      %406 = vmatpush.bf16.msra.mxu0 %v303
      %407 = vmatmul.bf16.gmra.mxu0 %v245
      %v408 = vpop.f32.mrf.mxu0
      %v409 = vadd.f32 %v240, %v408
      %v410 = vpop.f32.mrf.mxu0
      %v411 = vadd.f32 %v240, %v410
      %412 = vmatmul.bf16.gmra.mxu0 %v248
      %v413 = vpop.f32.mrf.mxu0
      %v414 = vadd.f32 %v240, %v413
      %v415 = vpop.f32.mrf.mxu0
      %v416 = vadd.f32 %v240, %v415
      %417 = vmatmul.bf16.gmra.mxu0 %v251
      %v418 = vpop.f32.mrf.mxu0
      %v419 = vadd.f32 %v240, %v418
      %v420 = vpop.f32.mrf.mxu0
      %v421 = vadd.f32 %v240, %v420
      %422 = vmatmul.bf16.gmra.mxu0 %v254
      %v423 = vpop.f32.mrf.mxu0
      %v424 = vadd.f32 %v240, %v423
      %v425 = vpop.f32.mrf.mxu0
      %v426 = vadd.f32 %v240, %v425
      %427 = vmatmul.bf16.gmra.mxu0 %v257
      %v428 = vpop.f32.mrf.mxu0
      %v429 = vadd.f32 %v240, %v428
      %v430 = vpop.f32.mrf.mxu0
      %v431 = vadd.f32 %v240, %v430
      %432 = vmatmul.bf16.gmra.mxu0 %v260
      %v433 = vpop.f32.mrf.mxu0
      %v434 = vadd.f32 %v240, %v433
      %v435 = vpop.f32.mrf.mxu0
      %v436 = vadd.f32 %v240, %v435
      %437 = vmatmul.bf16.gmra.mxu0 %v263
      %v438 = vpop.f32.mrf.mxu0
      %v439 = vadd.f32 %v240, %v438
      %v440 = vpop.f32.mrf.mxu0
      %v441 = vadd.f32 %v240, %v440
      %442 = vmatmul.bf16.gmra.mxu0 %v266
      %v443 = vpop.f32.mrf.mxu0
      %v444 = vadd.f32 %v240, %v443
      %v445 = vpop.f32.mrf.mxu0
      %v446 = vadd.f32 %v240, %v445
      %447 = vmatmul.bf16.gmra.mxu0 %v269
      %v448 = vpop.f32.mrf.mxu0
      %v449 = vadd.f32 %v240, %v448
      %v450 = vpop.f32.mrf.mxu0
      %v451 = vadd.f32 %v240, %v450
      %452 = vmatmul.bf16.gmra.mxu0 %v272
      %v453 = vpop.f32.mrf.mxu0
      %v454 = vadd.f32 %v240, %v453
      %v455 = vpop.f32.mrf.mxu0
      %v456 = vadd.f32 %v240, %v455
      %457 = vmatmul.bf16.gmra.mxu0 %v275
      %v458 = vpop.f32.mrf.mxu0
      %v459 = vadd.f32 %v240, %v458
      %v460 = vpop.f32.mrf.mxu0
      %v461 = vadd.f32 %v240, %v460
      %462 = vmatmul.bf16.gmra.mxu0 %v278
      %v463 = vpop.f32.mrf.mxu0
      %v464 = vadd.f32 %v240, %v463
      %v465 = vpop.f32.mrf.mxu0
      %v466 = vadd.f32 %v240, %v465
      %467 = vmatmul.bf16.gmra.mxu0 %v281
      %v468 = vpop.f32.mrf.mxu0
      %v469 = vadd.f32 %v240, %v468
      %v470 = vpop.f32.mrf.mxu0
      %v471 = vadd.f32 %v240, %v470
      %472 = vmatmul.bf16.gmra.mxu0 %v284
      %v473 = vpop.f32.mrf.mxu0
      %v474 = vadd.f32 %v240, %v473
      %v475 = vpop.f32.mrf.mxu0
      %v476 = vadd.f32 %v240, %v475
      %477 = vmatmul.bf16.gmra.mxu0 %v287
      %v478 = vpop.f32.mrf.mxu0
      %v479 = vadd.f32 %v240, %v478
      %v480 = vpop.f32.mrf.mxu0
      %v481 = vadd.f32 %v240, %v480
      %482 = vmatmul.bf16.gmra.mxu0 %v290
      %v483 = vpop.f32.mrf.mxu0
      %v484 = vadd.f32 %v240, %v483
      %v485 = vpop.f32.mrf.mxu0
      %v486 = vadd.f32 %v240, %v485
      %487 = vmatmul.bf16.gmra.mxu0 %v293
      %v488 = vpop.f32.mrf.mxu0
      %v489 = vadd.f32 %v240, %v488
      %v490 = vpop.f32.mrf.mxu0
      %v491 = vadd.f32 %v240, %v490
      %492 = vdwg.mxu0
      %493 = vst [vmem:[%s174] sm:$0xff] %v315
      %vm494 = vcmask 523264
      %495 = vst.msk [vmem:[%s174 + $0x8] sm:$0xff] %vm494, %v409
      %496 = vst [vmem:[%s174 + $0x10] sm:$0xff] %v317
      %497 = vst.msk [vmem:[%s174 + $0x18] sm:$0xff] %vm494, %v411
      %498 = vst [vmem:[%s174 + $0x20] sm:$0xff] %v320
      %499 = vst.msk [vmem:[%s174 + $0x28] sm:$0xff] %vm494, %v414
      %500 = vst [vmem:[%s174 + $0x30] sm:$0xff] %v322
      %501 = vst.msk [vmem:[%s174 + $0x38] sm:$0xff] %vm494, %v416
      %502 = vst [vmem:[%s174 + $0x40] sm:$0xff] %v325
      %503 = vst.msk [vmem:[%s174 + $0x48] sm:$0xff] %vm494, %v419
      %504 = vst [vmem:[%s174 + $0x50] sm:$0xff] %v327
      %505 = vst.msk [vmem:[%s174 + $0x58] sm:$0xff] %vm494, %v421
      %506 = vst [vmem:[%s174 + $0x60] sm:$0xff] %v330
      %507 = vst.msk [vmem:[%s174 + $0x68] sm:$0xff] %vm494, %v424
      %508 = vst [vmem:[%s174 + $0x70] sm:$0xff] %v332
      %509 = vst.msk [vmem:[%s174 + $0x78] sm:$0xff] %vm494, %v426
      %510 = vst [vmem:[%s174 + $0x80] sm:$0xff] %v335
      %511 = vst.msk [vmem:[%s174 + $0x88] sm:$0xff] %vm494, %v429
      %512 = vst [vmem:[%s174 + $0x90] sm:$0xff] %v337
      %513 = vst.msk [vmem:[%s174 + $0x98] sm:$0xff] %vm494, %v431
      %514 = vst [vmem:[%s174 + $0xa0] sm:$0xff] %v340
      %515 = vst.msk [vmem:[%s174 + $0xa8] sm:$0xff] %vm494, %v434
      %516 = vst [vmem:[%s174 + $0xb0] sm:$0xff] %v342
      %517 = vst.msk [vmem:[%s174 + $0xb8] sm:$0xff] %vm494, %v436
      %518 = vst [vmem:[%s174 + $0xc0] sm:$0xff] %v345
      %519 = vst.msk [vmem:[%s174 + $0xc8] sm:$0xff] %vm494, %v439
      %520 = vst [vmem:[%s174 + $0xd0] sm:$0xff] %v347
      %521 = vst.msk [vmem:[%s174 + $0xd8] sm:$0xff] %vm494, %v441
      %522 = vst [vmem:[%s174 + $0xe0] sm:$0xff] %v350
      %523 = vst.msk [vmem:[%s174 + $0xe8] sm:$0xff] %vm494, %v444
      %524 = vst [vmem:[%s174 + $0xf0] sm:$0xff] %v352
      %525 = vst.msk [vmem:[%s174 + $0xf8] sm:$0xff] %vm494, %v446
      %526 = vst [vmem:[%s174 + $0x100] sm:$0xff] %v355
      %527 = vst.msk [vmem:[%s174 + $0x108] sm:$0xff] %vm494, %v449
      %528 = vst [vmem:[%s174 + $0x110] sm:$0xff] %v357
      %529 = vst.msk [vmem:[%s174 + $0x118] sm:$0xff] %vm494, %v451
      %530 = vst [vmem:[%s174 + $0x120] sm:$0xff] %v360
      %531 = vst.msk [vmem:[%s174 + $0x128] sm:$0xff] %vm494, %v454
      %532 = vst [vmem:[%s174 + $0x130] sm:$0xff] %v362
      %533 = vst.msk [vmem:[%s174 + $0x138] sm:$0xff] %vm494, %v456
      %534 = vst [vmem:[%s174 + $0x140] sm:$0xff] %v365
      %535 = vst.msk [vmem:[%s174 + $0x148] sm:$0xff] %vm494, %v459
      %536 = vst [vmem:[%s174 + $0x150] sm:$0xff] %v367
      %537 = vst.msk [vmem:[%s174 + $0x158] sm:$0xff] %vm494, %v461
      %538 = vst [vmem:[%s174 + $0x160] sm:$0xff] %v370
      %539 = vst.msk [vmem:[%s174 + $0x168] sm:$0xff] %vm494, %v464
      %540 = vst [vmem:[%s174 + $0x170] sm:$0xff] %v372
      %541 = vst.msk [vmem:[%s174 + $0x178] sm:$0xff] %vm494, %v466
      %542 = vst [vmem:[%s174 + $0x180] sm:$0xff] %v375
      %543 = vst.msk [vmem:[%s174 + $0x188] sm:$0xff] %vm494, %v469
      %544 = vst [vmem:[%s174 + $0x190] sm:$0xff] %v377
      %545 = vst.msk [vmem:[%s174 + $0x198] sm:$0xff] %vm494, %v471
      %546 = vst [vmem:[%s174 + $0x1a0] sm:$0xff] %v380
      %547 = vst.msk [vmem:[%s174 + $0x1a8] sm:$0xff] %vm494, %v474
      %548 = vst [vmem:[%s174 + $0x1b0] sm:$0xff] %v382
      %549 = vst.msk [vmem:[%s174 + $0x1b8] sm:$0xff] %vm494, %v476
      %550 = vst [vmem:[%s174 + $0x1c0] sm:$0xff] %v385
      %551 = vst.msk [vmem:[%s174 + $0x1c8] sm:$0xff] %vm494, %v479
      %552 = vst [vmem:[%s174 + $0x1d0] sm:$0xff] %v387
      %553 = vst.msk [vmem:[%s174 + $0x1d8] sm:$0xff] %vm494, %v481
      %554 = vst [vmem:[%s174 + $0x1e0] sm:$0xff] %v390
      %555 = vst.msk [vmem:[%s174 + $0x1e8] sm:$0xff] %vm494, %v484
      %556 = vst [vmem:[%s174 + $0x1f0] sm:$0xff] %v392
      %557 = vst.msk [vmem:[%s174 + $0x1f8] sm:$0xff] %vm494, %v486
      %558 = vst [vmem:[%s174 + $0x200] sm:$0xff] %v395
      %559 = vst.msk [vmem:[%s174 + $0x208] sm:$0xff] %vm494, %v489
      %560 = vst [vmem:[%s174 + $0x210] sm:$0xff] %v397
      %561 = vst.msk [vmem:[%s174 + $0x218] sm:$0xff] %vm494, %v491
      %s562 = smul.u32 34, %s14
      %p563 = scmp.lt.s32.totalorder %s562, 67
      %s564 = scalar_select %p563, %s562, 67
      %s565 = smul.addr %s564, 2
      %s566 = smul.addr %s565, 8
      %s567 = scalar_lea.vmem %s3, %s566
      // Predicated region
      $region33: #{_lambda_.11} parent=31 // pred_check
        %p568 = pneg %p100
      $region34: #{_lambda_.11} parent=31 // pred_check_branch
        %570 = sbr.rel (%p568) target = $region36
      $region35: #{_lambda_.11} parent=31 // pred_region
        %s571 = smul.u32 34, %s14
      $region36: #{_lambda_.11} parent=31 // pred_fallthru
        _
    $region32: #{_lambda_.11} parent=5 // pred_fallthru
      _
    %p572 = scmp.le.s32.totalorder 2, %s9
    // Predicated region
    $region37: #{_lambda_.11} parent=5 // pred_check
      %p573 = pneg %p572
    $region38: #{_lambda_.11} parent=5 // pred_check_branch
      %575 = sbr.rel (%p573) target = $region40
    $region39: #{_lambda_.11} parent=5 // pred_region
      %s576 = ssub.s32 %s9, 2
      // Predicated region
      $region41: #{_lambda_.11} parent=39 // pred_check
        %p577 = pneg %p106
      $region42: #{_lambda_.11} parent=39 // pred_check_branch
        %579 = sbr.rel (%p577) target = $region44
      $region43: #{_lambda_.11} parent=39 // pred_region
        %s580 = smul.u32 34, %s15
        %p581 = scmp.lt.s32.totalorder %s580, 67
        %s582 = scalar_select %p581, %s580, 67
        %s583 = smul.addr %s582, 2
        %s584 = smul.addr %s583, 8
        %s585 = scalar_lea.vmem %s3, %s584
      $region44: #{_lambda_.11} parent=39 // pred_fallthru
        _
    $region40: #{_lambda_.11} parent=5 // pred_fallthru
      _
  $region6: #{_lambda_.11} parent=0 // loop_footer
    %s13 = sadd.s32 1, %s9
  $region7: #{_lambda_.11} parent=0 // loop_footer_branch
    %8 = sbr.rel target = $region3
  $region8: #{_lambda_.11} parent=0 // loop_exit
    _

// kernel: _lambda_.12
$region0: #{_lambda_.12}
  #allocation0 [shape = 'u32[]', space=smem, size = 0x4, offset = 0x4, fixed_abs, tag = 'smem constant byte address 0x4 - core index']
  #allocation1 [shape = 'u32[72,128]{1,0:T(1,128)}', space=vmem, size = 0x9000, scoped, tag = 'internal scratch']
  %s0 = inlined_call_operand.vmem [shape: f32[128,16,51], index: 0, kind: input, shape index: {}]
  %s1 = inlined_call_operand.vmem [shape: f32[128,51,17], index: 1, kind: input, shape index: {}]
  %s2 = inlined_call_operand.vmem [shape: f32[128,16,17], index: 2, kind: output, shape index: {}]
  %s3 = sld [smem:[#allocation0]]
  $region41: #{_lambda_.12} parent=0
    _
  %s5 = ssub.s32 1, %s3
  %s6 = scalar_select 0, %s5, %s3
  loop: start=0, step=1, limit=4
  $region2: #{_lambda_.12} parent=0 // loop_pre_header
    _
  $region3: #{_lambda_.12} parent=0 // loop_header
    %s8 = sphi 0, %s12
    %p9 = scmp.ge.s32.totalorder %s8, 4
    %s18 = sphi 0, %s20
    %s21 = sphi 0, %s18
    %s22 = sphi 0, %s21
    %s38 = sphi 0, %s22
    %s44 = sphi 0, %s46
    %s47 = sphi 0, %s44
    %s48 = sphi 0, %s47
    %s64 = sphi 0, %s48
    %s70 = sphi 0, %s72
    %s73 = sphi 0, %s70
    %s74 = sphi 0, %s73
    %s90 = sphi 0, %s74
  $region4: #{_lambda_.12} parent=0 // loop_header_branch
    %11 = sbr.rel (%p9) target = $region8
  $region5: #{_lambda_.12} parent=0 // loop_body
    %s13 = ssub.s32 %s8, 1
    %s14 = ssub.s32 %s8, 2
    %s15 = sadd.s32 %s8, 1
    %s16 = ssub.s32 %s8, %s15
    %p17 = scmp.eq.s32.totalorder %s16, 0
    %s19 = sadd.s32 %s18, 1
    %s20 = scalar_select %p17, %s18, %s19
    %p23 = pneg %p17
    %p24 = scmp.eq.s32.totalorder %s8, 1
    %p25 = por %p23, %p24
    %p26 = scmp.ne.s32.totalorder %s18, %s21
    %p27 = scmp.eq.s32.totalorder %s8, 0
    %p28 = por %p26, %p27
    %p29 = scmp.ne.s32.totalorder %s18, %s21
    %p30 = scmp.eq.s32.totalorder %s13, 1
    %p31 = por %p29, %p30
    %p32 = scmp.ne.s32.totalorder %s21, %s22
    %p33 = scmp.eq.s32.totalorder %s13, 0
    %p34 = por %p32, %p33
    %p35 = scmp.ne.s32.totalorder %s21, %s22
    %p36 = scmp.eq.s32.totalorder %s14, 1
    %p37 = por %p35, %p36
    %p39 = scmp.ne.s32.totalorder %s22, %s38
    %p40 = scmp.eq.s32.totalorder %s14, 0
    %p41 = por %p39, %p40
    %s42 = ssub.s32 %s8, %s15
    %p43 = scmp.eq.s32.totalorder %s42, 0
    %s45 = sadd.s32 %s44, 1
    %s46 = scalar_select %p43, %s44, %s45
    %p49 = pneg %p43
    %p50 = scmp.eq.s32.totalorder %s8, 1
    %p51 = por %p49, %p50
    %p52 = scmp.ne.s32.totalorder %s44, %s47
    %p53 = scmp.eq.s32.totalorder %s8, 0
    %p54 = por %p52, %p53
    %p55 = scmp.ne.s32.totalorder %s44, %s47
    %p56 = scmp.eq.s32.totalorder %s13, 1
    %p57 = por %p55, %p56
    %p58 = scmp.ne.s32.totalorder %s47, %s48
    %p59 = scmp.eq.s32.totalorder %s13, 0
    %p60 = por %p58, %p59
    %p61 = scmp.ne.s32.totalorder %s47, %s48
    %p62 = scmp.eq.s32.totalorder %s14, 1
    %p63 = por %p61, %p62
    %p65 = scmp.ne.s32.totalorder %s48, %s64
    %p66 = scmp.eq.s32.totalorder %s14, 0
    %p67 = por %p65, %p66
    %s68 = ssub.s32 %s8, %s15
    %p69 = scmp.eq.s32.totalorder %s68, 0
    %s71 = sadd.s32 %s70, 1
    %s72 = scalar_select %p69, %s70, %s71
    %p75 = pneg %p69
    %p76 = scmp.eq.s32.totalorder %s8, 1
    %p77 = por %p75, %p76
    %p78 = scmp.ne.s32.totalorder %s70, %s73
    %p79 = scmp.eq.s32.totalorder %s8, 0
    %p80 = por %p78, %p79
    %p81 = scmp.ne.s32.totalorder %s70, %s73
    %p82 = scmp.eq.s32.totalorder %s13, 1
    %p83 = por %p81, %p82
    %p84 = scmp.ne.s32.totalorder %s73, %s74
    %p85 = scmp.eq.s32.totalorder %s13, 0
    %p86 = por %p84, %p85
    %p87 = scmp.ne.s32.totalorder %s73, %s74
    %p88 = scmp.eq.s32.totalorder %s14, 1
    %p89 = por %p87, %p88
    %p91 = scmp.ne.s32.totalorder %s74, %s90
    %p92 = scmp.eq.s32.totalorder %s14, 0
    %p93 = por %p91, %p92
    %p94 = scmp.le.s32.totalorder 1, %s8
    %p95 = scmp.lt.s32.totalorder %s8, 3
    %p96 = pnand %p94, %p95
    %p97 = pneg %p96
    // Predicated region
    $region9: #{_lambda_.12} parent=5 // pred_check
      _
    $region10: #{_lambda_.12} parent=5 // pred_check_branch
      %99 = sbr.rel (%p96) target = $region12
    $region11: #{_lambda_.12} parent=5 // pred_region
      %s100 = ssub.s32 %s8, 1
    $region12: #{_lambda_.12} parent=5 // pred_fallthru
      _
    %p101 = scmp.lt.s32.totalorder %s8, 2
    // Predicated region
    $region13: #{_lambda_.12} parent=5 // pred_check
      %p102 = pneg %p101
    $region14: #{_lambda_.12} parent=5 // pred_check_branch
      %104 = sbr.rel (%p102) target = $region16
    $region15: #{_lambda_.12} parent=5 // pred_region
      // Predicated region
      $region17: #{_lambda_.12} parent=15 // pred_check
        %p105 = pneg %p28
      $region18: #{_lambda_.12} parent=15 // pred_check_branch
        %107 = sbr.rel (%p105) target = $region20
      $region19: #{_lambda_.12} parent=15 // pred_region
        %s108 = smul.u32 64, %s8
        %p109 = scmp.lt.s32.totalorder %s108, 127
        %s110 = scalar_select %p109, %s108, 127
        %s111 = smul.addr %s110, 2
        %s112 = smul.addr %s111, 8
        %s113 = scalar_lea.vmem %s0, %s112
        %s114 = smul.u32 64, %s8
      $region20: #{_lambda_.12} parent=15 // pred_fallthru
        _
      // Predicated region
      $region21: #{_lambda_.12} parent=15 // pred_check
        %p115 = pneg %p54
      $region22: #{_lambda_.12} parent=15 // pred_check_branch
        %117 = sbr.rel (%p115) target = $region24
      $region23: #{_lambda_.12} parent=15 // pred_region
        %s118 = smul.u32 64, %s8
        %p119 = scmp.lt.s32.totalorder %s118, 127
        %s120 = scalar_select %p119, %s118, 127
        %s121 = smul.addr %s120, 7
        %s122 = smul.addr %s121, 8
        %s123 = scalar_lea.vmem %s1, %s122
        %s124 = smul.u32 64, %s8
      $region24: #{_lambda_.12} parent=15 // pred_fallthru
        _
    $region16: #{_lambda_.12} parent=5 // pred_fallthru
      _
    %p125 = scmp.le.s32.totalorder 1, %s8
    %p126 = scmp.lt.s32.totalorder %s8, 3
    %p127 = pnand %p125, %p126
    %p128 = pneg %p127
    // Predicated region
    $region25: #{_lambda_.12} parent=5 // pred_check
      _
    $region26: #{_lambda_.12} parent=5 // pred_check_branch
      %130 = sbr.rel (%p127) target = $region28
    $region27: #{_lambda_.12} parent=5 // pred_region
      %s131 = ssub.s32 %s8, 1
      %s132 = smul.u32 64, %s13
      %p133 = scmp.lt.s32.totalorder %s132, 127
      %s134 = scalar_select %p133, %s132, 127
      %s135 = smul.addr %s134, 2
      %s136 = smul.addr %s135, 8
      %s137 = scalar_lea.vmem %s0, %s136
      %p138 = pneg %p34
      %p139 = pneg %p31
      %s140 = smul.u32 64, %s13
      %p141 = scmp.lt.s32.totalorder %s140, 127
      %s142 = scalar_select %p141, %s140, 127
      %s143 = smul.addr %s142, 7
      %s144 = smul.addr %s143, 8
      %s145 = scalar_lea.vmem %s1, %s144
      %p146 = pneg %p60
      %p147 = pneg %p57
      %p148 = pneg %p86
      %p149 = pneg %p83
      %s150 = smul.u32 64, %s13
      %p151 = scmp.lt.s32.totalorder %s150, 127
      %s152 = scalar_select %p151, %s150, 127
      %s153 = smul.addr %s152, 2
      %s154 = smul.addr %s153, 8
      %s155 = scalar_lea.vmem %s2, %s154
      %s156 = smul.u32 64, %s13
      %p157 = scmp.lt.s32.totalorder %s156, 127
      %s158 = scalar_select %p157, %s156, 127
      %s159 = smul.addr %s158, 2
      %s160 = smul.addr %s159, 8
      %s161 = scalar_lea.vmem %s0, %s160
      %s162 = smul.u32 64, %s13
      %s163 = smul.u32 64, %s13
      %p164 = scmp.lt.s32.totalorder %s163, 127
      %s165 = scalar_select %p164, %s163, 127
      %s166 = smul.addr %s165, 7
      %s167 = smul.addr %s166, 8
      %s168 = scalar_lea.vmem %s1, %s167
      %s169 = smul.u32 64, %s13
      %s170 = smul.u32 64, %s13
      %p171 = scmp.lt.s32.totalorder %s170, 127
      %s172 = scalar_select %p171, %s170, 127
      %s173 = smul.addr %s172, 2
      %s174 = smul.addr %s173, 8
      %s175 = scalar_lea.vmem %s2, %s174
      %s176 = smul.u32 64, %s13
      %v178 = vld [vmem:[%s161] sm:$0xff]
      %v179 = vld [vmem:[%s161 + $0x8] sm:$0xff]
      %v180 = vld [vmem:[%s161 + $0x10] sm:$0xff]
      %v181 = vld [vmem:[%s161 + $0x18] sm:$0xff]
      %v182 = vld [vmem:[%s161 + $0x20] sm:$0xff]
      %v183 = vld [vmem:[%s161 + $0x28] sm:$0xff]
      %v184 = vld [vmem:[%s161 + $0x30] sm:$0xff]
      %v185 = vld [vmem:[%s161 + $0x38] sm:$0xff]
      %v186 = vld [vmem:[%s161 + $0x40] sm:$0xff]
      %v187 = vld [vmem:[%s161 + $0x48] sm:$0xff]
      %v188 = vld [vmem:[%s161 + $0x50] sm:$0xff]
      %v189 = vld [vmem:[%s161 + $0x58] sm:$0xff]
      %v190 = vld [vmem:[%s161 + $0x60] sm:$0xff]
      %v191 = vld [vmem:[%s161 + $0x68] sm:$0xff]
      %v192 = vld [vmem:[%s161 + $0x70] sm:$0xff]
      %v193 = vld [vmem:[%s161 + $0x78] sm:$0xff]
      %v194 = vld [vmem:[%s161 + $0x80] sm:$0xff]
      %v195 = vld [vmem:[%s161 + $0x88] sm:$0xff]
      %v196 = vld [vmem:[%s161 + $0x90] sm:$0xff]
      %v197 = vld [vmem:[%s161 + $0x98] sm:$0xff]
      %v198 = vld [vmem:[%s161 + $0xa0] sm:$0xff]
      %v199 = vld [vmem:[%s161 + $0xa8] sm:$0xff]
      %v200 = vld [vmem:[%s161 + $0xb0] sm:$0xff]
      %v201 = vld [vmem:[%s161 + $0xb8] sm:$0xff]
      %v202 = vld [vmem:[%s161 + $0xc0] sm:$0xff]
      %v203 = vld [vmem:[%s161 + $0xc8] sm:$0xff]
      %v204 = vld [vmem:[%s161 + $0xd0] sm:$0xff]
      %v205 = vld [vmem:[%s161 + $0xd8] sm:$0xff]
      %v206 = vld [vmem:[%s161 + $0xe0] sm:$0xff]
      %v207 = vld [vmem:[%s161 + $0xe8] sm:$0xff]
      %v208 = vld [vmem:[%s161 + $0xf0] sm:$0xff]
      %v209 = vld [vmem:[%s161 + $0xf8] sm:$0xff]
      %v210 = vld [vmem:[%s161 + $0x100] sm:$0xff]
      %v211 = vld [vmem:[%s161 + $0x108] sm:$0xff]
      %v212 = vld [vmem:[%s161 + $0x110] sm:$0xff]
      %v213 = vld [vmem:[%s161 + $0x118] sm:$0xff]
      %v214 = vld [vmem:[%s161 + $0x120] sm:$0xff]
      %v215 = vld [vmem:[%s161 + $0x128] sm:$0xff]
      %v216 = vld [vmem:[%s161 + $0x130] sm:$0xff]
      %v217 = vld [vmem:[%s161 + $0x138] sm:$0xff]
      %v218 = vld [vmem:[%s161 + $0x140] sm:$0xff]
      %v219 = vld [vmem:[%s161 + $0x148] sm:$0xff]
      %v220 = vld [vmem:[%s161 + $0x150] sm:$0xff]
      %v221 = vld [vmem:[%s161 + $0x158] sm:$0xff]
      %v222 = vld [vmem:[%s161 + $0x160] sm:$0xff]
      %v223 = vld [vmem:[%s161 + $0x168] sm:$0xff]
      %v224 = vld [vmem:[%s161 + $0x170] sm:$0xff]
      %v225 = vld [vmem:[%s161 + $0x178] sm:$0xff]
      %v226 = vld [vmem:[%s161 + $0x180] sm:$0xff]
      %v227 = vld [vmem:[%s161 + $0x188] sm:$0xff]
      %v228 = vld [vmem:[%s161 + $0x190] sm:$0xff]
      %v229 = vld [vmem:[%s161 + $0x198] sm:$0xff]
      %v230 = vld [vmem:[%s161 + $0x1a0] sm:$0xff]
      %v231 = vld [vmem:[%s161 + $0x1a8] sm:$0xff]
      %v232 = vld [vmem:[%s161 + $0x1b0] sm:$0xff]
      %v233 = vld [vmem:[%s161 + $0x1b8] sm:$0xff]
      %v234 = vld [vmem:[%s161 + $0x1c0] sm:$0xff]
      %v235 = vld [vmem:[%s161 + $0x1c8] sm:$0xff]
      %v236 = vld [vmem:[%s161 + $0x1d0] sm:$0xff]
      %v237 = vld [vmem:[%s161 + $0x1d8] sm:$0xff]
      %v238 = vld [vmem:[%s161 + $0x1e0] sm:$0xff]
      %v239 = vld [vmem:[%s161 + $0x1e8] sm:$0xff]
      %v240 = vld [vmem:[%s161 + $0x1f0] sm:$0xff]
      %v241 = vld [vmem:[%s161 + $0x1f8] sm:$0xff]
      %v242 = vld [vmem:[%s161 + $0x200] sm:$0xff]
      %v243 = vld [vmem:[%s161 + $0x208] sm:$0xff]
      %v244 = vld [vmem:[%s161 + $0x210] sm:$0xff]
      %v245 = vld [vmem:[%s161 + $0x218] sm:$0xff]
      %v246 = vld [vmem:[%s161 + $0x220] sm:$0xff]
      %v247 = vld [vmem:[%s161 + $0x228] sm:$0xff]
      %v248 = vld [vmem:[%s161 + $0x230] sm:$0xff]
      %v249 = vld [vmem:[%s161 + $0x238] sm:$0xff]
      %v250 = vld [vmem:[%s161 + $0x240] sm:$0xff]
      %v251 = vld [vmem:[%s161 + $0x248] sm:$0xff]
      %v252 = vld [vmem:[%s161 + $0x250] sm:$0xff]
      %v253 = vld [vmem:[%s161 + $0x258] sm:$0xff]
      %v254 = vld [vmem:[%s161 + $0x260] sm:$0xff]
      %v255 = vld [vmem:[%s161 + $0x268] sm:$0xff]
      %v256 = vld [vmem:[%s161 + $0x270] sm:$0xff]
      %v257 = vld [vmem:[%s161 + $0x278] sm:$0xff]
      %v258 = vld [vmem:[%s161 + $0x280] sm:$0xff]
      %v259 = vld [vmem:[%s161 + $0x288] sm:$0xff]
      %v260 = vld [vmem:[%s161 + $0x290] sm:$0xff]
      %v261 = vld [vmem:[%s161 + $0x298] sm:$0xff]
      %v262 = vld [vmem:[%s161 + $0x2a0] sm:$0xff]
      %v263 = vld [vmem:[%s161 + $0x2a8] sm:$0xff]
      %v264 = vld [vmem:[%s161 + $0x2b0] sm:$0xff]
      %v265 = vld [vmem:[%s161 + $0x2b8] sm:$0xff]
      %v266 = vld [vmem:[%s161 + $0x2c0] sm:$0xff]
      %v267 = vld [vmem:[%s161 + $0x2c8] sm:$0xff]
      %v268 = vld [vmem:[%s161 + $0x2d0] sm:$0xff]
      %v269 = vld [vmem:[%s161 + $0x2d8] sm:$0xff]
      %v270 = vld [vmem:[%s161 + $0x2e0] sm:$0xff]
      %v271 = vld [vmem:[%s161 + $0x2e8] sm:$0xff]
      %v272 = vld [vmem:[%s161 + $0x2f0] sm:$0xff]
      %v273 = vld [vmem:[%s161 + $0x2f8] sm:$0xff]
      %v274 = vld [vmem:[%s161 + $0x300] sm:$0xff]
      %v275 = vld [vmem:[%s161 + $0x308] sm:$0xff]
      %v276 = vld [vmem:[%s161 + $0x310] sm:$0xff]
      %v277 = vld [vmem:[%s161 + $0x318] sm:$0xff]
      %v278 = vld [vmem:[%s161 + $0x320] sm:$0xff]
      %v279 = vld [vmem:[%s161 + $0x328] sm:$0xff]
      %v280 = vld [vmem:[%s161 + $0x330] sm:$0xff]
      %v281 = vld [vmem:[%s161 + $0x338] sm:$0xff]
      %v282 = vld [vmem:[%s161 + $0x340] sm:$0xff]
      %v283 = vld [vmem:[%s161 + $0x348] sm:$0xff]
      %v284 = vld [vmem:[%s161 + $0x350] sm:$0xff]
      %v285 = vld [vmem:[%s161 + $0x358] sm:$0xff]
      %v286 = vld [vmem:[%s161 + $0x360] sm:$0xff]
      %v287 = vld [vmem:[%s161 + $0x368] sm:$0xff]
      %v288 = vld [vmem:[%s161 + $0x370] sm:$0xff]
      %v289 = vld [vmem:[%s161 + $0x378] sm:$0xff]
      %v290 = vld [vmem:[%s161 + $0x380] sm:$0xff]
      %v291 = vld [vmem:[%s161 + $0x388] sm:$0xff]
      %v292 = vld [vmem:[%s161 + $0x390] sm:$0xff]
      %v293 = vld [vmem:[%s161 + $0x398] sm:$0xff]
      %v294 = vld [vmem:[%s161 + $0x3a0] sm:$0xff]
      %v295 = vld [vmem:[%s161 + $0x3a8] sm:$0xff]
      %v296 = vld [vmem:[%s161 + $0x3b0] sm:$0xff]
      %v297 = vld [vmem:[%s161 + $0x3b8] sm:$0xff]
      %v298 = vld [vmem:[%s161 + $0x3c0] sm:$0xff]
      %v299 = vld [vmem:[%s161 + $0x3c8] sm:$0xff]
      %v300 = vld [vmem:[%s161 + $0x3d0] sm:$0xff]
      %v301 = vld [vmem:[%s161 + $0x3d8] sm:$0xff]
      %v302 = vld [vmem:[%s161 + $0x3e0] sm:$0xff]
      %v303 = vld [vmem:[%s161 + $0x3e8] sm:$0xff]
      %v304 = vld [vmem:[%s161 + $0x3f0] sm:$0xff]
      %v305 = vld [vmem:[%s161 + $0x3f8] sm:$0xff]
      %v306 = vpack.c.bf16 %v178, %v178
      %v307 = vpack.c.bf16 %v179, %v179
      %v308 = vpack.c.bf16 %v180, %v180
      %v309 = vpack.c.bf16 %v181, %v181
      %v310 = vpack.c.bf16 %v182, %v182
      %v311 = vpack.c.bf16 %v183, %v183
      %v312 = vpack.c.bf16 %v184, %v184
      %v313 = vpack.c.bf16 %v185, %v185
      %v314 = vpack.c.bf16 %v186, %v186
      %v315 = vpack.c.bf16 %v187, %v187
      %v316 = vpack.c.bf16 %v188, %v188
      %v317 = vpack.c.bf16 %v189, %v189
      %v318 = vpack.c.bf16 %v190, %v190
      %v319 = vpack.c.bf16 %v191, %v191
      %v320 = vpack.c.bf16 %v192, %v192
      %v321 = vpack.c.bf16 %v193, %v193
      %v322 = vpack.c.bf16 %v194, %v194
      %v323 = vpack.c.bf16 %v195, %v195
      %v324 = vpack.c.bf16 %v196, %v196
      %v325 = vpack.c.bf16 %v197, %v197
      %v326 = vpack.c.bf16 %v198, %v198
      %v327 = vpack.c.bf16 %v199, %v199
      %v328 = vpack.c.bf16 %v200, %v200
      %v329 = vpack.c.bf16 %v201, %v201
      %v330 = vpack.c.bf16 %v202, %v202
      %v331 = vpack.c.bf16 %v203, %v203
      %v332 = vpack.c.bf16 %v204, %v204
      %v333 = vpack.c.bf16 %v205, %v205
      %v334 = vpack.c.bf16 %v206, %v206
      %v335 = vpack.c.bf16 %v207, %v207
      %v336 = vpack.c.bf16 %v208, %v208
      %v337 = vpack.c.bf16 %v209, %v209
      %v338 = vpack.c.bf16 %v210, %v210
      %v339 = vpack.c.bf16 %v211, %v211
      %v340 = vpack.c.bf16 %v212, %v212
      %v341 = vpack.c.bf16 %v213, %v213
      %v342 = vpack.c.bf16 %v214, %v214
      %v343 = vpack.c.bf16 %v215, %v215
      %v344 = vpack.c.bf16 %v216, %v216
      %v345 = vpack.c.bf16 %v217, %v217
      %v346 = vpack.c.bf16 %v218, %v218
      %v347 = vpack.c.bf16 %v219, %v219
      %v348 = vpack.c.bf16 %v220, %v220
      %v349 = vpack.c.bf16 %v221, %v221
      %v350 = vpack.c.bf16 %v222, %v222
      %v351 = vpack.c.bf16 %v223, %v223
      %v352 = vpack.c.bf16 %v224, %v224
      %v353 = vpack.c.bf16 %v225, %v225
      %v354 = vpack.c.bf16 %v226, %v226
      %v355 = vpack.c.bf16 %v227, %v227
      %v356 = vpack.c.bf16 %v228, %v228
      %v357 = vpack.c.bf16 %v229, %v229
      %v358 = vpack.c.bf16 %v230, %v230
      %v359 = vpack.c.bf16 %v231, %v231
      %v360 = vpack.c.bf16 %v232, %v232
      %v361 = vpack.c.bf16 %v233, %v233
      %v362 = vpack.c.bf16 %v234, %v234
      %v363 = vpack.c.bf16 %v235, %v235
      %v364 = vpack.c.bf16 %v236, %v236
      %v365 = vpack.c.bf16 %v237, %v237
      %v366 = vpack.c.bf16 %v238, %v238
      %v367 = vpack.c.bf16 %v239, %v239
      %v368 = vpack.c.bf16 %v240, %v240
      %v369 = vpack.c.bf16 %v241, %v241
      %v370 = vpack.c.bf16 %v242, %v242
      %v371 = vpack.c.bf16 %v243, %v243
      %v372 = vpack.c.bf16 %v244, %v244
      %v373 = vpack.c.bf16 %v245, %v245
      %v374 = vpack.c.bf16 %v246, %v246
      %v375 = vpack.c.bf16 %v247, %v247
      %v376 = vpack.c.bf16 %v248, %v248
      %v377 = vpack.c.bf16 %v249, %v249
      %v378 = vpack.c.bf16 %v250, %v250
      %v379 = vpack.c.bf16 %v251, %v251
      %v380 = vpack.c.bf16 %v252, %v252
      %v381 = vpack.c.bf16 %v253, %v253
      %v382 = vpack.c.bf16 %v254, %v254
      %v383 = vpack.c.bf16 %v255, %v255
      %v384 = vpack.c.bf16 %v256, %v256
      %v385 = vpack.c.bf16 %v257, %v257
      %v386 = vpack.c.bf16 %v258, %v258
      %v387 = vpack.c.bf16 %v259, %v259
      %v388 = vpack.c.bf16 %v260, %v260
      %v389 = vpack.c.bf16 %v261, %v261
      %v390 = vpack.c.bf16 %v262, %v262
      %v391 = vpack.c.bf16 %v263, %v263
      %v392 = vpack.c.bf16 %v264, %v264
      %v393 = vpack.c.bf16 %v265, %v265
      %v394 = vpack.c.bf16 %v266, %v266
      %v395 = vpack.c.bf16 %v267, %v267
      %v396 = vpack.c.bf16 %v268, %v268
      %v397 = vpack.c.bf16 %v269, %v269
      %v398 = vpack.c.bf16 %v270, %v270
      %v399 = vpack.c.bf16 %v271, %v271
      %v400 = vpack.c.bf16 %v272, %v272
      %v401 = vpack.c.bf16 %v273, %v273
      %v402 = vpack.c.bf16 %v274, %v274
      %v403 = vpack.c.bf16 %v275, %v275
      %v404 = vpack.c.bf16 %v276, %v276
      %v405 = vpack.c.bf16 %v277, %v277
      %v406 = vpack.c.bf16 %v278, %v278
      %v407 = vpack.c.bf16 %v279, %v279
      %v408 = vpack.c.bf16 %v280, %v280
      %v409 = vpack.c.bf16 %v281, %v281
      %v410 = vpack.c.bf16 %v282, %v282
      %v411 = vpack.c.bf16 %v283, %v283
      %v412 = vpack.c.bf16 %v284, %v284
      %v413 = vpack.c.bf16 %v285, %v285
      %v414 = vpack.c.bf16 %v286, %v286
      %v415 = vpack.c.bf16 %v287, %v287
      %v416 = vpack.c.bf16 %v288, %v288
      %v417 = vpack.c.bf16 %v289, %v289
      %v418 = vpack.c.bf16 %v290, %v290
      %v419 = vpack.c.bf16 %v291, %v291
      %v420 = vpack.c.bf16 %v292, %v292
      %v421 = vpack.c.bf16 %v293, %v293
      %v422 = vpack.c.bf16 %v294, %v294
      %v423 = vpack.c.bf16 %v295, %v295
      %v424 = vpack.c.bf16 %v296, %v296
      %v425 = vpack.c.bf16 %v297, %v297
      %v426 = vpack.c.bf16 %v298, %v298
      %v427 = vpack.c.bf16 %v299, %v299
      %v428 = vpack.c.bf16 %v300, %v300
      %v429 = vpack.c.bf16 %v301, %v301
      %v430 = vpack.c.bf16 %v302, %v302
      %v431 = vpack.c.bf16 %v303, %v303
      %v432 = vpack.c.bf16 %v304, %v304
      %v433 = vpack.c.bf16 %v305, %v305
      %v434 = vld [vmem:[%s168] sm:$0xff]
      %v435 = vld [vmem:[%s168 + $0x8] sm:$0xff]
      %v436 = vld [vmem:[%s168 + $0x10] sm:$0xff]
      %v437 = vld [vmem:[%s168 + $0x18] sm:$0xff]
      %v438 = vld [vmem:[%s168 + $0x20] sm:$0xff]
      %v439 = vld [vmem:[%s168 + $0x28] sm:$0xff]
      %v440 = vld [vmem:[%s168 + $0x30] sm:$0x7]
      %v441 = vld [vmem:[%s168 + $0x38] sm:$0xff]
      %v442 = vld [vmem:[%s168 + $0x40] sm:$0xff]
      %v443 = vld [vmem:[%s168 + $0x48] sm:$0xff]
      %v444 = vld [vmem:[%s168 + $0x50] sm:$0xff]
      %v445 = vld [vmem:[%s168 + $0x58] sm:$0xff]
      %v446 = vld [vmem:[%s168 + $0x60] sm:$0xff]
      %v447 = vld [vmem:[%s168 + $0x68] sm:$0x7]
      %v448 = vld [vmem:[%s168 + $0x70] sm:$0xff]
      %v449 = vld [vmem:[%s168 + $0x78] sm:$0xff]
      %v450 = vld [vmem:[%s168 + $0x80] sm:$0xff]
      %v451 = vld [vmem:[%s168 + $0x88] sm:$0xff]
      %v452 = vld [vmem:[%s168 + $0x90] sm:$0xff]
      %v453 = vld [vmem:[%s168 + $0x98] sm:$0xff]
      %v454 = vld [vmem:[%s168 + $0xa0] sm:$0x7]
      %v455 = vld [vmem:[%s168 + $0xa8] sm:$0xff]
      %v456 = vld [vmem:[%s168 + $0xb0] sm:$0xff]
      %v457 = vld [vmem:[%s168 + $0xb8] sm:$0xff]
      %v458 = vld [vmem:[%s168 + $0xc0] sm:$0xff]
      %v459 = vld [vmem:[%s168 + $0xc8] sm:$0xff]
      %v460 = vld [vmem:[%s168 + $0xd0] sm:$0xff]
      %v461 = vld [vmem:[%s168 + $0xd8] sm:$0x7]
      %v462 = vld [vmem:[%s168 + $0xe0] sm:$0xff]
      %v463 = vld [vmem:[%s168 + $0xe8] sm:$0xff]
      %v464 = vld [vmem:[%s168 + $0xf0] sm:$0xff]
      %v465 = vld [vmem:[%s168 + $0xf8] sm:$0xff]
      %v466 = vld [vmem:[%s168 + $0x100] sm:$0xff]
      %v467 = vld [vmem:[%s168 + $0x108] sm:$0xff]
      %v468 = vld [vmem:[%s168 + $0x110] sm:$0x7]
      %v469 = vld [vmem:[%s168 + $0x118] sm:$0xff]
      %v470 = vld [vmem:[%s168 + $0x120] sm:$0xff]
      %v471 = vld [vmem:[%s168 + $0x128] sm:$0xff]
      %v472 = vld [vmem:[%s168 + $0x130] sm:$0xff]
      %v473 = vld [vmem:[%s168 + $0x138] sm:$0xff]
      %v474 = vld [vmem:[%s168 + $0x140] sm:$0xff]
      %v475 = vld [vmem:[%s168 + $0x148] sm:$0x7]
      %v476 = vld [vmem:[%s168 + $0x150] sm:$0xff]
      %v477 = vld [vmem:[%s168 + $0x158] sm:$0xff]
      %v478 = vld [vmem:[%s168 + $0x160] sm:$0xff]
      %v479 = vld [vmem:[%s168 + $0x168] sm:$0xff]
      %v480 = vld [vmem:[%s168 + $0x170] sm:$0xff]
      %v481 = vld [vmem:[%s168 + $0x178] sm:$0xff]
      %v482 = vld [vmem:[%s168 + $0x180] sm:$0x7]
      %v483 = vld [vmem:[%s168 + $0x188] sm:$0xff]
      %v484 = vld [vmem:[%s168 + $0x190] sm:$0xff]
      %v485 = vld [vmem:[%s168 + $0x198] sm:$0xff]
      %v486 = vld [vmem:[%s168 + $0x1a0] sm:$0xff]
      %v487 = vld [vmem:[%s168 + $0x1a8] sm:$0xff]
      %v488 = vld [vmem:[%s168 + $0x1b0] sm:$0xff]
      %v489 = vld [vmem:[%s168 + $0x1b8] sm:$0x7]
      %v490 = vld [vmem:[%s168 + $0x1c0] sm:$0xff]
      %v491 = vld [vmem:[%s168 + $0x1c8] sm:$0xff]
      %v492 = vld [vmem:[%s168 + $0x1d0] sm:$0xff]
      %v493 = vld [vmem:[%s168 + $0x1d8] sm:$0xff]
      %v494 = vld [vmem:[%s168 + $0x1e0] sm:$0xff]
      %v495 = vld [vmem:[%s168 + $0x1e8] sm:$0xff]
      %v496 = vld [vmem:[%s168 + $0x1f0] sm:$0x7]
      %v497 = vld [vmem:[%s168 + $0x1f8] sm:$0xff]
      %v498 = vld [vmem:[%s168 + $0x200] sm:$0xff]
      %v499 = vld [vmem:[%s168 + $0x208] sm:$0xff]
      %v500 = vld [vmem:[%s168 + $0x210] sm:$0xff]
      %v501 = vld [vmem:[%s168 + $0x218] sm:$0xff]
      %v502 = vld [vmem:[%s168 + $0x220] sm:$0xff]
      %v503 = vld [vmem:[%s168 + $0x228] sm:$0x7]
      %v504 = vld [vmem:[%s168 + $0x230] sm:$0xff]
      %v505 = vld [vmem:[%s168 + $0x238] sm:$0xff]
      %v506 = vld [vmem:[%s168 + $0x240] sm:$0xff]
      %v507 = vld [vmem:[%s168 + $0x248] sm:$0xff]
      %v508 = vld [vmem:[%s168 + $0x250] sm:$0xff]
      %v509 = vld [vmem:[%s168 + $0x258] sm:$0xff]
      %v510 = vld [vmem:[%s168 + $0x260] sm:$0x7]
      %v511 = vld [vmem:[%s168 + $0x268] sm:$0xff]
      %v512 = vld [vmem:[%s168 + $0x270] sm:$0xff]
      %v513 = vld [vmem:[%s168 + $0x278] sm:$0xff]
      %v514 = vld [vmem:[%s168 + $0x280] sm:$0xff]
      %v515 = vld [vmem:[%s168 + $0x288] sm:$0xff]
      %v516 = vld [vmem:[%s168 + $0x290] sm:$0xff]
      %v517 = vld [vmem:[%s168 + $0x298] sm:$0x7]
      %v518 = vld [vmem:[%s168 + $0x2a0] sm:$0xff]
      %v519 = vld [vmem:[%s168 + $0x2a8] sm:$0xff]
      %v520 = vld [vmem:[%s168 + $0x2b0] sm:$0xff]
      %v521 = vld [vmem:[%s168 + $0x2b8] sm:$0xff]
      %v522 = vld [vmem:[%s168 + $0x2c0] sm:$0xff]
      %v523 = vld [vmem:[%s168 + $0x2c8] sm:$0xff]
      %v524 = vld [vmem:[%s168 + $0x2d0] sm:$0x7]
      %v525 = vld [vmem:[%s168 + $0x2d8] sm:$0xff]
      %v526 = vld [vmem:[%s168 + $0x2e0] sm:$0xff]
      %v527 = vld [vmem:[%s168 + $0x2e8] sm:$0xff]
      %v528 = vld [vmem:[%s168 + $0x2f0] sm:$0xff]
      %v529 = vld [vmem:[%s168 + $0x2f8] sm:$0xff]
      %v530 = vld [vmem:[%s168 + $0x300] sm:$0xff]
      %v531 = vld [vmem:[%s168 + $0x308] sm:$0x7]
      %v532 = vld [vmem:[%s168 + $0x310] sm:$0xff]
      %v533 = vld [vmem:[%s168 + $0x318] sm:$0xff]
      %v534 = vld [vmem:[%s168 + $0x320] sm:$0xff]
      %v535 = vld [vmem:[%s168 + $0x328] sm:$0xff]
      %v536 = vld [vmem:[%s168 + $0x330] sm:$0xff]
      %v537 = vld [vmem:[%s168 + $0x338] sm:$0xff]
      %v538 = vld [vmem:[%s168 + $0x340] sm:$0x7]
      %v539 = vld [vmem:[%s168 + $0x348] sm:$0xff]
      %v540 = vld [vmem:[%s168 + $0x350] sm:$0xff]
      %v541 = vld [vmem:[%s168 + $0x358] sm:$0xff]
      %v542 = vld [vmem:[%s168 + $0x360] sm:$0xff]
      %v543 = vld [vmem:[%s168 + $0x368] sm:$0xff]
      %v544 = vld [vmem:[%s168 + $0x370] sm:$0xff]
      %v545 = vld [vmem:[%s168 + $0x378] sm:$0x7]
      %v546 = vld [vmem:[%s168 + $0x380] sm:$0xff]
      %v547 = vld [vmem:[%s168 + $0x388] sm:$0xff]
      %v548 = vld [vmem:[%s168 + $0x390] sm:$0xff]
      %v549 = vld [vmem:[%s168 + $0x398] sm:$0xff]
      %v550 = vld [vmem:[%s168 + $0x3a0] sm:$0xff]
      %v551 = vld [vmem:[%s168 + $0x3a8] sm:$0xff]
      %v552 = vld [vmem:[%s168 + $0x3b0] sm:$0x7]
      %v553 = vld [vmem:[%s168 + $0x3b8] sm:$0xff]
      %v554 = vld [vmem:[%s168 + $0x3c0] sm:$0xff]
      %v555 = vld [vmem:[%s168 + $0x3c8] sm:$0xff]
      %v556 = vld [vmem:[%s168 + $0x3d0] sm:$0xff]
      %v557 = vld [vmem:[%s168 + $0x3d8] sm:$0xff]
      %v558 = vld [vmem:[%s168 + $0x3e0] sm:$0xff]
      %v559 = vld [vmem:[%s168 + $0x3e8] sm:$0x7]
      %v560 = vld [vmem:[%s168 + $0x3f0] sm:$0xff]
      %v561 = vld [vmem:[%s168 + $0x3f8] sm:$0xff]
      %v562 = vld [vmem:[%s168 + $0x400] sm:$0xff]
      %v563 = vld [vmem:[%s168 + $0x408] sm:$0xff]
      %v564 = vld [vmem:[%s168 + $0x410] sm:$0xff]
      %v565 = vld [vmem:[%s168 + $0x418] sm:$0xff]
      %v566 = vld [vmem:[%s168 + $0x420] sm:$0x7]
      %v567 = vld [vmem:[%s168 + $0x428] sm:$0xff]
      %v568 = vld [vmem:[%s168 + $0x430] sm:$0xff]
      %v569 = vld [vmem:[%s168 + $0x438] sm:$0xff]
      %v570 = vld [vmem:[%s168 + $0x440] sm:$0xff]
      %v571 = vld [vmem:[%s168 + $0x448] sm:$0xff]
      %v572 = vld [vmem:[%s168 + $0x450] sm:$0xff]
      %v573 = vld [vmem:[%s168 + $0x458] sm:$0x7]
      %v574 = vld [vmem:[%s168 + $0x460] sm:$0xff]
      %v575 = vld [vmem:[%s168 + $0x468] sm:$0xff]
      %v576 = vld [vmem:[%s168 + $0x470] sm:$0xff]
      %v577 = vld [vmem:[%s168 + $0x478] sm:$0xff]
      %v578 = vld [vmem:[%s168 + $0x480] sm:$0xff]
      %v579 = vld [vmem:[%s168 + $0x488] sm:$0xff]
      %v580 = vld [vmem:[%s168 + $0x490] sm:$0x7]
      %v581 = vld [vmem:[%s168 + $0x498] sm:$0xff]
      %v582 = vld [vmem:[%s168 + $0x4a0] sm:$0xff]
      %v583 = vld [vmem:[%s168 + $0x4a8] sm:$0xff]
      %v584 = vld [vmem:[%s168 + $0x4b0] sm:$0xff]
      %v585 = vld [vmem:[%s168 + $0x4b8] sm:$0xff]
      %v586 = vld [vmem:[%s168 + $0x4c0] sm:$0xff]
      %v587 = vld [vmem:[%s168 + $0x4c8] sm:$0x7]
      %v588 = vld [vmem:[%s168 + $0x4d0] sm:$0xff]
      %v589 = vld [vmem:[%s168 + $0x4d8] sm:$0xff]
      %v590 = vld [vmem:[%s168 + $0x4e0] sm:$0xff]
      %v591 = vld [vmem:[%s168 + $0x4e8] sm:$0xff]
      %v592 = vld [vmem:[%s168 + $0x4f0] sm:$0xff]
      %v593 = vld [vmem:[%s168 + $0x4f8] sm:$0xff]
      %v594 = vld [vmem:[%s168 + $0x500] sm:$0x7]
      %v595 = vld [vmem:[%s168 + $0x508] sm:$0xff]
      %v596 = vld [vmem:[%s168 + $0x510] sm:$0xff]
      %v597 = vld [vmem:[%s168 + $0x518] sm:$0xff]
      %v598 = vld [vmem:[%s168 + $0x520] sm:$0xff]
      %v599 = vld [vmem:[%s168 + $0x528] sm:$0xff]
      %v600 = vld [vmem:[%s168 + $0x530] sm:$0xff]
      %v601 = vld [vmem:[%s168 + $0x538] sm:$0x7]
      %v602 = vld [vmem:[%s168 + $0x540] sm:$0xff]
      %v603 = vld [vmem:[%s168 + $0x548] sm:$0xff]
      %v604 = vld [vmem:[%s168 + $0x550] sm:$0xff]
      %v605 = vld [vmem:[%s168 + $0x558] sm:$0xff]
      %v606 = vld [vmem:[%s168 + $0x560] sm:$0xff]
      %v607 = vld [vmem:[%s168 + $0x568] sm:$0xff]
      %v608 = vld [vmem:[%s168 + $0x570] sm:$0x7]
      %v609 = vld [vmem:[%s168 + $0x578] sm:$0xff]
      %v610 = vld [vmem:[%s168 + $0x580] sm:$0xff]
      %v611 = vld [vmem:[%s168 + $0x588] sm:$0xff]
      %v612 = vld [vmem:[%s168 + $0x590] sm:$0xff]
      %v613 = vld [vmem:[%s168 + $0x598] sm:$0xff]
      %v614 = vld [vmem:[%s168 + $0x5a0] sm:$0xff]
      %v615 = vld [vmem:[%s168 + $0x5a8] sm:$0x7]
      %v616 = vld [vmem:[%s168 + $0x5b0] sm:$0xff]
      %v617 = vld [vmem:[%s168 + $0x5b8] sm:$0xff]
      %v618 = vld [vmem:[%s168 + $0x5c0] sm:$0xff]
      %v619 = vld [vmem:[%s168 + $0x5c8] sm:$0xff]
      %v620 = vld [vmem:[%s168 + $0x5d0] sm:$0xff]
      %v621 = vld [vmem:[%s168 + $0x5d8] sm:$0xff]
      %v622 = vld [vmem:[%s168 + $0x5e0] sm:$0x7]
      %v623 = vld [vmem:[%s168 + $0x5e8] sm:$0xff]
      %v624 = vld [vmem:[%s168 + $0x5f0] sm:$0xff]
      %v625 = vld [vmem:[%s168 + $0x5f8] sm:$0xff]
      %v626 = vld [vmem:[%s168 + $0x600] sm:$0xff]
      %v627 = vld [vmem:[%s168 + $0x608] sm:$0xff]
      %v628 = vld [vmem:[%s168 + $0x610] sm:$0xff]
      %v629 = vld [vmem:[%s168 + $0x618] sm:$0x7]
      %v630 = vld [vmem:[%s168 + $0x620] sm:$0xff]
      %v631 = vld [vmem:[%s168 + $0x628] sm:$0xff]
      %v632 = vld [vmem:[%s168 + $0x630] sm:$0xff]
      %v633 = vld [vmem:[%s168 + $0x638] sm:$0xff]
      %v634 = vld [vmem:[%s168 + $0x640] sm:$0xff]
      %v635 = vld [vmem:[%s168 + $0x648] sm:$0xff]
      %v636 = vld [vmem:[%s168 + $0x650] sm:$0x7]
      %v637 = vld [vmem:[%s168 + $0x658] sm:$0xff]
      %v638 = vld [vmem:[%s168 + $0x660] sm:$0xff]
      %v639 = vld [vmem:[%s168 + $0x668] sm:$0xff]
      %v640 = vld [vmem:[%s168 + $0x670] sm:$0xff]
      %v641 = vld [vmem:[%s168 + $0x678] sm:$0xff]
      %v642 = vld [vmem:[%s168 + $0x680] sm:$0xff]
      %v643 = vld [vmem:[%s168 + $0x688] sm:$0x7]
      %v644 = vld [vmem:[%s168 + $0x690] sm:$0xff]
      %v645 = vld [vmem:[%s168 + $0x698] sm:$0xff]
      %v646 = vld [vmem:[%s168 + $0x6a0] sm:$0xff]
      %v647 = vld [vmem:[%s168 + $0x6a8] sm:$0xff]
      %v648 = vld [vmem:[%s168 + $0x6b0] sm:$0xff]
      %v649 = vld [vmem:[%s168 + $0x6b8] sm:$0xff]
      %v650 = vld [vmem:[%s168 + $0x6c0] sm:$0x7]
      %v651 = vld [vmem:[%s168 + $0x6c8] sm:$0xff]
      %v652 = vld [vmem:[%s168 + $0x6d0] sm:$0xff]
      %v653 = vld [vmem:[%s168 + $0x6d8] sm:$0xff]
      %v654 = vld [vmem:[%s168 + $0x6e0] sm:$0xff]
      %v655 = vld [vmem:[%s168 + $0x6e8] sm:$0xff]
      %v656 = vld [vmem:[%s168 + $0x6f0] sm:$0xff]
      %v657 = vld [vmem:[%s168 + $0x6f8] sm:$0x7]
      %v658 = vld [vmem:[%s168 + $0x700] sm:$0xff]
      %v659 = vld [vmem:[%s168 + $0x708] sm:$0xff]
      %v660 = vld [vmem:[%s168 + $0x710] sm:$0xff]
      %v661 = vld [vmem:[%s168 + $0x718] sm:$0xff]
      %v662 = vld [vmem:[%s168 + $0x720] sm:$0xff]
      %v663 = vld [vmem:[%s168 + $0x728] sm:$0xff]
      %v664 = vld [vmem:[%s168 + $0x730] sm:$0x7]
      %v665 = vld [vmem:[%s168 + $0x738] sm:$0xff]
      %v666 = vld [vmem:[%s168 + $0x740] sm:$0xff]
      %v667 = vld [vmem:[%s168 + $0x748] sm:$0xff]
      %v668 = vld [vmem:[%s168 + $0x750] sm:$0xff]
      %v669 = vld [vmem:[%s168 + $0x758] sm:$0xff]
      %v670 = vld [vmem:[%s168 + $0x760] sm:$0xff]
      %v671 = vld [vmem:[%s168 + $0x768] sm:$0x7]
      %v672 = vld [vmem:[%s168 + $0x770] sm:$0xff]
      %v673 = vld [vmem:[%s168 + $0x778] sm:$0xff]
      %v674 = vld [vmem:[%s168 + $0x780] sm:$0xff]
      %v675 = vld [vmem:[%s168 + $0x788] sm:$0xff]
      %v676 = vld [vmem:[%s168 + $0x790] sm:$0xff]
      %v677 = vld [vmem:[%s168 + $0x798] sm:$0xff]
      %v678 = vld [vmem:[%s168 + $0x7a0] sm:$0x7]
      %v679 = vld [vmem:[%s168 + $0x7a8] sm:$0xff]
      %v680 = vld [vmem:[%s168 + $0x7b0] sm:$0xff]
      %v681 = vld [vmem:[%s168 + $0x7b8] sm:$0xff]
      %v682 = vld [vmem:[%s168 + $0x7c0] sm:$0xff]
      %v683 = vld [vmem:[%s168 + $0x7c8] sm:$0xff]
      %v684 = vld [vmem:[%s168 + $0x7d0] sm:$0xff]
      %v685 = vld [vmem:[%s168 + $0x7d8] sm:$0x7]
      %v686 = vld [vmem:[%s168 + $0x7e0] sm:$0xff]
      %v687 = vld [vmem:[%s168 + $0x7e8] sm:$0xff]
      %v688 = vld [vmem:[%s168 + $0x7f0] sm:$0xff]
      %v689 = vld [vmem:[%s168 + $0x7f8] sm:$0xff]
      %v690 = vld [vmem:[%s168 + $0x800] sm:$0xff]
      %v691 = vld [vmem:[%s168 + $0x808] sm:$0xff]
      %v692 = vld [vmem:[%s168 + $0x810] sm:$0x7]
      %v693 = vld [vmem:[%s168 + $0x818] sm:$0xff]
      %v694 = vld [vmem:[%s168 + $0x820] sm:$0xff]
      %v695 = vld [vmem:[%s168 + $0x828] sm:$0xff]
      %v696 = vld [vmem:[%s168 + $0x830] sm:$0xff]
      %v697 = vld [vmem:[%s168 + $0x838] sm:$0xff]
      %v698 = vld [vmem:[%s168 + $0x840] sm:$0xff]
      %v699 = vld [vmem:[%s168 + $0x848] sm:$0x7]
      %v700 = vld [vmem:[%s168 + $0x850] sm:$0xff]
      %v701 = vld [vmem:[%s168 + $0x858] sm:$0xff]
      %v702 = vld [vmem:[%s168 + $0x860] sm:$0xff]
      %v703 = vld [vmem:[%s168 + $0x868] sm:$0xff]
      %v704 = vld [vmem:[%s168 + $0x870] sm:$0xff]
      %v705 = vld [vmem:[%s168 + $0x878] sm:$0xff]
      %v706 = vld [vmem:[%s168 + $0x880] sm:$0x7]
      %v707 = vld [vmem:[%s168 + $0x888] sm:$0xff]
      %v708 = vld [vmem:[%s168 + $0x890] sm:$0xff]
      %v709 = vld [vmem:[%s168 + $0x898] sm:$0xff]
      %v710 = vld [vmem:[%s168 + $0x8a0] sm:$0xff]
      %v711 = vld [vmem:[%s168 + $0x8a8] sm:$0xff]
      %v712 = vld [vmem:[%s168 + $0x8b0] sm:$0xff]
      %v713 = vld [vmem:[%s168 + $0x8b8] sm:$0x7]
      %v714 = vld [vmem:[%s168 + $0x8c0] sm:$0xff]
      %v715 = vld [vmem:[%s168 + $0x8c8] sm:$0xff]
      %v716 = vld [vmem:[%s168 + $0x8d0] sm:$0xff]
      %v717 = vld [vmem:[%s168 + $0x8d8] sm:$0xff]
      %v718 = vld [vmem:[%s168 + $0x8e0] sm:$0xff]
      %v719 = vld [vmem:[%s168 + $0x8e8] sm:$0xff]
      %v720 = vld [vmem:[%s168 + $0x8f0] sm:$0x7]
      %v721 = vld [vmem:[%s168 + $0x8f8] sm:$0xff]
      %v722 = vld [vmem:[%s168 + $0x900] sm:$0xff]
      %v723 = vld [vmem:[%s168 + $0x908] sm:$0xff]
      %v724 = vld [vmem:[%s168 + $0x910] sm:$0xff]
      %v725 = vld [vmem:[%s168 + $0x918] sm:$0xff]
      %v726 = vld [vmem:[%s168 + $0x920] sm:$0xff]
      %v727 = vld [vmem:[%s168 + $0x928] sm:$0x7]
      %v728 = vld [vmem:[%s168 + $0x930] sm:$0xff]
      %v729 = vld [vmem:[%s168 + $0x938] sm:$0xff]
      %v730 = vld [vmem:[%s168 + $0x940] sm:$0xff]
      %v731 = vld [vmem:[%s168 + $0x948] sm:$0xff]
      %v732 = vld [vmem:[%s168 + $0x950] sm:$0xff]
      %v733 = vld [vmem:[%s168 + $0x958] sm:$0xff]
      %v734 = vld [vmem:[%s168 + $0x960] sm:$0x7]
      %v735 = vld [vmem:[%s168 + $0x968] sm:$0xff]
      %v736 = vld [vmem:[%s168 + $0x970] sm:$0xff]
      %v737 = vld [vmem:[%s168 + $0x978] sm:$0xff]
      %v738 = vld [vmem:[%s168 + $0x980] sm:$0xff]
      %v739 = vld [vmem:[%s168 + $0x988] sm:$0xff]
      %v740 = vld [vmem:[%s168 + $0x990] sm:$0xff]
      %v741 = vld [vmem:[%s168 + $0x998] sm:$0x7]
      %v742 = vld [vmem:[%s168 + $0x9a0] sm:$0xff]
      %v743 = vld [vmem:[%s168 + $0x9a8] sm:$0xff]
      %v744 = vld [vmem:[%s168 + $0x9b0] sm:$0xff]
      %v745 = vld [vmem:[%s168 + $0x9b8] sm:$0xff]
      %v746 = vld [vmem:[%s168 + $0x9c0] sm:$0xff]
      %v747 = vld [vmem:[%s168 + $0x9c8] sm:$0xff]
      %v748 = vld [vmem:[%s168 + $0x9d0] sm:$0x7]
      %v749 = vld [vmem:[%s168 + $0x9d8] sm:$0xff]
      %v750 = vld [vmem:[%s168 + $0x9e0] sm:$0xff]
      %v751 = vld [vmem:[%s168 + $0x9e8] sm:$0xff]
      %v752 = vld [vmem:[%s168 + $0x9f0] sm:$0xff]
      %v753 = vld [vmem:[%s168 + $0x9f8] sm:$0xff]
      %v754 = vld [vmem:[%s168 + $0xa00] sm:$0xff]
      %v755 = vld [vmem:[%s168 + $0xa08] sm:$0x7]
      %v756 = vld [vmem:[%s168 + $0xa10] sm:$0xff]
      %v757 = vld [vmem:[%s168 + $0xa18] sm:$0xff]
      %v758 = vld [vmem:[%s168 + $0xa20] sm:$0xff]
      %v759 = vld [vmem:[%s168 + $0xa28] sm:$0xff]
      %v760 = vld [vmem:[%s168 + $0xa30] sm:$0xff]
      %v761 = vld [vmem:[%s168 + $0xa38] sm:$0xff]
      %v762 = vld [vmem:[%s168 + $0xa40] sm:$0x7]
      %v763 = vld [vmem:[%s168 + $0xa48] sm:$0xff]
      %v764 = vld [vmem:[%s168 + $0xa50] sm:$0xff]
      %v765 = vld [vmem:[%s168 + $0xa58] sm:$0xff]
      %v766 = vld [vmem:[%s168 + $0xa60] sm:$0xff]
      %v767 = vld [vmem:[%s168 + $0xa68] sm:$0xff]
      %v768 = vld [vmem:[%s168 + $0xa70] sm:$0xff]
      %v769 = vld [vmem:[%s168 + $0xa78] sm:$0x7]
      %v770 = vld [vmem:[%s168 + $0xa80] sm:$0xff]
      %v771 = vld [vmem:[%s168 + $0xa88] sm:$0xff]
      %v772 = vld [vmem:[%s168 + $0xa90] sm:$0xff]
      %v773 = vld [vmem:[%s168 + $0xa98] sm:$0xff]
      %v774 = vld [vmem:[%s168 + $0xaa0] sm:$0xff]
      %v775 = vld [vmem:[%s168 + $0xaa8] sm:$0xff]
      %v776 = vld [vmem:[%s168 + $0xab0] sm:$0x7]
      %v777 = vld [vmem:[%s168 + $0xab8] sm:$0xff]
      %v778 = vld [vmem:[%s168 + $0xac0] sm:$0xff]
      %v779 = vld [vmem:[%s168 + $0xac8] sm:$0xff]
      %v780 = vld [vmem:[%s168 + $0xad0] sm:$0xff]
      %v781 = vld [vmem:[%s168 + $0xad8] sm:$0xff]
      %v782 = vld [vmem:[%s168 + $0xae0] sm:$0xff]
      %v783 = vld [vmem:[%s168 + $0xae8] sm:$0x7]
      %v784 = vld [vmem:[%s168 + $0xaf0] sm:$0xff]
      %v785 = vld [vmem:[%s168 + $0xaf8] sm:$0xff]
      %v786 = vld [vmem:[%s168 + $0xb00] sm:$0xff]
      %v787 = vld [vmem:[%s168 + $0xb08] sm:$0xff]
      %v788 = vld [vmem:[%s168 + $0xb10] sm:$0xff]
      %v789 = vld [vmem:[%s168 + $0xb18] sm:$0xff]
      %v790 = vld [vmem:[%s168 + $0xb20] sm:$0x7]
      %v791 = vld [vmem:[%s168 + $0xb28] sm:$0xff]
      %v792 = vld [vmem:[%s168 + $0xb30] sm:$0xff]
      %v793 = vld [vmem:[%s168 + $0xb38] sm:$0xff]
      %v794 = vld [vmem:[%s168 + $0xb40] sm:$0xff]
      %v795 = vld [vmem:[%s168 + $0xb48] sm:$0xff]
      %v796 = vld [vmem:[%s168 + $0xb50] sm:$0xff]
      %v797 = vld [vmem:[%s168 + $0xb58] sm:$0x7]
      %v798 = vld [vmem:[%s168 + $0xb60] sm:$0xff]
      %v799 = vld [vmem:[%s168 + $0xb68] sm:$0xff]
      %v800 = vld [vmem:[%s168 + $0xb70] sm:$0xff]
      %v801 = vld [vmem:[%s168 + $0xb78] sm:$0xff]
      %v802 = vld [vmem:[%s168 + $0xb80] sm:$0xff]
      %v803 = vld [vmem:[%s168 + $0xb88] sm:$0xff]
      %v804 = vld [vmem:[%s168 + $0xb90] sm:$0x7]
      %v805 = vld [vmem:[%s168 + $0xb98] sm:$0xff]
      %v806 = vld [vmem:[%s168 + $0xba0] sm:$0xff]
      %v807 = vld [vmem:[%s168 + $0xba8] sm:$0xff]
      %v808 = vld [vmem:[%s168 + $0xbb0] sm:$0xff]
      %v809 = vld [vmem:[%s168 + $0xbb8] sm:$0xff]
      %v810 = vld [vmem:[%s168 + $0xbc0] sm:$0xff]
      %v811 = vld [vmem:[%s168 + $0xbc8] sm:$0x7]
      %v812 = vld [vmem:[%s168 + $0xbd0] sm:$0xff]
      %v813 = vld [vmem:[%s168 + $0xbd8] sm:$0xff]
      %v814 = vld [vmem:[%s168 + $0xbe0] sm:$0xff]
      %v815 = vld [vmem:[%s168 + $0xbe8] sm:$0xff]
      %v816 = vld [vmem:[%s168 + $0xbf0] sm:$0xff]
      %v817 = vld [vmem:[%s168 + $0xbf8] sm:$0xff]
      %v818 = vld [vmem:[%s168 + $0xc00] sm:$0x7]
      %v819 = vld [vmem:[%s168 + $0xc08] sm:$0xff]
      %v820 = vld [vmem:[%s168 + $0xc10] sm:$0xff]
      %v821 = vld [vmem:[%s168 + $0xc18] sm:$0xff]
      %v822 = vld [vmem:[%s168 + $0xc20] sm:$0xff]
      %v823 = vld [vmem:[%s168 + $0xc28] sm:$0xff]
      %v824 = vld [vmem:[%s168 + $0xc30] sm:$0xff]
      %v825 = vld [vmem:[%s168 + $0xc38] sm:$0x7]
      %v826 = vld [vmem:[%s168 + $0xc40] sm:$0xff]
      %v827 = vld [vmem:[%s168 + $0xc48] sm:$0xff]
      %v828 = vld [vmem:[%s168 + $0xc50] sm:$0xff]
      %v829 = vld [vmem:[%s168 + $0xc58] sm:$0xff]
      %v830 = vld [vmem:[%s168 + $0xc60] sm:$0xff]
      %v831 = vld [vmem:[%s168 + $0xc68] sm:$0xff]
      %v832 = vld [vmem:[%s168 + $0xc70] sm:$0x7]
      %v833 = vld [vmem:[%s168 + $0xc78] sm:$0xff]
      %v834 = vld [vmem:[%s168 + $0xc80] sm:$0xff]
      %v835 = vld [vmem:[%s168 + $0xc88] sm:$0xff]
      %v836 = vld [vmem:[%s168 + $0xc90] sm:$0xff]
      %v837 = vld [vmem:[%s168 + $0xc98] sm:$0xff]
      %v838 = vld [vmem:[%s168 + $0xca0] sm:$0xff]
      %v839 = vld [vmem:[%s168 + $0xca8] sm:$0x7]
      %v840 = vld [vmem:[%s168 + $0xcb0] sm:$0xff]
      %v841 = vld [vmem:[%s168 + $0xcb8] sm:$0xff]
      %v842 = vld [vmem:[%s168 + $0xcc0] sm:$0xff]
      %v843 = vld [vmem:[%s168 + $0xcc8] sm:$0xff]
      %v844 = vld [vmem:[%s168 + $0xcd0] sm:$0xff]
      %v845 = vld [vmem:[%s168 + $0xcd8] sm:$0xff]
      %v846 = vld [vmem:[%s168 + $0xce0] sm:$0x7]
      %v847 = vld [vmem:[%s168 + $0xce8] sm:$0xff]
      %v848 = vld [vmem:[%s168 + $0xcf0] sm:$0xff]
      %v849 = vld [vmem:[%s168 + $0xcf8] sm:$0xff]
      %v850 = vld [vmem:[%s168 + $0xd00] sm:$0xff]
      %v851 = vld [vmem:[%s168 + $0xd08] sm:$0xff]
      %v852 = vld [vmem:[%s168 + $0xd10] sm:$0xff]
      %v853 = vld [vmem:[%s168 + $0xd18] sm:$0x7]
      %v854 = vld [vmem:[%s168 + $0xd20] sm:$0xff]
      %v855 = vld [vmem:[%s168 + $0xd28] sm:$0xff]
      %v856 = vld [vmem:[%s168 + $0xd30] sm:$0xff]
      %v857 = vld [vmem:[%s168 + $0xd38] sm:$0xff]
      %v858 = vld [vmem:[%s168 + $0xd40] sm:$0xff]
      %v859 = vld [vmem:[%s168 + $0xd48] sm:$0xff]
      %v860 = vld [vmem:[%s168 + $0xd50] sm:$0x7]
      %v861 = vld [vmem:[%s168 + $0xd58] sm:$0xff]
      %v862 = vld [vmem:[%s168 + $0xd60] sm:$0xff]
      %v863 = vld [vmem:[%s168 + $0xd68] sm:$0xff]
      %v864 = vld [vmem:[%s168 + $0xd70] sm:$0xff]
      %v865 = vld [vmem:[%s168 + $0xd78] sm:$0xff]
      %v866 = vld [vmem:[%s168 + $0xd80] sm:$0xff]
      %v867 = vld [vmem:[%s168 + $0xd88] sm:$0x7]
      %v868 = vld [vmem:[%s168 + $0xd90] sm:$0xff]
      %v869 = vld [vmem:[%s168 + $0xd98] sm:$0xff]
      %v870 = vld [vmem:[%s168 + $0xda0] sm:$0xff]
      %v871 = vld [vmem:[%s168 + $0xda8] sm:$0xff]
      %v872 = vld [vmem:[%s168 + $0xdb0] sm:$0xff]
      %v873 = vld [vmem:[%s168 + $0xdb8] sm:$0xff]
      %v874 = vld [vmem:[%s168 + $0xdc0] sm:$0x7]
      %v875 = vld [vmem:[%s168 + $0xdc8] sm:$0xff]
      %v876 = vld [vmem:[%s168 + $0xdd0] sm:$0xff]
      %v877 = vld [vmem:[%s168 + $0xdd8] sm:$0xff]
      %v878 = vld [vmem:[%s168 + $0xde0] sm:$0xff]
      %v879 = vld [vmem:[%s168 + $0xde8] sm:$0xff]
      %v880 = vld [vmem:[%s168 + $0xdf0] sm:$0xff]
      %v881 = vld [vmem:[%s168 + $0xdf8] sm:$0x7]
      %v882 = vpack.c.bf16 %v434, %v434
      %v883 = vpack.c.bf16 %v435, %v435
      %v884 = vpack.c.bf16 %v436, %v436
      %v885 = vpack.c.bf16 %v437, %v437
      %v886 = vpack.c.bf16 %v438, %v438
      %v887 = vpack.c.bf16 %v439, %v439
      %v888 = vpack.c.bf16 %v440, %v440
      %v889 = vpack.c.bf16 %v441, %v441
      %v890 = vpack.c.bf16 %v442, %v442
      %v891 = vpack.c.bf16 %v443, %v443
      %v892 = vpack.c.bf16 %v444, %v444
      %v893 = vpack.c.bf16 %v445, %v445
      %v894 = vpack.c.bf16 %v446, %v446
      %v895 = vpack.c.bf16 %v447, %v447
      %v896 = vpack.c.bf16 %v448, %v448
      %v897 = vpack.c.bf16 %v449, %v449
      %v898 = vpack.c.bf16 %v450, %v450
      %v899 = vpack.c.bf16 %v451, %v451
      %v900 = vpack.c.bf16 %v452, %v452
      %v901 = vpack.c.bf16 %v453, %v453
      %v902 = vpack.c.bf16 %v454, %v454
      %v903 = vpack.c.bf16 %v455, %v455
      %v904 = vpack.c.bf16 %v456, %v456
      %v905 = vpack.c.bf16 %v457, %v457
      %v906 = vpack.c.bf16 %v458, %v458
      %v907 = vpack.c.bf16 %v459, %v459
      %v908 = vpack.c.bf16 %v460, %v460
      %v909 = vpack.c.bf16 %v461, %v461
      %v910 = vpack.c.bf16 %v462, %v462
      %v911 = vpack.c.bf16 %v463, %v463
      %v912 = vpack.c.bf16 %v464, %v464
      %v913 = vpack.c.bf16 %v465, %v465
      %v914 = vpack.c.bf16 %v466, %v466
      %v915 = vpack.c.bf16 %v467, %v467
      %v916 = vpack.c.bf16 %v468, %v468
      %v917 = vpack.c.bf16 %v469, %v469
      %v918 = vpack.c.bf16 %v470, %v470
      %v919 = vpack.c.bf16 %v471, %v471
      %v920 = vpack.c.bf16 %v472, %v472
      %v921 = vpack.c.bf16 %v473, %v473
      %v922 = vpack.c.bf16 %v474, %v474
      %v923 = vpack.c.bf16 %v475, %v475
      %v924 = vpack.c.bf16 %v476, %v476
      %v925 = vpack.c.bf16 %v477, %v477
      %v926 = vpack.c.bf16 %v478, %v478
      %v927 = vpack.c.bf16 %v479, %v479
      %v928 = vpack.c.bf16 %v480, %v480
      %v929 = vpack.c.bf16 %v481, %v481
      %v930 = vpack.c.bf16 %v482, %v482
      %v931 = vpack.c.bf16 %v483, %v483
      %v932 = vpack.c.bf16 %v484, %v484
      %v933 = vpack.c.bf16 %v485, %v485
      %v934 = vpack.c.bf16 %v486, %v486
      %v935 = vpack.c.bf16 %v487, %v487
      %v936 = vpack.c.bf16 %v488, %v488
      %v937 = vpack.c.bf16 %v489, %v489
      %v938 = vpack.c.bf16 %v490, %v490
      %v939 = vpack.c.bf16 %v491, %v491
      %v940 = vpack.c.bf16 %v492, %v492
      %v941 = vpack.c.bf16 %v493, %v493
      %v942 = vpack.c.bf16 %v494, %v494
      %v943 = vpack.c.bf16 %v495, %v495
      %v944 = vpack.c.bf16 %v496, %v496
      %v945 = vpack.c.bf16 %v497, %v497
      %v946 = vpack.c.bf16 %v498, %v498
      %v947 = vpack.c.bf16 %v499, %v499
      %v948 = vpack.c.bf16 %v500, %v500
      %v949 = vpack.c.bf16 %v501, %v501
      %v950 = vpack.c.bf16 %v502, %v502
      %v951 = vpack.c.bf16 %v503, %v503
      %v952 = vpack.c.bf16 %v504, %v504
      %v953 = vpack.c.bf16 %v505, %v505
      %v954 = vpack.c.bf16 %v506, %v506
      %v955 = vpack.c.bf16 %v507, %v507
      %v956 = vpack.c.bf16 %v508, %v508
      %v957 = vpack.c.bf16 %v509, %v509
      %v958 = vpack.c.bf16 %v510, %v510
      %v959 = vpack.c.bf16 %v511, %v511
      %v960 = vpack.c.bf16 %v512, %v512
      %v961 = vpack.c.bf16 %v513, %v513
      %v962 = vpack.c.bf16 %v514, %v514
      %v963 = vpack.c.bf16 %v515, %v515
      %v964 = vpack.c.bf16 %v516, %v516
      %v965 = vpack.c.bf16 %v517, %v517
      %v966 = vpack.c.bf16 %v518, %v518
      %v967 = vpack.c.bf16 %v519, %v519
      %v968 = vpack.c.bf16 %v520, %v520
      %v969 = vpack.c.bf16 %v521, %v521
      %v970 = vpack.c.bf16 %v522, %v522
      %v971 = vpack.c.bf16 %v523, %v523
      %v972 = vpack.c.bf16 %v524, %v524
      %v973 = vpack.c.bf16 %v525, %v525
      %v974 = vpack.c.bf16 %v526, %v526
      %v975 = vpack.c.bf16 %v527, %v527
      %v976 = vpack.c.bf16 %v528, %v528
      %v977 = vpack.c.bf16 %v529, %v529
      %v978 = vpack.c.bf16 %v530, %v530
      %v979 = vpack.c.bf16 %v531, %v531
      %v980 = vpack.c.bf16 %v532, %v532
      %v981 = vpack.c.bf16 %v533, %v533
      %v982 = vpack.c.bf16 %v534, %v534
      %v983 = vpack.c.bf16 %v535, %v535
      %v984 = vpack.c.bf16 %v536, %v536
      %v985 = vpack.c.bf16 %v537, %v537
      %v986 = vpack.c.bf16 %v538, %v538
      %v987 = vpack.c.bf16 %v539, %v539
      %v988 = vpack.c.bf16 %v540, %v540
      %v989 = vpack.c.bf16 %v541, %v541
      %v990 = vpack.c.bf16 %v542, %v542
      %v991 = vpack.c.bf16 %v543, %v543
      %v992 = vpack.c.bf16 %v544, %v544
      %v993 = vpack.c.bf16 %v545, %v545
      %v994 = vpack.c.bf16 %v546, %v546
      %v995 = vpack.c.bf16 %v547, %v547
      %v996 = vpack.c.bf16 %v548, %v548
      %v997 = vpack.c.bf16 %v549, %v549
      %v998 = vpack.c.bf16 %v550, %v550
      %v999 = vpack.c.bf16 %v551, %v551
      %v1000 = vpack.c.bf16 %v552, %v552
      %v1001 = vpack.c.bf16 %v553, %v553
      %v1002 = vpack.c.bf16 %v554, %v554
      %v1003 = vpack.c.bf16 %v555, %v555
      %v1004 = vpack.c.bf16 %v556, %v556
      %v1005 = vpack.c.bf16 %v557, %v557
      %v1006 = vpack.c.bf16 %v558, %v558
      %v1007 = vpack.c.bf16 %v559, %v559
      %v1008 = vpack.c.bf16 %v560, %v560
      %v1009 = vpack.c.bf16 %v561, %v561
      %v1010 = vpack.c.bf16 %v562, %v562
      %v1011 = vpack.c.bf16 %v563, %v563
      %v1012 = vpack.c.bf16 %v564, %v564
      %v1013 = vpack.c.bf16 %v565, %v565
      %v1014 = vpack.c.bf16 %v566, %v566
      %v1015 = vpack.c.bf16 %v567, %v567
      %v1016 = vpack.c.bf16 %v568, %v568
      %v1017 = vpack.c.bf16 %v569, %v569
      %v1018 = vpack.c.bf16 %v570, %v570
      %v1019 = vpack.c.bf16 %v571, %v571
      %v1020 = vpack.c.bf16 %v572, %v572
      %v1021 = vpack.c.bf16 %v573, %v573
      %v1022 = vpack.c.bf16 %v574, %v574
      %v1023 = vpack.c.bf16 %v575, %v575
      %v1024 = vpack.c.bf16 %v576, %v576
      %v1025 = vpack.c.bf16 %v577, %v577
      %v1026 = vpack.c.bf16 %v578, %v578
      %v1027 = vpack.c.bf16 %v579, %v579
      %v1028 = vpack.c.bf16 %v580, %v580
      %v1029 = vpack.c.bf16 %v581, %v581
      %v1030 = vpack.c.bf16 %v582, %v582
      %v1031 = vpack.c.bf16 %v583, %v583
      %v1032 = vpack.c.bf16 %v584, %v584
      %v1033 = vpack.c.bf16 %v585, %v585
      %v1034 = vpack.c.bf16 %v586, %v586
      %v1035 = vpack.c.bf16 %v587, %v587
      %v1036 = vpack.c.bf16 %v588, %v588
      %v1037 = vpack.c.bf16 %v589, %v589
      %v1038 = vpack.c.bf16 %v590, %v590
      %v1039 = vpack.c.bf16 %v591, %v591
      %v1040 = vpack.c.bf16 %v592, %v592
      %v1041 = vpack.c.bf16 %v593, %v593
      %v1042 = vpack.c.bf16 %v594, %v594
      %v1043 = vpack.c.bf16 %v595, %v595
      %v1044 = vpack.c.bf16 %v596, %v596
      %v1045 = vpack.c.bf16 %v597, %v597
      %v1046 = vpack.c.bf16 %v598, %v598
      %v1047 = vpack.c.bf16 %v599, %v599
      %v1048 = vpack.c.bf16 %v600, %v600
      %v1049 = vpack.c.bf16 %v601, %v601
      %v1050 = vpack.c.bf16 %v602, %v602
      %v1051 = vpack.c.bf16 %v603, %v603
      %v1052 = vpack.c.bf16 %v604, %v604
      %v1053 = vpack.c.bf16 %v605, %v605
      %v1054 = vpack.c.bf16 %v606, %v606
      %v1055 = vpack.c.bf16 %v607, %v607
      %v1056 = vpack.c.bf16 %v608, %v608
      %v1057 = vpack.c.bf16 %v609, %v609
      %v1058 = vpack.c.bf16 %v610, %v610
      %v1059 = vpack.c.bf16 %v611, %v611
      %v1060 = vpack.c.bf16 %v612, %v612
      %v1061 = vpack.c.bf16 %v613, %v613
      %v1062 = vpack.c.bf16 %v614, %v614
      %v1063 = vpack.c.bf16 %v615, %v615
      %v1064 = vpack.c.bf16 %v616, %v616
      %v1065 = vpack.c.bf16 %v617, %v617
      %v1066 = vpack.c.bf16 %v618, %v618
      %v1067 = vpack.c.bf16 %v619, %v619
      %v1068 = vpack.c.bf16 %v620, %v620
      %v1069 = vpack.c.bf16 %v621, %v621
      %v1070 = vpack.c.bf16 %v622, %v622
      %v1071 = vpack.c.bf16 %v623, %v623
      %v1072 = vpack.c.bf16 %v624, %v624
      %v1073 = vpack.c.bf16 %v625, %v625
      %v1074 = vpack.c.bf16 %v626, %v626
      %v1075 = vpack.c.bf16 %v627, %v627
      %v1076 = vpack.c.bf16 %v628, %v628
      %v1077 = vpack.c.bf16 %v629, %v629
      %v1078 = vpack.c.bf16 %v630, %v630
      %v1079 = vpack.c.bf16 %v631, %v631
      %v1080 = vpack.c.bf16 %v632, %v632
      %v1081 = vpack.c.bf16 %v633, %v633
      %v1082 = vpack.c.bf16 %v634, %v634
      %v1083 = vpack.c.bf16 %v635, %v635
      %v1084 = vpack.c.bf16 %v636, %v636
      %v1085 = vpack.c.bf16 %v637, %v637
      %v1086 = vpack.c.bf16 %v638, %v638
      %v1087 = vpack.c.bf16 %v639, %v639
      %v1088 = vpack.c.bf16 %v640, %v640
      %v1089 = vpack.c.bf16 %v641, %v641
      %v1090 = vpack.c.bf16 %v642, %v642
      %v1091 = vpack.c.bf16 %v643, %v643
      %v1092 = vpack.c.bf16 %v644, %v644
      %v1093 = vpack.c.bf16 %v645, %v645
      %v1094 = vpack.c.bf16 %v646, %v646
      %v1095 = vpack.c.bf16 %v647, %v647
      %v1096 = vpack.c.bf16 %v648, %v648
      %v1097 = vpack.c.bf16 %v649, %v649
      %v1098 = vpack.c.bf16 %v650, %v650
      %v1099 = vpack.c.bf16 %v651, %v651
      %v1100 = vpack.c.bf16 %v652, %v652
      %v1101 = vpack.c.bf16 %v653, %v653
      %v1102 = vpack.c.bf16 %v654, %v654
      %v1103 = vpack.c.bf16 %v655, %v655
      %v1104 = vpack.c.bf16 %v656, %v656
      %v1105 = vpack.c.bf16 %v657, %v657
      %v1106 = vpack.c.bf16 %v658, %v658
      %v1107 = vpack.c.bf16 %v659, %v659
      %v1108 = vpack.c.bf16 %v660, %v660
      %v1109 = vpack.c.bf16 %v661, %v661
      %v1110 = vpack.c.bf16 %v662, %v662
      %v1111 = vpack.c.bf16 %v663, %v663
      %v1112 = vpack.c.bf16 %v664, %v664
      %v1113 = vpack.c.bf16 %v665, %v665
      %v1114 = vpack.c.bf16 %v666, %v666
      %v1115 = vpack.c.bf16 %v667, %v667
      %v1116 = vpack.c.bf16 %v668, %v668
      %v1117 = vpack.c.bf16 %v669, %v669
      %v1118 = vpack.c.bf16 %v670, %v670
      %v1119 = vpack.c.bf16 %v671, %v671
      %v1120 = vpack.c.bf16 %v672, %v672
      %v1121 = vpack.c.bf16 %v673, %v673
      %v1122 = vpack.c.bf16 %v674, %v674
      %v1123 = vpack.c.bf16 %v675, %v675
      %v1124 = vpack.c.bf16 %v676, %v676
      %v1125 = vpack.c.bf16 %v677, %v677
      %v1126 = vpack.c.bf16 %v678, %v678
      %v1127 = vpack.c.bf16 %v679, %v679
      %v1128 = vpack.c.bf16 %v680, %v680
      %v1129 = vpack.c.bf16 %v681, %v681
      %v1130 = vpack.c.bf16 %v682, %v682
      %v1131 = vpack.c.bf16 %v683, %v683
      %v1132 = vpack.c.bf16 %v684, %v684
      %v1133 = vpack.c.bf16 %v685, %v685
      %v1134 = vpack.c.bf16 %v686, %v686
      %v1135 = vpack.c.bf16 %v687, %v687
      %v1136 = vpack.c.bf16 %v688, %v688
      %v1137 = vpack.c.bf16 %v689, %v689
      %v1138 = vpack.c.bf16 %v690, %v690
      %v1139 = vpack.c.bf16 %v691, %v691
      %v1140 = vpack.c.bf16 %v692, %v692
      %v1141 = vpack.c.bf16 %v693, %v693
      %v1142 = vpack.c.bf16 %v694, %v694
      %v1143 = vpack.c.bf16 %v695, %v695
      %v1144 = vpack.c.bf16 %v696, %v696
      %v1145 = vpack.c.bf16 %v697, %v697
      %v1146 = vpack.c.bf16 %v698, %v698
      %v1147 = vpack.c.bf16 %v699, %v699
      %v1148 = vpack.c.bf16 %v700, %v700
      %v1149 = vpack.c.bf16 %v701, %v701
      %v1150 = vpack.c.bf16 %v702, %v702
      %v1151 = vpack.c.bf16 %v703, %v703
      %v1152 = vpack.c.bf16 %v704, %v704
      %v1153 = vpack.c.bf16 %v705, %v705
      %v1154 = vpack.c.bf16 %v706, %v706
      %v1155 = vpack.c.bf16 %v707, %v707
      %v1156 = vpack.c.bf16 %v708, %v708
      %v1157 = vpack.c.bf16 %v709, %v709
      %v1158 = vpack.c.bf16 %v710, %v710
      %v1159 = vpack.c.bf16 %v711, %v711
      %v1160 = vpack.c.bf16 %v712, %v712
      %v1161 = vpack.c.bf16 %v713, %v713
      %v1162 = vpack.c.bf16 %v714, %v714
      %v1163 = vpack.c.bf16 %v715, %v715
      %v1164 = vpack.c.bf16 %v716, %v716
      %v1165 = vpack.c.bf16 %v717, %v717
      %v1166 = vpack.c.bf16 %v718, %v718
      %v1167 = vpack.c.bf16 %v719, %v719
      %v1168 = vpack.c.bf16 %v720, %v720
      %v1169 = vpack.c.bf16 %v721, %v721
      %v1170 = vpack.c.bf16 %v722, %v722
      %v1171 = vpack.c.bf16 %v723, %v723
      %v1172 = vpack.c.bf16 %v724, %v724
      %v1173 = vpack.c.bf16 %v725, %v725
      %v1174 = vpack.c.bf16 %v726, %v726
      %v1175 = vpack.c.bf16 %v727, %v727
      %v1176 = vpack.c.bf16 %v728, %v728
      %v1177 = vpack.c.bf16 %v729, %v729
      %v1178 = vpack.c.bf16 %v730, %v730
      %v1179 = vpack.c.bf16 %v731, %v731
      %v1180 = vpack.c.bf16 %v732, %v732
      %v1181 = vpack.c.bf16 %v733, %v733
      %v1182 = vpack.c.bf16 %v734, %v734
      %v1183 = vpack.c.bf16 %v735, %v735
      %v1184 = vpack.c.bf16 %v736, %v736
      %v1185 = vpack.c.bf16 %v737, %v737
      %v1186 = vpack.c.bf16 %v738, %v738
      %v1187 = vpack.c.bf16 %v739, %v739
      %v1188 = vpack.c.bf16 %v740, %v740
      %v1189 = vpack.c.bf16 %v741, %v741
      %v1190 = vpack.c.bf16 %v742, %v742
      %v1191 = vpack.c.bf16 %v743, %v743
      %v1192 = vpack.c.bf16 %v744, %v744
      %v1193 = vpack.c.bf16 %v745, %v745
      %v1194 = vpack.c.bf16 %v746, %v746
      %v1195 = vpack.c.bf16 %v747, %v747
      %v1196 = vpack.c.bf16 %v748, %v748
      %v1197 = vpack.c.bf16 %v749, %v749
      %v1198 = vpack.c.bf16 %v750, %v750
      %v1199 = vpack.c.bf16 %v751, %v751
      %v1200 = vpack.c.bf16 %v752, %v752
      %v1201 = vpack.c.bf16 %v753, %v753
      %v1202 = vpack.c.bf16 %v754, %v754
      %v1203 = vpack.c.bf16 %v755, %v755
      %v1204 = vpack.c.bf16 %v756, %v756
      %v1205 = vpack.c.bf16 %v757, %v757
      %v1206 = vpack.c.bf16 %v758, %v758
      %v1207 = vpack.c.bf16 %v759, %v759
      %v1208 = vpack.c.bf16 %v760, %v760
      %v1209 = vpack.c.bf16 %v761, %v761
      %v1210 = vpack.c.bf16 %v762, %v762
      %v1211 = vpack.c.bf16 %v763, %v763
      %v1212 = vpack.c.bf16 %v764, %v764
      %v1213 = vpack.c.bf16 %v765, %v765
      %v1214 = vpack.c.bf16 %v766, %v766
      %v1215 = vpack.c.bf16 %v767, %v767
      %v1216 = vpack.c.bf16 %v768, %v768
      %v1217 = vpack.c.bf16 %v769, %v769
      %v1218 = vpack.c.bf16 %v770, %v770
      %v1219 = vpack.c.bf16 %v771, %v771
      %v1220 = vpack.c.bf16 %v772, %v772
      %v1221 = vpack.c.bf16 %v773, %v773
      %v1222 = vpack.c.bf16 %v774, %v774
      %v1223 = vpack.c.bf16 %v775, %v775
      %v1224 = vpack.c.bf16 %v776, %v776
      %v1225 = vpack.c.bf16 %v777, %v777
      %v1226 = vpack.c.bf16 %v778, %v778
      %v1227 = vpack.c.bf16 %v779, %v779
      %v1228 = vpack.c.bf16 %v780, %v780
      %v1229 = vpack.c.bf16 %v781, %v781
      %v1230 = vpack.c.bf16 %v782, %v782
      %v1231 = vpack.c.bf16 %v783, %v783
      %v1232 = vpack.c.bf16 %v784, %v784
      %v1233 = vpack.c.bf16 %v785, %v785
      %v1234 = vpack.c.bf16 %v786, %v786
      %v1235 = vpack.c.bf16 %v787, %v787
      %v1236 = vpack.c.bf16 %v788, %v788
      %v1237 = vpack.c.bf16 %v789, %v789
      %v1238 = vpack.c.bf16 %v790, %v790
      %v1239 = vpack.c.bf16 %v791, %v791
      %v1240 = vpack.c.bf16 %v792, %v792
      %v1241 = vpack.c.bf16 %v793, %v793
      %v1242 = vpack.c.bf16 %v794, %v794
      %v1243 = vpack.c.bf16 %v795, %v795
      %v1244 = vpack.c.bf16 %v796, %v796
      %v1245 = vpack.c.bf16 %v797, %v797
      %v1246 = vpack.c.bf16 %v798, %v798
      %v1247 = vpack.c.bf16 %v799, %v799
      %v1248 = vpack.c.bf16 %v800, %v800
      %v1249 = vpack.c.bf16 %v801, %v801
      %v1250 = vpack.c.bf16 %v802, %v802
      %v1251 = vpack.c.bf16 %v803, %v803
      %v1252 = vpack.c.bf16 %v804, %v804
      %v1253 = vpack.c.bf16 %v805, %v805
      %v1254 = vpack.c.bf16 %v806, %v806
      %v1255 = vpack.c.bf16 %v807, %v807
      %v1256 = vpack.c.bf16 %v808, %v808
      %v1257 = vpack.c.bf16 %v809, %v809
      %v1258 = vpack.c.bf16 %v810, %v810
      %v1259 = vpack.c.bf16 %v811, %v811
      %v1260 = vpack.c.bf16 %v812, %v812
      %v1261 = vpack.c.bf16 %v813, %v813
      %v1262 = vpack.c.bf16 %v814, %v814
      %v1263 = vpack.c.bf16 %v815, %v815
      %v1264 = vpack.c.bf16 %v816, %v816
      %v1265 = vpack.c.bf16 %v817, %v817
      %v1266 = vpack.c.bf16 %v818, %v818
      %v1267 = vpack.c.bf16 %v819, %v819
      %v1268 = vpack.c.bf16 %v820, %v820
      %v1269 = vpack.c.bf16 %v821, %v821
      %v1270 = vpack.c.bf16 %v822, %v822
      %v1271 = vpack.c.bf16 %v823, %v823
      %v1272 = vpack.c.bf16 %v824, %v824
      %v1273 = vpack.c.bf16 %v825, %v825
      %v1274 = vpack.c.bf16 %v826, %v826
      %v1275 = vpack.c.bf16 %v827, %v827
      %v1276 = vpack.c.bf16 %v828, %v828
      %v1277 = vpack.c.bf16 %v829, %v829
      %v1278 = vpack.c.bf16 %v830, %v830
      %v1279 = vpack.c.bf16 %v831, %v831
      %v1280 = vpack.c.bf16 %v832, %v832
      %v1281 = vpack.c.bf16 %v833, %v833
      %v1282 = vpack.c.bf16 %v834, %v834
      %v1283 = vpack.c.bf16 %v835, %v835
      %v1284 = vpack.c.bf16 %v836, %v836
      %v1285 = vpack.c.bf16 %v837, %v837
      %v1286 = vpack.c.bf16 %v838, %v838
      %v1287 = vpack.c.bf16 %v839, %v839
      %v1288 = vpack.c.bf16 %v840, %v840
      %v1289 = vpack.c.bf16 %v841, %v841
      %v1290 = vpack.c.bf16 %v842, %v842
      %v1291 = vpack.c.bf16 %v843, %v843
      %v1292 = vpack.c.bf16 %v844, %v844
      %v1293 = vpack.c.bf16 %v845, %v845
      %v1294 = vpack.c.bf16 %v846, %v846
      %v1295 = vpack.c.bf16 %v847, %v847
      %v1296 = vpack.c.bf16 %v848, %v848
      %v1297 = vpack.c.bf16 %v849, %v849
      %v1298 = vpack.c.bf16 %v850, %v850
      %v1299 = vpack.c.bf16 %v851, %v851
      %v1300 = vpack.c.bf16 %v852, %v852
      %v1301 = vpack.c.bf16 %v853, %v853
      %v1302 = vpack.c.bf16 %v854, %v854
      %v1303 = vpack.c.bf16 %v855, %v855
      %v1304 = vpack.c.bf16 %v856, %v856
      %v1305 = vpack.c.bf16 %v857, %v857
      %v1306 = vpack.c.bf16 %v858, %v858
      %v1307 = vpack.c.bf16 %v859, %v859
      %v1308 = vpack.c.bf16 %v860, %v860
      %v1309 = vpack.c.bf16 %v861, %v861
      %v1310 = vpack.c.bf16 %v862, %v862
      %v1311 = vpack.c.bf16 %v863, %v863
      %v1312 = vpack.c.bf16 %v864, %v864
      %v1313 = vpack.c.bf16 %v865, %v865
      %v1314 = vpack.c.bf16 %v866, %v866
      %v1315 = vpack.c.bf16 %v867, %v867
      %v1316 = vpack.c.bf16 %v868, %v868
      %v1317 = vpack.c.bf16 %v869, %v869
      %v1318 = vpack.c.bf16 %v870, %v870
      %v1319 = vpack.c.bf16 %v871, %v871
      %v1320 = vpack.c.bf16 %v872, %v872
      %v1321 = vpack.c.bf16 %v873, %v873
      %v1322 = vpack.c.bf16 %v874, %v874
      %v1323 = vpack.c.bf16 %v875, %v875
      %v1324 = vpack.c.bf16 %v876, %v876
      %v1325 = vpack.c.bf16 %v877, %v877
      %v1326 = vpack.c.bf16 %v878, %v878
      %v1327 = vpack.c.bf16 %v879, %v879
      %v1328 = vpack.c.bf16 %v880, %v880
      %v1329 = vpack.c.bf16 %v881, %v881
      %v1332 = vunpack.c.l.b16 %v306
      %v1333 = vunpack.c.l.b16 %v307
      %v1334 = vpack.c.b16 %v1333, %v1332
      %v1342 = vunpack.c.l.b16 %v882
      %v1343 = vunpack.c.l.b16 %v883
      %v1344 = vunpack.c.l.b16 %v884
      %v1345 = vunpack.c.l.b16 %v885
      %v1346 = vunpack.c.l.b16 %v886
      %v1347 = vunpack.c.l.b16 %v887
      %v1348 = vunpack.c.l.b16 %v888
      %v1349 = vpack.c.b16 %v1343, %v1342
      %v1350 = vpack.c.b16 %v1345, %v1344
      %v1351 = vpack.c.b16 %v1347, %v1346
      %v1352 = vpack.c.b16 %v1348, %v1348
      %vm1356 = vcmask 416768
      %v1358 = vsel %vm1356, %v1334, 0
      %vm1360 = vcmask 1040384
      %vm1361 = vcmask 1041408
      %v1362 = vsel %vm1360, 4294967295, 65535
      %v1363 = vsel %vm1361, %v1362, 0
      %v1365 = vand.u32 %v1352, %v1363
      %1367 = vmatpush.bf16.msra.mxu0 0
      %1368 = vmatpush.bf16.msra.mxu0 0
      %1369 = vmatpush.bf16.msra.mxu0 0
      %1370 = vmatpush.bf16.msra.mxu0 0
      %1371 = vmatpush.bf16.msra.mxu0 %v1365
      %1372 = vmatpush.bf16.msra.mxu0 %v1351
      %1373 = vmatpush.bf16.msra.mxu0 %v1350
      %1374 = vmatpush.bf16.msra.mxu0 %v1349
      %1375 = vmatmul.bf16.gmra.mxu0 %v1358
      %v1376 = vpop.f32.mrf.mxu0
      %v1377 = vadd.f32 0.0, %v1376
      %v1378 = vpop.f32.mrf.mxu0
      %v1379 = vadd.f32 0.0, %v1378
      %1380 = vdwg.mxu0
      %v1383 = vunpack.c.l.b16 %v308
      %v1384 = vunpack.c.l.b16 %v309
      %v1385 = vpack.c.b16 %v1384, %v1383
      %v1393 = vunpack.c.l.b16 %v889
      %v1394 = vunpack.c.l.b16 %v890
      %v1395 = vunpack.c.l.b16 %v891
      %v1396 = vunpack.c.l.b16 %v892
      %v1397 = vunpack.c.l.b16 %v893
      %v1398 = vunpack.c.l.b16 %v894
      %v1399 = vunpack.c.l.b16 %v895
      %v1400 = vpack.c.b16 %v1394, %v1393
      %v1401 = vpack.c.b16 %v1396, %v1395
      %v1402 = vpack.c.b16 %v1398, %v1397
      %v1403 = vpack.c.b16 %v1399, %v1399
      %v1408 = vsel %vm1356, %v1385, 0
      %v1411 = vand.u32 %v1403, %v1363
      %1413 = vmatpush.bf16.msra.mxu0 0
      %1414 = vmatpush.bf16.msra.mxu0 0
      %1415 = vmatpush.bf16.msra.mxu0 0
      %1416 = vmatpush.bf16.msra.mxu0 0
      %1417 = vmatpush.bf16.msra.mxu0 %v1411
      %1418 = vmatpush.bf16.msra.mxu0 %v1402
      %1419 = vmatpush.bf16.msra.mxu0 %v1401
      %1420 = vmatpush.bf16.msra.mxu0 %v1400
      %1421 = vmatmul.bf16.gmra.mxu0 %v1408
      %v1422 = vpop.f32.mrf.mxu0
      %v1423 = vadd.f32 0.0, %v1422
      %v1424 = vpop.f32.mrf.mxu0
      %v1425 = vadd.f32 0.0, %v1424
      %1426 = vdwg.mxu0
      %v1429 = vunpack.c.l.b16 %v310
      %v1430 = vunpack.c.l.b16 %v311
      %v1431 = vpack.c.b16 %v1430, %v1429
      %v1439 = vunpack.c.l.b16 %v896
      %v1440 = vunpack.c.l.b16 %v897
      %v1441 = vunpack.c.l.b16 %v898
      %v1442 = vunpack.c.l.b16 %v899
      %v1443 = vunpack.c.l.b16 %v900
      %v1444 = vunpack.c.l.b16 %v901
      %v1445 = vunpack.c.l.b16 %v902
      %v1446 = vpack.c.b16 %v1440, %v1439
      %v1447 = vpack.c.b16 %v1442, %v1441
      %v1448 = vpack.c.b16 %v1444, %v1443
      %v1449 = vpack.c.b16 %v1445, %v1445
      %v1454 = vsel %vm1356, %v1431, 0
      %v1457 = vand.u32 %v1449, %v1363
      %1459 = vmatpush.bf16.msra.mxu0 0
      %1460 = vmatpush.bf16.msra.mxu0 0
      %1461 = vmatpush.bf16.msra.mxu0 0
      %1462 = vmatpush.bf16.msra.mxu0 0
      %1463 = vmatpush.bf16.msra.mxu0 %v1457
      %1464 = vmatpush.bf16.msra.mxu0 %v1448
      %1465 = vmatpush.bf16.msra.mxu0 %v1447
      %1466 = vmatpush.bf16.msra.mxu0 %v1446
      %1467 = vmatmul.bf16.gmra.mxu0 %v1454
      %v1468 = vpop.f32.mrf.mxu0
      %v1469 = vadd.f32 0.0, %v1468
      %v1470 = vpop.f32.mrf.mxu0
      %v1471 = vadd.f32 0.0, %v1470
      %1472 = vdwg.mxu0
      %v1475 = vunpack.c.l.b16 %v312
      %v1476 = vunpack.c.l.b16 %v313
      %v1477 = vpack.c.b16 %v1476, %v1475
      %v1485 = vunpack.c.l.b16 %v903
      %v1486 = vunpack.c.l.b16 %v904
      %v1487 = vunpack.c.l.b16 %v905
      %v1488 = vunpack.c.l.b16 %v906
      %v1489 = vunpack.c.l.b16 %v907
      %v1490 = vunpack.c.l.b16 %v908
      %v1491 = vunpack.c.l.b16 %v909
      %v1492 = vpack.c.b16 %v1486, %v1485
      %v1493 = vpack.c.b16 %v1488, %v1487
      %v1494 = vpack.c.b16 %v1490, %v1489
      %v1495 = vpack.c.b16 %v1491, %v1491
      %v1500 = vsel %vm1356, %v1477, 0
      %v1503 = vand.u32 %v1495, %v1363
      %1505 = vmatpush.bf16.msra.mxu0 0
      %1506 = vmatpush.bf16.msra.mxu0 0
      %1507 = vmatpush.bf16.msra.mxu0 0
      %1508 = vmatpush.bf16.msra.mxu0 0
      %1509 = vmatpush.bf16.msra.mxu0 %v1503
      %1510 = vmatpush.bf16.msra.mxu0 %v1494
      %1511 = vmatpush.bf16.msra.mxu0 %v1493
      %1512 = vmatpush.bf16.msra.mxu0 %v1492
      %1513 = vmatmul.bf16.gmra.mxu0 %v1500
      %v1514 = vpop.f32.mrf.mxu0
      %v1515 = vadd.f32 0.0, %v1514
      %v1516 = vpop.f32.mrf.mxu0
      %v1517 = vadd.f32 0.0, %v1516
      %1518 = vdwg.mxu0
      %v1521 = vunpack.c.l.b16 %v314
      %v1522 = vunpack.c.l.b16 %v315
      %v1523 = vpack.c.b16 %v1522, %v1521
      %v1531 = vunpack.c.l.b16 %v910
      %v1532 = vunpack.c.l.b16 %v911
      %v1533 = vunpack.c.l.b16 %v912
      %v1534 = vunpack.c.l.b16 %v913
      %v1535 = vunpack.c.l.b16 %v914
      %v1536 = vunpack.c.l.b16 %v915
      %v1537 = vunpack.c.l.b16 %v916
      %v1538 = vpack.c.b16 %v1532, %v1531
      %v1539 = vpack.c.b16 %v1534, %v1533
      %v1540 = vpack.c.b16 %v1536, %v1535
      %v1541 = vpack.c.b16 %v1537, %v1537
      %v1546 = vsel %vm1356, %v1523, 0
      %v1549 = vand.u32 %v1541, %v1363
      %1551 = vmatpush.bf16.msra.mxu0 0
      %1552 = vmatpush.bf16.msra.mxu0 0
      %1553 = vmatpush.bf16.msra.mxu0 0
      %1554 = vmatpush.bf16.msra.mxu0 0
      %1555 = vmatpush.bf16.msra.mxu0 %v1549
      %1556 = vmatpush.bf16.msra.mxu0 %v1540
      %1557 = vmatpush.bf16.msra.mxu0 %v1539
      %1558 = vmatpush.bf16.msra.mxu0 %v1538
      %1559 = vmatmul.bf16.gmra.mxu0 %v1546
      %v1560 = vpop.f32.mrf.mxu0
      %v1561 = vadd.f32 0.0, %v1560
      %v1562 = vpop.f32.mrf.mxu0
      %v1563 = vadd.f32 0.0, %v1562
      %1564 = vdwg.mxu0
      %v1567 = vunpack.c.l.b16 %v316
      %v1568 = vunpack.c.l.b16 %v317
      %v1569 = vpack.c.b16 %v1568, %v1567
      %v1577 = vunpack.c.l.b16 %v917
      %v1578 = vunpack.c.l.b16 %v918
      %v1579 = vunpack.c.l.b16 %v919
      %v1580 = vunpack.c.l.b16 %v920
      %v1581 = vunpack.c.l.b16 %v921
      %v1582 = vunpack.c.l.b16 %v922
      %v1583 = vunpack.c.l.b16 %v923
      %v1584 = vpack.c.b16 %v1578, %v1577
      %v1585 = vpack.c.b16 %v1580, %v1579
      %v1586 = vpack.c.b16 %v1582, %v1581
      %v1587 = vpack.c.b16 %v1583, %v1583
      %v1592 = vsel %vm1356, %v1569, 0
      %v1595 = vand.u32 %v1587, %v1363
      %1597 = vmatpush.bf16.msra.mxu0 0
      %1598 = vmatpush.bf16.msra.mxu0 0
      %1599 = vmatpush.bf16.msra.mxu0 0
      %1600 = vmatpush.bf16.msra.mxu0 0
      %1601 = vmatpush.bf16.msra.mxu0 %v1595
      %1602 = vmatpush.bf16.msra.mxu0 %v1586
      %1603 = vmatpush.bf16.msra.mxu0 %v1585
      %1604 = vmatpush.bf16.msra.mxu0 %v1584
      %1605 = vmatmul.bf16.gmra.mxu0 %v1592
      %v1606 = vpop.f32.mrf.mxu0
      %v1607 = vadd.f32 0.0, %v1606
      %v1608 = vpop.f32.mrf.mxu0
      %v1609 = vadd.f32 0.0, %v1608
      %1610 = vdwg.mxu0
      %v1613 = vunpack.c.l.b16 %v318
      %v1614 = vunpack.c.l.b16 %v319
      %v1615 = vpack.c.b16 %v1614, %v1613
      %v1623 = vunpack.c.l.b16 %v924
      %v1624 = vunpack.c.l.b16 %v925
      %v1625 = vunpack.c.l.b16 %v926
      %v1626 = vunpack.c.l.b16 %v927
      %v1627 = vunpack.c.l.b16 %v928
      %v1628 = vunpack.c.l.b16 %v929
      %v1629 = vunpack.c.l.b16 %v930
      %v1630 = vpack.c.b16 %v1624, %v1623
      %v1631 = vpack.c.b16 %v1626, %v1625
      %v1632 = vpack.c.b16 %v1628, %v1627
      %v1633 = vpack.c.b16 %v1629, %v1629
      %v1638 = vsel %vm1356, %v1615, 0
      %v1641 = vand.u32 %v1633, %v1363
      %1643 = vmatpush.bf16.msra.mxu0 0
      %1644 = vmatpush.bf16.msra.mxu0 0
      %1645 = vmatpush.bf16.msra.mxu0 0
      %1646 = vmatpush.bf16.msra.mxu0 0
      %1647 = vmatpush.bf16.msra.mxu0 %v1641
      %1648 = vmatpush.bf16.msra.mxu0 %v1632
      %1649 = vmatpush.bf16.msra.mxu0 %v1631
      %1650 = vmatpush.bf16.msra.mxu0 %v1630
      %1651 = vmatmul.bf16.gmra.mxu0 %v1638
      %v1652 = vpop.f32.mrf.mxu0
      %v1653 = vadd.f32 0.0, %v1652
      %v1654 = vpop.f32.mrf.mxu0
      %v1655 = vadd.f32 0.0, %v1654
      %1656 = vdwg.mxu0
      %v1659 = vunpack.c.l.b16 %v320
      %v1660 = vunpack.c.l.b16 %v321
      %v1661 = vpack.c.b16 %v1660, %v1659
      %v1669 = vunpack.c.l.b16 %v931
      %v1670 = vunpack.c.l.b16 %v932
      %v1671 = vunpack.c.l.b16 %v933
      %v1672 = vunpack.c.l.b16 %v934
      %v1673 = vunpack.c.l.b16 %v935
      %v1674 = vunpack.c.l.b16 %v936
      %v1675 = vunpack.c.l.b16 %v937
      %v1676 = vpack.c.b16 %v1670, %v1669
      %v1677 = vpack.c.b16 %v1672, %v1671
      %v1678 = vpack.c.b16 %v1674, %v1673
      %v1679 = vpack.c.b16 %v1675, %v1675
      %v1684 = vsel %vm1356, %v1661, 0
      %v1687 = vand.u32 %v1679, %v1363
      %1689 = vmatpush.bf16.msra.mxu0 0
      %1690 = vmatpush.bf16.msra.mxu0 0
      %1691 = vmatpush.bf16.msra.mxu0 0
      %1692 = vmatpush.bf16.msra.mxu0 0
      %1693 = vmatpush.bf16.msra.mxu0 %v1687
      %1694 = vmatpush.bf16.msra.mxu0 %v1678
      %1695 = vmatpush.bf16.msra.mxu0 %v1677
      %1696 = vmatpush.bf16.msra.mxu0 %v1676
      %1697 = vmatmul.bf16.gmra.mxu0 %v1684
      %v1698 = vpop.f32.mrf.mxu0
      %v1699 = vadd.f32 0.0, %v1698
      %v1700 = vpop.f32.mrf.mxu0
      %v1701 = vadd.f32 0.0, %v1700
      %1702 = vdwg.mxu0
      %v1705 = vunpack.c.l.b16 %v322
      %v1706 = vunpack.c.l.b16 %v323
      %v1707 = vpack.c.b16 %v1706, %v1705
      %v1715 = vunpack.c.l.b16 %v938
      %v1716 = vunpack.c.l.b16 %v939
      %v1717 = vunpack.c.l.b16 %v940
      %v1718 = vunpack.c.l.b16 %v941
      %v1719 = vunpack.c.l.b16 %v942
      %v1720 = vunpack.c.l.b16 %v943
      %v1721 = vunpack.c.l.b16 %v944
      %v1722 = vpack.c.b16 %v1716, %v1715
      %v1723 = vpack.c.b16 %v1718, %v1717
      %v1724 = vpack.c.b16 %v1720, %v1719
      %v1725 = vpack.c.b16 %v1721, %v1721
      %v1730 = vsel %vm1356, %v1707, 0
      %v1733 = vand.u32 %v1725, %v1363
      %1735 = vmatpush.bf16.msra.mxu0 0
      %1736 = vmatpush.bf16.msra.mxu0 0
      %1737 = vmatpush.bf16.msra.mxu0 0
      %1738 = vmatpush.bf16.msra.mxu0 0
      %1739 = vmatpush.bf16.msra.mxu0 %v1733
      %1740 = vmatpush.bf16.msra.mxu0 %v1724
      %1741 = vmatpush.bf16.msra.mxu0 %v1723
      %1742 = vmatpush.bf16.msra.mxu0 %v1722
      %1743 = vmatmul.bf16.gmra.mxu0 %v1730
      %v1744 = vpop.f32.mrf.mxu0
      %v1745 = vadd.f32 0.0, %v1744
      %v1746 = vpop.f32.mrf.mxu0
      %v1747 = vadd.f32 0.0, %v1746
      %1748 = vdwg.mxu0
      %v1751 = vunpack.c.l.b16 %v324
      %v1752 = vunpack.c.l.b16 %v325
      %v1753 = vpack.c.b16 %v1752, %v1751
      %v1761 = vunpack.c.l.b16 %v945
      %v1762 = vunpack.c.l.b16 %v946
      %v1763 = vunpack.c.l.b16 %v947
      %v1764 = vunpack.c.l.b16 %v948
      %v1765 = vunpack.c.l.b16 %v949
      %v1766 = vunpack.c.l.b16 %v950
      %v1767 = vunpack.c.l.b16 %v951
      %v1768 = vpack.c.b16 %v1762, %v1761
      %v1769 = vpack.c.b16 %v1764, %v1763
      %v1770 = vpack.c.b16 %v1766, %v1765
      %v1771 = vpack.c.b16 %v1767, %v1767
      %v1776 = vsel %vm1356, %v1753, 0
      %v1779 = vand.u32 %v1771, %v1363
      %1781 = vmatpush.bf16.msra.mxu0 0
      %1782 = vmatpush.bf16.msra.mxu0 0
      %1783 = vmatpush.bf16.msra.mxu0 0
      %1784 = vmatpush.bf16.msra.mxu0 0
      %1785 = vmatpush.bf16.msra.mxu0 %v1779
      %1786 = vmatpush.bf16.msra.mxu0 %v1770
      %1787 = vmatpush.bf16.msra.mxu0 %v1769
      %1788 = vmatpush.bf16.msra.mxu0 %v1768
      %1789 = vmatmul.bf16.gmra.mxu0 %v1776
      %v1790 = vpop.f32.mrf.mxu0
      %v1791 = vadd.f32 0.0, %v1790
      %v1792 = vpop.f32.mrf.mxu0
      %v1793 = vadd.f32 0.0, %v1792
      %1794 = vdwg.mxu0
      %v1797 = vunpack.c.l.b16 %v326
      %v1798 = vunpack.c.l.b16 %v327
      %v1799 = vpack.c.b16 %v1798, %v1797
      %v1807 = vunpack.c.l.b16 %v952
      %v1808 = vunpack.c.l.b16 %v953
      %v1809 = vunpack.c.l.b16 %v954
      %v1810 = vunpack.c.l.b16 %v955
      %v1811 = vunpack.c.l.b16 %v956
      %v1812 = vunpack.c.l.b16 %v957
      %v1813 = vunpack.c.l.b16 %v958
      %v1814 = vpack.c.b16 %v1808, %v1807
      %v1815 = vpack.c.b16 %v1810, %v1809
      %v1816 = vpack.c.b16 %v1812, %v1811
      %v1817 = vpack.c.b16 %v1813, %v1813
      %v1822 = vsel %vm1356, %v1799, 0
      %v1825 = vand.u32 %v1817, %v1363
      %1827 = vmatpush.bf16.msra.mxu0 0
      %1828 = vmatpush.bf16.msra.mxu0 0
      %1829 = vmatpush.bf16.msra.mxu0 0
      %1830 = vmatpush.bf16.msra.mxu0 0
      %1831 = vmatpush.bf16.msra.mxu0 %v1825
      %1832 = vmatpush.bf16.msra.mxu0 %v1816
      %1833 = vmatpush.bf16.msra.mxu0 %v1815
      %1834 = vmatpush.bf16.msra.mxu0 %v1814
      %1835 = vmatmul.bf16.gmra.mxu0 %v1822
      %v1836 = vpop.f32.mrf.mxu0
      %v1837 = vadd.f32 0.0, %v1836
      %v1838 = vpop.f32.mrf.mxu0
      %v1839 = vadd.f32 0.0, %v1838
      %1840 = vdwg.mxu0
      %v1843 = vunpack.c.l.b16 %v328
      %v1844 = vunpack.c.l.b16 %v329
      %v1845 = vpack.c.b16 %v1844, %v1843
      %v1853 = vunpack.c.l.b16 %v959
      %v1854 = vunpack.c.l.b16 %v960
      %v1855 = vunpack.c.l.b16 %v961
      %v1856 = vunpack.c.l.b16 %v962
      %v1857 = vunpack.c.l.b16 %v963
      %v1858 = vunpack.c.l.b16 %v964
      %v1859 = vunpack.c.l.b16 %v965
      %v1860 = vpack.c.b16 %v1854, %v1853
      %v1861 = vpack.c.b16 %v1856, %v1855
      %v1862 = vpack.c.b16 %v1858, %v1857
      %v1863 = vpack.c.b16 %v1859, %v1859
      %v1868 = vsel %vm1356, %v1845, 0
      %v1871 = vand.u32 %v1863, %v1363
      %1873 = vmatpush.bf16.msra.mxu0 0
      %1874 = vmatpush.bf16.msra.mxu0 0
      %1875 = vmatpush.bf16.msra.mxu0 0
      %1876 = vmatpush.bf16.msra.mxu0 0
      %1877 = vmatpush.bf16.msra.mxu0 %v1871
      %1878 = vmatpush.bf16.msra.mxu0 %v1862
      %1879 = vmatpush.bf16.msra.mxu0 %v1861
      %1880 = vmatpush.bf16.msra.mxu0 %v1860
      %1881 = vmatmul.bf16.gmra.mxu0 %v1868
      %v1882 = vpop.f32.mrf.mxu0
      %v1883 = vadd.f32 0.0, %v1882
      %v1884 = vpop.f32.mrf.mxu0
      %v1885 = vadd.f32 0.0, %v1884
      %1886 = vdwg.mxu0
      %v1889 = vunpack.c.l.b16 %v330
      %v1890 = vunpack.c.l.b16 %v331
      %v1891 = vpack.c.b16 %v1890, %v1889
      %v1899 = vunpack.c.l.b16 %v966
      %v1900 = vunpack.c.l.b16 %v967
      %v1901 = vunpack.c.l.b16 %v968
      %v1902 = vunpack.c.l.b16 %v969
      %v1903 = vunpack.c.l.b16 %v970
      %v1904 = vunpack.c.l.b16 %v971
      %v1905 = vunpack.c.l.b16 %v972
      %v1906 = vpack.c.b16 %v1900, %v1899
      %v1907 = vpack.c.b16 %v1902, %v1901
      %v1908 = vpack.c.b16 %v1904, %v1903
      %v1909 = vpack.c.b16 %v1905, %v1905
      %v1914 = vsel %vm1356, %v1891, 0
      %v1917 = vand.u32 %v1909, %v1363
      %1919 = vmatpush.bf16.msra.mxu0 0
      %1920 = vmatpush.bf16.msra.mxu0 0
      %1921 = vmatpush.bf16.msra.mxu0 0
      %1922 = vmatpush.bf16.msra.mxu0 0
      %1923 = vmatpush.bf16.msra.mxu0 %v1917
      %1924 = vmatpush.bf16.msra.mxu0 %v1908
      %1925 = vmatpush.bf16.msra.mxu0 %v1907
      %1926 = vmatpush.bf16.msra.mxu0 %v1906
      %1927 = vmatmul.bf16.gmra.mxu0 %v1914
      %v1928 = vpop.f32.mrf.mxu0
      %v1929 = vadd.f32 0.0, %v1928
      %v1930 = vpop.f32.mrf.mxu0
      %v1931 = vadd.f32 0.0, %v1930
      %1932 = vdwg.mxu0
      %v1935 = vunpack.c.l.b16 %v332
      %v1936 = vunpack.c.l.b16 %v333
      %v1937 = vpack.c.b16 %v1936, %v1935
      %v1945 = vunpack.c.l.b16 %v973
      %v1946 = vunpack.c.l.b16 %v974
      %v1947 = vunpack.c.l.b16 %v975
      %v1948 = vunpack.c.l.b16 %v976
      %v1949 = vunpack.c.l.b16 %v977
      %v1950 = vunpack.c.l.b16 %v978
      %v1951 = vunpack.c.l.b16 %v979
      %v1952 = vpack.c.b16 %v1946, %v1945
      %v1953 = vpack.c.b16 %v1948, %v1947
      %v1954 = vpack.c.b16 %v1950, %v1949
      %v1955 = vpack.c.b16 %v1951, %v1951
      %v1960 = vsel %vm1356, %v1937, 0
      %v1963 = vand.u32 %v1955, %v1363
      %1965 = vmatpush.bf16.msra.mxu0 0
      %1966 = vmatpush.bf16.msra.mxu0 0
      %1967 = vmatpush.bf16.msra.mxu0 0
      %1968 = vmatpush.bf16.msra.mxu0 0
      %1969 = vmatpush.bf16.msra.mxu0 %v1963
      %1970 = vmatpush.bf16.msra.mxu0 %v1954
      %1971 = vmatpush.bf16.msra.mxu0 %v1953
      %1972 = vmatpush.bf16.msra.mxu0 %v1952
      %1973 = vmatmul.bf16.gmra.mxu0 %v1960
      %v1974 = vpop.f32.mrf.mxu0
      %v1975 = vadd.f32 0.0, %v1974
      %v1976 = vpop.f32.mrf.mxu0
      %v1977 = vadd.f32 0.0, %v1976
      %1978 = vdwg.mxu0
      %v1981 = vunpack.c.l.b16 %v334
      %v1982 = vunpack.c.l.b16 %v335
      %v1983 = vpack.c.b16 %v1982, %v1981
      %v1991 = vunpack.c.l.b16 %v980
      %v1992 = vunpack.c.l.b16 %v981
      %v1993 = vunpack.c.l.b16 %v982
      %v1994 = vunpack.c.l.b16 %v983
      %v1995 = vunpack.c.l.b16 %v984
      %v1996 = vunpack.c.l.b16 %v985
      %v1997 = vunpack.c.l.b16 %v986
      %v1998 = vpack.c.b16 %v1992, %v1991
      %v1999 = vpack.c.b16 %v1994, %v1993
      %v2000 = vpack.c.b16 %v1996, %v1995
      %v2001 = vpack.c.b16 %v1997, %v1997
      %v2006 = vsel %vm1356, %v1983, 0
      %v2009 = vand.u32 %v2001, %v1363
      %2011 = vmatpush.bf16.msra.mxu0 0
      %2012 = vmatpush.bf16.msra.mxu0 0
      %2013 = vmatpush.bf16.msra.mxu0 0
      %2014 = vmatpush.bf16.msra.mxu0 0
      %2015 = vmatpush.bf16.msra.mxu0 %v2009
      %2016 = vmatpush.bf16.msra.mxu0 %v2000
      %2017 = vmatpush.bf16.msra.mxu0 %v1999
      %2018 = vmatpush.bf16.msra.mxu0 %v1998
      %2019 = vmatmul.bf16.gmra.mxu0 %v2006
      %v2020 = vpop.f32.mrf.mxu0
      %v2021 = vadd.f32 0.0, %v2020
      %v2022 = vpop.f32.mrf.mxu0
      %v2023 = vadd.f32 0.0, %v2022
      %2024 = vdwg.mxu0
      %v2027 = vunpack.c.l.b16 %v336
      %v2028 = vunpack.c.l.b16 %v337
      %v2029 = vpack.c.b16 %v2028, %v2027
      %v2037 = vunpack.c.l.b16 %v987
      %v2038 = vunpack.c.l.b16 %v988
      %v2039 = vunpack.c.l.b16 %v989
      %v2040 = vunpack.c.l.b16 %v990
      %v2041 = vunpack.c.l.b16 %v991
      %v2042 = vunpack.c.l.b16 %v992
      %v2043 = vunpack.c.l.b16 %v993
      %v2044 = vpack.c.b16 %v2038, %v2037
      %v2045 = vpack.c.b16 %v2040, %v2039
      %v2046 = vpack.c.b16 %v2042, %v2041
      %v2047 = vpack.c.b16 %v2043, %v2043
      %v2052 = vsel %vm1356, %v2029, 0
      %v2055 = vand.u32 %v2047, %v1363
      %2057 = vmatpush.bf16.msra.mxu0 0
      %2058 = vmatpush.bf16.msra.mxu0 0
      %2059 = vmatpush.bf16.msra.mxu0 0
      %2060 = vmatpush.bf16.msra.mxu0 0
      %2061 = vmatpush.bf16.msra.mxu0 %v2055
      %2062 = vmatpush.bf16.msra.mxu0 %v2046
      %2063 = vmatpush.bf16.msra.mxu0 %v2045
      %2064 = vmatpush.bf16.msra.mxu0 %v2044
      %2065 = vmatmul.bf16.gmra.mxu0 %v2052
      %v2066 = vpop.f32.mrf.mxu0
      %v2067 = vadd.f32 0.0, %v2066
      %v2068 = vpop.f32.mrf.mxu0
      %v2069 = vadd.f32 0.0, %v2068
      %2070 = vdwg.mxu0
      %v2073 = vunpack.c.l.b16 %v338
      %v2074 = vunpack.c.l.b16 %v339
      %v2075 = vpack.c.b16 %v2074, %v2073
      %v2083 = vunpack.c.l.b16 %v994
      %v2084 = vunpack.c.l.b16 %v995
      %v2085 = vunpack.c.l.b16 %v996
      %v2086 = vunpack.c.l.b16 %v997
      %v2087 = vunpack.c.l.b16 %v998
      %v2088 = vunpack.c.l.b16 %v999
      %v2089 = vunpack.c.l.b16 %v1000
      %v2090 = vpack.c.b16 %v2084, %v2083
      %v2091 = vpack.c.b16 %v2086, %v2085
      %v2092 = vpack.c.b16 %v2088, %v2087
      %v2093 = vpack.c.b16 %v2089, %v2089
      %v2098 = vsel %vm1356, %v2075, 0
      %v2101 = vand.u32 %v2093, %v1363
      %2103 = vmatpush.bf16.msra.mxu0 0
      %2104 = vmatpush.bf16.msra.mxu0 0
      %2105 = vmatpush.bf16.msra.mxu0 0
      %2106 = vmatpush.bf16.msra.mxu0 0
      %2107 = vmatpush.bf16.msra.mxu0 %v2101
      %2108 = vmatpush.bf16.msra.mxu0 %v2092
      %2109 = vmatpush.bf16.msra.mxu0 %v2091
      %2110 = vmatpush.bf16.msra.mxu0 %v2090
      %2111 = vmatmul.bf16.gmra.mxu0 %v2098
      %v2112 = vpop.f32.mrf.mxu0
      %v2113 = vadd.f32 0.0, %v2112
      %v2114 = vpop.f32.mrf.mxu0
      %v2115 = vadd.f32 0.0, %v2114
      %2116 = vdwg.mxu0
      %v2119 = vunpack.c.l.b16 %v340
      %v2120 = vunpack.c.l.b16 %v341
      %v2121 = vpack.c.b16 %v2120, %v2119
      %v2129 = vunpack.c.l.b16 %v1001
      %v2130 = vunpack.c.l.b16 %v1002
      %v2131 = vunpack.c.l.b16 %v1003
      %v2132 = vunpack.c.l.b16 %v1004
      %v2133 = vunpack.c.l.b16 %v1005
      %v2134 = vunpack.c.l.b16 %v1006
      %v2135 = vunpack.c.l.b16 %v1007
      %v2136 = vpack.c.b16 %v2130, %v2129
      %v2137 = vpack.c.b16 %v2132, %v2131
      %v2138 = vpack.c.b16 %v2134, %v2133
      %v2139 = vpack.c.b16 %v2135, %v2135
      %v2144 = vsel %vm1356, %v2121, 0
      %v2147 = vand.u32 %v2139, %v1363
      %2149 = vmatpush.bf16.msra.mxu0 0
      %2150 = vmatpush.bf16.msra.mxu0 0
      %2151 = vmatpush.bf16.msra.mxu0 0
      %2152 = vmatpush.bf16.msra.mxu0 0
      %2153 = vmatpush.bf16.msra.mxu0 %v2147
      %2154 = vmatpush.bf16.msra.mxu0 %v2138
      %2155 = vmatpush.bf16.msra.mxu0 %v2137
      %2156 = vmatpush.bf16.msra.mxu0 %v2136
      %2157 = vmatmul.bf16.gmra.mxu0 %v2144
      %v2158 = vpop.f32.mrf.mxu0
      %v2159 = vadd.f32 0.0, %v2158
      %v2160 = vpop.f32.mrf.mxu0
      %v2161 = vadd.f32 0.0, %v2160
      %2162 = vdwg.mxu0
      %v2165 = vunpack.c.l.b16 %v342
      %v2166 = vunpack.c.l.b16 %v343
      %v2167 = vpack.c.b16 %v2166, %v2165
      %v2175 = vunpack.c.l.b16 %v1008
      %v2176 = vunpack.c.l.b16 %v1009
      %v2177 = vunpack.c.l.b16 %v1010
      %v2178 = vunpack.c.l.b16 %v1011
      %v2179 = vunpack.c.l.b16 %v1012
      %v2180 = vunpack.c.l.b16 %v1013
      %v2181 = vunpack.c.l.b16 %v1014
      %v2182 = vpack.c.b16 %v2176, %v2175
      %v2183 = vpack.c.b16 %v2178, %v2177
      %v2184 = vpack.c.b16 %v2180, %v2179
      %v2185 = vpack.c.b16 %v2181, %v2181
      %v2190 = vsel %vm1356, %v2167, 0
      %v2193 = vand.u32 %v2185, %v1363
      %2195 = vmatpush.bf16.msra.mxu0 0
      %2196 = vmatpush.bf16.msra.mxu0 0
      %2197 = vmatpush.bf16.msra.mxu0 0
      %2198 = vmatpush.bf16.msra.mxu0 0
      %2199 = vmatpush.bf16.msra.mxu0 %v2193
      %2200 = vmatpush.bf16.msra.mxu0 %v2184
      %2201 = vmatpush.bf16.msra.mxu0 %v2183
      %2202 = vmatpush.bf16.msra.mxu0 %v2182
      %2203 = vmatmul.bf16.gmra.mxu0 %v2190
      %v2204 = vpop.f32.mrf.mxu0
      %v2205 = vadd.f32 0.0, %v2204
      %v2206 = vpop.f32.mrf.mxu0
      %v2207 = vadd.f32 0.0, %v2206
      %2208 = vdwg.mxu0
      %v2211 = vunpack.c.l.b16 %v344
      %v2212 = vunpack.c.l.b16 %v345
      %v2213 = vpack.c.b16 %v2212, %v2211
      %v2221 = vunpack.c.l.b16 %v1015
      %v2222 = vunpack.c.l.b16 %v1016
      %v2223 = vunpack.c.l.b16 %v1017
      %v2224 = vunpack.c.l.b16 %v1018
      %v2225 = vunpack.c.l.b16 %v1019
      %v2226 = vunpack.c.l.b16 %v1020
      %v2227 = vunpack.c.l.b16 %v1021
      %v2228 = vpack.c.b16 %v2222, %v2221
      %v2229 = vpack.c.b16 %v2224, %v2223
      %v2230 = vpack.c.b16 %v2226, %v2225
      %v2231 = vpack.c.b16 %v2227, %v2227
      %v2236 = vsel %vm1356, %v2213, 0
      %v2239 = vand.u32 %v2231, %v1363
      %2241 = vmatpush.bf16.msra.mxu0 0
      %2242 = vmatpush.bf16.msra.mxu0 0
      %2243 = vmatpush.bf16.msra.mxu0 0
      %2244 = vmatpush.bf16.msra.mxu0 0
      %2245 = vmatpush.bf16.msra.mxu0 %v2239
      %2246 = vmatpush.bf16.msra.mxu0 %v2230
      %2247 = vmatpush.bf16.msra.mxu0 %v2229
      %2248 = vmatpush.bf16.msra.mxu0 %v2228
      %2249 = vmatmul.bf16.gmra.mxu0 %v2236
      %v2250 = vpop.f32.mrf.mxu0
      %v2251 = vadd.f32 0.0, %v2250
      %v2252 = vpop.f32.mrf.mxu0
      %v2253 = vadd.f32 0.0, %v2252
      %2254 = vdwg.mxu0
      %v2257 = vunpack.c.l.b16 %v346
      %v2258 = vunpack.c.l.b16 %v347
      %v2259 = vpack.c.b16 %v2258, %v2257
      %v2267 = vunpack.c.l.b16 %v1022
      %v2268 = vunpack.c.l.b16 %v1023
      %v2269 = vunpack.c.l.b16 %v1024
      %v2270 = vunpack.c.l.b16 %v1025
      %v2271 = vunpack.c.l.b16 %v1026
      %v2272 = vunpack.c.l.b16 %v1027
      %v2273 = vunpack.c.l.b16 %v1028
      %v2274 = vpack.c.b16 %v2268, %v2267
      %v2275 = vpack.c.b16 %v2270, %v2269
      %v2276 = vpack.c.b16 %v2272, %v2271
      %v2277 = vpack.c.b16 %v2273, %v2273
      %v2282 = vsel %vm1356, %v2259, 0
      %v2285 = vand.u32 %v2277, %v1363
      %2287 = vmatpush.bf16.msra.mxu0 0
      %2288 = vmatpush.bf16.msra.mxu0 0
      %2289 = vmatpush.bf16.msra.mxu0 0
      %2290 = vmatpush.bf16.msra.mxu0 0
      %2291 = vmatpush.bf16.msra.mxu0 %v2285
      %2292 = vmatpush.bf16.msra.mxu0 %v2276
      %2293 = vmatpush.bf16.msra.mxu0 %v2275
      %2294 = vmatpush.bf16.msra.mxu0 %v2274
      %2295 = vmatmul.bf16.gmra.mxu0 %v2282
      %v2296 = vpop.f32.mrf.mxu0
      %v2297 = vadd.f32 0.0, %v2296
      %v2298 = vpop.f32.mrf.mxu0
      %v2299 = vadd.f32 0.0, %v2298
      %2300 = vdwg.mxu0
      %v2303 = vunpack.c.l.b16 %v348
      %v2304 = vunpack.c.l.b16 %v349
      %v2305 = vpack.c.b16 %v2304, %v2303
      %v2313 = vunpack.c.l.b16 %v1029
      %v2314 = vunpack.c.l.b16 %v1030
      %v2315 = vunpack.c.l.b16 %v1031
      %v2316 = vunpack.c.l.b16 %v1032
      %v2317 = vunpack.c.l.b16 %v1033
      %v2318 = vunpack.c.l.b16 %v1034
      %v2319 = vunpack.c.l.b16 %v1035
      %v2320 = vpack.c.b16 %v2314, %v2313
      %v2321 = vpack.c.b16 %v2316, %v2315
      %v2322 = vpack.c.b16 %v2318, %v2317
      %v2323 = vpack.c.b16 %v2319, %v2319
      %v2328 = vsel %vm1356, %v2305, 0
      %v2331 = vand.u32 %v2323, %v1363
      %2333 = vmatpush.bf16.msra.mxu0 0
      %2334 = vmatpush.bf16.msra.mxu0 0
      %2335 = vmatpush.bf16.msra.mxu0 0
      %2336 = vmatpush.bf16.msra.mxu0 0
      %2337 = vmatpush.bf16.msra.mxu0 %v2331
      %2338 = vmatpush.bf16.msra.mxu0 %v2322
      %2339 = vmatpush.bf16.msra.mxu0 %v2321
      %2340 = vmatpush.bf16.msra.mxu0 %v2320
      %2341 = vmatmul.bf16.gmra.mxu0 %v2328
      %v2342 = vpop.f32.mrf.mxu0
      %v2343 = vadd.f32 0.0, %v2342
      %v2344 = vpop.f32.mrf.mxu0
      %v2345 = vadd.f32 0.0, %v2344
      %2346 = vdwg.mxu0
      %v2349 = vunpack.c.l.b16 %v350
      %v2350 = vunpack.c.l.b16 %v351
      %v2351 = vpack.c.b16 %v2350, %v2349
      %v2359 = vunpack.c.l.b16 %v1036
      %v2360 = vunpack.c.l.b16 %v1037
      %v2361 = vunpack.c.l.b16 %v1038
      %v2362 = vunpack.c.l.b16 %v1039
      %v2363 = vunpack.c.l.b16 %v1040
      %v2364 = vunpack.c.l.b16 %v1041
      %v2365 = vunpack.c.l.b16 %v1042
      %v2366 = vpack.c.b16 %v2360, %v2359
      %v2367 = vpack.c.b16 %v2362, %v2361
      %v2368 = vpack.c.b16 %v2364, %v2363
      %v2369 = vpack.c.b16 %v2365, %v2365
      %v2374 = vsel %vm1356, %v2351, 0
      %v2377 = vand.u32 %v2369, %v1363
      %2379 = vmatpush.bf16.msra.mxu0 0
      %2380 = vmatpush.bf16.msra.mxu0 0
      %2381 = vmatpush.bf16.msra.mxu0 0
      %2382 = vmatpush.bf16.msra.mxu0 0
      %2383 = vmatpush.bf16.msra.mxu0 %v2377
      %2384 = vmatpush.bf16.msra.mxu0 %v2368
      %2385 = vmatpush.bf16.msra.mxu0 %v2367
      %2386 = vmatpush.bf16.msra.mxu0 %v2366
      %2387 = vmatmul.bf16.gmra.mxu0 %v2374
      %v2388 = vpop.f32.mrf.mxu0
      %v2389 = vadd.f32 0.0, %v2388
      %v2390 = vpop.f32.mrf.mxu0
      %v2391 = vadd.f32 0.0, %v2390
      %2392 = vdwg.mxu0
      %v2395 = vunpack.c.l.b16 %v352
      %v2396 = vunpack.c.l.b16 %v353
      %v2397 = vpack.c.b16 %v2396, %v2395
      %v2405 = vunpack.c.l.b16 %v1043
      %v2406 = vunpack.c.l.b16 %v1044
      %v2407 = vunpack.c.l.b16 %v1045
      %v2408 = vunpack.c.l.b16 %v1046
      %v2409 = vunpack.c.l.b16 %v1047
      %v2410 = vunpack.c.l.b16 %v1048
      %v2411 = vunpack.c.l.b16 %v1049
      %v2412 = vpack.c.b16 %v2406, %v2405
      %v2413 = vpack.c.b16 %v2408, %v2407
      %v2414 = vpack.c.b16 %v2410, %v2409
      %v2415 = vpack.c.b16 %v2411, %v2411
      %v2420 = vsel %vm1356, %v2397, 0
      %v2423 = vand.u32 %v2415, %v1363
      %2425 = vmatpush.bf16.msra.mxu0 0
      %2426 = vmatpush.bf16.msra.mxu0 0
      %2427 = vmatpush.bf16.msra.mxu0 0
      %2428 = vmatpush.bf16.msra.mxu0 0
      %2429 = vmatpush.bf16.msra.mxu0 %v2423
      %2430 = vmatpush.bf16.msra.mxu0 %v2414
      %2431 = vmatpush.bf16.msra.mxu0 %v2413
      %2432 = vmatpush.bf16.msra.mxu0 %v2412
      %2433 = vmatmul.bf16.gmra.mxu0 %v2420
      %v2434 = vpop.f32.mrf.mxu0
      %v2435 = vadd.f32 0.0, %v2434
      %v2436 = vpop.f32.mrf.mxu0
      %v2437 = vadd.f32 0.0, %v2436
      %2438 = vdwg.mxu0
      %v2441 = vunpack.c.l.b16 %v354
      %v2442 = vunpack.c.l.b16 %v355
      %v2443 = vpack.c.b16 %v2442, %v2441
      %v2451 = vunpack.c.l.b16 %v1050
      %v2452 = vunpack.c.l.b16 %v1051
      %v2453 = vunpack.c.l.b16 %v1052
      %v2454 = vunpack.c.l.b16 %v1053
      %v2455 = vunpack.c.l.b16 %v1054
      %v2456 = vunpack.c.l.b16 %v1055
      %v2457 = vunpack.c.l.b16 %v1056
      %v2458 = vpack.c.b16 %v2452, %v2451
      %v2459 = vpack.c.b16 %v2454, %v2453
      %v2460 = vpack.c.b16 %v2456, %v2455
      %v2461 = vpack.c.b16 %v2457, %v2457
      %v2466 = vsel %vm1356, %v2443, 0
      %v2469 = vand.u32 %v2461, %v1363
      %2471 = vmatpush.bf16.msra.mxu0 0
      %2472 = vmatpush.bf16.msra.mxu0 0
      %2473 = vmatpush.bf16.msra.mxu0 0
      %2474 = vmatpush.bf16.msra.mxu0 0
      %2475 = vmatpush.bf16.msra.mxu0 %v2469
      %2476 = vmatpush.bf16.msra.mxu0 %v2460
      %2477 = vmatpush.bf16.msra.mxu0 %v2459
      %2478 = vmatpush.bf16.msra.mxu0 %v2458
      %2479 = vmatmul.bf16.gmra.mxu0 %v2466
      %v2480 = vpop.f32.mrf.mxu0
      %v2481 = vadd.f32 0.0, %v2480
      %v2482 = vpop.f32.mrf.mxu0
      %v2483 = vadd.f32 0.0, %v2482
      %2484 = vdwg.mxu0
      %v2487 = vunpack.c.l.b16 %v356
      %v2488 = vunpack.c.l.b16 %v357
      %v2489 = vpack.c.b16 %v2488, %v2487
      %v2497 = vunpack.c.l.b16 %v1057
      %v2498 = vunpack.c.l.b16 %v1058
      %v2499 = vunpack.c.l.b16 %v1059
      %v2500 = vunpack.c.l.b16 %v1060
      %v2501 = vunpack.c.l.b16 %v1061
      %v2502 = vunpack.c.l.b16 %v1062
      %v2503 = vunpack.c.l.b16 %v1063
      %v2504 = vpack.c.b16 %v2498, %v2497
      %v2505 = vpack.c.b16 %v2500, %v2499
      %v2506 = vpack.c.b16 %v2502, %v2501
      %v2507 = vpack.c.b16 %v2503, %v2503
      %v2512 = vsel %vm1356, %v2489, 0
      %v2515 = vand.u32 %v2507, %v1363
      %2517 = vmatpush.bf16.msra.mxu0 0
      %2518 = vmatpush.bf16.msra.mxu0 0
      %2519 = vmatpush.bf16.msra.mxu0 0
      %2520 = vmatpush.bf16.msra.mxu0 0
      %2521 = vmatpush.bf16.msra.mxu0 %v2515
      %2522 = vmatpush.bf16.msra.mxu0 %v2506
      %2523 = vmatpush.bf16.msra.mxu0 %v2505
      %2524 = vmatpush.bf16.msra.mxu0 %v2504
      %2525 = vmatmul.bf16.gmra.mxu0 %v2512
      %v2526 = vpop.f32.mrf.mxu0
      %v2527 = vadd.f32 0.0, %v2526
      %v2528 = vpop.f32.mrf.mxu0
      %v2529 = vadd.f32 0.0, %v2528
      %2530 = vdwg.mxu0
      %v2533 = vunpack.c.l.b16 %v358
      %v2534 = vunpack.c.l.b16 %v359
      %v2535 = vpack.c.b16 %v2534, %v2533
      %v2543 = vunpack.c.l.b16 %v1064
      %v2544 = vunpack.c.l.b16 %v1065
      %v2545 = vunpack.c.l.b16 %v1066
      %v2546 = vunpack.c.l.b16 %v1067
      %v2547 = vunpack.c.l.b16 %v1068
      %v2548 = vunpack.c.l.b16 %v1069
      %v2549 = vunpack.c.l.b16 %v1070
      %v2550 = vpack.c.b16 %v2544, %v2543
      %v2551 = vpack.c.b16 %v2546, %v2545
      %v2552 = vpack.c.b16 %v2548, %v2547
      %v2553 = vpack.c.b16 %v2549, %v2549
      %v2558 = vsel %vm1356, %v2535, 0
      %v2561 = vand.u32 %v2553, %v1363
      %2563 = vmatpush.bf16.msra.mxu0 0
      %2564 = vmatpush.bf16.msra.mxu0 0
      %2565 = vmatpush.bf16.msra.mxu0 0
      %2566 = vmatpush.bf16.msra.mxu0 0
      %2567 = vmatpush.bf16.msra.mxu0 %v2561
      %2568 = vmatpush.bf16.msra.mxu0 %v2552
      %2569 = vmatpush.bf16.msra.mxu0 %v2551
      %2570 = vmatpush.bf16.msra.mxu0 %v2550
      %2571 = vmatmul.bf16.gmra.mxu0 %v2558
      %v2572 = vpop.f32.mrf.mxu0
      %v2573 = vadd.f32 0.0, %v2572
      %v2574 = vpop.f32.mrf.mxu0
      %v2575 = vadd.f32 0.0, %v2574
      %2576 = vdwg.mxu0
      %v2579 = vunpack.c.l.b16 %v360
      %v2580 = vunpack.c.l.b16 %v361
      %v2581 = vpack.c.b16 %v2580, %v2579
      %v2589 = vunpack.c.l.b16 %v1071
      %v2590 = vunpack.c.l.b16 %v1072
      %v2591 = vunpack.c.l.b16 %v1073
      %v2592 = vunpack.c.l.b16 %v1074
      %v2593 = vunpack.c.l.b16 %v1075
      %v2594 = vunpack.c.l.b16 %v1076
      %v2595 = vunpack.c.l.b16 %v1077
      %v2596 = vpack.c.b16 %v2590, %v2589
      %v2597 = vpack.c.b16 %v2592, %v2591
      %v2598 = vpack.c.b16 %v2594, %v2593
      %v2599 = vpack.c.b16 %v2595, %v2595
      %v2604 = vsel %vm1356, %v2581, 0
      %v2607 = vand.u32 %v2599, %v1363
      %2609 = vmatpush.bf16.msra.mxu0 0
      %2610 = vmatpush.bf16.msra.mxu0 0
      %2611 = vmatpush.bf16.msra.mxu0 0
      %2612 = vmatpush.bf16.msra.mxu0 0
      %2613 = vmatpush.bf16.msra.mxu0 %v2607
      %2614 = vmatpush.bf16.msra.mxu0 %v2598
      %2615 = vmatpush.bf16.msra.mxu0 %v2597
      %2616 = vmatpush.bf16.msra.mxu0 %v2596
      %2617 = vmatmul.bf16.gmra.mxu0 %v2604
      %v2618 = vpop.f32.mrf.mxu0
      %v2619 = vadd.f32 0.0, %v2618
      %v2620 = vpop.f32.mrf.mxu0
      %v2621 = vadd.f32 0.0, %v2620
      %2622 = vdwg.mxu0
      %v2625 = vunpack.c.l.b16 %v362
      %v2626 = vunpack.c.l.b16 %v363
      %v2627 = vpack.c.b16 %v2626, %v2625
      %v2635 = vunpack.c.l.b16 %v1078
      %v2636 = vunpack.c.l.b16 %v1079
      %v2637 = vunpack.c.l.b16 %v1080
      %v2638 = vunpack.c.l.b16 %v1081
      %v2639 = vunpack.c.l.b16 %v1082
      %v2640 = vunpack.c.l.b16 %v1083
      %v2641 = vunpack.c.l.b16 %v1084
      %v2642 = vpack.c.b16 %v2636, %v2635
      %v2643 = vpack.c.b16 %v2638, %v2637
      %v2644 = vpack.c.b16 %v2640, %v2639
      %v2645 = vpack.c.b16 %v2641, %v2641
      %v2650 = vsel %vm1356, %v2627, 0
      %v2653 = vand.u32 %v2645, %v1363
      %2655 = vmatpush.bf16.msra.mxu0 0
      %2656 = vmatpush.bf16.msra.mxu0 0
      %2657 = vmatpush.bf16.msra.mxu0 0
      %2658 = vmatpush.bf16.msra.mxu0 0
      %2659 = vmatpush.bf16.msra.mxu0 %v2653
      %2660 = vmatpush.bf16.msra.mxu0 %v2644
      %2661 = vmatpush.bf16.msra.mxu0 %v2643
      %2662 = vmatpush.bf16.msra.mxu0 %v2642
      %2663 = vmatmul.bf16.gmra.mxu0 %v2650
      %v2664 = vpop.f32.mrf.mxu0
      %v2665 = vadd.f32 0.0, %v2664
      %v2666 = vpop.f32.mrf.mxu0
      %v2667 = vadd.f32 0.0, %v2666
      %2668 = vdwg.mxu0
      %v2671 = vunpack.c.l.b16 %v364
      %v2672 = vunpack.c.l.b16 %v365
      %v2673 = vpack.c.b16 %v2672, %v2671
      %v2681 = vunpack.c.l.b16 %v1085
      %v2682 = vunpack.c.l.b16 %v1086
      %v2683 = vunpack.c.l.b16 %v1087
      %v2684 = vunpack.c.l.b16 %v1088
      %v2685 = vunpack.c.l.b16 %v1089
      %v2686 = vunpack.c.l.b16 %v1090
      %v2687 = vunpack.c.l.b16 %v1091
      %v2688 = vpack.c.b16 %v2682, %v2681
      %v2689 = vpack.c.b16 %v2684, %v2683
      %v2690 = vpack.c.b16 %v2686, %v2685
      %v2691 = vpack.c.b16 %v2687, %v2687
      %v2696 = vsel %vm1356, %v2673, 0
      %v2699 = vand.u32 %v2691, %v1363
      %2701 = vmatpush.bf16.msra.mxu0 0
      %2702 = vmatpush.bf16.msra.mxu0 0
      %2703 = vmatpush.bf16.msra.mxu0 0
      %2704 = vmatpush.bf16.msra.mxu0 0
      %2705 = vmatpush.bf16.msra.mxu0 %v2699
      %2706 = vmatpush.bf16.msra.mxu0 %v2690
      %2707 = vmatpush.bf16.msra.mxu0 %v2689
      %2708 = vmatpush.bf16.msra.mxu0 %v2688
      %2709 = vmatmul.bf16.gmra.mxu0 %v2696
      %v2710 = vpop.f32.mrf.mxu0
      %v2711 = vadd.f32 0.0, %v2710
      %v2712 = vpop.f32.mrf.mxu0
      %v2713 = vadd.f32 0.0, %v2712
      %2714 = vdwg.mxu0
      %v2717 = vunpack.c.l.b16 %v366
      %v2718 = vunpack.c.l.b16 %v367
      %v2719 = vpack.c.b16 %v2718, %v2717
      %v2727 = vunpack.c.l.b16 %v1092
      %v2728 = vunpack.c.l.b16 %v1093
      %v2729 = vunpack.c.l.b16 %v1094
      %v2730 = vunpack.c.l.b16 %v1095
      %v2731 = vunpack.c.l.b16 %v1096
      %v2732 = vunpack.c.l.b16 %v1097
      %v2733 = vunpack.c.l.b16 %v1098
      %v2734 = vpack.c.b16 %v2728, %v2727
      %v2735 = vpack.c.b16 %v2730, %v2729
      %v2736 = vpack.c.b16 %v2732, %v2731
      %v2737 = vpack.c.b16 %v2733, %v2733
      %v2742 = vsel %vm1356, %v2719, 0
      %v2745 = vand.u32 %v2737, %v1363
      %2747 = vmatpush.bf16.msra.mxu0 0
      %2748 = vmatpush.bf16.msra.mxu0 0
      %2749 = vmatpush.bf16.msra.mxu0 0
      %2750 = vmatpush.bf16.msra.mxu0 0
      %2751 = vmatpush.bf16.msra.mxu0 %v2745
      %2752 = vmatpush.bf16.msra.mxu0 %v2736
      %2753 = vmatpush.bf16.msra.mxu0 %v2735
      %2754 = vmatpush.bf16.msra.mxu0 %v2734
      %2755 = vmatmul.bf16.gmra.mxu0 %v2742
      %v2756 = vpop.f32.mrf.mxu0
      %v2757 = vadd.f32 0.0, %v2756
      %v2758 = vpop.f32.mrf.mxu0
      %v2759 = vadd.f32 0.0, %v2758
      %2760 = vdwg.mxu0
      %v2763 = vunpack.c.l.b16 %v368
      %v2764 = vunpack.c.l.b16 %v369
      %v2765 = vpack.c.b16 %v2764, %v2763
      %v2773 = vunpack.c.l.b16 %v1099
      %v2774 = vunpack.c.l.b16 %v1100
      %v2775 = vunpack.c.l.b16 %v1101
      %v2776 = vunpack.c.l.b16 %v1102
      %v2777 = vunpack.c.l.b16 %v1103
      %v2778 = vunpack.c.l.b16 %v1104
      %v2779 = vunpack.c.l.b16 %v1105
      %v2780 = vpack.c.b16 %v2774, %v2773
      %v2781 = vpack.c.b16 %v2776, %v2775
      %v2782 = vpack.c.b16 %v2778, %v2777
      %v2783 = vpack.c.b16 %v2779, %v2779
      %v2788 = vsel %vm1356, %v2765, 0
      %v2791 = vand.u32 %v2783, %v1363
      %2793 = vmatpush.bf16.msra.mxu0 0
      %2794 = vmatpush.bf16.msra.mxu0 0
      %2795 = vmatpush.bf16.msra.mxu0 0
      %2796 = vmatpush.bf16.msra.mxu0 0
      %2797 = vmatpush.bf16.msra.mxu0 %v2791
      %2798 = vmatpush.bf16.msra.mxu0 %v2782
      %2799 = vmatpush.bf16.msra.mxu0 %v2781
      %2800 = vmatpush.bf16.msra.mxu0 %v2780
      %2801 = vmatmul.bf16.gmra.mxu0 %v2788
      %v2802 = vpop.f32.mrf.mxu0
      %v2803 = vadd.f32 0.0, %v2802
      %v2804 = vpop.f32.mrf.mxu0
      %v2805 = vadd.f32 0.0, %v2804
      %2806 = vdwg.mxu0
      %v2809 = vunpack.c.l.b16 %v370
      %v2810 = vunpack.c.l.b16 %v371
      %v2811 = vpack.c.b16 %v2810, %v2809
      %v2819 = vunpack.c.l.b16 %v1106
      %v2820 = vunpack.c.l.b16 %v1107
      %v2821 = vunpack.c.l.b16 %v1108
      %v2822 = vunpack.c.l.b16 %v1109
      %v2823 = vunpack.c.l.b16 %v1110
      %v2824 = vunpack.c.l.b16 %v1111
      %v2825 = vunpack.c.l.b16 %v1112
      %v2826 = vpack.c.b16 %v2820, %v2819
      %v2827 = vpack.c.b16 %v2822, %v2821
      %v2828 = vpack.c.b16 %v2824, %v2823
      %v2829 = vpack.c.b16 %v2825, %v2825
      %v2834 = vsel %vm1356, %v2811, 0
      %v2837 = vand.u32 %v2829, %v1363
      %2839 = vmatpush.bf16.msra.mxu0 0
      %2840 = vmatpush.bf16.msra.mxu0 0
      %2841 = vmatpush.bf16.msra.mxu0 0
      %2842 = vmatpush.bf16.msra.mxu0 0
      %2843 = vmatpush.bf16.msra.mxu0 %v2837
      %2844 = vmatpush.bf16.msra.mxu0 %v2828
      %2845 = vmatpush.bf16.msra.mxu0 %v2827
      %2846 = vmatpush.bf16.msra.mxu0 %v2826
      %2847 = vmatmul.bf16.gmra.mxu0 %v2834
      %v2848 = vpop.f32.mrf.mxu0
      %v2849 = vadd.f32 0.0, %v2848
      %v2850 = vpop.f32.mrf.mxu0
      %v2851 = vadd.f32 0.0, %v2850
      %2852 = vdwg.mxu0
      %v2855 = vunpack.c.l.b16 %v372
      %v2856 = vunpack.c.l.b16 %v373
      %v2857 = vpack.c.b16 %v2856, %v2855
      %v2865 = vunpack.c.l.b16 %v1113
      %v2866 = vunpack.c.l.b16 %v1114
      %v2867 = vunpack.c.l.b16 %v1115
      %v2868 = vunpack.c.l.b16 %v1116
      %v2869 = vunpack.c.l.b16 %v1117
      %v2870 = vunpack.c.l.b16 %v1118
      %v2871 = vunpack.c.l.b16 %v1119
      %v2872 = vpack.c.b16 %v2866, %v2865
      %v2873 = vpack.c.b16 %v2868, %v2867
      %v2874 = vpack.c.b16 %v2870, %v2869
      %v2875 = vpack.c.b16 %v2871, %v2871
      %v2880 = vsel %vm1356, %v2857, 0
      %v2883 = vand.u32 %v2875, %v1363
      %2885 = vmatpush.bf16.msra.mxu0 0
      %2886 = vmatpush.bf16.msra.mxu0 0
      %2887 = vmatpush.bf16.msra.mxu0 0
      %2888 = vmatpush.bf16.msra.mxu0 0
      %2889 = vmatpush.bf16.msra.mxu0 %v2883
      %2890 = vmatpush.bf16.msra.mxu0 %v2874
      %2891 = vmatpush.bf16.msra.mxu0 %v2873
      %2892 = vmatpush.bf16.msra.mxu0 %v2872
      %2893 = vmatmul.bf16.gmra.mxu0 %v2880
      %v2894 = vpop.f32.mrf.mxu0
      %v2895 = vadd.f32 0.0, %v2894
      %v2896 = vpop.f32.mrf.mxu0
      %v2897 = vadd.f32 0.0, %v2896
      %2898 = vdwg.mxu0
      %v2901 = vunpack.c.l.b16 %v374
      %v2902 = vunpack.c.l.b16 %v375
      %v2903 = vpack.c.b16 %v2902, %v2901
      %v2911 = vunpack.c.l.b16 %v1120
      %v2912 = vunpack.c.l.b16 %v1121
      %v2913 = vunpack.c.l.b16 %v1122
      %v2914 = vunpack.c.l.b16 %v1123
      %v2915 = vunpack.c.l.b16 %v1124
      %v2916 = vunpack.c.l.b16 %v1125
      %v2917 = vunpack.c.l.b16 %v1126
      %v2918 = vpack.c.b16 %v2912, %v2911
      %v2919 = vpack.c.b16 %v2914, %v2913
      %v2920 = vpack.c.b16 %v2916, %v2915
      %v2921 = vpack.c.b16 %v2917, %v2917
      %v2926 = vsel %vm1356, %v2903, 0
      %v2929 = vand.u32 %v2921, %v1363
      %2931 = vmatpush.bf16.msra.mxu0 0
      %2932 = vmatpush.bf16.msra.mxu0 0
      %2933 = vmatpush.bf16.msra.mxu0 0
      %2934 = vmatpush.bf16.msra.mxu0 0
      %2935 = vmatpush.bf16.msra.mxu0 %v2929
      %2936 = vmatpush.bf16.msra.mxu0 %v2920
      %2937 = vmatpush.bf16.msra.mxu0 %v2919
      %2938 = vmatpush.bf16.msra.mxu0 %v2918
      %2939 = vmatmul.bf16.gmra.mxu0 %v2926
      %v2940 = vpop.f32.mrf.mxu0
      %v2941 = vadd.f32 0.0, %v2940
      %v2942 = vpop.f32.mrf.mxu0
      %v2943 = vadd.f32 0.0, %v2942
      %2944 = vdwg.mxu0
      %v2947 = vunpack.c.l.b16 %v376
      %v2948 = vunpack.c.l.b16 %v377
      %v2949 = vpack.c.b16 %v2948, %v2947
      %v2957 = vunpack.c.l.b16 %v1127
      %v2958 = vunpack.c.l.b16 %v1128
      %v2959 = vunpack.c.l.b16 %v1129
      %v2960 = vunpack.c.l.b16 %v1130
      %v2961 = vunpack.c.l.b16 %v1131
      %v2962 = vunpack.c.l.b16 %v1132
      %v2963 = vunpack.c.l.b16 %v1133
      %v2964 = vpack.c.b16 %v2958, %v2957
      %v2965 = vpack.c.b16 %v2960, %v2959
      %v2966 = vpack.c.b16 %v2962, %v2961
      %v2967 = vpack.c.b16 %v2963, %v2963
      %v2972 = vsel %vm1356, %v2949, 0
      %v2975 = vand.u32 %v2967, %v1363
      %2977 = vmatpush.bf16.msra.mxu0 0
      %2978 = vmatpush.bf16.msra.mxu0 0
      %2979 = vmatpush.bf16.msra.mxu0 0
      %2980 = vmatpush.bf16.msra.mxu0 0
      %2981 = vmatpush.bf16.msra.mxu0 %v2975
      %2982 = vmatpush.bf16.msra.mxu0 %v2966
      %2983 = vmatpush.bf16.msra.mxu0 %v2965
      %2984 = vmatpush.bf16.msra.mxu0 %v2964
      %2985 = vmatmul.bf16.gmra.mxu0 %v2972
      %v2986 = vpop.f32.mrf.mxu0
      %v2987 = vadd.f32 0.0, %v2986
      %v2988 = vpop.f32.mrf.mxu0
      %v2989 = vadd.f32 0.0, %v2988
      %2990 = vdwg.mxu0
      %v2993 = vunpack.c.l.b16 %v378
      %v2994 = vunpack.c.l.b16 %v379
      %v2995 = vpack.c.b16 %v2994, %v2993
      %v3003 = vunpack.c.l.b16 %v1134
      %v3004 = vunpack.c.l.b16 %v1135
      %v3005 = vunpack.c.l.b16 %v1136
      %v3006 = vunpack.c.l.b16 %v1137
      %v3007 = vunpack.c.l.b16 %v1138
      %v3008 = vunpack.c.l.b16 %v1139
      %v3009 = vunpack.c.l.b16 %v1140
      %v3010 = vpack.c.b16 %v3004, %v3003
      %v3011 = vpack.c.b16 %v3006, %v3005
      %v3012 = vpack.c.b16 %v3008, %v3007
      %v3013 = vpack.c.b16 %v3009, %v3009
      %v3018 = vsel %vm1356, %v2995, 0
      %v3021 = vand.u32 %v3013, %v1363
      %3023 = vmatpush.bf16.msra.mxu0 0
      %3024 = vmatpush.bf16.msra.mxu0 0
      %3025 = vmatpush.bf16.msra.mxu0 0
      %3026 = vmatpush.bf16.msra.mxu0 0
      %3027 = vmatpush.bf16.msra.mxu0 %v3021
      %3028 = vmatpush.bf16.msra.mxu0 %v3012
      %3029 = vmatpush.bf16.msra.mxu0 %v3011
      %3030 = vmatpush.bf16.msra.mxu0 %v3010
      %3031 = vmatmul.bf16.gmra.mxu0 %v3018
      %v3032 = vpop.f32.mrf.mxu0
      %v3033 = vadd.f32 0.0, %v3032
      %v3034 = vpop.f32.mrf.mxu0
      %v3035 = vadd.f32 0.0, %v3034
      %3036 = vdwg.mxu0
      %v3039 = vunpack.c.l.b16 %v380
      %v3040 = vunpack.c.l.b16 %v381
      %v3041 = vpack.c.b16 %v3040, %v3039
      %v3049 = vunpack.c.l.b16 %v1141
      %v3050 = vunpack.c.l.b16 %v1142
      %v3051 = vunpack.c.l.b16 %v1143
      %v3052 = vunpack.c.l.b16 %v1144
      %v3053 = vunpack.c.l.b16 %v1145
      %v3054 = vunpack.c.l.b16 %v1146
      %v3055 = vunpack.c.l.b16 %v1147
      %v3056 = vpack.c.b16 %v3050, %v3049
      %v3057 = vpack.c.b16 %v3052, %v3051
      %v3058 = vpack.c.b16 %v3054, %v3053
      %v3059 = vpack.c.b16 %v3055, %v3055
      %v3064 = vsel %vm1356, %v3041, 0
      %v3067 = vand.u32 %v3059, %v1363
      %3069 = vmatpush.bf16.msra.mxu0 0
      %3070 = vmatpush.bf16.msra.mxu0 0
      %3071 = vmatpush.bf16.msra.mxu0 0
      %3072 = vmatpush.bf16.msra.mxu0 0
      %3073 = vmatpush.bf16.msra.mxu0 %v3067
      %3074 = vmatpush.bf16.msra.mxu0 %v3058
      %3075 = vmatpush.bf16.msra.mxu0 %v3057
      %3076 = vmatpush.bf16.msra.mxu0 %v3056
      %3077 = vmatmul.bf16.gmra.mxu0 %v3064
      %v3078 = vpop.f32.mrf.mxu0
      %v3079 = vadd.f32 0.0, %v3078
      %v3080 = vpop.f32.mrf.mxu0
      %v3081 = vadd.f32 0.0, %v3080
      %3082 = vdwg.mxu0
      %v3085 = vunpack.c.l.b16 %v382
      %v3086 = vunpack.c.l.b16 %v383
      %v3087 = vpack.c.b16 %v3086, %v3085
      %v3095 = vunpack.c.l.b16 %v1148
      %v3096 = vunpack.c.l.b16 %v1149
      %v3097 = vunpack.c.l.b16 %v1150
      %v3098 = vunpack.c.l.b16 %v1151
      %v3099 = vunpack.c.l.b16 %v1152
      %v3100 = vunpack.c.l.b16 %v1153
      %v3101 = vunpack.c.l.b16 %v1154
      %v3102 = vpack.c.b16 %v3096, %v3095
      %v3103 = vpack.c.b16 %v3098, %v3097
      %v3104 = vpack.c.b16 %v3100, %v3099
      %v3105 = vpack.c.b16 %v3101, %v3101
      %v3110 = vsel %vm1356, %v3087, 0
      %v3113 = vand.u32 %v3105, %v1363
      %3115 = vmatpush.bf16.msra.mxu0 0
      %3116 = vmatpush.bf16.msra.mxu0 0
      %3117 = vmatpush.bf16.msra.mxu0 0
      %3118 = vmatpush.bf16.msra.mxu0 0
      %3119 = vmatpush.bf16.msra.mxu0 %v3113
      %3120 = vmatpush.bf16.msra.mxu0 %v3104
      %3121 = vmatpush.bf16.msra.mxu0 %v3103
      %3122 = vmatpush.bf16.msra.mxu0 %v3102
      %3123 = vmatmul.bf16.gmra.mxu0 %v3110
      %v3124 = vpop.f32.mrf.mxu0
      %v3125 = vadd.f32 0.0, %v3124
      %v3126 = vpop.f32.mrf.mxu0
      %v3127 = vadd.f32 0.0, %v3126
      %3128 = vdwg.mxu0
      %v3131 = vunpack.c.l.b16 %v384
      %v3132 = vunpack.c.l.b16 %v385
      %v3133 = vpack.c.b16 %v3132, %v3131
      %v3141 = vunpack.c.l.b16 %v1155
      %v3142 = vunpack.c.l.b16 %v1156
      %v3143 = vunpack.c.l.b16 %v1157
      %v3144 = vunpack.c.l.b16 %v1158
      %v3145 = vunpack.c.l.b16 %v1159
      %v3146 = vunpack.c.l.b16 %v1160
      %v3147 = vunpack.c.l.b16 %v1161
      %v3148 = vpack.c.b16 %v3142, %v3141
      %v3149 = vpack.c.b16 %v3144, %v3143
      %v3150 = vpack.c.b16 %v3146, %v3145
      %v3151 = vpack.c.b16 %v3147, %v3147
      %v3156 = vsel %vm1356, %v3133, 0
      %v3159 = vand.u32 %v3151, %v1363
      %3161 = vmatpush.bf16.msra.mxu0 0
      %3162 = vmatpush.bf16.msra.mxu0 0
      %3163 = vmatpush.bf16.msra.mxu0 0
      %3164 = vmatpush.bf16.msra.mxu0 0
      %3165 = vmatpush.bf16.msra.mxu0 %v3159
      %3166 = vmatpush.bf16.msra.mxu0 %v3150
      %3167 = vmatpush.bf16.msra.mxu0 %v3149
      %3168 = vmatpush.bf16.msra.mxu0 %v3148
      %3169 = vmatmul.bf16.gmra.mxu0 %v3156
      %v3170 = vpop.f32.mrf.mxu0
      %v3171 = vadd.f32 0.0, %v3170
      %v3172 = vpop.f32.mrf.mxu0
      %v3173 = vadd.f32 0.0, %v3172
      %3174 = vdwg.mxu0
      %v3177 = vunpack.c.l.b16 %v386
      %v3178 = vunpack.c.l.b16 %v387
      %v3179 = vpack.c.b16 %v3178, %v3177
      %v3187 = vunpack.c.l.b16 %v1162
      %v3188 = vunpack.c.l.b16 %v1163
      %v3189 = vunpack.c.l.b16 %v1164
      %v3190 = vunpack.c.l.b16 %v1165
      %v3191 = vunpack.c.l.b16 %v1166
      %v3192 = vunpack.c.l.b16 %v1167
      %v3193 = vunpack.c.l.b16 %v1168
      %v3194 = vpack.c.b16 %v3188, %v3187
      %v3195 = vpack.c.b16 %v3190, %v3189
      %v3196 = vpack.c.b16 %v3192, %v3191
      %v3197 = vpack.c.b16 %v3193, %v3193
      %v3202 = vsel %vm1356, %v3179, 0
      %v3205 = vand.u32 %v3197, %v1363
      %3207 = vmatpush.bf16.msra.mxu0 0
      %3208 = vmatpush.bf16.msra.mxu0 0
      %3209 = vmatpush.bf16.msra.mxu0 0
      %3210 = vmatpush.bf16.msra.mxu0 0
      %3211 = vmatpush.bf16.msra.mxu0 %v3205
      %3212 = vmatpush.bf16.msra.mxu0 %v3196
      %3213 = vmatpush.bf16.msra.mxu0 %v3195
      %3214 = vmatpush.bf16.msra.mxu0 %v3194
      %3215 = vmatmul.bf16.gmra.mxu0 %v3202
      %v3216 = vpop.f32.mrf.mxu0
      %v3217 = vadd.f32 0.0, %v3216
      %v3218 = vpop.f32.mrf.mxu0
      %v3219 = vadd.f32 0.0, %v3218
      %3220 = vdwg.mxu0
      %v3223 = vunpack.c.l.b16 %v388
      %v3224 = vunpack.c.l.b16 %v389
      %v3225 = vpack.c.b16 %v3224, %v3223
      %v3233 = vunpack.c.l.b16 %v1169
      %v3234 = vunpack.c.l.b16 %v1170
      %v3235 = vunpack.c.l.b16 %v1171
      %v3236 = vunpack.c.l.b16 %v1172
      %v3237 = vunpack.c.l.b16 %v1173
      %v3238 = vunpack.c.l.b16 %v1174
      %v3239 = vunpack.c.l.b16 %v1175
      %v3240 = vpack.c.b16 %v3234, %v3233
      %v3241 = vpack.c.b16 %v3236, %v3235
      %v3242 = vpack.c.b16 %v3238, %v3237
      %v3243 = vpack.c.b16 %v3239, %v3239
      %v3248 = vsel %vm1356, %v3225, 0
      %v3251 = vand.u32 %v3243, %v1363
      %3253 = vmatpush.bf16.msra.mxu0 0
      %3254 = vmatpush.bf16.msra.mxu0 0
      %3255 = vmatpush.bf16.msra.mxu0 0
      %3256 = vmatpush.bf16.msra.mxu0 0
      %3257 = vmatpush.bf16.msra.mxu0 %v3251
      %3258 = vmatpush.bf16.msra.mxu0 %v3242
      %3259 = vmatpush.bf16.msra.mxu0 %v3241
      %3260 = vmatpush.bf16.msra.mxu0 %v3240
      %3261 = vmatmul.bf16.gmra.mxu0 %v3248
      %v3262 = vpop.f32.mrf.mxu0
      %v3263 = vadd.f32 0.0, %v3262
      %v3264 = vpop.f32.mrf.mxu0
      %v3265 = vadd.f32 0.0, %v3264
      %3266 = vdwg.mxu0
      %v3269 = vunpack.c.l.b16 %v390
      %v3270 = vunpack.c.l.b16 %v391
      %v3271 = vpack.c.b16 %v3270, %v3269
      %v3279 = vunpack.c.l.b16 %v1176
      %v3280 = vunpack.c.l.b16 %v1177
      %v3281 = vunpack.c.l.b16 %v1178
      %v3282 = vunpack.c.l.b16 %v1179
      %v3283 = vunpack.c.l.b16 %v1180
      %v3284 = vunpack.c.l.b16 %v1181
      %v3285 = vunpack.c.l.b16 %v1182
      %v3286 = vpack.c.b16 %v3280, %v3279
      %v3287 = vpack.c.b16 %v3282, %v3281
      %v3288 = vpack.c.b16 %v3284, %v3283
      %v3289 = vpack.c.b16 %v3285, %v3285
      %v3294 = vsel %vm1356, %v3271, 0
      %v3297 = vand.u32 %v3289, %v1363
      %3299 = vmatpush.bf16.msra.mxu0 0
      %3300 = vmatpush.bf16.msra.mxu0 0
      %3301 = vmatpush.bf16.msra.mxu0 0
      %3302 = vmatpush.bf16.msra.mxu0 0
      %3303 = vmatpush.bf16.msra.mxu0 %v3297
      %3304 = vmatpush.bf16.msra.mxu0 %v3288
      %3305 = vmatpush.bf16.msra.mxu0 %v3287
      %3306 = vmatpush.bf16.msra.mxu0 %v3286
      %3307 = vmatmul.bf16.gmra.mxu0 %v3294
      %v3308 = vpop.f32.mrf.mxu0
      %v3309 = vadd.f32 0.0, %v3308
      %v3310 = vpop.f32.mrf.mxu0
      %v3311 = vadd.f32 0.0, %v3310
      %3312 = vdwg.mxu0
      %v3315 = vunpack.c.l.b16 %v392
      %v3316 = vunpack.c.l.b16 %v393
      %v3317 = vpack.c.b16 %v3316, %v3315
      %v3325 = vunpack.c.l.b16 %v1183
      %v3326 = vunpack.c.l.b16 %v1184
      %v3327 = vunpack.c.l.b16 %v1185
      %v3328 = vunpack.c.l.b16 %v1186
      %v3329 = vunpack.c.l.b16 %v1187
      %v3330 = vunpack.c.l.b16 %v1188
      %v3331 = vunpack.c.l.b16 %v1189
      %v3332 = vpack.c.b16 %v3326, %v3325
      %v3333 = vpack.c.b16 %v3328, %v3327
      %v3334 = vpack.c.b16 %v3330, %v3329
      %v3335 = vpack.c.b16 %v3331, %v3331
      %v3340 = vsel %vm1356, %v3317, 0
      %v3343 = vand.u32 %v3335, %v1363
      %3345 = vmatpush.bf16.msra.mxu0 0
      %3346 = vmatpush.bf16.msra.mxu0 0
      %3347 = vmatpush.bf16.msra.mxu0 0
      %3348 = vmatpush.bf16.msra.mxu0 0
      %3349 = vmatpush.bf16.msra.mxu0 %v3343
      %3350 = vmatpush.bf16.msra.mxu0 %v3334
      %3351 = vmatpush.bf16.msra.mxu0 %v3333
      %3352 = vmatpush.bf16.msra.mxu0 %v3332
      %3353 = vmatmul.bf16.gmra.mxu0 %v3340
      %v3354 = vpop.f32.mrf.mxu0
      %v3355 = vadd.f32 0.0, %v3354
      %v3356 = vpop.f32.mrf.mxu0
      %v3357 = vadd.f32 0.0, %v3356
      %3358 = vdwg.mxu0
      %v3361 = vunpack.c.l.b16 %v394
      %v3362 = vunpack.c.l.b16 %v395
      %v3363 = vpack.c.b16 %v3362, %v3361
      %v3371 = vunpack.c.l.b16 %v1190
      %v3372 = vunpack.c.l.b16 %v1191
      %v3373 = vunpack.c.l.b16 %v1192
      %v3374 = vunpack.c.l.b16 %v1193
      %v3375 = vunpack.c.l.b16 %v1194
      %v3376 = vunpack.c.l.b16 %v1195
      %v3377 = vunpack.c.l.b16 %v1196
      %v3378 = vpack.c.b16 %v3372, %v3371
      %v3379 = vpack.c.b16 %v3374, %v3373
      %v3380 = vpack.c.b16 %v3376, %v3375
      %v3381 = vpack.c.b16 %v3377, %v3377
      %v3386 = vsel %vm1356, %v3363, 0
      %v3389 = vand.u32 %v3381, %v1363
      %3391 = vmatpush.bf16.msra.mxu0 0
      %3392 = vmatpush.bf16.msra.mxu0 0
      %3393 = vmatpush.bf16.msra.mxu0 0
      %3394 = vmatpush.bf16.msra.mxu0 0
      %3395 = vmatpush.bf16.msra.mxu0 %v3389
      %3396 = vmatpush.bf16.msra.mxu0 %v3380
      %3397 = vmatpush.bf16.msra.mxu0 %v3379
      %3398 = vmatpush.bf16.msra.mxu0 %v3378
      %3399 = vmatmul.bf16.gmra.mxu0 %v3386
      %v3400 = vpop.f32.mrf.mxu0
      %v3401 = vadd.f32 0.0, %v3400
      %v3402 = vpop.f32.mrf.mxu0
      %v3403 = vadd.f32 0.0, %v3402
      %3404 = vdwg.mxu0
      %v3407 = vunpack.c.l.b16 %v396
      %v3408 = vunpack.c.l.b16 %v397
      %v3409 = vpack.c.b16 %v3408, %v3407
      %v3417 = vunpack.c.l.b16 %v1197
      %v3418 = vunpack.c.l.b16 %v1198
      %v3419 = vunpack.c.l.b16 %v1199
      %v3420 = vunpack.c.l.b16 %v1200
      %v3421 = vunpack.c.l.b16 %v1201
      %v3422 = vunpack.c.l.b16 %v1202
      %v3423 = vunpack.c.l.b16 %v1203
      %v3424 = vpack.c.b16 %v3418, %v3417
      %v3425 = vpack.c.b16 %v3420, %v3419
      %v3426 = vpack.c.b16 %v3422, %v3421
      %v3427 = vpack.c.b16 %v3423, %v3423
      %v3432 = vsel %vm1356, %v3409, 0
      %v3435 = vand.u32 %v3427, %v1363
      %3437 = vmatpush.bf16.msra.mxu0 0
      %3438 = vmatpush.bf16.msra.mxu0 0
      %3439 = vmatpush.bf16.msra.mxu0 0
      %3440 = vmatpush.bf16.msra.mxu0 0
      %3441 = vmatpush.bf16.msra.mxu0 %v3435
      %3442 = vmatpush.bf16.msra.mxu0 %v3426
      %3443 = vmatpush.bf16.msra.mxu0 %v3425
      %3444 = vmatpush.bf16.msra.mxu0 %v3424
      %3445 = vmatmul.bf16.gmra.mxu0 %v3432
      %v3446 = vpop.f32.mrf.mxu0
      %v3447 = vadd.f32 0.0, %v3446
      %v3448 = vpop.f32.mrf.mxu0
      %v3449 = vadd.f32 0.0, %v3448
      %3450 = vdwg.mxu0
      %v3453 = vunpack.c.l.b16 %v398
      %v3454 = vunpack.c.l.b16 %v399
      %v3455 = vpack.c.b16 %v3454, %v3453
      %v3463 = vunpack.c.l.b16 %v1204
      %v3464 = vunpack.c.l.b16 %v1205
      %v3465 = vunpack.c.l.b16 %v1206
      %v3466 = vunpack.c.l.b16 %v1207
      %v3467 = vunpack.c.l.b16 %v1208
      %v3468 = vunpack.c.l.b16 %v1209
      %v3469 = vunpack.c.l.b16 %v1210
      %v3470 = vpack.c.b16 %v3464, %v3463
      %v3471 = vpack.c.b16 %v3466, %v3465
      %v3472 = vpack.c.b16 %v3468, %v3467
      %v3473 = vpack.c.b16 %v3469, %v3469
      %v3478 = vsel %vm1356, %v3455, 0
      %v3481 = vand.u32 %v3473, %v1363
      %3483 = vmatpush.bf16.msra.mxu0 0
      %3484 = vmatpush.bf16.msra.mxu0 0
      %3485 = vmatpush.bf16.msra.mxu0 0
      %3486 = vmatpush.bf16.msra.mxu0 0
      %3487 = vmatpush.bf16.msra.mxu0 %v3481
      %3488 = vmatpush.bf16.msra.mxu0 %v3472
      %3489 = vmatpush.bf16.msra.mxu0 %v3471
      %3490 = vmatpush.bf16.msra.mxu0 %v3470
      %3491 = vmatmul.bf16.gmra.mxu0 %v3478
      %v3492 = vpop.f32.mrf.mxu0
      %v3493 = vadd.f32 0.0, %v3492
      %v3494 = vpop.f32.mrf.mxu0
      %v3495 = vadd.f32 0.0, %v3494
      %3496 = vdwg.mxu0
      %v3499 = vunpack.c.l.b16 %v400
      %v3500 = vunpack.c.l.b16 %v401
      %v3501 = vpack.c.b16 %v3500, %v3499
      %v3509 = vunpack.c.l.b16 %v1211
      %v3510 = vunpack.c.l.b16 %v1212
      %v3511 = vunpack.c.l.b16 %v1213
      %v3512 = vunpack.c.l.b16 %v1214
      %v3513 = vunpack.c.l.b16 %v1215
      %v3514 = vunpack.c.l.b16 %v1216
      %v3515 = vunpack.c.l.b16 %v1217
      %v3516 = vpack.c.b16 %v3510, %v3509
      %v3517 = vpack.c.b16 %v3512, %v3511
      %v3518 = vpack.c.b16 %v3514, %v3513
      %v3519 = vpack.c.b16 %v3515, %v3515
      %v3524 = vsel %vm1356, %v3501, 0
      %v3527 = vand.u32 %v3519, %v1363
      %3529 = vmatpush.bf16.msra.mxu0 0
      %3530 = vmatpush.bf16.msra.mxu0 0
      %3531 = vmatpush.bf16.msra.mxu0 0
      %3532 = vmatpush.bf16.msra.mxu0 0
      %3533 = vmatpush.bf16.msra.mxu0 %v3527
      %3534 = vmatpush.bf16.msra.mxu0 %v3518
      %3535 = vmatpush.bf16.msra.mxu0 %v3517
      %3536 = vmatpush.bf16.msra.mxu0 %v3516
      %3537 = vmatmul.bf16.gmra.mxu0 %v3524
      %v3538 = vpop.f32.mrf.mxu0
      %v3539 = vadd.f32 0.0, %v3538
      %v3540 = vpop.f32.mrf.mxu0
      %v3541 = vadd.f32 0.0, %v3540
      %3542 = vdwg.mxu0
      %v3545 = vunpack.c.l.b16 %v402
      %v3546 = vunpack.c.l.b16 %v403
      %v3547 = vpack.c.b16 %v3546, %v3545
      %v3555 = vunpack.c.l.b16 %v1218
      %v3556 = vunpack.c.l.b16 %v1219
      %v3557 = vunpack.c.l.b16 %v1220
      %v3558 = vunpack.c.l.b16 %v1221
      %v3559 = vunpack.c.l.b16 %v1222
      %v3560 = vunpack.c.l.b16 %v1223
      %v3561 = vunpack.c.l.b16 %v1224
      %v3562 = vpack.c.b16 %v3556, %v3555
      %v3563 = vpack.c.b16 %v3558, %v3557
      %v3564 = vpack.c.b16 %v3560, %v3559
      %v3565 = vpack.c.b16 %v3561, %v3561
      %v3570 = vsel %vm1356, %v3547, 0
      %v3573 = vand.u32 %v3565, %v1363
      %3575 = vmatpush.bf16.msra.mxu0 0
      %3576 = vmatpush.bf16.msra.mxu0 0
      %3577 = vmatpush.bf16.msra.mxu0 0
      %3578 = vmatpush.bf16.msra.mxu0 0
      %3579 = vmatpush.bf16.msra.mxu0 %v3573
      %3580 = vmatpush.bf16.msra.mxu0 %v3564
      %3581 = vmatpush.bf16.msra.mxu0 %v3563
      %3582 = vmatpush.bf16.msra.mxu0 %v3562
      %3583 = vmatmul.bf16.gmra.mxu0 %v3570
      %v3584 = vpop.f32.mrf.mxu0
      %v3585 = vadd.f32 0.0, %v3584
      %v3586 = vpop.f32.mrf.mxu0
      %v3587 = vadd.f32 0.0, %v3586
      %3588 = vdwg.mxu0
      %v3591 = vunpack.c.l.b16 %v404
      %v3592 = vunpack.c.l.b16 %v405
      %v3593 = vpack.c.b16 %v3592, %v3591
      %v3601 = vunpack.c.l.b16 %v1225
      %v3602 = vunpack.c.l.b16 %v1226
      %v3603 = vunpack.c.l.b16 %v1227
      %v3604 = vunpack.c.l.b16 %v1228
      %v3605 = vunpack.c.l.b16 %v1229
      %v3606 = vunpack.c.l.b16 %v1230
      %v3607 = vunpack.c.l.b16 %v1231
      %v3608 = vpack.c.b16 %v3602, %v3601
      %v3609 = vpack.c.b16 %v3604, %v3603
      %v3610 = vpack.c.b16 %v3606, %v3605
      %v3611 = vpack.c.b16 %v3607, %v3607
      %v3616 = vsel %vm1356, %v3593, 0
      %v3619 = vand.u32 %v3611, %v1363
      %3621 = vmatpush.bf16.msra.mxu0 0
      %3622 = vmatpush.bf16.msra.mxu0 0
      %3623 = vmatpush.bf16.msra.mxu0 0
      %3624 = vmatpush.bf16.msra.mxu0 0
      %3625 = vmatpush.bf16.msra.mxu0 %v3619
      %3626 = vmatpush.bf16.msra.mxu0 %v3610
      %3627 = vmatpush.bf16.msra.mxu0 %v3609
      %3628 = vmatpush.bf16.msra.mxu0 %v3608
      %3629 = vmatmul.bf16.gmra.mxu0 %v3616
      %v3630 = vpop.f32.mrf.mxu0
      %v3631 = vadd.f32 0.0, %v3630
      %v3632 = vpop.f32.mrf.mxu0
      %v3633 = vadd.f32 0.0, %v3632
      %3634 = vdwg.mxu0
      %v3637 = vunpack.c.l.b16 %v406
      %v3638 = vunpack.c.l.b16 %v407
      %v3639 = vpack.c.b16 %v3638, %v3637
      %v3647 = vunpack.c.l.b16 %v1232
      %v3648 = vunpack.c.l.b16 %v1233
      %v3649 = vunpack.c.l.b16 %v1234
      %v3650 = vunpack.c.l.b16 %v1235
      %v3651 = vunpack.c.l.b16 %v1236
      %v3652 = vunpack.c.l.b16 %v1237
      %v3653 = vunpack.c.l.b16 %v1238
      %v3654 = vpack.c.b16 %v3648, %v3647
      %v3655 = vpack.c.b16 %v3650, %v3649
      %v3656 = vpack.c.b16 %v3652, %v3651
      %v3657 = vpack.c.b16 %v3653, %v3653
      %v3662 = vsel %vm1356, %v3639, 0
      %v3665 = vand.u32 %v3657, %v1363
      %3667 = vmatpush.bf16.msra.mxu0 0
      %3668 = vmatpush.bf16.msra.mxu0 0
      %3669 = vmatpush.bf16.msra.mxu0 0
      %3670 = vmatpush.bf16.msra.mxu0 0
      %3671 = vmatpush.bf16.msra.mxu0 %v3665
      %3672 = vmatpush.bf16.msra.mxu0 %v3656
      %3673 = vmatpush.bf16.msra.mxu0 %v3655
      %3674 = vmatpush.bf16.msra.mxu0 %v3654
      %3675 = vmatmul.bf16.gmra.mxu0 %v3662
      %v3676 = vpop.f32.mrf.mxu0
      %v3677 = vadd.f32 0.0, %v3676
      %v3678 = vpop.f32.mrf.mxu0
      %v3679 = vadd.f32 0.0, %v3678
      %3680 = vdwg.mxu0
      %v3683 = vunpack.c.l.b16 %v408
      %v3684 = vunpack.c.l.b16 %v409
      %v3685 = vpack.c.b16 %v3684, %v3683
      %v3693 = vunpack.c.l.b16 %v1239
      %v3694 = vunpack.c.l.b16 %v1240
      %v3695 = vunpack.c.l.b16 %v1241
      %v3696 = vunpack.c.l.b16 %v1242
      %v3697 = vunpack.c.l.b16 %v1243
      %v3698 = vunpack.c.l.b16 %v1244
      %v3699 = vunpack.c.l.b16 %v1245
      %v3700 = vpack.c.b16 %v3694, %v3693
      %v3701 = vpack.c.b16 %v3696, %v3695
      %v3702 = vpack.c.b16 %v3698, %v3697
      %v3703 = vpack.c.b16 %v3699, %v3699
      %v3708 = vsel %vm1356, %v3685, 0
      %v3711 = vand.u32 %v3703, %v1363
      %3713 = vmatpush.bf16.msra.mxu0 0
      %3714 = vmatpush.bf16.msra.mxu0 0
      %3715 = vmatpush.bf16.msra.mxu0 0
      %3716 = vmatpush.bf16.msra.mxu0 0
      %3717 = vmatpush.bf16.msra.mxu0 %v3711
      %3718 = vmatpush.bf16.msra.mxu0 %v3702
      %3719 = vmatpush.bf16.msra.mxu0 %v3701
      %3720 = vmatpush.bf16.msra.mxu0 %v3700
      %3721 = vmatmul.bf16.gmra.mxu0 %v3708
      %v3722 = vpop.f32.mrf.mxu0
      %v3723 = vadd.f32 0.0, %v3722
      %v3724 = vpop.f32.mrf.mxu0
      %v3725 = vadd.f32 0.0, %v3724
      %3726 = vdwg.mxu0
      %v3729 = vunpack.c.l.b16 %v410
      %v3730 = vunpack.c.l.b16 %v411
      %v3731 = vpack.c.b16 %v3730, %v3729
      %v3739 = vunpack.c.l.b16 %v1246
      %v3740 = vunpack.c.l.b16 %v1247
      %v3741 = vunpack.c.l.b16 %v1248
      %v3742 = vunpack.c.l.b16 %v1249
      %v3743 = vunpack.c.l.b16 %v1250
      %v3744 = vunpack.c.l.b16 %v1251
      %v3745 = vunpack.c.l.b16 %v1252
      %v3746 = vpack.c.b16 %v3740, %v3739
      %v3747 = vpack.c.b16 %v3742, %v3741
      %v3748 = vpack.c.b16 %v3744, %v3743
      %v3749 = vpack.c.b16 %v3745, %v3745
      %v3754 = vsel %vm1356, %v3731, 0
      %v3757 = vand.u32 %v3749, %v1363
      %3759 = vmatpush.bf16.msra.mxu0 0
      %3760 = vmatpush.bf16.msra.mxu0 0
      %3761 = vmatpush.bf16.msra.mxu0 0
      %3762 = vmatpush.bf16.msra.mxu0 0
      %3763 = vmatpush.bf16.msra.mxu0 %v3757
      %3764 = vmatpush.bf16.msra.mxu0 %v3748
      %3765 = vmatpush.bf16.msra.mxu0 %v3747
      %3766 = vmatpush.bf16.msra.mxu0 %v3746
      %3767 = vmatmul.bf16.gmra.mxu0 %v3754
      %v3768 = vpop.f32.mrf.mxu0
      %v3769 = vadd.f32 0.0, %v3768
      %v3770 = vpop.f32.mrf.mxu0
      %v3771 = vadd.f32 0.0, %v3770
      %3772 = vdwg.mxu0
      %v3775 = vunpack.c.l.b16 %v412
      %v3776 = vunpack.c.l.b16 %v413
      %v3777 = vpack.c.b16 %v3776, %v3775
      %v3785 = vunpack.c.l.b16 %v1253
      %v3786 = vunpack.c.l.b16 %v1254
      %v3787 = vunpack.c.l.b16 %v1255
      %v3788 = vunpack.c.l.b16 %v1256
      %v3789 = vunpack.c.l.b16 %v1257
      %v3790 = vunpack.c.l.b16 %v1258
      %v3791 = vunpack.c.l.b16 %v1259
      %v3792 = vpack.c.b16 %v3786, %v3785
      %v3793 = vpack.c.b16 %v3788, %v3787
      %v3794 = vpack.c.b16 %v3790, %v3789
      %v3795 = vpack.c.b16 %v3791, %v3791
      %v3800 = vsel %vm1356, %v3777, 0
      %v3803 = vand.u32 %v3795, %v1363
      %3805 = vmatpush.bf16.msra.mxu0 0
      %3806 = vmatpush.bf16.msra.mxu0 0
      %3807 = vmatpush.bf16.msra.mxu0 0
      %3808 = vmatpush.bf16.msra.mxu0 0
      %3809 = vmatpush.bf16.msra.mxu0 %v3803
      %3810 = vmatpush.bf16.msra.mxu0 %v3794
      %3811 = vmatpush.bf16.msra.mxu0 %v3793
      %3812 = vmatpush.bf16.msra.mxu0 %v3792
      %3813 = vmatmul.bf16.gmra.mxu0 %v3800
      %v3814 = vpop.f32.mrf.mxu0
      %v3815 = vadd.f32 0.0, %v3814
      %v3816 = vpop.f32.mrf.mxu0
      %v3817 = vadd.f32 0.0, %v3816
      %3818 = vdwg.mxu0
      %v3821 = vunpack.c.l.b16 %v414
      %v3822 = vunpack.c.l.b16 %v415
      %v3823 = vpack.c.b16 %v3822, %v3821
      %v3831 = vunpack.c.l.b16 %v1260
      %v3832 = vunpack.c.l.b16 %v1261
      %v3833 = vunpack.c.l.b16 %v1262
      %v3834 = vunpack.c.l.b16 %v1263
      %v3835 = vunpack.c.l.b16 %v1264
      %v3836 = vunpack.c.l.b16 %v1265
      %v3837 = vunpack.c.l.b16 %v1266
      %v3838 = vpack.c.b16 %v3832, %v3831
      %v3839 = vpack.c.b16 %v3834, %v3833
      %v3840 = vpack.c.b16 %v3836, %v3835
      %v3841 = vpack.c.b16 %v3837, %v3837
      %v3846 = vsel %vm1356, %v3823, 0
      %v3849 = vand.u32 %v3841, %v1363
      %3851 = vmatpush.bf16.msra.mxu0 0
      %3852 = vmatpush.bf16.msra.mxu0 0
      %3853 = vmatpush.bf16.msra.mxu0 0
      %3854 = vmatpush.bf16.msra.mxu0 0
      %3855 = vmatpush.bf16.msra.mxu0 %v3849
      %3856 = vmatpush.bf16.msra.mxu0 %v3840
      %3857 = vmatpush.bf16.msra.mxu0 %v3839
      %3858 = vmatpush.bf16.msra.mxu0 %v3838
      %3859 = vmatmul.bf16.gmra.mxu0 %v3846
      %v3860 = vpop.f32.mrf.mxu0
      %v3861 = vadd.f32 0.0, %v3860
      %v3862 = vpop.f32.mrf.mxu0
      %v3863 = vadd.f32 0.0, %v3862
      %3864 = vdwg.mxu0
      %v3867 = vunpack.c.l.b16 %v416
      %v3868 = vunpack.c.l.b16 %v417
      %v3869 = vpack.c.b16 %v3868, %v3867
      %v3877 = vunpack.c.l.b16 %v1267
      %v3878 = vunpack.c.l.b16 %v1268
      %v3879 = vunpack.c.l.b16 %v1269
      %v3880 = vunpack.c.l.b16 %v1270
      %v3881 = vunpack.c.l.b16 %v1271
      %v3882 = vunpack.c.l.b16 %v1272
      %v3883 = vunpack.c.l.b16 %v1273
      %v3884 = vpack.c.b16 %v3878, %v3877
      %v3885 = vpack.c.b16 %v3880, %v3879
      %v3886 = vpack.c.b16 %v3882, %v3881
      %v3887 = vpack.c.b16 %v3883, %v3883
      %v3892 = vsel %vm1356, %v3869, 0
      %v3895 = vand.u32 %v3887, %v1363
      %3897 = vmatpush.bf16.msra.mxu0 0
      %3898 = vmatpush.bf16.msra.mxu0 0
      %3899 = vmatpush.bf16.msra.mxu0 0
      %3900 = vmatpush.bf16.msra.mxu0 0
      %3901 = vmatpush.bf16.msra.mxu0 %v3895
      %3902 = vmatpush.bf16.msra.mxu0 %v3886
      %3903 = vmatpush.bf16.msra.mxu0 %v3885
      %3904 = vmatpush.bf16.msra.mxu0 %v3884
      %3905 = vmatmul.bf16.gmra.mxu0 %v3892
      %v3906 = vpop.f32.mrf.mxu0
      %v3907 = vadd.f32 0.0, %v3906
      %v3908 = vpop.f32.mrf.mxu0
      %v3909 = vadd.f32 0.0, %v3908
      %3910 = vdwg.mxu0
      %v3913 = vunpack.c.l.b16 %v418
      %v3914 = vunpack.c.l.b16 %v419
      %v3915 = vpack.c.b16 %v3914, %v3913
      %v3923 = vunpack.c.l.b16 %v1274
      %v3924 = vunpack.c.l.b16 %v1275
      %v3925 = vunpack.c.l.b16 %v1276
      %v3926 = vunpack.c.l.b16 %v1277
      %v3927 = vunpack.c.l.b16 %v1278
      %v3928 = vunpack.c.l.b16 %v1279
      %v3929 = vunpack.c.l.b16 %v1280
      %v3930 = vpack.c.b16 %v3924, %v3923
      %v3931 = vpack.c.b16 %v3926, %v3925
      %v3932 = vpack.c.b16 %v3928, %v3927
      %v3933 = vpack.c.b16 %v3929, %v3929
      %v3938 = vsel %vm1356, %v3915, 0
      %v3941 = vand.u32 %v3933, %v1363
      %3943 = vmatpush.bf16.msra.mxu0 0
      %3944 = vmatpush.bf16.msra.mxu0 0
      %3945 = vmatpush.bf16.msra.mxu0 0
      %3946 = vmatpush.bf16.msra.mxu0 0
      %3947 = vmatpush.bf16.msra.mxu0 %v3941
      %3948 = vmatpush.bf16.msra.mxu0 %v3932
      %3949 = vmatpush.bf16.msra.mxu0 %v3931
      %3950 = vmatpush.bf16.msra.mxu0 %v3930
      %3951 = vmatmul.bf16.gmra.mxu0 %v3938
      %v3952 = vpop.f32.mrf.mxu0
      %v3953 = vadd.f32 0.0, %v3952
      %v3954 = vpop.f32.mrf.mxu0
      %v3955 = vadd.f32 0.0, %v3954
      %3956 = vdwg.mxu0
      %v3959 = vunpack.c.l.b16 %v420
      %v3960 = vunpack.c.l.b16 %v421
      %v3961 = vpack.c.b16 %v3960, %v3959
      %v3969 = vunpack.c.l.b16 %v1281
      %v3970 = vunpack.c.l.b16 %v1282
      %v3971 = vunpack.c.l.b16 %v1283
      %v3972 = vunpack.c.l.b16 %v1284
      %v3973 = vunpack.c.l.b16 %v1285
      %v3974 = vunpack.c.l.b16 %v1286
      %v3975 = vunpack.c.l.b16 %v1287
      %v3976 = vpack.c.b16 %v3970, %v3969
      %v3977 = vpack.c.b16 %v3972, %v3971
      %v3978 = vpack.c.b16 %v3974, %v3973
      %v3979 = vpack.c.b16 %v3975, %v3975
      %v3984 = vsel %vm1356, %v3961, 0
      %v3987 = vand.u32 %v3979, %v1363
      %3989 = vmatpush.bf16.msra.mxu0 0
      %3990 = vmatpush.bf16.msra.mxu0 0
      %3991 = vmatpush.bf16.msra.mxu0 0
      %3992 = vmatpush.bf16.msra.mxu0 0
      %3993 = vmatpush.bf16.msra.mxu0 %v3987
      %3994 = vmatpush.bf16.msra.mxu0 %v3978
      %3995 = vmatpush.bf16.msra.mxu0 %v3977
      %3996 = vmatpush.bf16.msra.mxu0 %v3976
      %3997 = vmatmul.bf16.gmra.mxu0 %v3984
      %v3998 = vpop.f32.mrf.mxu0
      %v3999 = vadd.f32 0.0, %v3998
      %v4000 = vpop.f32.mrf.mxu0
      %v4001 = vadd.f32 0.0, %v4000
      %4002 = vdwg.mxu0
      %v4005 = vunpack.c.l.b16 %v422
      %v4006 = vunpack.c.l.b16 %v423
      %v4007 = vpack.c.b16 %v4006, %v4005
      %v4015 = vunpack.c.l.b16 %v1288
      %v4016 = vunpack.c.l.b16 %v1289
      %v4017 = vunpack.c.l.b16 %v1290
      %v4018 = vunpack.c.l.b16 %v1291
      %v4019 = vunpack.c.l.b16 %v1292
      %v4020 = vunpack.c.l.b16 %v1293
      %v4021 = vunpack.c.l.b16 %v1294
      %v4022 = vpack.c.b16 %v4016, %v4015
      %v4023 = vpack.c.b16 %v4018, %v4017
      %v4024 = vpack.c.b16 %v4020, %v4019
      %v4025 = vpack.c.b16 %v4021, %v4021
      %v4030 = vsel %vm1356, %v4007, 0
      %v4033 = vand.u32 %v4025, %v1363
      %4035 = vmatpush.bf16.msra.mxu0 0
      %4036 = vmatpush.bf16.msra.mxu0 0
      %4037 = vmatpush.bf16.msra.mxu0 0
      %4038 = vmatpush.bf16.msra.mxu0 0
      %4039 = vmatpush.bf16.msra.mxu0 %v4033
      %4040 = vmatpush.bf16.msra.mxu0 %v4024
      %4041 = vmatpush.bf16.msra.mxu0 %v4023
      %4042 = vmatpush.bf16.msra.mxu0 %v4022
      %4043 = vmatmul.bf16.gmra.mxu0 %v4030
      %v4044 = vpop.f32.mrf.mxu0
      %v4045 = vadd.f32 0.0, %v4044
      %v4046 = vpop.f32.mrf.mxu0
      %v4047 = vadd.f32 0.0, %v4046
      %4048 = vdwg.mxu0
      %v4051 = vunpack.c.l.b16 %v424
      %v4052 = vunpack.c.l.b16 %v425
      %v4053 = vpack.c.b16 %v4052, %v4051
      %v4061 = vunpack.c.l.b16 %v1295
      %v4062 = vunpack.c.l.b16 %v1296
      %v4063 = vunpack.c.l.b16 %v1297
      %v4064 = vunpack.c.l.b16 %v1298
      %v4065 = vunpack.c.l.b16 %v1299
      %v4066 = vunpack.c.l.b16 %v1300
      %v4067 = vunpack.c.l.b16 %v1301
      %v4068 = vpack.c.b16 %v4062, %v4061
      %v4069 = vpack.c.b16 %v4064, %v4063
      %v4070 = vpack.c.b16 %v4066, %v4065
      %v4071 = vpack.c.b16 %v4067, %v4067
      %v4076 = vsel %vm1356, %v4053, 0
      %v4079 = vand.u32 %v4071, %v1363
      %4081 = vmatpush.bf16.msra.mxu0 0
      %4082 = vmatpush.bf16.msra.mxu0 0
      %4083 = vmatpush.bf16.msra.mxu0 0
      %4084 = vmatpush.bf16.msra.mxu0 0
      %4085 = vmatpush.bf16.msra.mxu0 %v4079
      %4086 = vmatpush.bf16.msra.mxu0 %v4070
      %4087 = vmatpush.bf16.msra.mxu0 %v4069
      %4088 = vmatpush.bf16.msra.mxu0 %v4068
      %4089 = vmatmul.bf16.gmra.mxu0 %v4076
      %v4090 = vpop.f32.mrf.mxu0
      %v4091 = vadd.f32 0.0, %v4090
      %v4092 = vpop.f32.mrf.mxu0
      %v4093 = vadd.f32 0.0, %v4092
      %4094 = vdwg.mxu0
      %v4097 = vunpack.c.l.b16 %v426
      %v4098 = vunpack.c.l.b16 %v427
      %v4099 = vpack.c.b16 %v4098, %v4097
      %v4107 = vunpack.c.l.b16 %v1302
      %v4108 = vunpack.c.l.b16 %v1303
      %v4109 = vunpack.c.l.b16 %v1304
      %v4110 = vunpack.c.l.b16 %v1305
      %v4111 = vunpack.c.l.b16 %v1306
      %v4112 = vunpack.c.l.b16 %v1307
      %v4113 = vunpack.c.l.b16 %v1308
      %v4114 = vpack.c.b16 %v4108, %v4107
      %v4115 = vpack.c.b16 %v4110, %v4109
      %v4116 = vpack.c.b16 %v4112, %v4111
      %v4117 = vpack.c.b16 %v4113, %v4113
      %v4122 = vsel %vm1356, %v4099, 0
      %v4125 = vand.u32 %v4117, %v1363
      %4127 = vmatpush.bf16.msra.mxu0 0
      %4128 = vmatpush.bf16.msra.mxu0 0
      %4129 = vmatpush.bf16.msra.mxu0 0
      %4130 = vmatpush.bf16.msra.mxu0 0
      %4131 = vmatpush.bf16.msra.mxu0 %v4125
      %4132 = vmatpush.bf16.msra.mxu0 %v4116
      %4133 = vmatpush.bf16.msra.mxu0 %v4115
      %4134 = vmatpush.bf16.msra.mxu0 %v4114
      %4135 = vmatmul.bf16.gmra.mxu0 %v4122
      %v4136 = vpop.f32.mrf.mxu0
      %v4137 = vadd.f32 0.0, %v4136
      %v4138 = vpop.f32.mrf.mxu0
      %v4139 = vadd.f32 0.0, %v4138
      %4140 = vdwg.mxu0
      %v4143 = vunpack.c.l.b16 %v428
      %v4144 = vunpack.c.l.b16 %v429
      %v4145 = vpack.c.b16 %v4144, %v4143
      %v4153 = vunpack.c.l.b16 %v1309
      %v4154 = vunpack.c.l.b16 %v1310
      %v4155 = vunpack.c.l.b16 %v1311
      %v4156 = vunpack.c.l.b16 %v1312
      %v4157 = vunpack.c.l.b16 %v1313
      %v4158 = vunpack.c.l.b16 %v1314
      %v4159 = vunpack.c.l.b16 %v1315
      %v4160 = vpack.c.b16 %v4154, %v4153
      %v4161 = vpack.c.b16 %v4156, %v4155
      %v4162 = vpack.c.b16 %v4158, %v4157
      %v4163 = vpack.c.b16 %v4159, %v4159
      %v4168 = vsel %vm1356, %v4145, 0
      %v4171 = vand.u32 %v4163, %v1363
      %4173 = vmatpush.bf16.msra.mxu0 0
      %4174 = vmatpush.bf16.msra.mxu0 0
      %4175 = vmatpush.bf16.msra.mxu0 0
      %4176 = vmatpush.bf16.msra.mxu0 0
      %4177 = vmatpush.bf16.msra.mxu0 %v4171
      %4178 = vmatpush.bf16.msra.mxu0 %v4162
      %4179 = vmatpush.bf16.msra.mxu0 %v4161
      %4180 = vmatpush.bf16.msra.mxu0 %v4160
      %4181 = vmatmul.bf16.gmra.mxu0 %v4168
      %v4182 = vpop.f32.mrf.mxu0
      %v4183 = vadd.f32 0.0, %v4182
      %v4184 = vpop.f32.mrf.mxu0
      %v4185 = vadd.f32 0.0, %v4184
      %4186 = vdwg.mxu0
      %v4189 = vunpack.c.l.b16 %v430
      %v4190 = vunpack.c.l.b16 %v431
      %v4191 = vpack.c.b16 %v4190, %v4189
      %v4199 = vunpack.c.l.b16 %v1316
      %v4200 = vunpack.c.l.b16 %v1317
      %v4201 = vunpack.c.l.b16 %v1318
      %v4202 = vunpack.c.l.b16 %v1319
      %v4203 = vunpack.c.l.b16 %v1320
      %v4204 = vunpack.c.l.b16 %v1321
      %v4205 = vunpack.c.l.b16 %v1322
      %v4206 = vpack.c.b16 %v4200, %v4199
      %v4207 = vpack.c.b16 %v4202, %v4201
      %v4208 = vpack.c.b16 %v4204, %v4203
      %v4209 = vpack.c.b16 %v4205, %v4205
      %v4214 = vsel %vm1356, %v4191, 0
      %v4217 = vand.u32 %v4209, %v1363
      %4219 = vmatpush.bf16.msra.mxu0 0
      %4220 = vmatpush.bf16.msra.mxu0 0
      %4221 = vmatpush.bf16.msra.mxu0 0
      %4222 = vmatpush.bf16.msra.mxu0 0
      %4223 = vmatpush.bf16.msra.mxu0 %v4217
      %4224 = vmatpush.bf16.msra.mxu0 %v4208
      %4225 = vmatpush.bf16.msra.mxu0 %v4207
      %4226 = vmatpush.bf16.msra.mxu0 %v4206
      %4227 = vmatmul.bf16.gmra.mxu0 %v4214
      %v4228 = vpop.f32.mrf.mxu0
      %v4229 = vadd.f32 0.0, %v4228
      %v4230 = vpop.f32.mrf.mxu0
      %v4231 = vadd.f32 0.0, %v4230
      %4232 = vdwg.mxu0
      %v4235 = vunpack.c.l.b16 %v432
      %v4236 = vunpack.c.l.b16 %v433
      %v4237 = vpack.c.b16 %v4236, %v4235
      %v4245 = vunpack.c.l.b16 %v1323
      %v4246 = vunpack.c.l.b16 %v1324
      %v4247 = vunpack.c.l.b16 %v1325
      %v4248 = vunpack.c.l.b16 %v1326
      %v4249 = vunpack.c.l.b16 %v1327
      %v4250 = vunpack.c.l.b16 %v1328
      %v4251 = vunpack.c.l.b16 %v1329
      %v4252 = vpack.c.b16 %v4246, %v4245
      %v4253 = vpack.c.b16 %v4248, %v4247
      %v4254 = vpack.c.b16 %v4250, %v4249
      %v4255 = vpack.c.b16 %v4251, %v4251
      %v4260 = vsel %vm1356, %v4237, 0
      %v4263 = vand.u32 %v4255, %v1363
      %4265 = vmatpush.bf16.msra.mxu0 0
      %4266 = vmatpush.bf16.msra.mxu0 0
      %4267 = vmatpush.bf16.msra.mxu0 0
      %4268 = vmatpush.bf16.msra.mxu0 0
      %4269 = vmatpush.bf16.msra.mxu0 %v4263
      %4270 = vmatpush.bf16.msra.mxu0 %v4254
      %4271 = vmatpush.bf16.msra.mxu0 %v4253
      %4272 = vmatpush.bf16.msra.mxu0 %v4252
      %4273 = vmatmul.bf16.gmra.mxu0 %v4260
      %v4274 = vpop.f32.mrf.mxu0
      %v4275 = vadd.f32 0.0, %v4274
      %v4276 = vpop.f32.mrf.mxu0
      %v4277 = vadd.f32 0.0, %v4276
      %4278 = vdwg.mxu0
      %vm4279 = vcmask 138240
      %4280 = vst.msk [vmem:[%s175] sm:$0xff] %vm4279, %v1377
      %4281 = vst.msk [vmem:[%s175 + $0x8] sm:$0xff] %vm4279, %v1379
      %4282 = vst.msk [vmem:[%s175 + $0x10] sm:$0xff] %vm4279, %v1423
      %4283 = vst.msk [vmem:[%s175 + $0x18] sm:$0xff] %vm4279, %v1425
      %4284 = vst.msk [vmem:[%s175 + $0x20] sm:$0xff] %vm4279, %v1469
      %4285 = vst.msk [vmem:[%s175 + $0x28] sm:$0xff] %vm4279, %v1471
      %4286 = vst.msk [vmem:[%s175 + $0x30] sm:$0xff] %vm4279, %v1515
      %4287 = vst.msk [vmem:[%s175 + $0x38] sm:$0xff] %vm4279, %v1517
      %4288 = vst.msk [vmem:[%s175 + $0x40] sm:$0xff] %vm4279, %v1561
      %4289 = vst.msk [vmem:[%s175 + $0x48] sm:$0xff] %vm4279, %v1563
      %4290 = vst.msk [vmem:[%s175 + $0x50] sm:$0xff] %vm4279, %v1607
      %4291 = vst.msk [vmem:[%s175 + $0x58] sm:$0xff] %vm4279, %v1609
      %4292 = vst.msk [vmem:[%s175 + $0x60] sm:$0xff] %vm4279, %v1653
      %4293 = vst.msk [vmem:[%s175 + $0x68] sm:$0xff] %vm4279, %v1655
      %4294 = vst.msk [vmem:[%s175 + $0x70] sm:$0xff] %vm4279, %v1699
      %4295 = vst.msk [vmem:[%s175 + $0x78] sm:$0xff] %vm4279, %v1701
      %4296 = vst.msk [vmem:[%s175 + $0x80] sm:$0xff] %vm4279, %v1745
      %4297 = vst.msk [vmem:[%s175 + $0x88] sm:$0xff] %vm4279, %v1747
      %4298 = vst.msk [vmem:[%s175 + $0x90] sm:$0xff] %vm4279, %v1791
      %4299 = vst.msk [vmem:[%s175 + $0x98] sm:$0xff] %vm4279, %v1793
      %4300 = vst.msk [vmem:[%s175 + $0xa0] sm:$0xff] %vm4279, %v1837
      %4301 = vst.msk [vmem:[%s175 + $0xa8] sm:$0xff] %vm4279, %v1839
      %4302 = vst.msk [vmem:[%s175 + $0xb0] sm:$0xff] %vm4279, %v1883
      %4303 = vst.msk [vmem:[%s175 + $0xb8] sm:$0xff] %vm4279, %v1885
      %4304 = vst.msk [vmem:[%s175 + $0xc0] sm:$0xff] %vm4279, %v1929
      %4305 = vst.msk [vmem:[%s175 + $0xc8] sm:$0xff] %vm4279, %v1931
      %4306 = vst.msk [vmem:[%s175 + $0xd0] sm:$0xff] %vm4279, %v1975
      %4307 = vst.msk [vmem:[%s175 + $0xd8] sm:$0xff] %vm4279, %v1977
      %4308 = vst.msk [vmem:[%s175 + $0xe0] sm:$0xff] %vm4279, %v2021
      %4309 = vst.msk [vmem:[%s175 + $0xe8] sm:$0xff] %vm4279, %v2023
      %4310 = vst.msk [vmem:[%s175 + $0xf0] sm:$0xff] %vm4279, %v2067
      %4311 = vst.msk [vmem:[%s175 + $0xf8] sm:$0xff] %vm4279, %v2069
      %4312 = vst.msk [vmem:[%s175 + $0x100] sm:$0xff] %vm4279, %v2113
      %4313 = vst.msk [vmem:[%s175 + $0x108] sm:$0xff] %vm4279, %v2115
      %4314 = vst.msk [vmem:[%s175 + $0x110] sm:$0xff] %vm4279, %v2159
      %4315 = vst.msk [vmem:[%s175 + $0x118] sm:$0xff] %vm4279, %v2161
      %4316 = vst.msk [vmem:[%s175 + $0x120] sm:$0xff] %vm4279, %v2205
      %4317 = vst.msk [vmem:[%s175 + $0x128] sm:$0xff] %vm4279, %v2207
      %4318 = vst.msk [vmem:[%s175 + $0x130] sm:$0xff] %vm4279, %v2251
      %4319 = vst.msk [vmem:[%s175 + $0x138] sm:$0xff] %vm4279, %v2253
      %4320 = vst.msk [vmem:[%s175 + $0x140] sm:$0xff] %vm4279, %v2297
      %4321 = vst.msk [vmem:[%s175 + $0x148] sm:$0xff] %vm4279, %v2299
      %4322 = vst.msk [vmem:[%s175 + $0x150] sm:$0xff] %vm4279, %v2343
      %4323 = vst.msk [vmem:[%s175 + $0x158] sm:$0xff] %vm4279, %v2345
      %4324 = vst.msk [vmem:[%s175 + $0x160] sm:$0xff] %vm4279, %v2389
      %4325 = vst.msk [vmem:[%s175 + $0x168] sm:$0xff] %vm4279, %v2391
      %4326 = vst.msk [vmem:[%s175 + $0x170] sm:$0xff] %vm4279, %v2435
      %4327 = vst.msk [vmem:[%s175 + $0x178] sm:$0xff] %vm4279, %v2437
      %4328 = vst.msk [vmem:[%s175 + $0x180] sm:$0xff] %vm4279, %v2481
      %4329 = vst.msk [vmem:[%s175 + $0x188] sm:$0xff] %vm4279, %v2483
      %4330 = vst.msk [vmem:[%s175 + $0x190] sm:$0xff] %vm4279, %v2527
      %4331 = vst.msk [vmem:[%s175 + $0x198] sm:$0xff] %vm4279, %v2529
      %4332 = vst.msk [vmem:[%s175 + $0x1a0] sm:$0xff] %vm4279, %v2573
      %4333 = vst.msk [vmem:[%s175 + $0x1a8] sm:$0xff] %vm4279, %v2575
      %4334 = vst.msk [vmem:[%s175 + $0x1b0] sm:$0xff] %vm4279, %v2619
      %4335 = vst.msk [vmem:[%s175 + $0x1b8] sm:$0xff] %vm4279, %v2621
      %4336 = vst.msk [vmem:[%s175 + $0x1c0] sm:$0xff] %vm4279, %v2665
      %4337 = vst.msk [vmem:[%s175 + $0x1c8] sm:$0xff] %vm4279, %v2667
      %4338 = vst.msk [vmem:[%s175 + $0x1d0] sm:$0xff] %vm4279, %v2711
      %4339 = vst.msk [vmem:[%s175 + $0x1d8] sm:$0xff] %vm4279, %v2713
      %4340 = vst.msk [vmem:[%s175 + $0x1e0] sm:$0xff] %vm4279, %v2757
      %4341 = vst.msk [vmem:[%s175 + $0x1e8] sm:$0xff] %vm4279, %v2759
      %4342 = vst.msk [vmem:[%s175 + $0x1f0] sm:$0xff] %vm4279, %v2803
      %4343 = vst.msk [vmem:[%s175 + $0x1f8] sm:$0xff] %vm4279, %v2805
      %4344 = vst.msk [vmem:[%s175 + $0x200] sm:$0xff] %vm4279, %v2849
      %4345 = vst.msk [vmem:[%s175 + $0x208] sm:$0xff] %vm4279, %v2851
      %4346 = vst.msk [vmem:[%s175 + $0x210] sm:$0xff] %vm4279, %v2895
      %4347 = vst.msk [vmem:[%s175 + $0x218] sm:$0xff] %vm4279, %v2897
      %4348 = vst.msk [vmem:[%s175 + $0x220] sm:$0xff] %vm4279, %v2941
      %4349 = vst.msk [vmem:[%s175 + $0x228] sm:$0xff] %vm4279, %v2943
      %4350 = vst.msk [vmem:[%s175 + $0x230] sm:$0xff] %vm4279, %v2987
      %4351 = vst.msk [vmem:[%s175 + $0x238] sm:$0xff] %vm4279, %v2989
      %4352 = vst.msk [vmem:[%s175 + $0x240] sm:$0xff] %vm4279, %v3033
      %4353 = vst.msk [vmem:[%s175 + $0x248] sm:$0xff] %vm4279, %v3035
      %4354 = vst.msk [vmem:[%s175 + $0x250] sm:$0xff] %vm4279, %v3079
      %4355 = vst.msk [vmem:[%s175 + $0x258] sm:$0xff] %vm4279, %v3081
      %4356 = vst.msk [vmem:[%s175 + $0x260] sm:$0xff] %vm4279, %v3125
      %4357 = vst.msk [vmem:[%s175 + $0x268] sm:$0xff] %vm4279, %v3127
      %4358 = vst.msk [vmem:[%s175 + $0x270] sm:$0xff] %vm4279, %v3171
      %4359 = vst.msk [vmem:[%s175 + $0x278] sm:$0xff] %vm4279, %v3173
      %4360 = vst.msk [vmem:[%s175 + $0x280] sm:$0xff] %vm4279, %v3217
      %4361 = vst.msk [vmem:[%s175 + $0x288] sm:$0xff] %vm4279, %v3219
      %4362 = vst.msk [vmem:[%s175 + $0x290] sm:$0xff] %vm4279, %v3263
      %4363 = vst.msk [vmem:[%s175 + $0x298] sm:$0xff] %vm4279, %v3265
      %4364 = vst.msk [vmem:[%s175 + $0x2a0] sm:$0xff] %vm4279, %v3309
      %4365 = vst.msk [vmem:[%s175 + $0x2a8] sm:$0xff] %vm4279, %v3311
      %4366 = vst.msk [vmem:[%s175 + $0x2b0] sm:$0xff] %vm4279, %v3355
      %4367 = vst.msk [vmem:[%s175 + $0x2b8] sm:$0xff] %vm4279, %v3357
      %4368 = vst.msk [vmem:[%s175 + $0x2c0] sm:$0xff] %vm4279, %v3401
      %4369 = vst.msk [vmem:[%s175 + $0x2c8] sm:$0xff] %vm4279, %v3403
      %4370 = vst.msk [vmem:[%s175 + $0x2d0] sm:$0xff] %vm4279, %v3447
      %4371 = vst.msk [vmem:[%s175 + $0x2d8] sm:$0xff] %vm4279, %v3449
      %4372 = vst.msk [vmem:[%s175 + $0x2e0] sm:$0xff] %vm4279, %v3493
      %4373 = vst.msk [vmem:[%s175 + $0x2e8] sm:$0xff] %vm4279, %v3495
      %4374 = vst.msk [vmem:[%s175 + $0x2f0] sm:$0xff] %vm4279, %v3539
      %4375 = vst.msk [vmem:[%s175 + $0x2f8] sm:$0xff] %vm4279, %v3541
      %4376 = vst.msk [vmem:[%s175 + $0x300] sm:$0xff] %vm4279, %v3585
      %4377 = vst.msk [vmem:[%s175 + $0x308] sm:$0xff] %vm4279, %v3587
      %4378 = vst.msk [vmem:[%s175 + $0x310] sm:$0xff] %vm4279, %v3631
      %4379 = vst.msk [vmem:[%s175 + $0x318] sm:$0xff] %vm4279, %v3633
      %4380 = vst.msk [vmem:[%s175 + $0x320] sm:$0xff] %vm4279, %v3677
      %4381 = vst.msk [vmem:[%s175 + $0x328] sm:$0xff] %vm4279, %v3679
      %4382 = vst.msk [vmem:[%s175 + $0x330] sm:$0xff] %vm4279, %v3723
      %4383 = vst.msk [vmem:[%s175 + $0x338] sm:$0xff] %vm4279, %v3725
      %4384 = vst.msk [vmem:[%s175 + $0x340] sm:$0xff] %vm4279, %v3769
      %4385 = vst.msk [vmem:[%s175 + $0x348] sm:$0xff] %vm4279, %v3771
      %4386 = vst.msk [vmem:[%s175 + $0x350] sm:$0xff] %vm4279, %v3815
      %4387 = vst.msk [vmem:[%s175 + $0x358] sm:$0xff] %vm4279, %v3817
      %4388 = vst.msk [vmem:[%s175 + $0x360] sm:$0xff] %vm4279, %v3861
      %4389 = vst.msk [vmem:[%s175 + $0x368] sm:$0xff] %vm4279, %v3863
      %4390 = vst.msk [vmem:[%s175 + $0x370] sm:$0xff] %vm4279, %v3907
      %4391 = vst.msk [vmem:[%s175 + $0x378] sm:$0xff] %vm4279, %v3909
      %4392 = vst.msk [vmem:[%s175 + $0x380] sm:$0xff] %vm4279, %v3953
      %4393 = vst.msk [vmem:[%s175 + $0x388] sm:$0xff] %vm4279, %v3955
      %4394 = vst.msk [vmem:[%s175 + $0x390] sm:$0xff] %vm4279, %v3999
      %4395 = vst.msk [vmem:[%s175 + $0x398] sm:$0xff] %vm4279, %v4001
      %4396 = vst.msk [vmem:[%s175 + $0x3a0] sm:$0xff] %vm4279, %v4045
      %4397 = vst.msk [vmem:[%s175 + $0x3a8] sm:$0xff] %vm4279, %v4047
      %4398 = vst.msk [vmem:[%s175 + $0x3b0] sm:$0xff] %vm4279, %v4091
      %4399 = vst.msk [vmem:[%s175 + $0x3b8] sm:$0xff] %vm4279, %v4093
      %4400 = vst.msk [vmem:[%s175 + $0x3c0] sm:$0xff] %vm4279, %v4137
      %4401 = vst.msk [vmem:[%s175 + $0x3c8] sm:$0xff] %vm4279, %v4139
      %4402 = vst.msk [vmem:[%s175 + $0x3d0] sm:$0xff] %vm4279, %v4183
      %4403 = vst.msk [vmem:[%s175 + $0x3d8] sm:$0xff] %vm4279, %v4185
      %4404 = vst.msk [vmem:[%s175 + $0x3e0] sm:$0xff] %vm4279, %v4229
      %4405 = vst.msk [vmem:[%s175 + $0x3e8] sm:$0xff] %vm4279, %v4231
      %4406 = vst.msk [vmem:[%s175 + $0x3f0] sm:$0xff] %vm4279, %v4275
      %4407 = vst.msk [vmem:[%s175 + $0x3f8] sm:$0xff] %vm4279, %v4277
      %s4408 = smul.u32 64, %s13
      %p4409 = scmp.lt.s32.totalorder %s4408, 127
      %s4410 = scalar_select %p4409, %s4408, 127
      %s4411 = smul.addr %s4410, 2
      %s4412 = smul.addr %s4411, 8
      %s4413 = scalar_lea.vmem %s2, %s4412
      // Predicated region
      $region29: #{_lambda_.12} parent=27 // pred_check
        %p4414 = pneg %p83
      $region30: #{_lambda_.12} parent=27 // pred_check_branch
        %4416 = sbr.rel (%p4414) target = $region32
      $region31: #{_lambda_.12} parent=27 // pred_region
        %s4417 = smul.u32 64, %s13
      $region32: #{_lambda_.12} parent=27 // pred_fallthru
        _
    $region28: #{_lambda_.12} parent=5 // pred_fallthru
      _
    %p4418 = scmp.le.s32.totalorder 2, %s8
    // Predicated region
    $region33: #{_lambda_.12} parent=5 // pred_check
      %p4419 = pneg %p4418
    $region34: #{_lambda_.12} parent=5 // pred_check_branch
      %4421 = sbr.rel (%p4419) target = $region36
    $region35: #{_lambda_.12} parent=5 // pred_region
      %s4422 = ssub.s32 %s8, 2
      // Predicated region
      $region37: #{_lambda_.12} parent=35 // pred_check
        %p4423 = pneg %p89
      $region38: #{_lambda_.12} parent=35 // pred_check_branch
        %4425 = sbr.rel (%p4423) target = $region40
      $region39: #{_lambda_.12} parent=35 // pred_region
        %s4426 = smul.u32 64, %s14
        %p4427 = scmp.lt.s32.totalorder %s4426, 127
        %s4428 = scalar_select %p4427, %s4426, 127
        %s4429 = smul.addr %s4428, 2
        %s4430 = smul.addr %s4429, 8
        %s4431 = scalar_lea.vmem %s2, %s4430
      $region40: #{_lambda_.12} parent=35 // pred_fallthru
        _
    $region36: #{_lambda_.12} parent=5 // pred_fallthru
      _
  $region6: #{_lambda_.12} parent=0 // loop_footer
    %s12 = sadd.s32 1, %s8
  $region7: #{_lambda_.12} parent=0 // loop_footer_branch
    %7 = sbr.rel target = $region3
  $region8: #{_lambda_.12} parent=0 // loop_exit
    _

// kernel: _lambda_.13
$region0: #{_lambda_.13}
  #allocation0 [shape = 'u32[]', space=smem, size = 0x4, offset = 0x4, fixed_abs, tag = 'smem constant byte address 0x4 - core index']
  #allocation1 [shape = 'u32[72,128]{1,0:T(1,128)}', space=vmem, size = 0x9000, scoped, tag = 'internal scratch']
  %s0 = inlined_call_operand.vmem [shape: f32[544,3], index: 0, kind: input, shape index: {}]
  %s1 = inlined_call_operand.vmem [shape: f32[3,64], index: 1, kind: input, shape index: {}]
  %s2 = inlined_call_operand.vmem [shape: f32[1,64], index: 2, kind: input, shape index: {}]
  %s3 = inlined_call_operand.vmem [shape: f32[544,64], index: 3, kind: output, shape index: {}]
  %s4 = sld [smem:[#allocation0]]
  $region45: #{_lambda_.13} parent=0
    _
  %s6 = ssub.s32 1, %s4
  %s7 = scalar_select 0, %s6, %s4
  loop: start=0, step=1, limit=4
  $region2: #{_lambda_.13} parent=0 // loop_pre_header
    _
  $region3: #{_lambda_.13} parent=0 // loop_header
    %s9 = sphi 0, %s13
    %p10 = scmp.ge.s32.totalorder %s9, 4
    %s19 = sphi 0, %s21
    %s22 = sphi 0, %s19
    %s23 = sphi 0, %s22
    %s39 = sphi 0, %s23
    %s43 = sphi 0, %s43
    %s45 = sphi 0, %s43
    %s46 = sphi 0, %s45
    %s60 = sphi 0, %s46
    %s64 = sphi 0, %s64
    %s66 = sphi 0, %s64
    %s67 = sphi 0, %s66
    %s81 = sphi 0, %s67
    %s87 = sphi 0, %s89
    %s90 = sphi 0, %s87
    %s91 = sphi 0, %s90
    %s107 = sphi 0, %s91
  $region4: #{_lambda_.13} parent=0 // loop_header_branch
    %12 = sbr.rel (%p10) target = $region8
  $region5: #{_lambda_.13} parent=0 // loop_body
    %s14 = ssub.s32 %s9, 1
    %s15 = ssub.s32 %s9, 2
    %s16 = sadd.s32 %s9, 1
    %s17 = ssub.s32 %s9, %s16
    %p18 = scmp.eq.s32.totalorder %s17, 0
    %s20 = sadd.s32 %s19, 1
    %s21 = scalar_select %p18, %s19, %s20
    %p24 = pneg %p18
    %p25 = scmp.eq.s32.totalorder %s9, 1
    %p26 = por %p24, %p25
    %p27 = scmp.ne.s32.totalorder %s19, %s22
    %p28 = scmp.eq.s32.totalorder %s9, 0
    %p29 = por %p27, %p28
    %p30 = scmp.ne.s32.totalorder %s19, %s22
    %p31 = scmp.eq.s32.totalorder %s14, 1
    %p32 = por %p30, %p31
    %p33 = scmp.ne.s32.totalorder %s22, %s23
    %p34 = scmp.eq.s32.totalorder %s14, 0
    %p35 = por %p33, %p34
    %p36 = scmp.ne.s32.totalorder %s22, %s23
    %p37 = scmp.eq.s32.totalorder %s15, 1
    %p38 = por %p36, %p37
    %p40 = scmp.ne.s32.totalorder %s23, %s39
    %p41 = scmp.eq.s32.totalorder %s15, 0
    %p42 = por %p40, %p41
    %s44 = sadd.s32 %s43, 1
    %p47 = scmp.eq.s32.totalorder %s9, 1
    %p48 = scmp.ne.s32.totalorder %s43, %s45
    %p49 = scmp.eq.s32.totalorder %s9, 0
    %p50 = por %p48, %p49
    %p51 = scmp.ne.s32.totalorder %s43, %s45
    %p52 = scmp.eq.s32.totalorder %s14, 1
    %p53 = por %p51, %p52
    %p54 = scmp.ne.s32.totalorder %s45, %s46
    %p55 = scmp.eq.s32.totalorder %s14, 0
    %p56 = por %p54, %p55
    %p57 = scmp.ne.s32.totalorder %s45, %s46
    %p58 = scmp.eq.s32.totalorder %s15, 1
    %p59 = por %p57, %p58
    %p61 = scmp.ne.s32.totalorder %s46, %s60
    %p62 = scmp.eq.s32.totalorder %s15, 0
    %p63 = por %p61, %p62
    %s65 = sadd.s32 %s64, 1
    %p68 = scmp.eq.s32.totalorder %s9, 1
    %p69 = scmp.ne.s32.totalorder %s64, %s66
    %p70 = scmp.eq.s32.totalorder %s9, 0
    %p71 = por %p69, %p70
    %p72 = scmp.ne.s32.totalorder %s64, %s66
    %p73 = scmp.eq.s32.totalorder %s14, 1
    %p74 = por %p72, %p73
    %p75 = scmp.ne.s32.totalorder %s66, %s67
    %p76 = scmp.eq.s32.totalorder %s14, 0
    %p77 = por %p75, %p76
    %p78 = scmp.ne.s32.totalorder %s66, %s67
    %p79 = scmp.eq.s32.totalorder %s15, 1
    %p80 = por %p78, %p79
    %p82 = scmp.ne.s32.totalorder %s67, %s81
    %p83 = scmp.eq.s32.totalorder %s15, 0
    %p84 = por %p82, %p83
    %s85 = ssub.s32 %s9, %s16
    %p86 = scmp.eq.s32.totalorder %s85, 0
    %s88 = sadd.s32 %s87, 1
    %s89 = scalar_select %p86, %s87, %s88
    %p92 = pneg %p86
    %p93 = scmp.eq.s32.totalorder %s9, 1
    %p94 = por %p92, %p93
    %p95 = scmp.ne.s32.totalorder %s87, %s90
    %p96 = scmp.eq.s32.totalorder %s9, 0
    %p97 = por %p95, %p96
    %p98 = scmp.ne.s32.totalorder %s87, %s90
    %p99 = scmp.eq.s32.totalorder %s14, 1
    %p100 = por %p98, %p99
    %p101 = scmp.ne.s32.totalorder %s90, %s91
    %p102 = scmp.eq.s32.totalorder %s14, 0
    %p103 = por %p101, %p102
    %p104 = scmp.ne.s32.totalorder %s90, %s91
    %p105 = scmp.eq.s32.totalorder %s15, 1
    %p106 = por %p104, %p105
    %p108 = scmp.ne.s32.totalorder %s91, %s107
    %p109 = scmp.eq.s32.totalorder %s15, 0
    %p110 = por %p108, %p109
    %p111 = scmp.le.s32.totalorder 1, %s9
    %p112 = scmp.lt.s32.totalorder %s9, 3
    %p113 = pnand %p111, %p112
    %p114 = pneg %p113
    // Predicated region
    $region9: #{_lambda_.13} parent=5 // pred_check
      _
    $region10: #{_lambda_.13} parent=5 // pred_check_branch
      %116 = sbr.rel (%p113) target = $region12
    $region11: #{_lambda_.13} parent=5 // pred_region
      %s117 = ssub.s32 %s9, 1
      // Predicated region
      $region13: #{_lambda_.13} parent=11 // pred_check
        %p118 = pneg %p56
      $region14: #{_lambda_.13} parent=11 // pred_check_branch
        %120 = sbr.rel (%p118) target = $region16
      $region15: #{_lambda_.13} parent=11 // pred_region
        _
      $region16: #{_lambda_.13} parent=11 // pred_fallthru
        _
      // Predicated region
      $region17: #{_lambda_.13} parent=11 // pred_check
        %p121 = pneg %p77
      $region18: #{_lambda_.13} parent=11 // pred_check_branch
        %123 = sbr.rel (%p121) target = $region20
      $region19: #{_lambda_.13} parent=11 // pred_region
        _
      $region20: #{_lambda_.13} parent=11 // pred_fallthru
        _
    $region12: #{_lambda_.13} parent=5 // pred_fallthru
      _
    %p124 = scmp.lt.s32.totalorder %s9, 2
    // Predicated region
    $region21: #{_lambda_.13} parent=5 // pred_check
      %p125 = pneg %p124
    $region22: #{_lambda_.13} parent=5 // pred_check_branch
      %127 = sbr.rel (%p125) target = $region24
    $region23: #{_lambda_.13} parent=5 // pred_region
      // Predicated region
      $region25: #{_lambda_.13} parent=23 // pred_check
        %p128 = pneg %p29
      $region26: #{_lambda_.13} parent=23 // pred_check_branch
        %130 = sbr.rel (%p128) target = $region28
      $region27: #{_lambda_.13} parent=23 // pred_region
        %s131 = smul.u32 34, %s9
        %p132 = scmp.lt.s32.totalorder %s131, 67
        %s133 = scalar_select %p132, %s131, 67
        %s134 = smul.addr %s133, 8
        %s135 = scalar_lea.vmem %s0, %s134
        %s136 = smul.u32 34, %s9
      $region28: #{_lambda_.13} parent=23 // pred_fallthru
        _
    $region24: #{_lambda_.13} parent=5 // pred_fallthru
      _
    %p137 = scmp.le.s32.totalorder 1, %s9
    %p138 = scmp.lt.s32.totalorder %s9, 3
    %p139 = pnand %p137, %p138
    %p140 = pneg %p139
    // Predicated region
    $region29: #{_lambda_.13} parent=5 // pred_check
      _
    $region30: #{_lambda_.13} parent=5 // pred_check_branch
      %142 = sbr.rel (%p139) target = $region32
    $region31: #{_lambda_.13} parent=5 // pred_region
      %s143 = ssub.s32 %s9, 1
      %s144 = smul.u32 34, %s14
      %p145 = scmp.lt.s32.totalorder %s144, 67
      %s146 = scalar_select %p145, %s144, 67
      %s147 = smul.addr %s146, 8
      %s148 = scalar_lea.vmem %s0, %s147
      %p149 = pneg %p35
      %p150 = pneg %p32
      %p151 = pneg %p56
      %p152 = pneg %p53
      %p153 = pneg %p77
      %p154 = pneg %p74
      %p155 = pneg %p103
      %p156 = pneg %p100
      %s157 = smul.u32 34, %s14
      %p158 = scmp.lt.s32.totalorder %s157, 67
      %s159 = scalar_select %p158, %s157, 67
      %s160 = smul.addr %s159, 8
      %s161 = scalar_lea.vmem %s3, %s160
      %s162 = smul.u32 34, %s14
      %p163 = scmp.lt.s32.totalorder %s162, 67
      %s164 = scalar_select %p163, %s162, 67
      %s165 = smul.addr %s164, 8
      %s166 = scalar_lea.vmem %s0, %s165
      %s167 = smul.u32 34, %s14
      %s168 = smul.u32 34, %s14
      %p169 = scmp.lt.s32.totalorder %s168, 67
      %s170 = scalar_select %p169, %s168, 67
      %s171 = smul.addr %s170, 8
      %s172 = scalar_lea.vmem %s3, %s171
      %s173 = smul.u32 34, %s14
      %v175 = vld [vmem:[%s166] sm:$0xff]
      %v176 = vld [vmem:[%s166 + $0x8] sm:$0xff]
      %v177 = vld [vmem:[%s166 + $0x10] sm:$0xff]
      %v178 = vld [vmem:[%s166 + $0x18] sm:$0xff]
      %v179 = vld [vmem:[%s166 + $0x20] sm:$0xff]
      %v180 = vld [vmem:[%s166 + $0x28] sm:$0xff]
      %v181 = vld [vmem:[%s166 + $0x30] sm:$0xff]
      %v182 = vld [vmem:[%s166 + $0x38] sm:$0xff]
      %v183 = vld [vmem:[%s166 + $0x40] sm:$0xff]
      %v184 = vld [vmem:[%s166 + $0x48] sm:$0xff]
      %v185 = vld [vmem:[%s166 + $0x50] sm:$0xff]
      %v186 = vld [vmem:[%s166 + $0x58] sm:$0xff]
      %v187 = vld [vmem:[%s166 + $0x60] sm:$0xff]
      %v188 = vld [vmem:[%s166 + $0x68] sm:$0xff]
      %v189 = vld [vmem:[%s166 + $0x70] sm:$0xff]
      %v190 = vld [vmem:[%s166 + $0x78] sm:$0xff]
      %v191 = vld [vmem:[%s166 + $0x80] sm:$0xff]
      %v192 = vld [vmem:[%s166 + $0x88] sm:$0xff]
      %v193 = vld [vmem:[%s166 + $0x90] sm:$0xff]
      %v194 = vld [vmem:[%s166 + $0x98] sm:$0xff]
      %v195 = vld [vmem:[%s166 + $0xa0] sm:$0xff]
      %v196 = vld [vmem:[%s166 + $0xa8] sm:$0xff]
      %v197 = vld [vmem:[%s166 + $0xb0] sm:$0xff]
      %v198 = vld [vmem:[%s166 + $0xb8] sm:$0xff]
      %v199 = vld [vmem:[%s166 + $0xc0] sm:$0xff]
      %v200 = vld [vmem:[%s166 + $0xc8] sm:$0xff]
      %v201 = vld [vmem:[%s166 + $0xd0] sm:$0xff]
      %v202 = vld [vmem:[%s166 + $0xd8] sm:$0xff]
      %v203 = vld [vmem:[%s166 + $0xe0] sm:$0xff]
      %v204 = vld [vmem:[%s166 + $0xe8] sm:$0xff]
      %v205 = vld [vmem:[%s166 + $0xf0] sm:$0xff]
      %v206 = vld [vmem:[%s166 + $0xf8] sm:$0xff]
      %v207 = vld [vmem:[%s166 + $0x100] sm:$0xff]
      %v208 = vld [vmem:[%s166 + $0x108] sm:$0xff]
      %v209 = vpack.c.bf16 %v176, %v175
      %v210 = vpack.c.bf16 %v178, %v177
      %v211 = vpack.c.bf16 %v180, %v179
      %v212 = vpack.c.bf16 %v182, %v181
      %v213 = vpack.c.bf16 %v184, %v183
      %v214 = vpack.c.bf16 %v186, %v185
      %v215 = vpack.c.bf16 %v188, %v187
      %v216 = vpack.c.bf16 %v190, %v189
      %v217 = vpack.c.bf16 %v192, %v191
      %v218 = vpack.c.bf16 %v194, %v193
      %v219 = vpack.c.bf16 %v196, %v195
      %v220 = vpack.c.bf16 %v198, %v197
      %v221 = vpack.c.bf16 %v200, %v199
      %v222 = vpack.c.bf16 %v202, %v201
      %v223 = vpack.c.bf16 %v204, %v203
      %v224 = vpack.c.bf16 %v206, %v205
      %v225 = vpack.c.bf16 %v208, %v207
      %v226 = vld [vmem:[%s1] sm:$0x7]
      %v227 = vpack.c.bf16 %v226, %v226
      %v228 = vld [vmem:[%s2] sm:$0x1]
      %v230 = vperm.slane %v228, 0
      %vm232 = vcmask 23552
      %v234 = vsel %vm232, %v209, 0
      %v237 = vsel %vm232, %v210, 0
      %v240 = vsel %vm232, %v211, 0
      %v243 = vsel %vm232, %v212, 0
      %v246 = vsel %vm232, %v213, 0
      %v249 = vsel %vm232, %v214, 0
      %v252 = vsel %vm232, %v215, 0
      %v255 = vsel %vm232, %v216, 0
      %v258 = vsel %vm232, %v217, 0
      %v261 = vsel %vm232, %v218, 0
      %v264 = vsel %vm232, %v219, 0
      %v267 = vsel %vm232, %v220, 0
      %v270 = vsel %vm232, %v221, 0
      %v273 = vsel %vm232, %v222, 0
      %v276 = vsel %vm232, %v223, 0
      %v279 = vsel %vm232, %v224, 0
      %v282 = vsel %vm232, %v225, 0
      %vm284 = vcmask 1040384
      %vm285 = vcmask 1041408
      %v286 = vsel %vm284, 4294967295, 65535
      %v287 = vsel %vm285, %v286, 0
      %v289 = vand.u32 %v227, %v287
      %291 = vmatpush.bf16.msra.mxu0 0
      %292 = vmatpush.bf16.msra.mxu0 0
      %293 = vmatpush.bf16.msra.mxu0 0
      %294 = vmatpush.bf16.msra.mxu0 0
      %295 = vmatpush.bf16.msra.mxu0 0
      %296 = vmatpush.bf16.msra.mxu0 0
      %297 = vmatpush.bf16.msra.mxu0 0
      %298 = vmatpush.bf16.msra.mxu0 %v289
      %299 = vmatmul.bf16.gmra.mxu0 %v234
      %v300 = vpop.f32.mrf.mxu0
      %v301 = vadd.f32 %v230, %v300
      %v302 = vpop.f32.mrf.mxu0
      %v303 = vadd.f32 %v230, %v302
      %304 = vmatmul.bf16.gmra.mxu0 %v237
      %v305 = vpop.f32.mrf.mxu0
      %v306 = vadd.f32 %v230, %v305
      %v307 = vpop.f32.mrf.mxu0
      %v308 = vadd.f32 %v230, %v307
      %309 = vmatmul.bf16.gmra.mxu0 %v240
      %v310 = vpop.f32.mrf.mxu0
      %v311 = vadd.f32 %v230, %v310
      %v312 = vpop.f32.mrf.mxu0
      %v313 = vadd.f32 %v230, %v312
      %314 = vmatmul.bf16.gmra.mxu0 %v243
      %v315 = vpop.f32.mrf.mxu0
      %v316 = vadd.f32 %v230, %v315
      %v317 = vpop.f32.mrf.mxu0
      %v318 = vadd.f32 %v230, %v317
      %319 = vmatmul.bf16.gmra.mxu0 %v246
      %v320 = vpop.f32.mrf.mxu0
      %v321 = vadd.f32 %v230, %v320
      %v322 = vpop.f32.mrf.mxu0
      %v323 = vadd.f32 %v230, %v322
      %324 = vmatmul.bf16.gmra.mxu0 %v249
      %v325 = vpop.f32.mrf.mxu0
      %v326 = vadd.f32 %v230, %v325
      %v327 = vpop.f32.mrf.mxu0
      %v328 = vadd.f32 %v230, %v327
      %329 = vmatmul.bf16.gmra.mxu0 %v252
      %v330 = vpop.f32.mrf.mxu0
      %v331 = vadd.f32 %v230, %v330
      %v332 = vpop.f32.mrf.mxu0
      %v333 = vadd.f32 %v230, %v332
      %334 = vmatmul.bf16.gmra.mxu0 %v255
      %v335 = vpop.f32.mrf.mxu0
      %v336 = vadd.f32 %v230, %v335
      %v337 = vpop.f32.mrf.mxu0
      %v338 = vadd.f32 %v230, %v337
      %339 = vmatmul.bf16.gmra.mxu0 %v258
      %v340 = vpop.f32.mrf.mxu0
      %v341 = vadd.f32 %v230, %v340
      %v342 = vpop.f32.mrf.mxu0
      %v343 = vadd.f32 %v230, %v342
      %344 = vmatmul.bf16.gmra.mxu0 %v261
      %v345 = vpop.f32.mrf.mxu0
      %v346 = vadd.f32 %v230, %v345
      %v347 = vpop.f32.mrf.mxu0
      %v348 = vadd.f32 %v230, %v347
      %349 = vmatmul.bf16.gmra.mxu0 %v264
      %v350 = vpop.f32.mrf.mxu0
      %v351 = vadd.f32 %v230, %v350
      %v352 = vpop.f32.mrf.mxu0
      %v353 = vadd.f32 %v230, %v352
      %354 = vmatmul.bf16.gmra.mxu0 %v267
      %v355 = vpop.f32.mrf.mxu0
      %v356 = vadd.f32 %v230, %v355
      %v357 = vpop.f32.mrf.mxu0
      %v358 = vadd.f32 %v230, %v357
      %359 = vmatmul.bf16.gmra.mxu0 %v270
      %v360 = vpop.f32.mrf.mxu0
      %v361 = vadd.f32 %v230, %v360
      %v362 = vpop.f32.mrf.mxu0
      %v363 = vadd.f32 %v230, %v362
      %364 = vmatmul.bf16.gmra.mxu0 %v273
      %v365 = vpop.f32.mrf.mxu0
      %v366 = vadd.f32 %v230, %v365
      %v367 = vpop.f32.mrf.mxu0
      %v368 = vadd.f32 %v230, %v367
      %369 = vmatmul.bf16.gmra.mxu0 %v276
      %v370 = vpop.f32.mrf.mxu0
      %v371 = vadd.f32 %v230, %v370
      %v372 = vpop.f32.mrf.mxu0
      %v373 = vadd.f32 %v230, %v372
      %374 = vmatmul.bf16.gmra.mxu0 %v279
      %v375 = vpop.f32.mrf.mxu0
      %v376 = vadd.f32 %v230, %v375
      %v377 = vpop.f32.mrf.mxu0
      %v378 = vadd.f32 %v230, %v377
      %379 = vmatmul.bf16.gmra.mxu0 %v282
      %v380 = vpop.f32.mrf.mxu0
      %v381 = vadd.f32 %v230, %v380
      %v382 = vpop.f32.mrf.mxu0
      %v383 = vadd.f32 %v230, %v382
      %384 = vdwg.mxu0
      %vm385 = vcmask 523264
      %386 = vst.msk [vmem:[%s172] sm:$0xff] %vm385, %v301
      %387 = vst.msk [vmem:[%s172 + $0x8] sm:$0xff] %vm385, %v303
      %388 = vst.msk [vmem:[%s172 + $0x10] sm:$0xff] %vm385, %v306
      %389 = vst.msk [vmem:[%s172 + $0x18] sm:$0xff] %vm385, %v308
      %390 = vst.msk [vmem:[%s172 + $0x20] sm:$0xff] %vm385, %v311
      %391 = vst.msk [vmem:[%s172 + $0x28] sm:$0xff] %vm385, %v313
      %392 = vst.msk [vmem:[%s172 + $0x30] sm:$0xff] %vm385, %v316
      %393 = vst.msk [vmem:[%s172 + $0x38] sm:$0xff] %vm385, %v318
      %394 = vst.msk [vmem:[%s172 + $0x40] sm:$0xff] %vm385, %v321
      %395 = vst.msk [vmem:[%s172 + $0x48] sm:$0xff] %vm385, %v323
      %396 = vst.msk [vmem:[%s172 + $0x50] sm:$0xff] %vm385, %v326
      %397 = vst.msk [vmem:[%s172 + $0x58] sm:$0xff] %vm385, %v328
      %398 = vst.msk [vmem:[%s172 + $0x60] sm:$0xff] %vm385, %v331
      %399 = vst.msk [vmem:[%s172 + $0x68] sm:$0xff] %vm385, %v333
      %400 = vst.msk [vmem:[%s172 + $0x70] sm:$0xff] %vm385, %v336
      %401 = vst.msk [vmem:[%s172 + $0x78] sm:$0xff] %vm385, %v338
      %402 = vst.msk [vmem:[%s172 + $0x80] sm:$0xff] %vm385, %v341
      %403 = vst.msk [vmem:[%s172 + $0x88] sm:$0xff] %vm385, %v343
      %404 = vst.msk [vmem:[%s172 + $0x90] sm:$0xff] %vm385, %v346
      %405 = vst.msk [vmem:[%s172 + $0x98] sm:$0xff] %vm385, %v348
      %406 = vst.msk [vmem:[%s172 + $0xa0] sm:$0xff] %vm385, %v351
      %407 = vst.msk [vmem:[%s172 + $0xa8] sm:$0xff] %vm385, %v353
      %408 = vst.msk [vmem:[%s172 + $0xb0] sm:$0xff] %vm385, %v356
      %409 = vst.msk [vmem:[%s172 + $0xb8] sm:$0xff] %vm385, %v358
      %410 = vst.msk [vmem:[%s172 + $0xc0] sm:$0xff] %vm385, %v361
      %411 = vst.msk [vmem:[%s172 + $0xc8] sm:$0xff] %vm385, %v363
      %412 = vst.msk [vmem:[%s172 + $0xd0] sm:$0xff] %vm385, %v366
      %413 = vst.msk [vmem:[%s172 + $0xd8] sm:$0xff] %vm385, %v368
      %414 = vst.msk [vmem:[%s172 + $0xe0] sm:$0xff] %vm385, %v371
      %415 = vst.msk [vmem:[%s172 + $0xe8] sm:$0xff] %vm385, %v373
      %416 = vst.msk [vmem:[%s172 + $0xf0] sm:$0xff] %vm385, %v376
      %417 = vst.msk [vmem:[%s172 + $0xf8] sm:$0xff] %vm385, %v378
      %418 = vst.msk [vmem:[%s172 + $0x100] sm:$0xff] %vm385, %v381
      %419 = vst.msk [vmem:[%s172 + $0x108] sm:$0xff] %vm385, %v383
      %s420 = smul.u32 34, %s14
      %p421 = scmp.lt.s32.totalorder %s420, 67
      %s422 = scalar_select %p421, %s420, 67
      %s423 = smul.addr %s422, 8
      %s424 = scalar_lea.vmem %s3, %s423
      // Predicated region
      $region33: #{_lambda_.13} parent=31 // pred_check
        %p425 = pneg %p100
      $region34: #{_lambda_.13} parent=31 // pred_check_branch
        %427 = sbr.rel (%p425) target = $region36
      $region35: #{_lambda_.13} parent=31 // pred_region
        %s428 = smul.u32 34, %s14
      $region36: #{_lambda_.13} parent=31 // pred_fallthru
        _
    $region32: #{_lambda_.13} parent=5 // pred_fallthru
      _
    %p429 = scmp.le.s32.totalorder 2, %s9
    // Predicated region
    $region37: #{_lambda_.13} parent=5 // pred_check
      %p430 = pneg %p429
    $region38: #{_lambda_.13} parent=5 // pred_check_branch
      %432 = sbr.rel (%p430) target = $region40
    $region39: #{_lambda_.13} parent=5 // pred_region
      %s433 = ssub.s32 %s9, 2
      // Predicated region
      $region41: #{_lambda_.13} parent=39 // pred_check
        %p434 = pneg %p106
      $region42: #{_lambda_.13} parent=39 // pred_check_branch
        %436 = sbr.rel (%p434) target = $region44
      $region43: #{_lambda_.13} parent=39 // pred_region
        %s437 = smul.u32 34, %s15
        %p438 = scmp.lt.s32.totalorder %s437, 67
        %s439 = scalar_select %p438, %s437, 67
        %s440 = smul.addr %s439, 8
        %s441 = scalar_lea.vmem %s3, %s440
      $region44: #{_lambda_.13} parent=39 // pred_fallthru
        _
    $region40: #{_lambda_.13} parent=5 // pred_fallthru
      _
  $region6: #{_lambda_.13} parent=0 // loop_footer
    %s13 = sadd.s32 1, %s9
  $region7: #{_lambda_.13} parent=0 // loop_footer_branch
    %8 = sbr.rel target = $region3
  $region8: #{_lambda_.13} parent=0 // loop_exit
    _

// kernel: _lambda_.14
$region0: #{_lambda_.14}
  #allocation0 [shape = 'u32[]', space=smem, size = 0x4, offset = 0x4, fixed_abs, tag = 'smem constant byte address 0x4 - core index']
  #allocation1 [shape = 'u32[72,128]{1,0:T(1,128)}', space=vmem, size = 0x9000, scoped, tag = 'internal scratch']
  %s0 = inlined_call_operand.vmem [shape: f32[544,64], index: 0, kind: input, shape index: {}]
  %s1 = inlined_call_operand.vmem [shape: f32[64,64], index: 1, kind: input, shape index: {}]
  %s2 = inlined_call_operand.vmem [shape: f32[1,64], index: 2, kind: input, shape index: {}]
  %s3 = inlined_call_operand.vmem [shape: f32[544,64], index: 3, kind: output, shape index: {}]
  %s4 = sld [smem:[#allocation0]]
  $region45: #{_lambda_.14} parent=0
    _
  %s6 = ssub.s32 1, %s4
  %s7 = scalar_select 0, %s6, %s4
  loop: start=0, step=1, limit=4
  $region2: #{_lambda_.14} parent=0 // loop_pre_header
    _
  $region3: #{_lambda_.14} parent=0 // loop_header
    %s9 = sphi 0, %s13
    %p10 = scmp.ge.s32.totalorder %s9, 4
    %s19 = sphi 0, %s21
    %s22 = sphi 0, %s19
    %s23 = sphi 0, %s22
    %s39 = sphi 0, %s23
    %s43 = sphi 0, %s43
    %s45 = sphi 0, %s43
    %s46 = sphi 0, %s45
    %s60 = sphi 0, %s46
    %s64 = sphi 0, %s64
    %s66 = sphi 0, %s64
    %s67 = sphi 0, %s66
    %s81 = sphi 0, %s67
    %s87 = sphi 0, %s89
    %s90 = sphi 0, %s87
    %s91 = sphi 0, %s90
    %s107 = sphi 0, %s91
  $region4: #{_lambda_.14} parent=0 // loop_header_branch
    %12 = sbr.rel (%p10) target = $region8
  $region5: #{_lambda_.14} parent=0 // loop_body
    %s14 = ssub.s32 %s9, 1
    %s15 = ssub.s32 %s9, 2
    %s16 = sadd.s32 %s9, 1
    %s17 = ssub.s32 %s9, %s16
    %p18 = scmp.eq.s32.totalorder %s17, 0
    %s20 = sadd.s32 %s19, 1
    %s21 = scalar_select %p18, %s19, %s20
    %p24 = pneg %p18
    %p25 = scmp.eq.s32.totalorder %s9, 1
    %p26 = por %p24, %p25
    %p27 = scmp.ne.s32.totalorder %s19, %s22
    %p28 = scmp.eq.s32.totalorder %s9, 0
    %p29 = por %p27, %p28
    %p30 = scmp.ne.s32.totalorder %s19, %s22
    %p31 = scmp.eq.s32.totalorder %s14, 1
    %p32 = por %p30, %p31
    %p33 = scmp.ne.s32.totalorder %s22, %s23
    %p34 = scmp.eq.s32.totalorder %s14, 0
    %p35 = por %p33, %p34
    %p36 = scmp.ne.s32.totalorder %s22, %s23
    %p37 = scmp.eq.s32.totalorder %s15, 1
    %p38 = por %p36, %p37
    %p40 = scmp.ne.s32.totalorder %s23, %s39
    %p41 = scmp.eq.s32.totalorder %s15, 0
    %p42 = por %p40, %p41
    %s44 = sadd.s32 %s43, 1
    %p47 = scmp.eq.s32.totalorder %s9, 1
    %p48 = scmp.ne.s32.totalorder %s43, %s45
    %p49 = scmp.eq.s32.totalorder %s9, 0
    %p50 = por %p48, %p49
    %p51 = scmp.ne.s32.totalorder %s43, %s45
    %p52 = scmp.eq.s32.totalorder %s14, 1
    %p53 = por %p51, %p52
    %p54 = scmp.ne.s32.totalorder %s45, %s46
    %p55 = scmp.eq.s32.totalorder %s14, 0
    %p56 = por %p54, %p55
    %p57 = scmp.ne.s32.totalorder %s45, %s46
    %p58 = scmp.eq.s32.totalorder %s15, 1
    %p59 = por %p57, %p58
    %p61 = scmp.ne.s32.totalorder %s46, %s60
    %p62 = scmp.eq.s32.totalorder %s15, 0
    %p63 = por %p61, %p62
    %s65 = sadd.s32 %s64, 1
    %p68 = scmp.eq.s32.totalorder %s9, 1
    %p69 = scmp.ne.s32.totalorder %s64, %s66
    %p70 = scmp.eq.s32.totalorder %s9, 0
    %p71 = por %p69, %p70
    %p72 = scmp.ne.s32.totalorder %s64, %s66
    %p73 = scmp.eq.s32.totalorder %s14, 1
    %p74 = por %p72, %p73
    %p75 = scmp.ne.s32.totalorder %s66, %s67
    %p76 = scmp.eq.s32.totalorder %s14, 0
    %p77 = por %p75, %p76
    %p78 = scmp.ne.s32.totalorder %s66, %s67
    %p79 = scmp.eq.s32.totalorder %s15, 1
    %p80 = por %p78, %p79
    %p82 = scmp.ne.s32.totalorder %s67, %s81
    %p83 = scmp.eq.s32.totalorder %s15, 0
    %p84 = por %p82, %p83
    %s85 = ssub.s32 %s9, %s16
    %p86 = scmp.eq.s32.totalorder %s85, 0
    %s88 = sadd.s32 %s87, 1
    %s89 = scalar_select %p86, %s87, %s88
    %p92 = pneg %p86
    %p93 = scmp.eq.s32.totalorder %s9, 1
    %p94 = por %p92, %p93
    %p95 = scmp.ne.s32.totalorder %s87, %s90
    %p96 = scmp.eq.s32.totalorder %s9, 0
    %p97 = por %p95, %p96
    %p98 = scmp.ne.s32.totalorder %s87, %s90
    %p99 = scmp.eq.s32.totalorder %s14, 1
    %p100 = por %p98, %p99
    %p101 = scmp.ne.s32.totalorder %s90, %s91
    %p102 = scmp.eq.s32.totalorder %s14, 0
    %p103 = por %p101, %p102
    %p104 = scmp.ne.s32.totalorder %s90, %s91
    %p105 = scmp.eq.s32.totalorder %s15, 1
    %p106 = por %p104, %p105
    %p108 = scmp.ne.s32.totalorder %s91, %s107
    %p109 = scmp.eq.s32.totalorder %s15, 0
    %p110 = por %p108, %p109
    %p111 = scmp.le.s32.totalorder 1, %s9
    %p112 = scmp.lt.s32.totalorder %s9, 3
    %p113 = pnand %p111, %p112
    %p114 = pneg %p113
    // Predicated region
    $region9: #{_lambda_.14} parent=5 // pred_check
      _
    $region10: #{_lambda_.14} parent=5 // pred_check_branch
      %116 = sbr.rel (%p113) target = $region12
    $region11: #{_lambda_.14} parent=5 // pred_region
      %s117 = ssub.s32 %s9, 1
      // Predicated region
      $region13: #{_lambda_.14} parent=11 // pred_check
        %p118 = pneg %p56
      $region14: #{_lambda_.14} parent=11 // pred_check_branch
        %120 = sbr.rel (%p118) target = $region16
      $region15: #{_lambda_.14} parent=11 // pred_region
        _
      $region16: #{_lambda_.14} parent=11 // pred_fallthru
        _
      // Predicated region
      $region17: #{_lambda_.14} parent=11 // pred_check
        %p121 = pneg %p77
      $region18: #{_lambda_.14} parent=11 // pred_check_branch
        %123 = sbr.rel (%p121) target = $region20
      $region19: #{_lambda_.14} parent=11 // pred_region
        _
      $region20: #{_lambda_.14} parent=11 // pred_fallthru
        _
    $region12: #{_lambda_.14} parent=5 // pred_fallthru
      _
    %p124 = scmp.lt.s32.totalorder %s9, 2
    // Predicated region
    $region21: #{_lambda_.14} parent=5 // pred_check
      %p125 = pneg %p124
    $region22: #{_lambda_.14} parent=5 // pred_check_branch
      %127 = sbr.rel (%p125) target = $region24
    $region23: #{_lambda_.14} parent=5 // pred_region
      // Predicated region
      $region25: #{_lambda_.14} parent=23 // pred_check
        %p128 = pneg %p29
      $region26: #{_lambda_.14} parent=23 // pred_check_branch
        %130 = sbr.rel (%p128) target = $region28
      $region27: #{_lambda_.14} parent=23 // pred_region
        %s131 = smul.u32 34, %s9
        %p132 = scmp.lt.s32.totalorder %s131, 67
        %s133 = scalar_select %p132, %s131, 67
        %s134 = smul.addr %s133, 8
        %s135 = scalar_lea.vmem %s0, %s134
        %s136 = smul.u32 34, %s9
      $region28: #{_lambda_.14} parent=23 // pred_fallthru
        _
    $region24: #{_lambda_.14} parent=5 // pred_fallthru
      _
    %p137 = scmp.le.s32.totalorder 1, %s9
    %p138 = scmp.lt.s32.totalorder %s9, 3
    %p139 = pnand %p137, %p138
    %p140 = pneg %p139
    // Predicated region
    $region29: #{_lambda_.14} parent=5 // pred_check
      _
    $region30: #{_lambda_.14} parent=5 // pred_check_branch
      %142 = sbr.rel (%p139) target = $region32
    $region31: #{_lambda_.14} parent=5 // pred_region
      %s143 = ssub.s32 %s9, 1
      %s144 = smul.u32 34, %s14
      %p145 = scmp.lt.s32.totalorder %s144, 67
      %s146 = scalar_select %p145, %s144, 67
      %s147 = smul.addr %s146, 8
      %s148 = scalar_lea.vmem %s0, %s147
      %p149 = pneg %p35
      %p150 = pneg %p32
      %p151 = pneg %p56
      %p152 = pneg %p53
      %p153 = pneg %p77
      %p154 = pneg %p74
      %p155 = pneg %p103
      %p156 = pneg %p100
      %s157 = smul.u32 34, %s14
      %p158 = scmp.lt.s32.totalorder %s157, 67
      %s159 = scalar_select %p158, %s157, 67
      %s160 = smul.addr %s159, 8
      %s161 = scalar_lea.vmem %s3, %s160
      %s162 = smul.u32 34, %s14
      %p163 = scmp.lt.s32.totalorder %s162, 67
      %s164 = scalar_select %p163, %s162, 67
      %s165 = smul.addr %s164, 8
      %s166 = scalar_lea.vmem %s0, %s165
      %s167 = smul.u32 34, %s14
      %s168 = smul.u32 34, %s14
      %p169 = scmp.lt.s32.totalorder %s168, 67
      %s170 = scalar_select %p169, %s168, 67
      %s171 = smul.addr %s170, 8
      %s172 = scalar_lea.vmem %s3, %s171
      %s173 = smul.u32 34, %s14
      %v175 = vld [vmem:[%s166] sm:$0xff]
      %v176 = vld [vmem:[%s166 + $0x8] sm:$0xff]
      %v177 = vld [vmem:[%s166 + $0x10] sm:$0xff]
      %v178 = vld [vmem:[%s166 + $0x18] sm:$0xff]
      %v179 = vld [vmem:[%s166 + $0x20] sm:$0xff]
      %v180 = vld [vmem:[%s166 + $0x28] sm:$0xff]
      %v181 = vld [vmem:[%s166 + $0x30] sm:$0xff]
      %v182 = vld [vmem:[%s166 + $0x38] sm:$0xff]
      %v183 = vld [vmem:[%s166 + $0x40] sm:$0xff]
      %v184 = vld [vmem:[%s166 + $0x48] sm:$0xff]
      %v185 = vld [vmem:[%s166 + $0x50] sm:$0xff]
      %v186 = vld [vmem:[%s166 + $0x58] sm:$0xff]
      %v187 = vld [vmem:[%s166 + $0x60] sm:$0xff]
      %v188 = vld [vmem:[%s166 + $0x68] sm:$0xff]
      %v189 = vld [vmem:[%s166 + $0x70] sm:$0xff]
      %v190 = vld [vmem:[%s166 + $0x78] sm:$0xff]
      %v191 = vld [vmem:[%s166 + $0x80] sm:$0xff]
      %v192 = vld [vmem:[%s166 + $0x88] sm:$0xff]
      %v193 = vld [vmem:[%s166 + $0x90] sm:$0xff]
      %v194 = vld [vmem:[%s166 + $0x98] sm:$0xff]
      %v195 = vld [vmem:[%s166 + $0xa0] sm:$0xff]
      %v196 = vld [vmem:[%s166 + $0xa8] sm:$0xff]
      %v197 = vld [vmem:[%s166 + $0xb0] sm:$0xff]
      %v198 = vld [vmem:[%s166 + $0xb8] sm:$0xff]
      %v199 = vld [vmem:[%s166 + $0xc0] sm:$0xff]
      %v200 = vld [vmem:[%s166 + $0xc8] sm:$0xff]
      %v201 = vld [vmem:[%s166 + $0xd0] sm:$0xff]
      %v202 = vld [vmem:[%s166 + $0xd8] sm:$0xff]
      %v203 = vld [vmem:[%s166 + $0xe0] sm:$0xff]
      %v204 = vld [vmem:[%s166 + $0xe8] sm:$0xff]
      %v205 = vld [vmem:[%s166 + $0xf0] sm:$0xff]
      %v206 = vld [vmem:[%s166 + $0xf8] sm:$0xff]
      %v207 = vld [vmem:[%s166 + $0x100] sm:$0xff]
      %v208 = vld [vmem:[%s166 + $0x108] sm:$0xff]
      %v209 = vpack.c.bf16 %v176, %v175
      %v210 = vpack.c.bf16 %v178, %v177
      %v211 = vpack.c.bf16 %v180, %v179
      %v212 = vpack.c.bf16 %v182, %v181
      %v213 = vpack.c.bf16 %v184, %v183
      %v214 = vpack.c.bf16 %v186, %v185
      %v215 = vpack.c.bf16 %v188, %v187
      %v216 = vpack.c.bf16 %v190, %v189
      %v217 = vpack.c.bf16 %v192, %v191
      %v218 = vpack.c.bf16 %v194, %v193
      %v219 = vpack.c.bf16 %v196, %v195
      %v220 = vpack.c.bf16 %v198, %v197
      %v221 = vpack.c.bf16 %v200, %v199
      %v222 = vpack.c.bf16 %v202, %v201
      %v223 = vpack.c.bf16 %v204, %v203
      %v224 = vpack.c.bf16 %v206, %v205
      %v225 = vpack.c.bf16 %v208, %v207
      %v226 = vld [vmem:[%s1] sm:$0xff]
      %v227 = vld [vmem:[%s1 + $0x8] sm:$0xff]
      %v228 = vld [vmem:[%s1 + $0x10] sm:$0xff]
      %v229 = vld [vmem:[%s1 + $0x18] sm:$0xff]
      %v230 = vld [vmem:[%s1 + $0x20] sm:$0xff]
      %v231 = vld [vmem:[%s1 + $0x28] sm:$0xff]
      %v232 = vld [vmem:[%s1 + $0x30] sm:$0xff]
      %v233 = vld [vmem:[%s1 + $0x38] sm:$0xff]
      %v234 = vpack.c.bf16 %v227, %v226
      %v235 = vpack.c.bf16 %v229, %v228
      %v236 = vpack.c.bf16 %v231, %v230
      %v237 = vpack.c.bf16 %v233, %v232
      %v238 = vld [vmem:[%s2] sm:$0x1]
      %v240 = vperm.slane %v238, 0
      %vm242 = vcmask 523264
      %v244 = vsel %vm242, %v209, 0
      %v247 = vsel %vm242, %v210, 0
      %v250 = vsel %vm242, %v211, 0
      %v253 = vsel %vm242, %v212, 0
      %v256 = vsel %vm242, %v213, 0
      %v259 = vsel %vm242, %v214, 0
      %v262 = vsel %vm242, %v215, 0
      %v265 = vsel %vm242, %v216, 0
      %v268 = vsel %vm242, %v217, 0
      %v271 = vsel %vm242, %v218, 0
      %v274 = vsel %vm242, %v219, 0
      %v277 = vsel %vm242, %v220, 0
      %v280 = vsel %vm242, %v221, 0
      %v283 = vsel %vm242, %v222, 0
      %v286 = vsel %vm242, %v223, 0
      %v289 = vsel %vm242, %v224, 0
      %v292 = vsel %vm242, %v225, 0
      %294 = vmatpush.bf16.msra.mxu0 0
      %295 = vmatpush.bf16.msra.mxu0 0
      %296 = vmatpush.bf16.msra.mxu0 0
      %297 = vmatpush.bf16.msra.mxu0 0
      %298 = vmatpush.bf16.msra.mxu0 %v237
      %299 = vmatpush.bf16.msra.mxu0 %v236
      %300 = vmatpush.bf16.msra.mxu0 %v235
      %301 = vmatpush.bf16.msra.mxu0 %v234
      %302 = vmatmul.bf16.gmra.mxu0 %v244
      %v303 = vpop.f32.mrf.mxu0
      %v304 = vadd.f32 %v240, %v303
      %v305 = vpop.f32.mrf.mxu0
      %v306 = vadd.f32 %v240, %v305
      %307 = vmatmul.bf16.gmra.mxu0 %v247
      %v308 = vpop.f32.mrf.mxu0
      %v309 = vadd.f32 %v240, %v308
      %v310 = vpop.f32.mrf.mxu0
      %v311 = vadd.f32 %v240, %v310
      %312 = vmatmul.bf16.gmra.mxu0 %v250
      %v313 = vpop.f32.mrf.mxu0
      %v314 = vadd.f32 %v240, %v313
      %v315 = vpop.f32.mrf.mxu0
      %v316 = vadd.f32 %v240, %v315
      %317 = vmatmul.bf16.gmra.mxu0 %v253
      %v318 = vpop.f32.mrf.mxu0
      %v319 = vadd.f32 %v240, %v318
      %v320 = vpop.f32.mrf.mxu0
      %v321 = vadd.f32 %v240, %v320
      %322 = vmatmul.bf16.gmra.mxu0 %v256
      %v323 = vpop.f32.mrf.mxu0
      %v324 = vadd.f32 %v240, %v323
      %v325 = vpop.f32.mrf.mxu0
      %v326 = vadd.f32 %v240, %v325
      %327 = vmatmul.bf16.gmra.mxu0 %v259
      %v328 = vpop.f32.mrf.mxu0
      %v329 = vadd.f32 %v240, %v328
      %v330 = vpop.f32.mrf.mxu0
      %v331 = vadd.f32 %v240, %v330
      %332 = vmatmul.bf16.gmra.mxu0 %v262
      %v333 = vpop.f32.mrf.mxu0
      %v334 = vadd.f32 %v240, %v333
      %v335 = vpop.f32.mrf.mxu0
      %v336 = vadd.f32 %v240, %v335
      %337 = vmatmul.bf16.gmra.mxu0 %v265
      %v338 = vpop.f32.mrf.mxu0
      %v339 = vadd.f32 %v240, %v338
      %v340 = vpop.f32.mrf.mxu0
      %v341 = vadd.f32 %v240, %v340
      %342 = vmatmul.bf16.gmra.mxu0 %v268
      %v343 = vpop.f32.mrf.mxu0
      %v344 = vadd.f32 %v240, %v343
      %v345 = vpop.f32.mrf.mxu0
      %v346 = vadd.f32 %v240, %v345
      %347 = vmatmul.bf16.gmra.mxu0 %v271
      %v348 = vpop.f32.mrf.mxu0
      %v349 = vadd.f32 %v240, %v348
      %v350 = vpop.f32.mrf.mxu0
      %v351 = vadd.f32 %v240, %v350
      %352 = vmatmul.bf16.gmra.mxu0 %v274
      %v353 = vpop.f32.mrf.mxu0
      %v354 = vadd.f32 %v240, %v353
      %v355 = vpop.f32.mrf.mxu0
      %v356 = vadd.f32 %v240, %v355
      %357 = vmatmul.bf16.gmra.mxu0 %v277
      %v358 = vpop.f32.mrf.mxu0
      %v359 = vadd.f32 %v240, %v358
      %v360 = vpop.f32.mrf.mxu0
      %v361 = vadd.f32 %v240, %v360
      %362 = vmatmul.bf16.gmra.mxu0 %v280
      %v363 = vpop.f32.mrf.mxu0
      %v364 = vadd.f32 %v240, %v363
      %v365 = vpop.f32.mrf.mxu0
      %v366 = vadd.f32 %v240, %v365
      %367 = vmatmul.bf16.gmra.mxu0 %v283
      %v368 = vpop.f32.mrf.mxu0
      %v369 = vadd.f32 %v240, %v368
      %v370 = vpop.f32.mrf.mxu0
      %v371 = vadd.f32 %v240, %v370
      %372 = vmatmul.bf16.gmra.mxu0 %v286
      %v373 = vpop.f32.mrf.mxu0
      %v374 = vadd.f32 %v240, %v373
      %v375 = vpop.f32.mrf.mxu0
      %v376 = vadd.f32 %v240, %v375
      %377 = vmatmul.bf16.gmra.mxu0 %v289
      %v378 = vpop.f32.mrf.mxu0
      %v379 = vadd.f32 %v240, %v378
      %v380 = vpop.f32.mrf.mxu0
      %v381 = vadd.f32 %v240, %v380
      %382 = vmatmul.bf16.gmra.mxu0 %v292
      %v383 = vpop.f32.mrf.mxu0
      %v384 = vadd.f32 %v240, %v383
      %v385 = vpop.f32.mrf.mxu0
      %v386 = vadd.f32 %v240, %v385
      %387 = vdwg.mxu0
      %388 = vst.msk [vmem:[%s172] sm:$0xff] %vm242, %v304
      %389 = vst.msk [vmem:[%s172 + $0x8] sm:$0xff] %vm242, %v306
      %390 = vst.msk [vmem:[%s172 + $0x10] sm:$0xff] %vm242, %v309
      %391 = vst.msk [vmem:[%s172 + $0x18] sm:$0xff] %vm242, %v311
      %392 = vst.msk [vmem:[%s172 + $0x20] sm:$0xff] %vm242, %v314
      %393 = vst.msk [vmem:[%s172 + $0x28] sm:$0xff] %vm242, %v316
      %394 = vst.msk [vmem:[%s172 + $0x30] sm:$0xff] %vm242, %v319
      %395 = vst.msk [vmem:[%s172 + $0x38] sm:$0xff] %vm242, %v321
      %396 = vst.msk [vmem:[%s172 + $0x40] sm:$0xff] %vm242, %v324
      %397 = vst.msk [vmem:[%s172 + $0x48] sm:$0xff] %vm242, %v326
      %398 = vst.msk [vmem:[%s172 + $0x50] sm:$0xff] %vm242, %v329
      %399 = vst.msk [vmem:[%s172 + $0x58] sm:$0xff] %vm242, %v331
      %400 = vst.msk [vmem:[%s172 + $0x60] sm:$0xff] %vm242, %v334
      %401 = vst.msk [vmem:[%s172 + $0x68] sm:$0xff] %vm242, %v336
      %402 = vst.msk [vmem:[%s172 + $0x70] sm:$0xff] %vm242, %v339
      %403 = vst.msk [vmem:[%s172 + $0x78] sm:$0xff] %vm242, %v341
      %404 = vst.msk [vmem:[%s172 + $0x80] sm:$0xff] %vm242, %v344
      %405 = vst.msk [vmem:[%s172 + $0x88] sm:$0xff] %vm242, %v346
      %406 = vst.msk [vmem:[%s172 + $0x90] sm:$0xff] %vm242, %v349
      %407 = vst.msk [vmem:[%s172 + $0x98] sm:$0xff] %vm242, %v351
      %408 = vst.msk [vmem:[%s172 + $0xa0] sm:$0xff] %vm242, %v354
      %409 = vst.msk [vmem:[%s172 + $0xa8] sm:$0xff] %vm242, %v356
      %410 = vst.msk [vmem:[%s172 + $0xb0] sm:$0xff] %vm242, %v359
      %411 = vst.msk [vmem:[%s172 + $0xb8] sm:$0xff] %vm242, %v361
      %412 = vst.msk [vmem:[%s172 + $0xc0] sm:$0xff] %vm242, %v364
      %413 = vst.msk [vmem:[%s172 + $0xc8] sm:$0xff] %vm242, %v366
      %414 = vst.msk [vmem:[%s172 + $0xd0] sm:$0xff] %vm242, %v369
      %415 = vst.msk [vmem:[%s172 + $0xd8] sm:$0xff] %vm242, %v371
      %416 = vst.msk [vmem:[%s172 + $0xe0] sm:$0xff] %vm242, %v374
      %417 = vst.msk [vmem:[%s172 + $0xe8] sm:$0xff] %vm242, %v376
      %418 = vst.msk [vmem:[%s172 + $0xf0] sm:$0xff] %vm242, %v379
      %419 = vst.msk [vmem:[%s172 + $0xf8] sm:$0xff] %vm242, %v381
      %420 = vst.msk [vmem:[%s172 + $0x100] sm:$0xff] %vm242, %v384
      %421 = vst.msk [vmem:[%s172 + $0x108] sm:$0xff] %vm242, %v386
      %s422 = smul.u32 34, %s14
      %p423 = scmp.lt.s32.totalorder %s422, 67
      %s424 = scalar_select %p423, %s422, 67
      %s425 = smul.addr %s424, 8
      %s426 = scalar_lea.vmem %s3, %s425
      // Predicated region
      $region33: #{_lambda_.14} parent=31 // pred_check
        %p427 = pneg %p100
      $region34: #{_lambda_.14} parent=31 // pred_check_branch
        %429 = sbr.rel (%p427) target = $region36
      $region35: #{_lambda_.14} parent=31 // pred_region
        %s430 = smul.u32 34, %s14
      $region36: #{_lambda_.14} parent=31 // pred_fallthru
        _
    $region32: #{_lambda_.14} parent=5 // pred_fallthru
      _
    %p431 = scmp.le.s32.totalorder 2, %s9
    // Predicated region
    $region37: #{_lambda_.14} parent=5 // pred_check
      %p432 = pneg %p431
    $region38: #{_lambda_.14} parent=5 // pred_check_branch
      %434 = sbr.rel (%p432) target = $region40
    $region39: #{_lambda_.14} parent=5 // pred_region
      %s435 = ssub.s32 %s9, 2
      // Predicated region
      $region41: #{_lambda_.14} parent=39 // pred_check
        %p436 = pneg %p106
      $region42: #{_lambda_.14} parent=39 // pred_check_branch
        %438 = sbr.rel (%p436) target = $region44
      $region43: #{_lambda_.14} parent=39 // pred_region
        %s439 = smul.u32 34, %s15
        %p440 = scmp.lt.s32.totalorder %s439, 67
        %s441 = scalar_select %p440, %s439, 67
        %s442 = smul.addr %s441, 8
        %s443 = scalar_lea.vmem %s3, %s442
      $region44: #{_lambda_.14} parent=39 // pred_fallthru
        _
    $region40: #{_lambda_.14} parent=5 // pred_fallthru
      _
  $region6: #{_lambda_.14} parent=0 // loop_footer
    %s13 = sadd.s32 1, %s9
  $region7: #{_lambda_.14} parent=0 // loop_footer_branch
    %8 = sbr.rel target = $region3
  $region8: #{_lambda_.14} parent=0 // loop_exit
    _

// kernel: _lambda_.15
$region0: #{_lambda_.15}
  #allocation0 [shape = 'u32[]', space=smem, size = 0x4, offset = 0x4, fixed_abs, tag = 'smem constant byte address 0x4 - core index']
  #allocation1 [shape = 'u32[72,128]{1,0:T(1,128)}', space=vmem, size = 0x9000, scoped, tag = 'internal scratch']
  %s0 = inlined_call_operand.vmem [shape: f32[2,340,16], index: 0, kind: input, shape index: {}]
  %s1 = inlined_call_operand.vmem [shape: f32[80,16], index: 1, kind: input, shape index: {}]
  %s2 = inlined_call_operand.vmem [shape: f32[1,16], index: 2, kind: input, shape index: {}]
  %s3 = inlined_call_operand.vmem [shape: f32[2,272,16], index: 3, kind: output, shape index: {}]
  %s4 = sld [smem:[#allocation0]]
  $region45: #{_lambda_.15} parent=0
    _
  %s6 = ssub.s32 1, %s4
  %s7 = scalar_select 0, %s6, %s4
  loop: start=0, step=1, limit=4
  $region2: #{_lambda_.15} parent=0 // loop_pre_header
    _
  $region3: #{_lambda_.15} parent=0 // loop_header
    %s9 = sphi 0, %s13
    %p10 = scmp.ge.s32.totalorder %s9, 4
    %s19 = sphi 0, %s21
    %s22 = sphi 0, %s19
    %s23 = sphi 0, %s22
    %s39 = sphi 0, %s23
    %s43 = sphi 0, %s43
    %s45 = sphi 0, %s43
    %s46 = sphi 0, %s45
    %s60 = sphi 0, %s46
    %s64 = sphi 0, %s64
    %s66 = sphi 0, %s64
    %s67 = sphi 0, %s66
    %s81 = sphi 0, %s67
    %s87 = sphi 0, %s89
    %s90 = sphi 0, %s87
    %s91 = sphi 0, %s90
    %s107 = sphi 0, %s91
  $region4: #{_lambda_.15} parent=0 // loop_header_branch
    %12 = sbr.rel (%p10) target = $region8
  $region5: #{_lambda_.15} parent=0 // loop_body
    %s14 = ssub.s32 %s9, 1
    %s15 = ssub.s32 %s9, 2
    %s16 = sadd.s32 %s9, 1
    %s17 = ssub.s32 %s9, %s16
    %p18 = scmp.eq.s32.totalorder %s17, 0
    %s20 = sadd.s32 %s19, 1
    %s21 = scalar_select %p18, %s19, %s20
    %p24 = pneg %p18
    %p25 = scmp.eq.s32.totalorder %s9, 1
    %p26 = por %p24, %p25
    %p27 = scmp.ne.s32.totalorder %s19, %s22
    %p28 = scmp.eq.s32.totalorder %s9, 0
    %p29 = por %p27, %p28
    %p30 = scmp.ne.s32.totalorder %s19, %s22
    %p31 = scmp.eq.s32.totalorder %s14, 1
    %p32 = por %p30, %p31
    %p33 = scmp.ne.s32.totalorder %s22, %s23
    %p34 = scmp.eq.s32.totalorder %s14, 0
    %p35 = por %p33, %p34
    %p36 = scmp.ne.s32.totalorder %s22, %s23
    %p37 = scmp.eq.s32.totalorder %s15, 1
    %p38 = por %p36, %p37
    %p40 = scmp.ne.s32.totalorder %s23, %s39
    %p41 = scmp.eq.s32.totalorder %s15, 0
    %p42 = por %p40, %p41
    %s44 = sadd.s32 %s43, 1
    %p47 = scmp.eq.s32.totalorder %s9, 1
    %p48 = scmp.ne.s32.totalorder %s43, %s45
    %p49 = scmp.eq.s32.totalorder %s9, 0
    %p50 = por %p48, %p49
    %p51 = scmp.ne.s32.totalorder %s43, %s45
    %p52 = scmp.eq.s32.totalorder %s14, 1
    %p53 = por %p51, %p52
    %p54 = scmp.ne.s32.totalorder %s45, %s46
    %p55 = scmp.eq.s32.totalorder %s14, 0
    %p56 = por %p54, %p55
    %p57 = scmp.ne.s32.totalorder %s45, %s46
    %p58 = scmp.eq.s32.totalorder %s15, 1
    %p59 = por %p57, %p58
    %p61 = scmp.ne.s32.totalorder %s46, %s60
    %p62 = scmp.eq.s32.totalorder %s15, 0
    %p63 = por %p61, %p62
    %s65 = sadd.s32 %s64, 1
    %p68 = scmp.eq.s32.totalorder %s9, 1
    %p69 = scmp.ne.s32.totalorder %s64, %s66
    %p70 = scmp.eq.s32.totalorder %s9, 0
    %p71 = por %p69, %p70
    %p72 = scmp.ne.s32.totalorder %s64, %s66
    %p73 = scmp.eq.s32.totalorder %s14, 1
    %p74 = por %p72, %p73
    %p75 = scmp.ne.s32.totalorder %s66, %s67
    %p76 = scmp.eq.s32.totalorder %s14, 0
    %p77 = por %p75, %p76
    %p78 = scmp.ne.s32.totalorder %s66, %s67
    %p79 = scmp.eq.s32.totalorder %s15, 1
    %p80 = por %p78, %p79
    %p82 = scmp.ne.s32.totalorder %s67, %s81
    %p83 = scmp.eq.s32.totalorder %s15, 0
    %p84 = por %p82, %p83
    %s85 = ssub.s32 %s9, %s16
    %p86 = scmp.eq.s32.totalorder %s85, 0
    %s88 = sadd.s32 %s87, 1
    %s89 = scalar_select %p86, %s87, %s88
    %p92 = pneg %p86
    %p93 = scmp.eq.s32.totalorder %s9, 1
    %p94 = por %p92, %p93
    %p95 = scmp.ne.s32.totalorder %s87, %s90
    %p96 = scmp.eq.s32.totalorder %s9, 0
    %p97 = por %p95, %p96
    %p98 = scmp.ne.s32.totalorder %s87, %s90
    %p99 = scmp.eq.s32.totalorder %s14, 1
    %p100 = por %p98, %p99
    %p101 = scmp.ne.s32.totalorder %s90, %s91
    %p102 = scmp.eq.s32.totalorder %s14, 0
    %p103 = por %p101, %p102
    %p104 = scmp.ne.s32.totalorder %s90, %s91
    %p105 = scmp.eq.s32.totalorder %s15, 1
    %p106 = por %p104, %p105
    %p108 = scmp.ne.s32.totalorder %s91, %s107
    %p109 = scmp.eq.s32.totalorder %s15, 0
    %p110 = por %p108, %p109
    %p111 = scmp.le.s32.totalorder 1, %s9
    %p112 = scmp.lt.s32.totalorder %s9, 3
    %p113 = pnand %p111, %p112
    %p114 = pneg %p113
    // Predicated region
    $region9: #{_lambda_.15} parent=5 // pred_check
      _
    $region10: #{_lambda_.15} parent=5 // pred_check_branch
      %116 = sbr.rel (%p113) target = $region12
    $region11: #{_lambda_.15} parent=5 // pred_region
      %s117 = ssub.s32 %s9, 1
      // Predicated region
      $region13: #{_lambda_.15} parent=11 // pred_check
        %p118 = pneg %p56
      $region14: #{_lambda_.15} parent=11 // pred_check_branch
        %120 = sbr.rel (%p118) target = $region16
      $region15: #{_lambda_.15} parent=11 // pred_region
        _
      $region16: #{_lambda_.15} parent=11 // pred_fallthru
        _
      // Predicated region
      $region17: #{_lambda_.15} parent=11 // pred_check
        %p121 = pneg %p77
      $region18: #{_lambda_.15} parent=11 // pred_check_branch
        %123 = sbr.rel (%p121) target = $region20
      $region19: #{_lambda_.15} parent=11 // pred_region
        _
      $region20: #{_lambda_.15} parent=11 // pred_fallthru
        _
    $region12: #{_lambda_.15} parent=5 // pred_fallthru
      _
    %p124 = scmp.lt.s32.totalorder %s9, 2
    // Predicated region
    $region21: #{_lambda_.15} parent=5 // pred_check
      %p125 = pneg %p124
    $region22: #{_lambda_.15} parent=5 // pred_check_branch
      %127 = sbr.rel (%p125) target = $region24
    $region23: #{_lambda_.15} parent=5 // pred_region
      // Predicated region
      $region25: #{_lambda_.15} parent=23 // pred_check
        %p128 = pneg %p29
      $region26: #{_lambda_.15} parent=23 // pred_check_branch
        %130 = sbr.rel (%p128) target = $region28
      $region27: #{_lambda_.15} parent=23 // pred_region
        %p131 = scmp.lt.s32.totalorder %s9, 1
        %s132 = scalar_select %p131, %s9, 1
        %s133 = smul.addr %s132, 43
        %s134 = smul.addr %s133, 8
        %s135 = scalar_lea.vmem %s0, %s134
      $region28: #{_lambda_.15} parent=23 // pred_fallthru
        _
    $region24: #{_lambda_.15} parent=5 // pred_fallthru
      _
    %p136 = scmp.le.s32.totalorder 1, %s9
    %p137 = scmp.lt.s32.totalorder %s9, 3
    %p138 = pnand %p136, %p137
    %p139 = pneg %p138
    // Predicated region
    $region29: #{_lambda_.15} parent=5 // pred_check
      _
    $region30: #{_lambda_.15} parent=5 // pred_check_branch
      %141 = sbr.rel (%p138) target = $region32
    $region31: #{_lambda_.15} parent=5 // pred_region
      %s142 = ssub.s32 %s9, 1
      %p143 = scmp.lt.s32.totalorder %s14, 1
      %s144 = scalar_select %p143, %s14, 1
      %s145 = smul.addr %s144, 43
      %s146 = smul.addr %s145, 8
      %s147 = scalar_lea.vmem %s0, %s146
      %p148 = pneg %p35
      %p149 = pneg %p32
      %p150 = pneg %p56
      %p151 = pneg %p53
      %p152 = pneg %p77
      %p153 = pneg %p74
      %p154 = pneg %p103
      %p155 = pneg %p100
      %p156 = scmp.lt.s32.totalorder %s14, 1
      %s157 = scalar_select %p156, %s14, 1
      %s158 = smul.addr %s157, 34
      %s159 = smul.addr %s158, 8
      %s160 = scalar_lea.vmem %s3, %s159
      %p161 = scmp.lt.s32.totalorder %s14, 1
      %s162 = scalar_select %p161, %s14, 1
      %s163 = smul.addr %s162, 43
      %s164 = smul.addr %s163, 8
      %s165 = scalar_lea.vmem %s0, %s164
      %p166 = scmp.lt.s32.totalorder %s14, 1
      %s167 = scalar_select %p166, %s14, 1
      %s168 = smul.addr %s167, 34
      %s169 = smul.addr %s168, 8
      %s170 = scalar_lea.vmem %s3, %s169
      %v172 = vld [vmem:[%s165] sm:$0xff]
      %v173 = vld [vmem:[%s165 + $0x8] sm:$0xff]
      %v174 = vld [vmem:[%s165 + $0x10] sm:$0xff]
      %v175 = vld [vmem:[%s165 + $0x18] sm:$0xff]
      %v176 = vld [vmem:[%s165 + $0x20] sm:$0xff]
      %v177 = vld [vmem:[%s165 + $0x28] sm:$0xff]
      %v178 = vld [vmem:[%s165 + $0x30] sm:$0xff]
      %v179 = vld [vmem:[%s165 + $0x38] sm:$0xff]
      %v180 = vld [vmem:[%s165 + $0x40] sm:$0xff]
      %v181 = vld [vmem:[%s165 + $0x48] sm:$0xff]
      %v182 = vld [vmem:[%s165 + $0x50] sm:$0xff]
      %v183 = vld [vmem:[%s165 + $0x58] sm:$0xff]
      %v184 = vld [vmem:[%s165 + $0x60] sm:$0xff]
      %v185 = vld [vmem:[%s165 + $0x68] sm:$0xff]
      %v186 = vld [vmem:[%s165 + $0x70] sm:$0xff]
      %v187 = vld [vmem:[%s165 + $0x78] sm:$0xff]
      %v188 = vld [vmem:[%s165 + $0x80] sm:$0xff]
      %v189 = vld [vmem:[%s165 + $0x88] sm:$0xff]
      %v190 = vld [vmem:[%s165 + $0x90] sm:$0xff]
      %v191 = vld [vmem:[%s165 + $0x98] sm:$0xff]
      %v192 = vld [vmem:[%s165 + $0xa0] sm:$0xff]
      %v193 = vld [vmem:[%s165 + $0xa8] sm:$0xff]
      %v194 = vld [vmem:[%s165 + $0xb0] sm:$0xff]
      %v195 = vld [vmem:[%s165 + $0xb8] sm:$0xff]
      %v196 = vld [vmem:[%s165 + $0xc0] sm:$0xff]
      %v197 = vld [vmem:[%s165 + $0xc8] sm:$0xff]
      %v198 = vld [vmem:[%s165 + $0xd0] sm:$0xff]
      %v199 = vld [vmem:[%s165 + $0xd8] sm:$0xff]
      %v200 = vld [vmem:[%s165 + $0xe0] sm:$0xff]
      %v201 = vld [vmem:[%s165 + $0xe8] sm:$0xff]
      %v202 = vld [vmem:[%s165 + $0xf0] sm:$0xff]
      %v203 = vld [vmem:[%s165 + $0xf8] sm:$0xff]
      %v204 = vld [vmem:[%s165 + $0x100] sm:$0xff]
      %v205 = vld [vmem:[%s165 + $0x108] sm:$0xff]
      %v206 = vpack.c.bf16 %v173, %v172
      %v207 = vpack.c.bf16 %v175, %v174
      %v208 = vpack.c.bf16 %v177, %v176
      %v209 = vpack.c.bf16 %v179, %v178
      %v210 = vpack.c.bf16 %v181, %v180
      %v211 = vpack.c.bf16 %v183, %v182
      %v212 = vpack.c.bf16 %v185, %v184
      %v213 = vpack.c.bf16 %v187, %v186
      %v214 = vpack.c.bf16 %v189, %v188
      %v215 = vpack.c.bf16 %v191, %v190
      %v216 = vpack.c.bf16 %v193, %v192
      %v217 = vpack.c.bf16 %v195, %v194
      %v218 = vpack.c.bf16 %v197, %v196
      %v219 = vpack.c.bf16 %v199, %v198
      %v220 = vpack.c.bf16 %v201, %v200
      %v221 = vpack.c.bf16 %v203, %v202
      %v222 = vpack.c.bf16 %v205, %v204
      %v223 = vld [vmem:[%s1] sm:$0xff]
      %v224 = vld [vmem:[%s1 + $0x8] sm:$0xff]
      %v225 = vpack.c.bf16 %v224, %v223
      %v226 = vld [vmem:[%s165 + $0x11] sm:$0xff]
      %v227 = vld [vmem:[%s165 + $0x19] sm:$0xff]
      %v228 = vld [vmem:[%s165 + $0x21] sm:$0xff]
      %v229 = vld [vmem:[%s165 + $0x29] sm:$0xff]
      %v230 = vld [vmem:[%s165 + $0x31] sm:$0xff]
      %v231 = vld [vmem:[%s165 + $0x39] sm:$0xff]
      %v232 = vld [vmem:[%s165 + $0x41] sm:$0xff]
      %v233 = vld [vmem:[%s165 + $0x49] sm:$0xff]
      %v234 = vld [vmem:[%s165 + $0x51] sm:$0xff]
      %v235 = vld [vmem:[%s165 + $0x59] sm:$0xff]
      %v236 = vld [vmem:[%s165 + $0x61] sm:$0xff]
      %v237 = vld [vmem:[%s165 + $0x69] sm:$0xff]
      %v238 = vld [vmem:[%s165 + $0x71] sm:$0xff]
      %v239 = vld [vmem:[%s165 + $0x79] sm:$0xff]
      %v240 = vld [vmem:[%s165 + $0x81] sm:$0xff]
      %v241 = vld [vmem:[%s165 + $0x89] sm:$0xff]
      %v242 = vld [vmem:[%s165 + $0x91] sm:$0xff]
      %v243 = vld [vmem:[%s165 + $0x99] sm:$0xff]
      %v244 = vld [vmem:[%s165 + $0xa1] sm:$0xff]
      %v245 = vld [vmem:[%s165 + $0xa9] sm:$0xff]
      %v246 = vld [vmem:[%s165 + $0xb1] sm:$0xff]
      %v247 = vld [vmem:[%s165 + $0xb9] sm:$0xff]
      %v248 = vld [vmem:[%s165 + $0xc1] sm:$0xff]
      %v249 = vld [vmem:[%s165 + $0xc9] sm:$0xff]
      %v250 = vld [vmem:[%s165 + $0xd1] sm:$0xff]
      %v251 = vld [vmem:[%s165 + $0xd9] sm:$0xff]
      %v252 = vld [vmem:[%s165 + $0xe1] sm:$0xff]
      %v253 = vld [vmem:[%s165 + $0xe9] sm:$0xff]
      %v254 = vld [vmem:[%s165 + $0xf1] sm:$0xff]
      %v255 = vld [vmem:[%s165 + $0xf9] sm:$0xff]
      %v256 = vld [vmem:[%s165 + $0x101] sm:$0xff]
      %v257 = vld [vmem:[%s165 + $0x109] sm:$0xff]
      %v258 = vld [vmem:[%s165 + $0x111] sm:$0xff]
      %v259 = vld [vmem:[%s165 + $0x119] sm:$0xff]
      %v260 = vpack.c.bf16 %v227, %v226
      %v261 = vpack.c.bf16 %v229, %v228
      %v262 = vpack.c.bf16 %v231, %v230
      %v263 = vpack.c.bf16 %v233, %v232
      %v264 = vpack.c.bf16 %v235, %v234
      %v265 = vpack.c.bf16 %v237, %v236
      %v266 = vpack.c.bf16 %v239, %v238
      %v267 = vpack.c.bf16 %v241, %v240
      %v268 = vpack.c.bf16 %v243, %v242
      %v269 = vpack.c.bf16 %v245, %v244
      %v270 = vpack.c.bf16 %v247, %v246
      %v271 = vpack.c.bf16 %v249, %v248
      %v272 = vpack.c.bf16 %v251, %v250
      %v273 = vpack.c.bf16 %v253, %v252
      %v274 = vpack.c.bf16 %v255, %v254
      %v275 = vpack.c.bf16 %v257, %v256
      %v276 = vpack.c.bf16 %v259, %v258
      %v277 = vld [vmem:[%s1 + $0x10] sm:$0xff]
      %v278 = vld [vmem:[%s1 + $0x18] sm:$0xff]
      %v279 = vpack.c.bf16 %v278, %v277
      %vm280 = vcmask 130048
      %v282 = vsel %vm280, %v260, 0
      %v285 = vsel %vm280, %v261, 0
      %v288 = vsel %vm280, %v262, 0
      %v291 = vsel %vm280, %v263, 0
      %v294 = vsel %vm280, %v264, 0
      %v297 = vsel %vm280, %v265, 0
      %v300 = vsel %vm280, %v266, 0
      %v303 = vsel %vm280, %v267, 0
      %v306 = vsel %vm280, %v268, 0
      %v309 = vsel %vm280, %v269, 0
      %v312 = vsel %vm280, %v270, 0
      %v315 = vsel %vm280, %v271, 0
      %v318 = vsel %vm280, %v272, 0
      %v321 = vsel %vm280, %v273, 0
      %v324 = vsel %vm280, %v274, 0
      %v327 = vsel %vm280, %v275, 0
      %v330 = vsel %vm280, %v276, 0
      %332 = vmatpush.bf16.msra.mxu0 0
      %333 = vmatpush.bf16.msra.mxu0 0
      %334 = vmatpush.bf16.msra.mxu0 0
      %335 = vmatpush.bf16.msra.mxu0 0
      %336 = vmatpush.bf16.msra.mxu0 0
      %337 = vmatpush.bf16.msra.mxu0 0
      %338 = vmatpush.bf16.msra.mxu0 0
      %339 = vmatpush.bf16.msra.mxu0 %v279
      %340 = vmatmul.bf16.gmra.mxu0 %v282
      %v341 = vpop.f32.mrf.mxu0
      %v342 = vadd.f32 0.0, %v341
      %v343 = vpop.f32.mrf.mxu0
      %v344 = vadd.f32 0.0, %v343
      %345 = vmatmul.bf16.gmra.mxu0 %v285
      %v346 = vpop.f32.mrf.mxu0
      %v347 = vadd.f32 0.0, %v346
      %v348 = vpop.f32.mrf.mxu0
      %v349 = vadd.f32 0.0, %v348
      %350 = vmatmul.bf16.gmra.mxu0 %v288
      %v351 = vpop.f32.mrf.mxu0
      %v352 = vadd.f32 0.0, %v351
      %v353 = vpop.f32.mrf.mxu0
      %v354 = vadd.f32 0.0, %v353
      %355 = vmatmul.bf16.gmra.mxu0 %v291
      %v356 = vpop.f32.mrf.mxu0
      %v357 = vadd.f32 0.0, %v356
      %v358 = vpop.f32.mrf.mxu0
      %v359 = vadd.f32 0.0, %v358
      %360 = vmatmul.bf16.gmra.mxu0 %v294
      %v361 = vpop.f32.mrf.mxu0
      %v362 = vadd.f32 0.0, %v361
      %v363 = vpop.f32.mrf.mxu0
      %v364 = vadd.f32 0.0, %v363
      %365 = vmatmul.bf16.gmra.mxu0 %v297
      %v366 = vpop.f32.mrf.mxu0
      %v367 = vadd.f32 0.0, %v366
      %v368 = vpop.f32.mrf.mxu0
      %v369 = vadd.f32 0.0, %v368
      %370 = vmatmul.bf16.gmra.mxu0 %v300
      %v371 = vpop.f32.mrf.mxu0
      %v372 = vadd.f32 0.0, %v371
      %v373 = vpop.f32.mrf.mxu0
      %v374 = vadd.f32 0.0, %v373
      %375 = vmatmul.bf16.gmra.mxu0 %v303
      %v376 = vpop.f32.mrf.mxu0
      %v377 = vadd.f32 0.0, %v376
      %v378 = vpop.f32.mrf.mxu0
      %v379 = vadd.f32 0.0, %v378
      %380 = vmatmul.bf16.gmra.mxu0 %v306
      %v381 = vpop.f32.mrf.mxu0
      %v382 = vadd.f32 0.0, %v381
      %v383 = vpop.f32.mrf.mxu0
      %v384 = vadd.f32 0.0, %v383
      %385 = vmatmul.bf16.gmra.mxu0 %v309
      %v386 = vpop.f32.mrf.mxu0
      %v387 = vadd.f32 0.0, %v386
      %v388 = vpop.f32.mrf.mxu0
      %v389 = vadd.f32 0.0, %v388
      %390 = vmatmul.bf16.gmra.mxu0 %v312
      %v391 = vpop.f32.mrf.mxu0
      %v392 = vadd.f32 0.0, %v391
      %v393 = vpop.f32.mrf.mxu0
      %v394 = vadd.f32 0.0, %v393
      %395 = vmatmul.bf16.gmra.mxu0 %v315
      %v396 = vpop.f32.mrf.mxu0
      %v397 = vadd.f32 0.0, %v396
      %v398 = vpop.f32.mrf.mxu0
      %v399 = vadd.f32 0.0, %v398
      %400 = vmatmul.bf16.gmra.mxu0 %v318
      %v401 = vpop.f32.mrf.mxu0
      %v402 = vadd.f32 0.0, %v401
      %v403 = vpop.f32.mrf.mxu0
      %v404 = vadd.f32 0.0, %v403
      %405 = vmatmul.bf16.gmra.mxu0 %v321
      %v406 = vpop.f32.mrf.mxu0
      %v407 = vadd.f32 0.0, %v406
      %v408 = vpop.f32.mrf.mxu0
      %v409 = vadd.f32 0.0, %v408
      %410 = vmatmul.bf16.gmra.mxu0 %v324
      %v411 = vpop.f32.mrf.mxu0
      %v412 = vadd.f32 0.0, %v411
      %v413 = vpop.f32.mrf.mxu0
      %v414 = vadd.f32 0.0, %v413
      %415 = vmatmul.bf16.gmra.mxu0 %v327
      %v416 = vpop.f32.mrf.mxu0
      %v417 = vadd.f32 0.0, %v416
      %v418 = vpop.f32.mrf.mxu0
      %v419 = vadd.f32 0.0, %v418
      %420 = vmatmul.bf16.gmra.mxu0 %v330
      %v421 = vpop.f32.mrf.mxu0
      %v422 = vadd.f32 0.0, %v421
      %v423 = vpop.f32.mrf.mxu0
      %v424 = vadd.f32 0.0, %v423
      %425 = vdwg.mxu0
      %v427 = vsel %vm280, %v206, 0
      %v430 = vsel %vm280, %v207, 0
      %v433 = vsel %vm280, %v208, 0
      %v436 = vsel %vm280, %v209, 0
      %v439 = vsel %vm280, %v210, 0
      %v442 = vsel %vm280, %v211, 0
      %v445 = vsel %vm280, %v212, 0
      %v448 = vsel %vm280, %v213, 0
      %v451 = vsel %vm280, %v214, 0
      %v454 = vsel %vm280, %v215, 0
      %v457 = vsel %vm280, %v216, 0
      %v460 = vsel %vm280, %v217, 0
      %v463 = vsel %vm280, %v218, 0
      %v466 = vsel %vm280, %v219, 0
      %v469 = vsel %vm280, %v220, 0
      %v472 = vsel %vm280, %v221, 0
      %v475 = vsel %vm280, %v222, 0
      %477 = vmatpush.bf16.msra.mxu0 0
      %478 = vmatpush.bf16.msra.mxu0 0
      %479 = vmatpush.bf16.msra.mxu0 0
      %480 = vmatpush.bf16.msra.mxu0 0
      %481 = vmatpush.bf16.msra.mxu0 0
      %482 = vmatpush.bf16.msra.mxu0 0
      %483 = vmatpush.bf16.msra.mxu0 0
      %484 = vmatpush.bf16.msra.mxu0 %v225
      %485 = vmatmul.bf16.gmra.mxu0 %v427
      %v486 = vpop.f32.mrf.mxu0
      %v487 = vadd.f32 %v342, %v486
      %v488 = vpop.f32.mrf.mxu0
      %v489 = vadd.f32 %v344, %v488
      %490 = vmatmul.bf16.gmra.mxu0 %v430
      %v491 = vpop.f32.mrf.mxu0
      %v492 = vadd.f32 %v347, %v491
      %v493 = vpop.f32.mrf.mxu0
      %v494 = vadd.f32 %v349, %v493
      %495 = vmatmul.bf16.gmra.mxu0 %v433
      %v496 = vpop.f32.mrf.mxu0
      %v497 = vadd.f32 %v352, %v496
      %v498 = vpop.f32.mrf.mxu0
      %v499 = vadd.f32 %v354, %v498
      %500 = vmatmul.bf16.gmra.mxu0 %v436
      %v501 = vpop.f32.mrf.mxu0
      %v502 = vadd.f32 %v357, %v501
      %v503 = vpop.f32.mrf.mxu0
      %v504 = vadd.f32 %v359, %v503
      %505 = vmatmul.bf16.gmra.mxu0 %v439
      %v506 = vpop.f32.mrf.mxu0
      %v507 = vadd.f32 %v362, %v506
      %v508 = vpop.f32.mrf.mxu0
      %v509 = vadd.f32 %v364, %v508
      %510 = vmatmul.bf16.gmra.mxu0 %v442
      %v511 = vpop.f32.mrf.mxu0
      %v512 = vadd.f32 %v367, %v511
      %v513 = vpop.f32.mrf.mxu0
      %v514 = vadd.f32 %v369, %v513
      %515 = vmatmul.bf16.gmra.mxu0 %v445
      %v516 = vpop.f32.mrf.mxu0
      %v517 = vadd.f32 %v372, %v516
      %v518 = vpop.f32.mrf.mxu0
      %v519 = vadd.f32 %v374, %v518
      %520 = vmatmul.bf16.gmra.mxu0 %v448
      %v521 = vpop.f32.mrf.mxu0
      %v522 = vadd.f32 %v377, %v521
      %v523 = vpop.f32.mrf.mxu0
      %v524 = vadd.f32 %v379, %v523
      %525 = vmatmul.bf16.gmra.mxu0 %v451
      %v526 = vpop.f32.mrf.mxu0
      %v527 = vadd.f32 %v382, %v526
      %v528 = vpop.f32.mrf.mxu0
      %v529 = vadd.f32 %v384, %v528
      %530 = vmatmul.bf16.gmra.mxu0 %v454
      %v531 = vpop.f32.mrf.mxu0
      %v532 = vadd.f32 %v387, %v531
      %v533 = vpop.f32.mrf.mxu0
      %v534 = vadd.f32 %v389, %v533
      %535 = vmatmul.bf16.gmra.mxu0 %v457
      %v536 = vpop.f32.mrf.mxu0
      %v537 = vadd.f32 %v392, %v536
      %v538 = vpop.f32.mrf.mxu0
      %v539 = vadd.f32 %v394, %v538
      %540 = vmatmul.bf16.gmra.mxu0 %v460
      %v541 = vpop.f32.mrf.mxu0
      %v542 = vadd.f32 %v397, %v541
      %v543 = vpop.f32.mrf.mxu0
      %v544 = vadd.f32 %v399, %v543
      %545 = vmatmul.bf16.gmra.mxu0 %v463
      %v546 = vpop.f32.mrf.mxu0
      %v547 = vadd.f32 %v402, %v546
      %v548 = vpop.f32.mrf.mxu0
      %v549 = vadd.f32 %v404, %v548
      %550 = vmatmul.bf16.gmra.mxu0 %v466
      %v551 = vpop.f32.mrf.mxu0
      %v552 = vadd.f32 %v407, %v551
      %v553 = vpop.f32.mrf.mxu0
      %v554 = vadd.f32 %v409, %v553
      %555 = vmatmul.bf16.gmra.mxu0 %v469
      %v556 = vpop.f32.mrf.mxu0
      %v557 = vadd.f32 %v412, %v556
      %v558 = vpop.f32.mrf.mxu0
      %v559 = vadd.f32 %v414, %v558
      %560 = vmatmul.bf16.gmra.mxu0 %v472
      %v561 = vpop.f32.mrf.mxu0
      %v562 = vadd.f32 %v417, %v561
      %v563 = vpop.f32.mrf.mxu0
      %v564 = vadd.f32 %v419, %v563
      %565 = vmatmul.bf16.gmra.mxu0 %v475
      %v566 = vpop.f32.mrf.mxu0
      %v567 = vadd.f32 %v422, %v566
      %v568 = vpop.f32.mrf.mxu0
      %v569 = vadd.f32 %v424, %v568
      %570 = vdwg.mxu0
      %v571 = vld [vmem:[%s165 + $0x22] sm:$0xff]
      %v572 = vld [vmem:[%s165 + $0x2a] sm:$0xff]
      %v573 = vld [vmem:[%s165 + $0x32] sm:$0xff]
      %v574 = vld [vmem:[%s165 + $0x3a] sm:$0xff]
      %v575 = vld [vmem:[%s165 + $0x42] sm:$0xff]
      %v576 = vld [vmem:[%s165 + $0x4a] sm:$0xff]
      %v577 = vld [vmem:[%s165 + $0x52] sm:$0xff]
      %v578 = vld [vmem:[%s165 + $0x5a] sm:$0xff]
      %v579 = vld [vmem:[%s165 + $0x62] sm:$0xff]
      %v580 = vld [vmem:[%s165 + $0x6a] sm:$0xff]
      %v581 = vld [vmem:[%s165 + $0x72] sm:$0xff]
      %v582 = vld [vmem:[%s165 + $0x7a] sm:$0xff]
      %v583 = vld [vmem:[%s165 + $0x82] sm:$0xff]
      %v584 = vld [vmem:[%s165 + $0x8a] sm:$0xff]
      %v585 = vld [vmem:[%s165 + $0x92] sm:$0xff]
      %v586 = vld [vmem:[%s165 + $0x9a] sm:$0xff]
      %v587 = vld [vmem:[%s165 + $0xa2] sm:$0xff]
      %v588 = vld [vmem:[%s165 + $0xaa] sm:$0xff]
      %v589 = vld [vmem:[%s165 + $0xb2] sm:$0xff]
      %v590 = vld [vmem:[%s165 + $0xba] sm:$0xff]
      %v591 = vld [vmem:[%s165 + $0xc2] sm:$0xff]
      %v592 = vld [vmem:[%s165 + $0xca] sm:$0xff]
      %v593 = vld [vmem:[%s165 + $0xd2] sm:$0xff]
      %v594 = vld [vmem:[%s165 + $0xda] sm:$0xff]
      %v595 = vld [vmem:[%s165 + $0xe2] sm:$0xff]
      %v596 = vld [vmem:[%s165 + $0xea] sm:$0xff]
      %v597 = vld [vmem:[%s165 + $0xf2] sm:$0xff]
      %v598 = vld [vmem:[%s165 + $0xfa] sm:$0xff]
      %v599 = vld [vmem:[%s165 + $0x102] sm:$0xff]
      %v600 = vld [vmem:[%s165 + $0x10a] sm:$0xff]
      %v601 = vld [vmem:[%s165 + $0x112] sm:$0xff]
      %v602 = vld [vmem:[%s165 + $0x11a] sm:$0xff]
      %v603 = vld [vmem:[%s165 + $0x122] sm:$0xff]
      %v604 = vld [vmem:[%s165 + $0x12a] sm:$0xff]
      %v605 = vpack.c.bf16 %v572, %v571
      %v606 = vpack.c.bf16 %v574, %v573
      %v607 = vpack.c.bf16 %v576, %v575
      %v608 = vpack.c.bf16 %v578, %v577
      %v609 = vpack.c.bf16 %v580, %v579
      %v610 = vpack.c.bf16 %v582, %v581
      %v611 = vpack.c.bf16 %v584, %v583
      %v612 = vpack.c.bf16 %v586, %v585
      %v613 = vpack.c.bf16 %v588, %v587
      %v614 = vpack.c.bf16 %v590, %v589
      %v615 = vpack.c.bf16 %v592, %v591
      %v616 = vpack.c.bf16 %v594, %v593
      %v617 = vpack.c.bf16 %v596, %v595
      %v618 = vpack.c.bf16 %v598, %v597
      %v619 = vpack.c.bf16 %v600, %v599
      %v620 = vpack.c.bf16 %v602, %v601
      %v621 = vpack.c.bf16 %v604, %v603
      %v622 = vld [vmem:[%s1 + $0x20] sm:$0xff]
      %v623 = vld [vmem:[%s1 + $0x28] sm:$0xff]
      %v624 = vpack.c.bf16 %v623, %v622
      %v626 = vsel %vm280, %v605, 0
      %v629 = vsel %vm280, %v606, 0
      %v632 = vsel %vm280, %v607, 0
      %v635 = vsel %vm280, %v608, 0
      %v638 = vsel %vm280, %v609, 0
      %v641 = vsel %vm280, %v610, 0
      %v644 = vsel %vm280, %v611, 0
      %v647 = vsel %vm280, %v612, 0
      %v650 = vsel %vm280, %v613, 0
      %v653 = vsel %vm280, %v614, 0
      %v656 = vsel %vm280, %v615, 0
      %v659 = vsel %vm280, %v616, 0
      %v662 = vsel %vm280, %v617, 0
      %v665 = vsel %vm280, %v618, 0
      %v668 = vsel %vm280, %v619, 0
      %v671 = vsel %vm280, %v620, 0
      %v674 = vsel %vm280, %v621, 0
      %676 = vmatpush.bf16.msra.mxu0 0
      %677 = vmatpush.bf16.msra.mxu0 0
      %678 = vmatpush.bf16.msra.mxu0 0
      %679 = vmatpush.bf16.msra.mxu0 0
      %680 = vmatpush.bf16.msra.mxu0 0
      %681 = vmatpush.bf16.msra.mxu0 0
      %682 = vmatpush.bf16.msra.mxu0 0
      %683 = vmatpush.bf16.msra.mxu0 %v624
      %684 = vmatmul.bf16.gmra.mxu0 %v626
      %v685 = vpop.f32.mrf.mxu0
      %v686 = vadd.f32 0.0, %v685
      %v687 = vpop.f32.mrf.mxu0
      %v688 = vadd.f32 0.0, %v687
      %689 = vmatmul.bf16.gmra.mxu0 %v629
      %v690 = vpop.f32.mrf.mxu0
      %v691 = vadd.f32 0.0, %v690
      %v692 = vpop.f32.mrf.mxu0
      %v693 = vadd.f32 0.0, %v692
      %694 = vmatmul.bf16.gmra.mxu0 %v632
      %v695 = vpop.f32.mrf.mxu0
      %v696 = vadd.f32 0.0, %v695
      %v697 = vpop.f32.mrf.mxu0
      %v698 = vadd.f32 0.0, %v697
      %699 = vmatmul.bf16.gmra.mxu0 %v635
      %v700 = vpop.f32.mrf.mxu0
      %v701 = vadd.f32 0.0, %v700
      %v702 = vpop.f32.mrf.mxu0
      %v703 = vadd.f32 0.0, %v702
      %704 = vmatmul.bf16.gmra.mxu0 %v638
      %v705 = vpop.f32.mrf.mxu0
      %v706 = vadd.f32 0.0, %v705
      %v707 = vpop.f32.mrf.mxu0
      %v708 = vadd.f32 0.0, %v707
      %709 = vmatmul.bf16.gmra.mxu0 %v641
      %v710 = vpop.f32.mrf.mxu0
      %v711 = vadd.f32 0.0, %v710
      %v712 = vpop.f32.mrf.mxu0
      %v713 = vadd.f32 0.0, %v712
      %714 = vmatmul.bf16.gmra.mxu0 %v644
      %v715 = vpop.f32.mrf.mxu0
      %v716 = vadd.f32 0.0, %v715
      %v717 = vpop.f32.mrf.mxu0
      %v718 = vadd.f32 0.0, %v717
      %719 = vmatmul.bf16.gmra.mxu0 %v647
      %v720 = vpop.f32.mrf.mxu0
      %v721 = vadd.f32 0.0, %v720
      %v722 = vpop.f32.mrf.mxu0
      %v723 = vadd.f32 0.0, %v722
      %724 = vmatmul.bf16.gmra.mxu0 %v650
      %v725 = vpop.f32.mrf.mxu0
      %v726 = vadd.f32 0.0, %v725
      %v727 = vpop.f32.mrf.mxu0
      %v728 = vadd.f32 0.0, %v727
      %729 = vmatmul.bf16.gmra.mxu0 %v653
      %v730 = vpop.f32.mrf.mxu0
      %v731 = vadd.f32 0.0, %v730
      %v732 = vpop.f32.mrf.mxu0
      %v733 = vadd.f32 0.0, %v732
      %734 = vmatmul.bf16.gmra.mxu0 %v656
      %v735 = vpop.f32.mrf.mxu0
      %v736 = vadd.f32 0.0, %v735
      %v737 = vpop.f32.mrf.mxu0
      %v738 = vadd.f32 0.0, %v737
      %739 = vmatmul.bf16.gmra.mxu0 %v659
      %v740 = vpop.f32.mrf.mxu0
      %v741 = vadd.f32 0.0, %v740
      %v742 = vpop.f32.mrf.mxu0
      %v743 = vadd.f32 0.0, %v742
      %744 = vmatmul.bf16.gmra.mxu0 %v662
      %v745 = vpop.f32.mrf.mxu0
      %v746 = vadd.f32 0.0, %v745
      %v747 = vpop.f32.mrf.mxu0
      %v748 = vadd.f32 0.0, %v747
      %749 = vmatmul.bf16.gmra.mxu0 %v665
      %v750 = vpop.f32.mrf.mxu0
      %v751 = vadd.f32 0.0, %v750
      %v752 = vpop.f32.mrf.mxu0
      %v753 = vadd.f32 0.0, %v752
      %754 = vmatmul.bf16.gmra.mxu0 %v668
      %v755 = vpop.f32.mrf.mxu0
      %v756 = vadd.f32 0.0, %v755
      %v757 = vpop.f32.mrf.mxu0
      %v758 = vadd.f32 0.0, %v757
      %759 = vmatmul.bf16.gmra.mxu0 %v671
      %v760 = vpop.f32.mrf.mxu0
      %v761 = vadd.f32 0.0, %v760
      %v762 = vpop.f32.mrf.mxu0
      %v763 = vadd.f32 0.0, %v762
      %764 = vmatmul.bf16.gmra.mxu0 %v674
      %v765 = vpop.f32.mrf.mxu0
      %v766 = vadd.f32 0.0, %v765
      %v767 = vpop.f32.mrf.mxu0
      %v768 = vadd.f32 0.0, %v767
      %769 = vdwg.mxu0
      %v770 = vadd.f32 %v487, %v686
      %v771 = vadd.f32 %v489, %v688
      %v772 = vadd.f32 %v492, %v691
      %v773 = vadd.f32 %v494, %v693
      %v774 = vadd.f32 %v497, %v696
      %v775 = vadd.f32 %v499, %v698
      %v776 = vadd.f32 %v502, %v701
      %v777 = vadd.f32 %v504, %v703
      %v778 = vadd.f32 %v507, %v706
      %v779 = vadd.f32 %v509, %v708
      %v780 = vadd.f32 %v512, %v711
      %v781 = vadd.f32 %v514, %v713
      %v782 = vadd.f32 %v517, %v716
      %v783 = vadd.f32 %v519, %v718
      %v784 = vadd.f32 %v522, %v721
      %v785 = vadd.f32 %v524, %v723
      %v786 = vadd.f32 %v527, %v726
      %v787 = vadd.f32 %v529, %v728
      %v788 = vadd.f32 %v532, %v731
      %v789 = vadd.f32 %v534, %v733
      %v790 = vadd.f32 %v537, %v736
      %v791 = vadd.f32 %v539, %v738
      %v792 = vadd.f32 %v542, %v741
      %v793 = vadd.f32 %v544, %v743
      %v794 = vadd.f32 %v547, %v746
      %v795 = vadd.f32 %v549, %v748
      %v796 = vadd.f32 %v552, %v751
      %v797 = vadd.f32 %v554, %v753
      %v798 = vadd.f32 %v557, %v756
      %v799 = vadd.f32 %v559, %v758
      %v800 = vadd.f32 %v562, %v761
      %v801 = vadd.f32 %v564, %v763
      %v802 = vadd.f32 %v567, %v766
      %v803 = vadd.f32 %v569, %v768
      %v804 = vld [vmem:[%s165 + $0x33] sm:$0xff]
      %v805 = vld [vmem:[%s165 + $0x3b] sm:$0xff]
      %v806 = vld [vmem:[%s165 + $0x43] sm:$0xff]
      %v807 = vld [vmem:[%s165 + $0x4b] sm:$0xff]
      %v808 = vld [vmem:[%s165 + $0x53] sm:$0xff]
      %v809 = vld [vmem:[%s165 + $0x5b] sm:$0xff]
      %v810 = vld [vmem:[%s165 + $0x63] sm:$0xff]
      %v811 = vld [vmem:[%s165 + $0x6b] sm:$0xff]
      %v812 = vld [vmem:[%s165 + $0x73] sm:$0xff]
      %v813 = vld [vmem:[%s165 + $0x7b] sm:$0xff]
      %v814 = vld [vmem:[%s165 + $0x83] sm:$0xff]
      %v815 = vld [vmem:[%s165 + $0x8b] sm:$0xff]
      %v816 = vld [vmem:[%s165 + $0x93] sm:$0xff]
      %v817 = vld [vmem:[%s165 + $0x9b] sm:$0xff]
      %v818 = vld [vmem:[%s165 + $0xa3] sm:$0xff]
      %v819 = vld [vmem:[%s165 + $0xab] sm:$0xff]
      %v820 = vld [vmem:[%s165 + $0xb3] sm:$0xff]
      %v821 = vld [vmem:[%s165 + $0xbb] sm:$0xff]
      %v822 = vld [vmem:[%s165 + $0xc3] sm:$0xff]
      %v823 = vld [vmem:[%s165 + $0xcb] sm:$0xff]
      %v824 = vld [vmem:[%s165 + $0xd3] sm:$0xff]
      %v825 = vld [vmem:[%s165 + $0xdb] sm:$0xff]
      %v826 = vld [vmem:[%s165 + $0xe3] sm:$0xff]
      %v827 = vld [vmem:[%s165 + $0xeb] sm:$0xff]
      %v828 = vld [vmem:[%s165 + $0xf3] sm:$0xff]
      %v829 = vld [vmem:[%s165 + $0xfb] sm:$0xff]
      %v830 = vld [vmem:[%s165 + $0x103] sm:$0xff]
      %v831 = vld [vmem:[%s165 + $0x10b] sm:$0xff]
      %v832 = vld [vmem:[%s165 + $0x113] sm:$0xff]
      %v833 = vld [vmem:[%s165 + $0x11b] sm:$0xff]
      %v834 = vld [vmem:[%s165 + $0x123] sm:$0xff]
      %v835 = vld [vmem:[%s165 + $0x12b] sm:$0xff]
      %v836 = vld [vmem:[%s165 + $0x133] sm:$0xff]
      %v837 = vld [vmem:[%s165 + $0x13b] sm:$0xff]
      %v838 = vpack.c.bf16 %v805, %v804
      %v839 = vpack.c.bf16 %v807, %v806
      %v840 = vpack.c.bf16 %v809, %v808
      %v841 = vpack.c.bf16 %v811, %v810
      %v842 = vpack.c.bf16 %v813, %v812
      %v843 = vpack.c.bf16 %v815, %v814
      %v844 = vpack.c.bf16 %v817, %v816
      %v845 = vpack.c.bf16 %v819, %v818
      %v846 = vpack.c.bf16 %v821, %v820
      %v847 = vpack.c.bf16 %v823, %v822
      %v848 = vpack.c.bf16 %v825, %v824
      %v849 = vpack.c.bf16 %v827, %v826
      %v850 = vpack.c.bf16 %v829, %v828
      %v851 = vpack.c.bf16 %v831, %v830
      %v852 = vpack.c.bf16 %v833, %v832
      %v853 = vpack.c.bf16 %v835, %v834
      %v854 = vpack.c.bf16 %v837, %v836
      %v855 = vld [vmem:[%s1 + $0x30] sm:$0xff]
      %v856 = vld [vmem:[%s1 + $0x38] sm:$0xff]
      %v857 = vpack.c.bf16 %v856, %v855
      %v859 = vsel %vm280, %v838, 0
      %v862 = vsel %vm280, %v839, 0
      %v865 = vsel %vm280, %v840, 0
      %v868 = vsel %vm280, %v841, 0
      %v871 = vsel %vm280, %v842, 0
      %v874 = vsel %vm280, %v843, 0
      %v877 = vsel %vm280, %v844, 0
      %v880 = vsel %vm280, %v845, 0
      %v883 = vsel %vm280, %v846, 0
      %v886 = vsel %vm280, %v847, 0
      %v889 = vsel %vm280, %v848, 0
      %v892 = vsel %vm280, %v849, 0
      %v895 = vsel %vm280, %v850, 0
      %v898 = vsel %vm280, %v851, 0
      %v901 = vsel %vm280, %v852, 0
      %v904 = vsel %vm280, %v853, 0
      %v907 = vsel %vm280, %v854, 0
      %909 = vmatpush.bf16.msra.mxu0 0
      %910 = vmatpush.bf16.msra.mxu0 0
      %911 = vmatpush.bf16.msra.mxu0 0
      %912 = vmatpush.bf16.msra.mxu0 0
      %913 = vmatpush.bf16.msra.mxu0 0
      %914 = vmatpush.bf16.msra.mxu0 0
      %915 = vmatpush.bf16.msra.mxu0 0
      %916 = vmatpush.bf16.msra.mxu0 %v857
      %917 = vmatmul.bf16.gmra.mxu0 %v859
      %v918 = vpop.f32.mrf.mxu0
      %v919 = vadd.f32 0.0, %v918
      %v920 = vpop.f32.mrf.mxu0
      %v921 = vadd.f32 0.0, %v920
      %922 = vmatmul.bf16.gmra.mxu0 %v862
      %v923 = vpop.f32.mrf.mxu0
      %v924 = vadd.f32 0.0, %v923
      %v925 = vpop.f32.mrf.mxu0
      %v926 = vadd.f32 0.0, %v925
      %927 = vmatmul.bf16.gmra.mxu0 %v865
      %v928 = vpop.f32.mrf.mxu0
      %v929 = vadd.f32 0.0, %v928
      %v930 = vpop.f32.mrf.mxu0
      %v931 = vadd.f32 0.0, %v930
      %932 = vmatmul.bf16.gmra.mxu0 %v868
      %v933 = vpop.f32.mrf.mxu0
      %v934 = vadd.f32 0.0, %v933
      %v935 = vpop.f32.mrf.mxu0
      %v936 = vadd.f32 0.0, %v935
      %937 = vmatmul.bf16.gmra.mxu0 %v871
      %v938 = vpop.f32.mrf.mxu0
      %v939 = vadd.f32 0.0, %v938
      %v940 = vpop.f32.mrf.mxu0
      %v941 = vadd.f32 0.0, %v940
      %942 = vmatmul.bf16.gmra.mxu0 %v874
      %v943 = vpop.f32.mrf.mxu0
      %v944 = vadd.f32 0.0, %v943
      %v945 = vpop.f32.mrf.mxu0
      %v946 = vadd.f32 0.0, %v945
      %947 = vmatmul.bf16.gmra.mxu0 %v877
      %v948 = vpop.f32.mrf.mxu0
      %v949 = vadd.f32 0.0, %v948
      %v950 = vpop.f32.mrf.mxu0
      %v951 = vadd.f32 0.0, %v950
      %952 = vmatmul.bf16.gmra.mxu0 %v880
      %v953 = vpop.f32.mrf.mxu0
      %v954 = vadd.f32 0.0, %v953
      %v955 = vpop.f32.mrf.mxu0
      %v956 = vadd.f32 0.0, %v955
      %957 = vmatmul.bf16.gmra.mxu0 %v883
      %v958 = vpop.f32.mrf.mxu0
      %v959 = vadd.f32 0.0, %v958
      %v960 = vpop.f32.mrf.mxu0
      %v961 = vadd.f32 0.0, %v960
      %962 = vmatmul.bf16.gmra.mxu0 %v886
      %v963 = vpop.f32.mrf.mxu0
      %v964 = vadd.f32 0.0, %v963
      %v965 = vpop.f32.mrf.mxu0
      %v966 = vadd.f32 0.0, %v965
      %967 = vmatmul.bf16.gmra.mxu0 %v889
      %v968 = vpop.f32.mrf.mxu0
      %v969 = vadd.f32 0.0, %v968
      %v970 = vpop.f32.mrf.mxu0
      %v971 = vadd.f32 0.0, %v970
      %972 = vmatmul.bf16.gmra.mxu0 %v892
      %v973 = vpop.f32.mrf.mxu0
      %v974 = vadd.f32 0.0, %v973
      %v975 = vpop.f32.mrf.mxu0
      %v976 = vadd.f32 0.0, %v975
      %977 = vmatmul.bf16.gmra.mxu0 %v895
      %v978 = vpop.f32.mrf.mxu0
      %v979 = vadd.f32 0.0, %v978
      %v980 = vpop.f32.mrf.mxu0
      %v981 = vadd.f32 0.0, %v980
      %982 = vmatmul.bf16.gmra.mxu0 %v898
      %v983 = vpop.f32.mrf.mxu0
      %v984 = vadd.f32 0.0, %v983
      %v985 = vpop.f32.mrf.mxu0
      %v986 = vadd.f32 0.0, %v985
      %987 = vmatmul.bf16.gmra.mxu0 %v901
      %v988 = vpop.f32.mrf.mxu0
      %v989 = vadd.f32 0.0, %v988
      %v990 = vpop.f32.mrf.mxu0
      %v991 = vadd.f32 0.0, %v990
      %992 = vmatmul.bf16.gmra.mxu0 %v904
      %v993 = vpop.f32.mrf.mxu0
      %v994 = vadd.f32 0.0, %v993
      %v995 = vpop.f32.mrf.mxu0
      %v996 = vadd.f32 0.0, %v995
      %997 = vmatmul.bf16.gmra.mxu0 %v907
      %v998 = vpop.f32.mrf.mxu0
      %v999 = vadd.f32 0.0, %v998
      %v1000 = vpop.f32.mrf.mxu0
      %v1001 = vadd.f32 0.0, %v1000
      %1002 = vdwg.mxu0
      %v1003 = vadd.f32 %v770, %v919
      %v1004 = vadd.f32 %v771, %v921
      %v1005 = vadd.f32 %v772, %v924
      %v1006 = vadd.f32 %v773, %v926
      %v1007 = vadd.f32 %v774, %v929
      %v1008 = vadd.f32 %v775, %v931
      %v1009 = vadd.f32 %v776, %v934
      %v1010 = vadd.f32 %v777, %v936
      %v1011 = vadd.f32 %v778, %v939
      %v1012 = vadd.f32 %v779, %v941
      %v1013 = vadd.f32 %v780, %v944
      %v1014 = vadd.f32 %v781, %v946
      %v1015 = vadd.f32 %v782, %v949
      %v1016 = vadd.f32 %v783, %v951
      %v1017 = vadd.f32 %v784, %v954
      %v1018 = vadd.f32 %v785, %v956
      %v1019 = vadd.f32 %v786, %v959
      %v1020 = vadd.f32 %v787, %v961
      %v1021 = vadd.f32 %v788, %v964
      %v1022 = vadd.f32 %v789, %v966
      %v1023 = vadd.f32 %v790, %v969
      %v1024 = vadd.f32 %v791, %v971
      %v1025 = vadd.f32 %v792, %v974
      %v1026 = vadd.f32 %v793, %v976
      %v1027 = vadd.f32 %v794, %v979
      %v1028 = vadd.f32 %v795, %v981
      %v1029 = vadd.f32 %v796, %v984
      %v1030 = vadd.f32 %v797, %v986
      %v1031 = vadd.f32 %v798, %v989
      %v1032 = vadd.f32 %v799, %v991
      %v1033 = vadd.f32 %v800, %v994
      %v1034 = vadd.f32 %v801, %v996
      %v1035 = vadd.f32 %v802, %v999
      %v1036 = vadd.f32 %v803, %v1001
      %v1037 = vld [vmem:[%s165 + $0x44] sm:$0xff]
      %v1038 = vld [vmem:[%s165 + $0x4c] sm:$0xff]
      %v1039 = vld [vmem:[%s165 + $0x54] sm:$0xff]
      %v1040 = vld [vmem:[%s165 + $0x5c] sm:$0xff]
      %v1041 = vld [vmem:[%s165 + $0x64] sm:$0xff]
      %v1042 = vld [vmem:[%s165 + $0x6c] sm:$0xff]
      %v1043 = vld [vmem:[%s165 + $0x74] sm:$0xff]
      %v1044 = vld [vmem:[%s165 + $0x7c] sm:$0xff]
      %v1045 = vld [vmem:[%s165 + $0x84] sm:$0xff]
      %v1046 = vld [vmem:[%s165 + $0x8c] sm:$0xff]
      %v1047 = vld [vmem:[%s165 + $0x94] sm:$0xff]
      %v1048 = vld [vmem:[%s165 + $0x9c] sm:$0xff]
      %v1049 = vld [vmem:[%s165 + $0xa4] sm:$0xff]
      %v1050 = vld [vmem:[%s165 + $0xac] sm:$0xff]
      %v1051 = vld [vmem:[%s165 + $0xb4] sm:$0xff]
      %v1052 = vld [vmem:[%s165 + $0xbc] sm:$0xff]
      %v1053 = vld [vmem:[%s165 + $0xc4] sm:$0xff]
      %v1054 = vld [vmem:[%s165 + $0xcc] sm:$0xff]
      %v1055 = vld [vmem:[%s165 + $0xd4] sm:$0xff]
      %v1056 = vld [vmem:[%s165 + $0xdc] sm:$0xff]
      %v1057 = vld [vmem:[%s165 + $0xe4] sm:$0xff]
      %v1058 = vld [vmem:[%s165 + $0xec] sm:$0xff]
      %v1059 = vld [vmem:[%s165 + $0xf4] sm:$0xff]
      %v1060 = vld [vmem:[%s165 + $0xfc] sm:$0xff]
      %v1061 = vld [vmem:[%s165 + $0x104] sm:$0xff]
      %v1062 = vld [vmem:[%s165 + $0x10c] sm:$0xff]
      %v1063 = vld [vmem:[%s165 + $0x114] sm:$0xff]
      %v1064 = vld [vmem:[%s165 + $0x11c] sm:$0xff]
      %v1065 = vld [vmem:[%s165 + $0x124] sm:$0xff]
      %v1066 = vld [vmem:[%s165 + $0x12c] sm:$0xff]
      %v1067 = vld [vmem:[%s165 + $0x134] sm:$0xff]
      %v1068 = vld [vmem:[%s165 + $0x13c] sm:$0xff]
      %v1069 = vld [vmem:[%s165 + $0x144] sm:$0xff]
      %v1070 = vld [vmem:[%s165 + $0x14c] sm:$0xff]
      %v1071 = vpack.c.bf16 %v1038, %v1037
      %v1072 = vpack.c.bf16 %v1040, %v1039
      %v1073 = vpack.c.bf16 %v1042, %v1041
      %v1074 = vpack.c.bf16 %v1044, %v1043
      %v1075 = vpack.c.bf16 %v1046, %v1045
      %v1076 = vpack.c.bf16 %v1048, %v1047
      %v1077 = vpack.c.bf16 %v1050, %v1049
      %v1078 = vpack.c.bf16 %v1052, %v1051
      %v1079 = vpack.c.bf16 %v1054, %v1053
      %v1080 = vpack.c.bf16 %v1056, %v1055
      %v1081 = vpack.c.bf16 %v1058, %v1057
      %v1082 = vpack.c.bf16 %v1060, %v1059
      %v1083 = vpack.c.bf16 %v1062, %v1061
      %v1084 = vpack.c.bf16 %v1064, %v1063
      %v1085 = vpack.c.bf16 %v1066, %v1065
      %v1086 = vpack.c.bf16 %v1068, %v1067
      %v1087 = vpack.c.bf16 %v1070, %v1069
      %v1088 = vld [vmem:[%s1 + $0x40] sm:$0xff]
      %v1089 = vld [vmem:[%s1 + $0x48] sm:$0xff]
      %v1090 = vpack.c.bf16 %v1089, %v1088
      %v1092 = vsel %vm280, %v1071, 0
      %v1095 = vsel %vm280, %v1072, 0
      %v1098 = vsel %vm280, %v1073, 0
      %v1101 = vsel %vm280, %v1074, 0
      %v1104 = vsel %vm280, %v1075, 0
      %v1107 = vsel %vm280, %v1076, 0
      %v1110 = vsel %vm280, %v1077, 0
      %v1113 = vsel %vm280, %v1078, 0
      %v1116 = vsel %vm280, %v1079, 0
      %v1119 = vsel %vm280, %v1080, 0
      %v1122 = vsel %vm280, %v1081, 0
      %v1125 = vsel %vm280, %v1082, 0
      %v1128 = vsel %vm280, %v1083, 0
      %v1131 = vsel %vm280, %v1084, 0
      %v1134 = vsel %vm280, %v1085, 0
      %v1137 = vsel %vm280, %v1086, 0
      %v1140 = vsel %vm280, %v1087, 0
      %1142 = vmatpush.bf16.msra.mxu0 0
      %1143 = vmatpush.bf16.msra.mxu0 0
      %1144 = vmatpush.bf16.msra.mxu0 0
      %1145 = vmatpush.bf16.msra.mxu0 0
      %1146 = vmatpush.bf16.msra.mxu0 0
      %1147 = vmatpush.bf16.msra.mxu0 0
      %1148 = vmatpush.bf16.msra.mxu0 0
      %1149 = vmatpush.bf16.msra.mxu0 %v1090
      %1150 = vmatmul.bf16.gmra.mxu0 %v1092
      %v1151 = vpop.f32.mrf.mxu0
      %v1152 = vadd.f32 0.0, %v1151
      %v1153 = vpop.f32.mrf.mxu0
      %v1154 = vadd.f32 0.0, %v1153
      %1155 = vmatmul.bf16.gmra.mxu0 %v1095
      %v1156 = vpop.f32.mrf.mxu0
      %v1157 = vadd.f32 0.0, %v1156
      %v1158 = vpop.f32.mrf.mxu0
      %v1159 = vadd.f32 0.0, %v1158
      %1160 = vmatmul.bf16.gmra.mxu0 %v1098
      %v1161 = vpop.f32.mrf.mxu0
      %v1162 = vadd.f32 0.0, %v1161
      %v1163 = vpop.f32.mrf.mxu0
      %v1164 = vadd.f32 0.0, %v1163
      %1165 = vmatmul.bf16.gmra.mxu0 %v1101
      %v1166 = vpop.f32.mrf.mxu0
      %v1167 = vadd.f32 0.0, %v1166
      %v1168 = vpop.f32.mrf.mxu0
      %v1169 = vadd.f32 0.0, %v1168
      %1170 = vmatmul.bf16.gmra.mxu0 %v1104
      %v1171 = vpop.f32.mrf.mxu0
      %v1172 = vadd.f32 0.0, %v1171
      %v1173 = vpop.f32.mrf.mxu0
      %v1174 = vadd.f32 0.0, %v1173
      %1175 = vmatmul.bf16.gmra.mxu0 %v1107
      %v1176 = vpop.f32.mrf.mxu0
      %v1177 = vadd.f32 0.0, %v1176
      %v1178 = vpop.f32.mrf.mxu0
      %v1179 = vadd.f32 0.0, %v1178
      %1180 = vmatmul.bf16.gmra.mxu0 %v1110
      %v1181 = vpop.f32.mrf.mxu0
      %v1182 = vadd.f32 0.0, %v1181
      %v1183 = vpop.f32.mrf.mxu0
      %v1184 = vadd.f32 0.0, %v1183
      %1185 = vmatmul.bf16.gmra.mxu0 %v1113
      %v1186 = vpop.f32.mrf.mxu0
      %v1187 = vadd.f32 0.0, %v1186
      %v1188 = vpop.f32.mrf.mxu0
      %v1189 = vadd.f32 0.0, %v1188
      %1190 = vmatmul.bf16.gmra.mxu0 %v1116
      %v1191 = vpop.f32.mrf.mxu0
      %v1192 = vadd.f32 0.0, %v1191
      %v1193 = vpop.f32.mrf.mxu0
      %v1194 = vadd.f32 0.0, %v1193
      %1195 = vmatmul.bf16.gmra.mxu0 %v1119
      %v1196 = vpop.f32.mrf.mxu0
      %v1197 = vadd.f32 0.0, %v1196
      %v1198 = vpop.f32.mrf.mxu0
      %v1199 = vadd.f32 0.0, %v1198
      %1200 = vmatmul.bf16.gmra.mxu0 %v1122
      %v1201 = vpop.f32.mrf.mxu0
      %v1202 = vadd.f32 0.0, %v1201
      %v1203 = vpop.f32.mrf.mxu0
      %v1204 = vadd.f32 0.0, %v1203
      %1205 = vmatmul.bf16.gmra.mxu0 %v1125
      %v1206 = vpop.f32.mrf.mxu0
      %v1207 = vadd.f32 0.0, %v1206
      %v1208 = vpop.f32.mrf.mxu0
      %v1209 = vadd.f32 0.0, %v1208
      %1210 = vmatmul.bf16.gmra.mxu0 %v1128
      %v1211 = vpop.f32.mrf.mxu0
      %v1212 = vadd.f32 0.0, %v1211
      %v1213 = vpop.f32.mrf.mxu0
      %v1214 = vadd.f32 0.0, %v1213
      %1215 = vmatmul.bf16.gmra.mxu0 %v1131
      %v1216 = vpop.f32.mrf.mxu0
      %v1217 = vadd.f32 0.0, %v1216
      %v1218 = vpop.f32.mrf.mxu0
      %v1219 = vadd.f32 0.0, %v1218
      %1220 = vmatmul.bf16.gmra.mxu0 %v1134
      %v1221 = vpop.f32.mrf.mxu0
      %v1222 = vadd.f32 0.0, %v1221
      %v1223 = vpop.f32.mrf.mxu0
      %v1224 = vadd.f32 0.0, %v1223
      %1225 = vmatmul.bf16.gmra.mxu0 %v1137
      %v1226 = vpop.f32.mrf.mxu0
      %v1227 = vadd.f32 0.0, %v1226
      %v1228 = vpop.f32.mrf.mxu0
      %v1229 = vadd.f32 0.0, %v1228
      %1230 = vmatmul.bf16.gmra.mxu0 %v1140
      %v1231 = vpop.f32.mrf.mxu0
      %v1232 = vadd.f32 0.0, %v1231
      %v1233 = vpop.f32.mrf.mxu0
      %v1234 = vadd.f32 0.0, %v1233
      %1235 = vdwg.mxu0
      %v1236 = vadd.f32 %v1003, %v1152
      %v1237 = vadd.f32 %v1004, %v1154
      %v1238 = vadd.f32 %v1005, %v1157
      %v1239 = vadd.f32 %v1006, %v1159
      %v1240 = vadd.f32 %v1007, %v1162
      %v1241 = vadd.f32 %v1008, %v1164
      %v1242 = vadd.f32 %v1009, %v1167
      %v1243 = vadd.f32 %v1010, %v1169
      %v1244 = vadd.f32 %v1011, %v1172
      %v1245 = vadd.f32 %v1012, %v1174
      %v1246 = vadd.f32 %v1013, %v1177
      %v1247 = vadd.f32 %v1014, %v1179
      %v1248 = vadd.f32 %v1015, %v1182
      %v1249 = vadd.f32 %v1016, %v1184
      %v1250 = vadd.f32 %v1017, %v1187
      %v1251 = vadd.f32 %v1018, %v1189
      %v1252 = vadd.f32 %v1019, %v1192
      %v1253 = vadd.f32 %v1020, %v1194
      %v1254 = vadd.f32 %v1021, %v1197
      %v1255 = vadd.f32 %v1022, %v1199
      %v1256 = vadd.f32 %v1023, %v1202
      %v1257 = vadd.f32 %v1024, %v1204
      %v1258 = vadd.f32 %v1025, %v1207
      %v1259 = vadd.f32 %v1026, %v1209
      %v1260 = vadd.f32 %v1027, %v1212
      %v1261 = vadd.f32 %v1028, %v1214
      %v1262 = vadd.f32 %v1029, %v1217
      %v1263 = vadd.f32 %v1030, %v1219
      %v1264 = vadd.f32 %v1031, %v1222
      %v1265 = vadd.f32 %v1032, %v1224
      %v1266 = vadd.f32 %v1033, %v1227
      %v1267 = vadd.f32 %v1034, %v1229
      %v1268 = vadd.f32 %v1035, %v1232
      %v1269 = vadd.f32 %v1036, %v1234
      %v1270 = vld [vmem:[%s2] sm:$0x1]
      %v1272 = vperm.slane %v1270, 0
      %v1274 = vadd.f32 %v1236, %v1272
      %v1275 = vadd.f32 %v1237, %v1272
      %v1276 = vadd.f32 %v1238, %v1272
      %v1277 = vadd.f32 %v1239, %v1272
      %v1278 = vadd.f32 %v1240, %v1272
      %v1279 = vadd.f32 %v1241, %v1272
      %v1280 = vadd.f32 %v1242, %v1272
      %v1281 = vadd.f32 %v1243, %v1272
      %v1282 = vadd.f32 %v1244, %v1272
      %v1283 = vadd.f32 %v1245, %v1272
      %v1284 = vadd.f32 %v1246, %v1272
      %v1285 = vadd.f32 %v1247, %v1272
      %v1286 = vadd.f32 %v1248, %v1272
      %v1287 = vadd.f32 %v1249, %v1272
      %v1288 = vadd.f32 %v1250, %v1272
      %v1289 = vadd.f32 %v1251, %v1272
      %v1290 = vadd.f32 %v1252, %v1272
      %v1291 = vadd.f32 %v1253, %v1272
      %v1292 = vadd.f32 %v1254, %v1272
      %v1293 = vadd.f32 %v1255, %v1272
      %v1294 = vadd.f32 %v1256, %v1272
      %v1295 = vadd.f32 %v1257, %v1272
      %v1296 = vadd.f32 %v1258, %v1272
      %v1297 = vadd.f32 %v1259, %v1272
      %v1298 = vadd.f32 %v1260, %v1272
      %v1299 = vadd.f32 %v1261, %v1272
      %v1300 = vadd.f32 %v1262, %v1272
      %v1301 = vadd.f32 %v1263, %v1272
      %v1302 = vadd.f32 %v1264, %v1272
      %v1303 = vadd.f32 %v1265, %v1272
      %v1304 = vadd.f32 %v1266, %v1272
      %v1305 = vadd.f32 %v1267, %v1272
      %v1306 = vadd.f32 %v1268, %v1272
      %v1307 = vadd.f32 %v1269, %v1272
      %1308 = vst.msk [vmem:[%s170] sm:$0xff] %vm280, %v1274
      %1309 = vst.msk [vmem:[%s170 + $0x8] sm:$0xff] %vm280, %v1275
      %1310 = vst.msk [vmem:[%s170 + $0x10] sm:$0xff] %vm280, %v1276
      %1311 = vst.msk [vmem:[%s170 + $0x18] sm:$0xff] %vm280, %v1277
      %1312 = vst.msk [vmem:[%s170 + $0x20] sm:$0xff] %vm280, %v1278
      %1313 = vst.msk [vmem:[%s170 + $0x28] sm:$0xff] %vm280, %v1279
      %1314 = vst.msk [vmem:[%s170 + $0x30] sm:$0xff] %vm280, %v1280
      %1315 = vst.msk [vmem:[%s170 + $0x38] sm:$0xff] %vm280, %v1281
      %1316 = vst.msk [vmem:[%s170 + $0x40] sm:$0xff] %vm280, %v1282
      %1317 = vst.msk [vmem:[%s170 + $0x48] sm:$0xff] %vm280, %v1283
      %1318 = vst.msk [vmem:[%s170 + $0x50] sm:$0xff] %vm280, %v1284
      %1319 = vst.msk [vmem:[%s170 + $0x58] sm:$0xff] %vm280, %v1285
      %1320 = vst.msk [vmem:[%s170 + $0x60] sm:$0xff] %vm280, %v1286
      %1321 = vst.msk [vmem:[%s170 + $0x68] sm:$0xff] %vm280, %v1287
      %1322 = vst.msk [vmem:[%s170 + $0x70] sm:$0xff] %vm280, %v1288
      %1323 = vst.msk [vmem:[%s170 + $0x78] sm:$0xff] %vm280, %v1289
      %1324 = vst.msk [vmem:[%s170 + $0x80] sm:$0xff] %vm280, %v1290
      %1325 = vst.msk [vmem:[%s170 + $0x88] sm:$0xff] %vm280, %v1291
      %1326 = vst.msk [vmem:[%s170 + $0x90] sm:$0xff] %vm280, %v1292
      %1327 = vst.msk [vmem:[%s170 + $0x98] sm:$0xff] %vm280, %v1293
      %1328 = vst.msk [vmem:[%s170 + $0xa0] sm:$0xff] %vm280, %v1294
      %1329 = vst.msk [vmem:[%s170 + $0xa8] sm:$0xff] %vm280, %v1295
      %1330 = vst.msk [vmem:[%s170 + $0xb0] sm:$0xff] %vm280, %v1296
      %1331 = vst.msk [vmem:[%s170 + $0xb8] sm:$0xff] %vm280, %v1297
      %1332 = vst.msk [vmem:[%s170 + $0xc0] sm:$0xff] %vm280, %v1298
      %1333 = vst.msk [vmem:[%s170 + $0xc8] sm:$0xff] %vm280, %v1299
      %1334 = vst.msk [vmem:[%s170 + $0xd0] sm:$0xff] %vm280, %v1300
      %1335 = vst.msk [vmem:[%s170 + $0xd8] sm:$0xff] %vm280, %v1301
      %1336 = vst.msk [vmem:[%s170 + $0xe0] sm:$0xff] %vm280, %v1302
      %1337 = vst.msk [vmem:[%s170 + $0xe8] sm:$0xff] %vm280, %v1303
      %1338 = vst.msk [vmem:[%s170 + $0xf0] sm:$0xff] %vm280, %v1304
      %1339 = vst.msk [vmem:[%s170 + $0xf8] sm:$0xff] %vm280, %v1305
      %1340 = vst.msk [vmem:[%s170 + $0x100] sm:$0xff] %vm280, %v1306
      %1341 = vst.msk [vmem:[%s170 + $0x108] sm:$0xff] %vm280, %v1307
      %p1342 = scmp.lt.s32.totalorder %s14, 1
      %s1343 = scalar_select %p1342, %s14, 1
      %s1344 = smul.addr %s1343, 34
      %s1345 = smul.addr %s1344, 8
      %s1346 = scalar_lea.vmem %s3, %s1345
      // Predicated region
      $region33: #{_lambda_.15} parent=31 // pred_check
        %p1347 = pneg %p100
      $region34: #{_lambda_.15} parent=31 // pred_check_branch
        %1349 = sbr.rel (%p1347) target = $region36
      $region35: #{_lambda_.15} parent=31 // pred_region
        _
      $region36: #{_lambda_.15} parent=31 // pred_fallthru
        _
    $region32: #{_lambda_.15} parent=5 // pred_fallthru
      _
    %p1350 = scmp.le.s32.totalorder 2, %s9
    // Predicated region
    $region37: #{_lambda_.15} parent=5 // pred_check
      %p1351 = pneg %p1350
    $region38: #{_lambda_.15} parent=5 // pred_check_branch
      %1353 = sbr.rel (%p1351) target = $region40
    $region39: #{_lambda_.15} parent=5 // pred_region
      %s1354 = ssub.s32 %s9, 2
      // Predicated region
      $region41: #{_lambda_.15} parent=39 // pred_check
        %p1355 = pneg %p106
      $region42: #{_lambda_.15} parent=39 // pred_check_branch
        %1357 = sbr.rel (%p1355) target = $region44
      $region43: #{_lambda_.15} parent=39 // pred_region
        %p1358 = scmp.lt.s32.totalorder %s15, 1
        %s1359 = scalar_select %p1358, %s15, 1
        %s1360 = smul.addr %s1359, 34
        %s1361 = smul.addr %s1360, 8
        %s1362 = scalar_lea.vmem %s3, %s1361
      $region44: #{_lambda_.15} parent=39 // pred_fallthru
        _
    $region40: #{_lambda_.15} parent=5 // pred_fallthru
      _
  $region6: #{_lambda_.15} parent=0 // loop_footer
    %s13 = sadd.s32 1, %s9
  $region7: #{_lambda_.15} parent=0 // loop_footer_branch
    %8 = sbr.rel target = $region3
  $region8: #{_lambda_.15} parent=0 // loop_exit
    _

// kernel: _lambda_.16
$region0: #{_lambda_.16}
  #allocation0 [shape = 'u32[]', space=smem, size = 0x4, offset = 0x4, fixed_abs, tag = 'smem constant byte address 0x4 - core index']
  #allocation1 [shape = 'u32[72,128]{1,0:T(1,128)}', space=vmem, size = 0x9000, scoped, tag = 'internal scratch']
  %s0 = inlined_call_operand.vmem [shape: f32[2,408,16], index: 0, kind: input, shape index: {}]
  %s1 = inlined_call_operand.vmem [shape: f32[80,16], index: 1, kind: input, shape index: {}]
  %s2 = inlined_call_operand.vmem [shape: f32[1,16], index: 2, kind: input, shape index: {}]
  %s3 = inlined_call_operand.vmem [shape: f32[2,272,16], index: 3, kind: output, shape index: {}]
  %s4 = sld [smem:[#allocation0]]
  $region45: #{_lambda_.16} parent=0
    _
  %s6 = ssub.s32 1, %s4
  %s7 = scalar_select 0, %s6, %s4
  loop: start=0, step=1, limit=4
  $region2: #{_lambda_.16} parent=0 // loop_pre_header
    _
  $region3: #{_lambda_.16} parent=0 // loop_header
    %s9 = sphi 0, %s13
    %p10 = scmp.ge.s32.totalorder %s9, 4
    %s19 = sphi 0, %s21
    %s22 = sphi 0, %s19
    %s23 = sphi 0, %s22
    %s39 = sphi 0, %s23
    %s43 = sphi 0, %s43
    %s45 = sphi 0, %s43
    %s46 = sphi 0, %s45
    %s60 = sphi 0, %s46
    %s64 = sphi 0, %s64
    %s66 = sphi 0, %s64
    %s67 = sphi 0, %s66
    %s81 = sphi 0, %s67
    %s87 = sphi 0, %s89
    %s90 = sphi 0, %s87
    %s91 = sphi 0, %s90
    %s107 = sphi 0, %s91
  $region4: #{_lambda_.16} parent=0 // loop_header_branch
    %12 = sbr.rel (%p10) target = $region8
  $region5: #{_lambda_.16} parent=0 // loop_body
    %s14 = ssub.s32 %s9, 1
    %s15 = ssub.s32 %s9, 2
    %s16 = sadd.s32 %s9, 1
    %s17 = ssub.s32 %s9, %s16
    %p18 = scmp.eq.s32.totalorder %s17, 0
    %s20 = sadd.s32 %s19, 1
    %s21 = scalar_select %p18, %s19, %s20
    %p24 = pneg %p18
    %p25 = scmp.eq.s32.totalorder %s9, 1
    %p26 = por %p24, %p25
    %p27 = scmp.ne.s32.totalorder %s19, %s22
    %p28 = scmp.eq.s32.totalorder %s9, 0
    %p29 = por %p27, %p28
    %p30 = scmp.ne.s32.totalorder %s19, %s22
    %p31 = scmp.eq.s32.totalorder %s14, 1
    %p32 = por %p30, %p31
    %p33 = scmp.ne.s32.totalorder %s22, %s23
    %p34 = scmp.eq.s32.totalorder %s14, 0
    %p35 = por %p33, %p34
    %p36 = scmp.ne.s32.totalorder %s22, %s23
    %p37 = scmp.eq.s32.totalorder %s15, 1
    %p38 = por %p36, %p37
    %p40 = scmp.ne.s32.totalorder %s23, %s39
    %p41 = scmp.eq.s32.totalorder %s15, 0
    %p42 = por %p40, %p41
    %s44 = sadd.s32 %s43, 1
    %p47 = scmp.eq.s32.totalorder %s9, 1
    %p48 = scmp.ne.s32.totalorder %s43, %s45
    %p49 = scmp.eq.s32.totalorder %s9, 0
    %p50 = por %p48, %p49
    %p51 = scmp.ne.s32.totalorder %s43, %s45
    %p52 = scmp.eq.s32.totalorder %s14, 1
    %p53 = por %p51, %p52
    %p54 = scmp.ne.s32.totalorder %s45, %s46
    %p55 = scmp.eq.s32.totalorder %s14, 0
    %p56 = por %p54, %p55
    %p57 = scmp.ne.s32.totalorder %s45, %s46
    %p58 = scmp.eq.s32.totalorder %s15, 1
    %p59 = por %p57, %p58
    %p61 = scmp.ne.s32.totalorder %s46, %s60
    %p62 = scmp.eq.s32.totalorder %s15, 0
    %p63 = por %p61, %p62
    %s65 = sadd.s32 %s64, 1
    %p68 = scmp.eq.s32.totalorder %s9, 1
    %p69 = scmp.ne.s32.totalorder %s64, %s66
    %p70 = scmp.eq.s32.totalorder %s9, 0
    %p71 = por %p69, %p70
    %p72 = scmp.ne.s32.totalorder %s64, %s66
    %p73 = scmp.eq.s32.totalorder %s14, 1
    %p74 = por %p72, %p73
    %p75 = scmp.ne.s32.totalorder %s66, %s67
    %p76 = scmp.eq.s32.totalorder %s14, 0
    %p77 = por %p75, %p76
    %p78 = scmp.ne.s32.totalorder %s66, %s67
    %p79 = scmp.eq.s32.totalorder %s15, 1
    %p80 = por %p78, %p79
    %p82 = scmp.ne.s32.totalorder %s67, %s81
    %p83 = scmp.eq.s32.totalorder %s15, 0
    %p84 = por %p82, %p83
    %s85 = ssub.s32 %s9, %s16
    %p86 = scmp.eq.s32.totalorder %s85, 0
    %s88 = sadd.s32 %s87, 1
    %s89 = scalar_select %p86, %s87, %s88
    %p92 = pneg %p86
    %p93 = scmp.eq.s32.totalorder %s9, 1
    %p94 = por %p92, %p93
    %p95 = scmp.ne.s32.totalorder %s87, %s90
    %p96 = scmp.eq.s32.totalorder %s9, 0
    %p97 = por %p95, %p96
    %p98 = scmp.ne.s32.totalorder %s87, %s90
    %p99 = scmp.eq.s32.totalorder %s14, 1
    %p100 = por %p98, %p99
    %p101 = scmp.ne.s32.totalorder %s90, %s91
    %p102 = scmp.eq.s32.totalorder %s14, 0
    %p103 = por %p101, %p102
    %p104 = scmp.ne.s32.totalorder %s90, %s91
    %p105 = scmp.eq.s32.totalorder %s15, 1
    %p106 = por %p104, %p105
    %p108 = scmp.ne.s32.totalorder %s91, %s107
    %p109 = scmp.eq.s32.totalorder %s15, 0
    %p110 = por %p108, %p109
    %p111 = scmp.le.s32.totalorder 1, %s9
    %p112 = scmp.lt.s32.totalorder %s9, 3
    %p113 = pnand %p111, %p112
    %p114 = pneg %p113
    // Predicated region
    $region9: #{_lambda_.16} parent=5 // pred_check
      _
    $region10: #{_lambda_.16} parent=5 // pred_check_branch
      %116 = sbr.rel (%p113) target = $region12
    $region11: #{_lambda_.16} parent=5 // pred_region
      %s117 = ssub.s32 %s9, 1
      // Predicated region
      $region13: #{_lambda_.16} parent=11 // pred_check
        %p118 = pneg %p56
      $region14: #{_lambda_.16} parent=11 // pred_check_branch
        %120 = sbr.rel (%p118) target = $region16
      $region15: #{_lambda_.16} parent=11 // pred_region
        _
      $region16: #{_lambda_.16} parent=11 // pred_fallthru
        _
      // Predicated region
      $region17: #{_lambda_.16} parent=11 // pred_check
        %p121 = pneg %p77
      $region18: #{_lambda_.16} parent=11 // pred_check_branch
        %123 = sbr.rel (%p121) target = $region20
      $region19: #{_lambda_.16} parent=11 // pred_region
        _
      $region20: #{_lambda_.16} parent=11 // pred_fallthru
        _
    $region12: #{_lambda_.16} parent=5 // pred_fallthru
      _
    %p124 = scmp.lt.s32.totalorder %s9, 2
    // Predicated region
    $region21: #{_lambda_.16} parent=5 // pred_check
      %p125 = pneg %p124
    $region22: #{_lambda_.16} parent=5 // pred_check_branch
      %127 = sbr.rel (%p125) target = $region24
    $region23: #{_lambda_.16} parent=5 // pred_region
      // Predicated region
      $region25: #{_lambda_.16} parent=23 // pred_check
        %p128 = pneg %p29
      $region26: #{_lambda_.16} parent=23 // pred_check_branch
        %130 = sbr.rel (%p128) target = $region28
      $region27: #{_lambda_.16} parent=23 // pred_region
        %p131 = scmp.lt.s32.totalorder %s9, 1
        %s132 = scalar_select %p131, %s9, 1
        %s133 = smul.addr %s132, 51
        %s134 = smul.addr %s133, 8
        %s135 = scalar_lea.vmem %s0, %s134
      $region28: #{_lambda_.16} parent=23 // pred_fallthru
        _
    $region24: #{_lambda_.16} parent=5 // pred_fallthru
      _
    %p136 = scmp.le.s32.totalorder 1, %s9
    %p137 = scmp.lt.s32.totalorder %s9, 3
    %p138 = pnand %p136, %p137
    %p139 = pneg %p138
    // Predicated region
    $region29: #{_lambda_.16} parent=5 // pred_check
      _
    $region30: #{_lambda_.16} parent=5 // pred_check_branch
      %141 = sbr.rel (%p138) target = $region32
    $region31: #{_lambda_.16} parent=5 // pred_region
      %s142 = ssub.s32 %s9, 1
      %p143 = scmp.lt.s32.totalorder %s14, 1
      %s144 = scalar_select %p143, %s14, 1
      %s145 = smul.addr %s144, 51
      %s146 = smul.addr %s145, 8
      %s147 = scalar_lea.vmem %s0, %s146
      %p148 = pneg %p35
      %p149 = pneg %p32
      %p150 = pneg %p56
      %p151 = pneg %p53
      %p152 = pneg %p77
      %p153 = pneg %p74
      %p154 = pneg %p103
      %p155 = pneg %p100
      %p156 = scmp.lt.s32.totalorder %s14, 1
      %s157 = scalar_select %p156, %s14, 1
      %s158 = smul.addr %s157, 34
      %s159 = smul.addr %s158, 8
      %s160 = scalar_lea.vmem %s3, %s159
      %p161 = scmp.lt.s32.totalorder %s14, 1
      %s162 = scalar_select %p161, %s14, 1
      %s163 = smul.addr %s162, 51
      %s164 = smul.addr %s163, 8
      %s165 = scalar_lea.vmem %s0, %s164
      %p166 = scmp.lt.s32.totalorder %s14, 1
      %s167 = scalar_select %p166, %s14, 1
      %s168 = smul.addr %s167, 34
      %s169 = smul.addr %s168, 8
      %s170 = scalar_lea.vmem %s3, %s169
      %v172 = vld [vmem:[%s165] sm:$0xff]
      %v173 = vld [vmem:[%s165 + $0x8] sm:$0xff]
      %v174 = vld [vmem:[%s165 + $0x10] sm:$0xff]
      %v175 = vld [vmem:[%s165 + $0x18] sm:$0xff]
      %v176 = vld [vmem:[%s165 + $0x20] sm:$0xff]
      %v177 = vld [vmem:[%s165 + $0x28] sm:$0xff]
      %v178 = vld [vmem:[%s165 + $0x30] sm:$0xff]
      %v179 = vld [vmem:[%s165 + $0x38] sm:$0xff]
      %v180 = vld [vmem:[%s165 + $0x40] sm:$0xff]
      %v181 = vld [vmem:[%s165 + $0x48] sm:$0xff]
      %v182 = vld [vmem:[%s165 + $0x50] sm:$0xff]
      %v183 = vld [vmem:[%s165 + $0x58] sm:$0xff]
      %v184 = vld [vmem:[%s165 + $0x60] sm:$0xff]
      %v185 = vld [vmem:[%s165 + $0x68] sm:$0xff]
      %v186 = vld [vmem:[%s165 + $0x70] sm:$0xff]
      %v187 = vld [vmem:[%s165 + $0x78] sm:$0xff]
      %v188 = vld [vmem:[%s165 + $0x80] sm:$0xff]
      %v189 = vld [vmem:[%s165 + $0x88] sm:$0xff]
      %v190 = vld [vmem:[%s165 + $0x90] sm:$0xff]
      %v191 = vld [vmem:[%s165 + $0x98] sm:$0xff]
      %v192 = vld [vmem:[%s165 + $0xa0] sm:$0xff]
      %v193 = vld [vmem:[%s165 + $0xa8] sm:$0xff]
      %v194 = vld [vmem:[%s165 + $0xb0] sm:$0xff]
      %v195 = vld [vmem:[%s165 + $0xb8] sm:$0xff]
      %v196 = vld [vmem:[%s165 + $0xc0] sm:$0xff]
      %v197 = vld [vmem:[%s165 + $0xc8] sm:$0xff]
      %v198 = vld [vmem:[%s165 + $0xd0] sm:$0xff]
      %v199 = vld [vmem:[%s165 + $0xd8] sm:$0xff]
      %v200 = vld [vmem:[%s165 + $0xe0] sm:$0xff]
      %v201 = vld [vmem:[%s165 + $0xe8] sm:$0xff]
      %v202 = vld [vmem:[%s165 + $0xf0] sm:$0xff]
      %v203 = vld [vmem:[%s165 + $0xf8] sm:$0xff]
      %v204 = vld [vmem:[%s165 + $0x100] sm:$0xff]
      %v205 = vld [vmem:[%s165 + $0x108] sm:$0xff]
      %v206 = vpack.c.bf16 %v173, %v172
      %v207 = vpack.c.bf16 %v175, %v174
      %v208 = vpack.c.bf16 %v177, %v176
      %v209 = vpack.c.bf16 %v179, %v178
      %v210 = vpack.c.bf16 %v181, %v180
      %v211 = vpack.c.bf16 %v183, %v182
      %v212 = vpack.c.bf16 %v185, %v184
      %v213 = vpack.c.bf16 %v187, %v186
      %v214 = vpack.c.bf16 %v189, %v188
      %v215 = vpack.c.bf16 %v191, %v190
      %v216 = vpack.c.bf16 %v193, %v192
      %v217 = vpack.c.bf16 %v195, %v194
      %v218 = vpack.c.bf16 %v197, %v196
      %v219 = vpack.c.bf16 %v199, %v198
      %v220 = vpack.c.bf16 %v201, %v200
      %v221 = vpack.c.bf16 %v203, %v202
      %v222 = vpack.c.bf16 %v205, %v204
      %v223 = vld [vmem:[%s1] sm:$0xff]
      %v224 = vld [vmem:[%s1 + $0x8] sm:$0xff]
      %v225 = vpack.c.bf16 %v224, %v223
      %v226 = vld [vmem:[%s165 + $0x22] sm:$0xff]
      %v227 = vld [vmem:[%s165 + $0x2a] sm:$0xff]
      %v228 = vld [vmem:[%s165 + $0x32] sm:$0xff]
      %v229 = vld [vmem:[%s165 + $0x3a] sm:$0xff]
      %v230 = vld [vmem:[%s165 + $0x42] sm:$0xff]
      %v231 = vld [vmem:[%s165 + $0x4a] sm:$0xff]
      %v232 = vld [vmem:[%s165 + $0x52] sm:$0xff]
      %v233 = vld [vmem:[%s165 + $0x5a] sm:$0xff]
      %v234 = vld [vmem:[%s165 + $0x62] sm:$0xff]
      %v235 = vld [vmem:[%s165 + $0x6a] sm:$0xff]
      %v236 = vld [vmem:[%s165 + $0x72] sm:$0xff]
      %v237 = vld [vmem:[%s165 + $0x7a] sm:$0xff]
      %v238 = vld [vmem:[%s165 + $0x82] sm:$0xff]
      %v239 = vld [vmem:[%s165 + $0x8a] sm:$0xff]
      %v240 = vld [vmem:[%s165 + $0x92] sm:$0xff]
      %v241 = vld [vmem:[%s165 + $0x9a] sm:$0xff]
      %v242 = vld [vmem:[%s165 + $0xa2] sm:$0xff]
      %v243 = vld [vmem:[%s165 + $0xaa] sm:$0xff]
      %v244 = vld [vmem:[%s165 + $0xb2] sm:$0xff]
      %v245 = vld [vmem:[%s165 + $0xba] sm:$0xff]
      %v246 = vld [vmem:[%s165 + $0xc2] sm:$0xff]
      %v247 = vld [vmem:[%s165 + $0xca] sm:$0xff]
      %v248 = vld [vmem:[%s165 + $0xd2] sm:$0xff]
      %v249 = vld [vmem:[%s165 + $0xda] sm:$0xff]
      %v250 = vld [vmem:[%s165 + $0xe2] sm:$0xff]
      %v251 = vld [vmem:[%s165 + $0xea] sm:$0xff]
      %v252 = vld [vmem:[%s165 + $0xf2] sm:$0xff]
      %v253 = vld [vmem:[%s165 + $0xfa] sm:$0xff]
      %v254 = vld [vmem:[%s165 + $0x102] sm:$0xff]
      %v255 = vld [vmem:[%s165 + $0x10a] sm:$0xff]
      %v256 = vld [vmem:[%s165 + $0x112] sm:$0xff]
      %v257 = vld [vmem:[%s165 + $0x11a] sm:$0xff]
      %v258 = vld [vmem:[%s165 + $0x122] sm:$0xff]
      %v259 = vld [vmem:[%s165 + $0x12a] sm:$0xff]
      %v260 = vpack.c.bf16 %v227, %v226
      %v261 = vpack.c.bf16 %v229, %v228
      %v262 = vpack.c.bf16 %v231, %v230
      %v263 = vpack.c.bf16 %v233, %v232
      %v264 = vpack.c.bf16 %v235, %v234
      %v265 = vpack.c.bf16 %v237, %v236
      %v266 = vpack.c.bf16 %v239, %v238
      %v267 = vpack.c.bf16 %v241, %v240
      %v268 = vpack.c.bf16 %v243, %v242
      %v269 = vpack.c.bf16 %v245, %v244
      %v270 = vpack.c.bf16 %v247, %v246
      %v271 = vpack.c.bf16 %v249, %v248
      %v272 = vpack.c.bf16 %v251, %v250
      %v273 = vpack.c.bf16 %v253, %v252
      %v274 = vpack.c.bf16 %v255, %v254
      %v275 = vpack.c.bf16 %v257, %v256
      %v276 = vpack.c.bf16 %v259, %v258
      %v277 = vld [vmem:[%s1 + $0x10] sm:$0xff]
      %v278 = vld [vmem:[%s1 + $0x18] sm:$0xff]
      %v279 = vpack.c.bf16 %v278, %v277
      %vm280 = vcmask 130048
      %v282 = vsel %vm280, %v260, 0
      %v285 = vsel %vm280, %v261, 0
      %v288 = vsel %vm280, %v262, 0
      %v291 = vsel %vm280, %v263, 0
      %v294 = vsel %vm280, %v264, 0
      %v297 = vsel %vm280, %v265, 0
      %v300 = vsel %vm280, %v266, 0
      %v303 = vsel %vm280, %v267, 0
      %v306 = vsel %vm280, %v268, 0
      %v309 = vsel %vm280, %v269, 0
      %v312 = vsel %vm280, %v270, 0
      %v315 = vsel %vm280, %v271, 0
      %v318 = vsel %vm280, %v272, 0
      %v321 = vsel %vm280, %v273, 0
      %v324 = vsel %vm280, %v274, 0
      %v327 = vsel %vm280, %v275, 0
      %v330 = vsel %vm280, %v276, 0
      %332 = vmatpush.bf16.msra.mxu0 0
      %333 = vmatpush.bf16.msra.mxu0 0
      %334 = vmatpush.bf16.msra.mxu0 0
      %335 = vmatpush.bf16.msra.mxu0 0
      %336 = vmatpush.bf16.msra.mxu0 0
      %337 = vmatpush.bf16.msra.mxu0 0
      %338 = vmatpush.bf16.msra.mxu0 0
      %339 = vmatpush.bf16.msra.mxu0 %v279
      %340 = vmatmul.bf16.gmra.mxu0 %v282
      %v341 = vpop.f32.mrf.mxu0
      %v342 = vadd.f32 0.0, %v341
      %v343 = vpop.f32.mrf.mxu0
      %v344 = vadd.f32 0.0, %v343
      %345 = vmatmul.bf16.gmra.mxu0 %v285
      %v346 = vpop.f32.mrf.mxu0
      %v347 = vadd.f32 0.0, %v346
      %v348 = vpop.f32.mrf.mxu0
      %v349 = vadd.f32 0.0, %v348
      %350 = vmatmul.bf16.gmra.mxu0 %v288
      %v351 = vpop.f32.mrf.mxu0
      %v352 = vadd.f32 0.0, %v351
      %v353 = vpop.f32.mrf.mxu0
      %v354 = vadd.f32 0.0, %v353
      %355 = vmatmul.bf16.gmra.mxu0 %v291
      %v356 = vpop.f32.mrf.mxu0
      %v357 = vadd.f32 0.0, %v356
      %v358 = vpop.f32.mrf.mxu0
      %v359 = vadd.f32 0.0, %v358
      %360 = vmatmul.bf16.gmra.mxu0 %v294
      %v361 = vpop.f32.mrf.mxu0
      %v362 = vadd.f32 0.0, %v361
      %v363 = vpop.f32.mrf.mxu0
      %v364 = vadd.f32 0.0, %v363
      %365 = vmatmul.bf16.gmra.mxu0 %v297
      %v366 = vpop.f32.mrf.mxu0
      %v367 = vadd.f32 0.0, %v366
      %v368 = vpop.f32.mrf.mxu0
      %v369 = vadd.f32 0.0, %v368
      %370 = vmatmul.bf16.gmra.mxu0 %v300
      %v371 = vpop.f32.mrf.mxu0
      %v372 = vadd.f32 0.0, %v371
      %v373 = vpop.f32.mrf.mxu0
      %v374 = vadd.f32 0.0, %v373
      %375 = vmatmul.bf16.gmra.mxu0 %v303
      %v376 = vpop.f32.mrf.mxu0
      %v377 = vadd.f32 0.0, %v376
      %v378 = vpop.f32.mrf.mxu0
      %v379 = vadd.f32 0.0, %v378
      %380 = vmatmul.bf16.gmra.mxu0 %v306
      %v381 = vpop.f32.mrf.mxu0
      %v382 = vadd.f32 0.0, %v381
      %v383 = vpop.f32.mrf.mxu0
      %v384 = vadd.f32 0.0, %v383
      %385 = vmatmul.bf16.gmra.mxu0 %v309
      %v386 = vpop.f32.mrf.mxu0
      %v387 = vadd.f32 0.0, %v386
      %v388 = vpop.f32.mrf.mxu0
      %v389 = vadd.f32 0.0, %v388
      %390 = vmatmul.bf16.gmra.mxu0 %v312
      %v391 = vpop.f32.mrf.mxu0
      %v392 = vadd.f32 0.0, %v391
      %v393 = vpop.f32.mrf.mxu0
      %v394 = vadd.f32 0.0, %v393
      %395 = vmatmul.bf16.gmra.mxu0 %v315
      %v396 = vpop.f32.mrf.mxu0
      %v397 = vadd.f32 0.0, %v396
      %v398 = vpop.f32.mrf.mxu0
      %v399 = vadd.f32 0.0, %v398
      %400 = vmatmul.bf16.gmra.mxu0 %v318
      %v401 = vpop.f32.mrf.mxu0
      %v402 = vadd.f32 0.0, %v401
      %v403 = vpop.f32.mrf.mxu0
      %v404 = vadd.f32 0.0, %v403
      %405 = vmatmul.bf16.gmra.mxu0 %v321
      %v406 = vpop.f32.mrf.mxu0
      %v407 = vadd.f32 0.0, %v406
      %v408 = vpop.f32.mrf.mxu0
      %v409 = vadd.f32 0.0, %v408
      %410 = vmatmul.bf16.gmra.mxu0 %v324
      %v411 = vpop.f32.mrf.mxu0
      %v412 = vadd.f32 0.0, %v411
      %v413 = vpop.f32.mrf.mxu0
      %v414 = vadd.f32 0.0, %v413
      %415 = vmatmul.bf16.gmra.mxu0 %v327
      %v416 = vpop.f32.mrf.mxu0
      %v417 = vadd.f32 0.0, %v416
      %v418 = vpop.f32.mrf.mxu0
      %v419 = vadd.f32 0.0, %v418
      %420 = vmatmul.bf16.gmra.mxu0 %v330
      %v421 = vpop.f32.mrf.mxu0
      %v422 = vadd.f32 0.0, %v421
      %v423 = vpop.f32.mrf.mxu0
      %v424 = vadd.f32 0.0, %v423
      %425 = vdwg.mxu0
      %v427 = vsel %vm280, %v206, 0
      %v430 = vsel %vm280, %v207, 0
      %v433 = vsel %vm280, %v208, 0
      %v436 = vsel %vm280, %v209, 0
      %v439 = vsel %vm280, %v210, 0
      %v442 = vsel %vm280, %v211, 0
      %v445 = vsel %vm280, %v212, 0
      %v448 = vsel %vm280, %v213, 0
      %v451 = vsel %vm280, %v214, 0
      %v454 = vsel %vm280, %v215, 0
      %v457 = vsel %vm280, %v216, 0
      %v460 = vsel %vm280, %v217, 0
      %v463 = vsel %vm280, %v218, 0
      %v466 = vsel %vm280, %v219, 0
      %v469 = vsel %vm280, %v220, 0
      %v472 = vsel %vm280, %v221, 0
      %v475 = vsel %vm280, %v222, 0
      %477 = vmatpush.bf16.msra.mxu0 0
      %478 = vmatpush.bf16.msra.mxu0 0
      %479 = vmatpush.bf16.msra.mxu0 0
      %480 = vmatpush.bf16.msra.mxu0 0
      %481 = vmatpush.bf16.msra.mxu0 0
      %482 = vmatpush.bf16.msra.mxu0 0
      %483 = vmatpush.bf16.msra.mxu0 0
      %484 = vmatpush.bf16.msra.mxu0 %v225
      %485 = vmatmul.bf16.gmra.mxu0 %v427
      %v486 = vpop.f32.mrf.mxu0
      %v487 = vadd.f32 %v342, %v486
      %v488 = vpop.f32.mrf.mxu0
      %v489 = vadd.f32 %v344, %v488
      %490 = vmatmul.bf16.gmra.mxu0 %v430
      %v491 = vpop.f32.mrf.mxu0
      %v492 = vadd.f32 %v347, %v491
      %v493 = vpop.f32.mrf.mxu0
      %v494 = vadd.f32 %v349, %v493
      %495 = vmatmul.bf16.gmra.mxu0 %v433
      %v496 = vpop.f32.mrf.mxu0
      %v497 = vadd.f32 %v352, %v496
      %v498 = vpop.f32.mrf.mxu0
      %v499 = vadd.f32 %v354, %v498
      %500 = vmatmul.bf16.gmra.mxu0 %v436
      %v501 = vpop.f32.mrf.mxu0
      %v502 = vadd.f32 %v357, %v501
      %v503 = vpop.f32.mrf.mxu0
      %v504 = vadd.f32 %v359, %v503
      %505 = vmatmul.bf16.gmra.mxu0 %v439
      %v506 = vpop.f32.mrf.mxu0
      %v507 = vadd.f32 %v362, %v506
      %v508 = vpop.f32.mrf.mxu0
      %v509 = vadd.f32 %v364, %v508
      %510 = vmatmul.bf16.gmra.mxu0 %v442
      %v511 = vpop.f32.mrf.mxu0
      %v512 = vadd.f32 %v367, %v511
      %v513 = vpop.f32.mrf.mxu0
      %v514 = vadd.f32 %v369, %v513
      %515 = vmatmul.bf16.gmra.mxu0 %v445
      %v516 = vpop.f32.mrf.mxu0
      %v517 = vadd.f32 %v372, %v516
      %v518 = vpop.f32.mrf.mxu0
      %v519 = vadd.f32 %v374, %v518
      %520 = vmatmul.bf16.gmra.mxu0 %v448
      %v521 = vpop.f32.mrf.mxu0
      %v522 = vadd.f32 %v377, %v521
      %v523 = vpop.f32.mrf.mxu0
      %v524 = vadd.f32 %v379, %v523
      %525 = vmatmul.bf16.gmra.mxu0 %v451
      %v526 = vpop.f32.mrf.mxu0
      %v527 = vadd.f32 %v382, %v526
      %v528 = vpop.f32.mrf.mxu0
      %v529 = vadd.f32 %v384, %v528
      %530 = vmatmul.bf16.gmra.mxu0 %v454
      %v531 = vpop.f32.mrf.mxu0
      %v532 = vadd.f32 %v387, %v531
      %v533 = vpop.f32.mrf.mxu0
      %v534 = vadd.f32 %v389, %v533
      %535 = vmatmul.bf16.gmra.mxu0 %v457
      %v536 = vpop.f32.mrf.mxu0
      %v537 = vadd.f32 %v392, %v536
      %v538 = vpop.f32.mrf.mxu0
      %v539 = vadd.f32 %v394, %v538
      %540 = vmatmul.bf16.gmra.mxu0 %v460
      %v541 = vpop.f32.mrf.mxu0
      %v542 = vadd.f32 %v397, %v541
      %v543 = vpop.f32.mrf.mxu0
      %v544 = vadd.f32 %v399, %v543
      %545 = vmatmul.bf16.gmra.mxu0 %v463
      %v546 = vpop.f32.mrf.mxu0
      %v547 = vadd.f32 %v402, %v546
      %v548 = vpop.f32.mrf.mxu0
      %v549 = vadd.f32 %v404, %v548
      %550 = vmatmul.bf16.gmra.mxu0 %v466
      %v551 = vpop.f32.mrf.mxu0
      %v552 = vadd.f32 %v407, %v551
      %v553 = vpop.f32.mrf.mxu0
      %v554 = vadd.f32 %v409, %v553
      %555 = vmatmul.bf16.gmra.mxu0 %v469
      %v556 = vpop.f32.mrf.mxu0
      %v557 = vadd.f32 %v412, %v556
      %v558 = vpop.f32.mrf.mxu0
      %v559 = vadd.f32 %v414, %v558
      %560 = vmatmul.bf16.gmra.mxu0 %v472
      %v561 = vpop.f32.mrf.mxu0
      %v562 = vadd.f32 %v417, %v561
      %v563 = vpop.f32.mrf.mxu0
      %v564 = vadd.f32 %v419, %v563
      %565 = vmatmul.bf16.gmra.mxu0 %v475
      %v566 = vpop.f32.mrf.mxu0
      %v567 = vadd.f32 %v422, %v566
      %v568 = vpop.f32.mrf.mxu0
      %v569 = vadd.f32 %v424, %v568
      %570 = vdwg.mxu0
      %v571 = vld [vmem:[%s165 + $0x44] sm:$0xff]
      %v572 = vld [vmem:[%s165 + $0x4c] sm:$0xff]
      %v573 = vld [vmem:[%s165 + $0x54] sm:$0xff]
      %v574 = vld [vmem:[%s165 + $0x5c] sm:$0xff]
      %v575 = vld [vmem:[%s165 + $0x64] sm:$0xff]
      %v576 = vld [vmem:[%s165 + $0x6c] sm:$0xff]
      %v577 = vld [vmem:[%s165 + $0x74] sm:$0xff]
      %v578 = vld [vmem:[%s165 + $0x7c] sm:$0xff]
      %v579 = vld [vmem:[%s165 + $0x84] sm:$0xff]
      %v580 = vld [vmem:[%s165 + $0x8c] sm:$0xff]
      %v581 = vld [vmem:[%s165 + $0x94] sm:$0xff]
      %v582 = vld [vmem:[%s165 + $0x9c] sm:$0xff]
      %v583 = vld [vmem:[%s165 + $0xa4] sm:$0xff]
      %v584 = vld [vmem:[%s165 + $0xac] sm:$0xff]
      %v585 = vld [vmem:[%s165 + $0xb4] sm:$0xff]
      %v586 = vld [vmem:[%s165 + $0xbc] sm:$0xff]
      %v587 = vld [vmem:[%s165 + $0xc4] sm:$0xff]
      %v588 = vld [vmem:[%s165 + $0xcc] sm:$0xff]
      %v589 = vld [vmem:[%s165 + $0xd4] sm:$0xff]
      %v590 = vld [vmem:[%s165 + $0xdc] sm:$0xff]
      %v591 = vld [vmem:[%s165 + $0xe4] sm:$0xff]
      %v592 = vld [vmem:[%s165 + $0xec] sm:$0xff]
      %v593 = vld [vmem:[%s165 + $0xf4] sm:$0xff]
      %v594 = vld [vmem:[%s165 + $0xfc] sm:$0xff]
      %v595 = vld [vmem:[%s165 + $0x104] sm:$0xff]
      %v596 = vld [vmem:[%s165 + $0x10c] sm:$0xff]
      %v597 = vld [vmem:[%s165 + $0x114] sm:$0xff]
      %v598 = vld [vmem:[%s165 + $0x11c] sm:$0xff]
      %v599 = vld [vmem:[%s165 + $0x124] sm:$0xff]
      %v600 = vld [vmem:[%s165 + $0x12c] sm:$0xff]
      %v601 = vld [vmem:[%s165 + $0x134] sm:$0xff]
      %v602 = vld [vmem:[%s165 + $0x13c] sm:$0xff]
      %v603 = vld [vmem:[%s165 + $0x144] sm:$0xff]
      %v604 = vld [vmem:[%s165 + $0x14c] sm:$0xff]
      %v605 = vpack.c.bf16 %v572, %v571
      %v606 = vpack.c.bf16 %v574, %v573
      %v607 = vpack.c.bf16 %v576, %v575
      %v608 = vpack.c.bf16 %v578, %v577
      %v609 = vpack.c.bf16 %v580, %v579
      %v610 = vpack.c.bf16 %v582, %v581
      %v611 = vpack.c.bf16 %v584, %v583
      %v612 = vpack.c.bf16 %v586, %v585
      %v613 = vpack.c.bf16 %v588, %v587
      %v614 = vpack.c.bf16 %v590, %v589
      %v615 = vpack.c.bf16 %v592, %v591
      %v616 = vpack.c.bf16 %v594, %v593
      %v617 = vpack.c.bf16 %v596, %v595
      %v618 = vpack.c.bf16 %v598, %v597
      %v619 = vpack.c.bf16 %v600, %v599
      %v620 = vpack.c.bf16 %v602, %v601
      %v621 = vpack.c.bf16 %v604, %v603
      %v622 = vld [vmem:[%s1 + $0x20] sm:$0xff]
      %v623 = vld [vmem:[%s1 + $0x28] sm:$0xff]
      %v624 = vpack.c.bf16 %v623, %v622
      %v626 = vsel %vm280, %v605, 0
      %v629 = vsel %vm280, %v606, 0
      %v632 = vsel %vm280, %v607, 0
      %v635 = vsel %vm280, %v608, 0
      %v638 = vsel %vm280, %v609, 0
      %v641 = vsel %vm280, %v610, 0
      %v644 = vsel %vm280, %v611, 0
      %v647 = vsel %vm280, %v612, 0
      %v650 = vsel %vm280, %v613, 0
      %v653 = vsel %vm280, %v614, 0
      %v656 = vsel %vm280, %v615, 0
      %v659 = vsel %vm280, %v616, 0
      %v662 = vsel %vm280, %v617, 0
      %v665 = vsel %vm280, %v618, 0
      %v668 = vsel %vm280, %v619, 0
      %v671 = vsel %vm280, %v620, 0
      %v674 = vsel %vm280, %v621, 0
      %676 = vmatpush.bf16.msra.mxu0 0
      %677 = vmatpush.bf16.msra.mxu0 0
      %678 = vmatpush.bf16.msra.mxu0 0
      %679 = vmatpush.bf16.msra.mxu0 0
      %680 = vmatpush.bf16.msra.mxu0 0
      %681 = vmatpush.bf16.msra.mxu0 0
      %682 = vmatpush.bf16.msra.mxu0 0
      %683 = vmatpush.bf16.msra.mxu0 %v624
      %684 = vmatmul.bf16.gmra.mxu0 %v626
      %v685 = vpop.f32.mrf.mxu0
      %v686 = vadd.f32 0.0, %v685
      %v687 = vpop.f32.mrf.mxu0
      %v688 = vadd.f32 0.0, %v687
      %689 = vmatmul.bf16.gmra.mxu0 %v629
      %v690 = vpop.f32.mrf.mxu0
      %v691 = vadd.f32 0.0, %v690
      %v692 = vpop.f32.mrf.mxu0
      %v693 = vadd.f32 0.0, %v692
      %694 = vmatmul.bf16.gmra.mxu0 %v632
      %v695 = vpop.f32.mrf.mxu0
      %v696 = vadd.f32 0.0, %v695
      %v697 = vpop.f32.mrf.mxu0
      %v698 = vadd.f32 0.0, %v697
      %699 = vmatmul.bf16.gmra.mxu0 %v635
      %v700 = vpop.f32.mrf.mxu0
      %v701 = vadd.f32 0.0, %v700
      %v702 = vpop.f32.mrf.mxu0
      %v703 = vadd.f32 0.0, %v702
      %704 = vmatmul.bf16.gmra.mxu0 %v638
      %v705 = vpop.f32.mrf.mxu0
      %v706 = vadd.f32 0.0, %v705
      %v707 = vpop.f32.mrf.mxu0
      %v708 = vadd.f32 0.0, %v707
      %709 = vmatmul.bf16.gmra.mxu0 %v641
      %v710 = vpop.f32.mrf.mxu0
      %v711 = vadd.f32 0.0, %v710
      %v712 = vpop.f32.mrf.mxu0
      %v713 = vadd.f32 0.0, %v712
      %714 = vmatmul.bf16.gmra.mxu0 %v644
      %v715 = vpop.f32.mrf.mxu0
      %v716 = vadd.f32 0.0, %v715
      %v717 = vpop.f32.mrf.mxu0
      %v718 = vadd.f32 0.0, %v717
      %719 = vmatmul.bf16.gmra.mxu0 %v647
      %v720 = vpop.f32.mrf.mxu0
      %v721 = vadd.f32 0.0, %v720
      %v722 = vpop.f32.mrf.mxu0
      %v723 = vadd.f32 0.0, %v722
      %724 = vmatmul.bf16.gmra.mxu0 %v650
      %v725 = vpop.f32.mrf.mxu0
      %v726 = vadd.f32 0.0, %v725
      %v727 = vpop.f32.mrf.mxu0
      %v728 = vadd.f32 0.0, %v727
      %729 = vmatmul.bf16.gmra.mxu0 %v653
      %v730 = vpop.f32.mrf.mxu0
      %v731 = vadd.f32 0.0, %v730
      %v732 = vpop.f32.mrf.mxu0
      %v733 = vadd.f32 0.0, %v732
      %734 = vmatmul.bf16.gmra.mxu0 %v656
      %v735 = vpop.f32.mrf.mxu0
      %v736 = vadd.f32 0.0, %v735
      %v737 = vpop.f32.mrf.mxu0
      %v738 = vadd.f32 0.0, %v737
      %739 = vmatmul.bf16.gmra.mxu0 %v659
      %v740 = vpop.f32.mrf.mxu0
      %v741 = vadd.f32 0.0, %v740
      %v742 = vpop.f32.mrf.mxu0
      %v743 = vadd.f32 0.0, %v742
      %744 = vmatmul.bf16.gmra.mxu0 %v662
      %v745 = vpop.f32.mrf.mxu0
      %v746 = vadd.f32 0.0, %v745
      %v747 = vpop.f32.mrf.mxu0
      %v748 = vadd.f32 0.0, %v747
      %749 = vmatmul.bf16.gmra.mxu0 %v665
      %v750 = vpop.f32.mrf.mxu0
      %v751 = vadd.f32 0.0, %v750
      %v752 = vpop.f32.mrf.mxu0
      %v753 = vadd.f32 0.0, %v752
      %754 = vmatmul.bf16.gmra.mxu0 %v668
      %v755 = vpop.f32.mrf.mxu0
      %v756 = vadd.f32 0.0, %v755
      %v757 = vpop.f32.mrf.mxu0
      %v758 = vadd.f32 0.0, %v757
      %759 = vmatmul.bf16.gmra.mxu0 %v671
      %v760 = vpop.f32.mrf.mxu0
      %v761 = vadd.f32 0.0, %v760
      %v762 = vpop.f32.mrf.mxu0
      %v763 = vadd.f32 0.0, %v762
      %764 = vmatmul.bf16.gmra.mxu0 %v674
      %v765 = vpop.f32.mrf.mxu0
      %v766 = vadd.f32 0.0, %v765
      %v767 = vpop.f32.mrf.mxu0
      %v768 = vadd.f32 0.0, %v767
      %769 = vdwg.mxu0
      %v770 = vadd.f32 %v487, %v686
      %v771 = vadd.f32 %v489, %v688
      %v772 = vadd.f32 %v492, %v691
      %v773 = vadd.f32 %v494, %v693
      %v774 = vadd.f32 %v497, %v696
      %v775 = vadd.f32 %v499, %v698
      %v776 = vadd.f32 %v502, %v701
      %v777 = vadd.f32 %v504, %v703
      %v778 = vadd.f32 %v507, %v706
      %v779 = vadd.f32 %v509, %v708
      %v780 = vadd.f32 %v512, %v711
      %v781 = vadd.f32 %v514, %v713
      %v782 = vadd.f32 %v517, %v716
      %v783 = vadd.f32 %v519, %v718
      %v784 = vadd.f32 %v522, %v721
      %v785 = vadd.f32 %v524, %v723
      %v786 = vadd.f32 %v527, %v726
      %v787 = vadd.f32 %v529, %v728
      %v788 = vadd.f32 %v532, %v731
      %v789 = vadd.f32 %v534, %v733
      %v790 = vadd.f32 %v537, %v736
      %v791 = vadd.f32 %v539, %v738
      %v792 = vadd.f32 %v542, %v741
      %v793 = vadd.f32 %v544, %v743
      %v794 = vadd.f32 %v547, %v746
      %v795 = vadd.f32 %v549, %v748
      %v796 = vadd.f32 %v552, %v751
      %v797 = vadd.f32 %v554, %v753
      %v798 = vadd.f32 %v557, %v756
      %v799 = vadd.f32 %v559, %v758
      %v800 = vadd.f32 %v562, %v761
      %v801 = vadd.f32 %v564, %v763
      %v802 = vadd.f32 %v567, %v766
      %v803 = vadd.f32 %v569, %v768
      %v804 = vld [vmem:[%s165 + $0x66] sm:$0xff]
      %v805 = vld [vmem:[%s165 + $0x6e] sm:$0xff]
      %v806 = vld [vmem:[%s165 + $0x76] sm:$0xff]
      %v807 = vld [vmem:[%s165 + $0x7e] sm:$0xff]
      %v808 = vld [vmem:[%s165 + $0x86] sm:$0xff]
      %v809 = vld [vmem:[%s165 + $0x8e] sm:$0xff]
      %v810 = vld [vmem:[%s165 + $0x96] sm:$0xff]
      %v811 = vld [vmem:[%s165 + $0x9e] sm:$0xff]
      %v812 = vld [vmem:[%s165 + $0xa6] sm:$0xff]
      %v813 = vld [vmem:[%s165 + $0xae] sm:$0xff]
      %v814 = vld [vmem:[%s165 + $0xb6] sm:$0xff]
      %v815 = vld [vmem:[%s165 + $0xbe] sm:$0xff]
      %v816 = vld [vmem:[%s165 + $0xc6] sm:$0xff]
      %v817 = vld [vmem:[%s165 + $0xce] sm:$0xff]
      %v818 = vld [vmem:[%s165 + $0xd6] sm:$0xff]
      %v819 = vld [vmem:[%s165 + $0xde] sm:$0xff]
      %v820 = vld [vmem:[%s165 + $0xe6] sm:$0xff]
      %v821 = vld [vmem:[%s165 + $0xee] sm:$0xff]
      %v822 = vld [vmem:[%s165 + $0xf6] sm:$0xff]
      %v823 = vld [vmem:[%s165 + $0xfe] sm:$0xff]
      %v824 = vld [vmem:[%s165 + $0x106] sm:$0xff]
      %v825 = vld [vmem:[%s165 + $0x10e] sm:$0xff]
      %v826 = vld [vmem:[%s165 + $0x116] sm:$0xff]
      %v827 = vld [vmem:[%s165 + $0x11e] sm:$0xff]
      %v828 = vld [vmem:[%s165 + $0x126] sm:$0xff]
      %v829 = vld [vmem:[%s165 + $0x12e] sm:$0xff]
      %v830 = vld [vmem:[%s165 + $0x136] sm:$0xff]
      %v831 = vld [vmem:[%s165 + $0x13e] sm:$0xff]
      %v832 = vld [vmem:[%s165 + $0x146] sm:$0xff]
      %v833 = vld [vmem:[%s165 + $0x14e] sm:$0xff]
      %v834 = vld [vmem:[%s165 + $0x156] sm:$0xff]
      %v835 = vld [vmem:[%s165 + $0x15e] sm:$0xff]
      %v836 = vld [vmem:[%s165 + $0x166] sm:$0xff]
      %v837 = vld [vmem:[%s165 + $0x16e] sm:$0xff]
      %v838 = vpack.c.bf16 %v805, %v804
      %v839 = vpack.c.bf16 %v807, %v806
      %v840 = vpack.c.bf16 %v809, %v808
      %v841 = vpack.c.bf16 %v811, %v810
      %v842 = vpack.c.bf16 %v813, %v812
      %v843 = vpack.c.bf16 %v815, %v814
      %v844 = vpack.c.bf16 %v817, %v816
      %v845 = vpack.c.bf16 %v819, %v818
      %v846 = vpack.c.bf16 %v821, %v820
      %v847 = vpack.c.bf16 %v823, %v822
      %v848 = vpack.c.bf16 %v825, %v824
      %v849 = vpack.c.bf16 %v827, %v826
      %v850 = vpack.c.bf16 %v829, %v828
      %v851 = vpack.c.bf16 %v831, %v830
      %v852 = vpack.c.bf16 %v833, %v832
      %v853 = vpack.c.bf16 %v835, %v834
      %v854 = vpack.c.bf16 %v837, %v836
      %v855 = vld [vmem:[%s1 + $0x30] sm:$0xff]
      %v856 = vld [vmem:[%s1 + $0x38] sm:$0xff]
      %v857 = vpack.c.bf16 %v856, %v855
      %v859 = vsel %vm280, %v838, 0
      %v862 = vsel %vm280, %v839, 0
      %v865 = vsel %vm280, %v840, 0
      %v868 = vsel %vm280, %v841, 0
      %v871 = vsel %vm280, %v842, 0
      %v874 = vsel %vm280, %v843, 0
      %v877 = vsel %vm280, %v844, 0
      %v880 = vsel %vm280, %v845, 0
      %v883 = vsel %vm280, %v846, 0
      %v886 = vsel %vm280, %v847, 0
      %v889 = vsel %vm280, %v848, 0
      %v892 = vsel %vm280, %v849, 0
      %v895 = vsel %vm280, %v850, 0
      %v898 = vsel %vm280, %v851, 0
      %v901 = vsel %vm280, %v852, 0
      %v904 = vsel %vm280, %v853, 0
      %v907 = vsel %vm280, %v854, 0
      %909 = vmatpush.bf16.msra.mxu0 0
      %910 = vmatpush.bf16.msra.mxu0 0
      %911 = vmatpush.bf16.msra.mxu0 0
      %912 = vmatpush.bf16.msra.mxu0 0
      %913 = vmatpush.bf16.msra.mxu0 0
      %914 = vmatpush.bf16.msra.mxu0 0
      %915 = vmatpush.bf16.msra.mxu0 0
      %916 = vmatpush.bf16.msra.mxu0 %v857
      %917 = vmatmul.bf16.gmra.mxu0 %v859
      %v918 = vpop.f32.mrf.mxu0
      %v919 = vadd.f32 0.0, %v918
      %v920 = vpop.f32.mrf.mxu0
      %v921 = vadd.f32 0.0, %v920
      %922 = vmatmul.bf16.gmra.mxu0 %v862
      %v923 = vpop.f32.mrf.mxu0
      %v924 = vadd.f32 0.0, %v923
      %v925 = vpop.f32.mrf.mxu0
      %v926 = vadd.f32 0.0, %v925
      %927 = vmatmul.bf16.gmra.mxu0 %v865
      %v928 = vpop.f32.mrf.mxu0
      %v929 = vadd.f32 0.0, %v928
      %v930 = vpop.f32.mrf.mxu0
      %v931 = vadd.f32 0.0, %v930
      %932 = vmatmul.bf16.gmra.mxu0 %v868
      %v933 = vpop.f32.mrf.mxu0
      %v934 = vadd.f32 0.0, %v933
      %v935 = vpop.f32.mrf.mxu0
      %v936 = vadd.f32 0.0, %v935
      %937 = vmatmul.bf16.gmra.mxu0 %v871
      %v938 = vpop.f32.mrf.mxu0
      %v939 = vadd.f32 0.0, %v938
      %v940 = vpop.f32.mrf.mxu0
      %v941 = vadd.f32 0.0, %v940
      %942 = vmatmul.bf16.gmra.mxu0 %v874
      %v943 = vpop.f32.mrf.mxu0
      %v944 = vadd.f32 0.0, %v943
      %v945 = vpop.f32.mrf.mxu0
      %v946 = vadd.f32 0.0, %v945
      %947 = vmatmul.bf16.gmra.mxu0 %v877
      %v948 = vpop.f32.mrf.mxu0
      %v949 = vadd.f32 0.0, %v948
      %v950 = vpop.f32.mrf.mxu0
      %v951 = vadd.f32 0.0, %v950
      %952 = vmatmul.bf16.gmra.mxu0 %v880
      %v953 = vpop.f32.mrf.mxu0
      %v954 = vadd.f32 0.0, %v953
      %v955 = vpop.f32.mrf.mxu0
      %v956 = vadd.f32 0.0, %v955
      %957 = vmatmul.bf16.gmra.mxu0 %v883
      %v958 = vpop.f32.mrf.mxu0
      %v959 = vadd.f32 0.0, %v958
      %v960 = vpop.f32.mrf.mxu0
      %v961 = vadd.f32 0.0, %v960
      %962 = vmatmul.bf16.gmra.mxu0 %v886
      %v963 = vpop.f32.mrf.mxu0
      %v964 = vadd.f32 0.0, %v963
      %v965 = vpop.f32.mrf.mxu0
      %v966 = vadd.f32 0.0, %v965
      %967 = vmatmul.bf16.gmra.mxu0 %v889
      %v968 = vpop.f32.mrf.mxu0
      %v969 = vadd.f32 0.0, %v968
      %v970 = vpop.f32.mrf.mxu0
      %v971 = vadd.f32 0.0, %v970
      %972 = vmatmul.bf16.gmra.mxu0 %v892
      %v973 = vpop.f32.mrf.mxu0
      %v974 = vadd.f32 0.0, %v973
      %v975 = vpop.f32.mrf.mxu0
      %v976 = vadd.f32 0.0, %v975
      %977 = vmatmul.bf16.gmra.mxu0 %v895
      %v978 = vpop.f32.mrf.mxu0
      %v979 = vadd.f32 0.0, %v978
      %v980 = vpop.f32.mrf.mxu0
      %v981 = vadd.f32 0.0, %v980
      %982 = vmatmul.bf16.gmra.mxu0 %v898
      %v983 = vpop.f32.mrf.mxu0
      %v984 = vadd.f32 0.0, %v983
      %v985 = vpop.f32.mrf.mxu0
      %v986 = vadd.f32 0.0, %v985
      %987 = vmatmul.bf16.gmra.mxu0 %v901
      %v988 = vpop.f32.mrf.mxu0
      %v989 = vadd.f32 0.0, %v988
      %v990 = vpop.f32.mrf.mxu0
      %v991 = vadd.f32 0.0, %v990
      %992 = vmatmul.bf16.gmra.mxu0 %v904
      %v993 = vpop.f32.mrf.mxu0
      %v994 = vadd.f32 0.0, %v993
      %v995 = vpop.f32.mrf.mxu0
      %v996 = vadd.f32 0.0, %v995
      %997 = vmatmul.bf16.gmra.mxu0 %v907
      %v998 = vpop.f32.mrf.mxu0
      %v999 = vadd.f32 0.0, %v998
      %v1000 = vpop.f32.mrf.mxu0
      %v1001 = vadd.f32 0.0, %v1000
      %1002 = vdwg.mxu0
      %v1003 = vadd.f32 %v770, %v919
      %v1004 = vadd.f32 %v771, %v921
      %v1005 = vadd.f32 %v772, %v924
      %v1006 = vadd.f32 %v773, %v926
      %v1007 = vadd.f32 %v774, %v929
      %v1008 = vadd.f32 %v775, %v931
      %v1009 = vadd.f32 %v776, %v934
      %v1010 = vadd.f32 %v777, %v936
      %v1011 = vadd.f32 %v778, %v939
      %v1012 = vadd.f32 %v779, %v941
      %v1013 = vadd.f32 %v780, %v944
      %v1014 = vadd.f32 %v781, %v946
      %v1015 = vadd.f32 %v782, %v949
      %v1016 = vadd.f32 %v783, %v951
      %v1017 = vadd.f32 %v784, %v954
      %v1018 = vadd.f32 %v785, %v956
      %v1019 = vadd.f32 %v786, %v959
      %v1020 = vadd.f32 %v787, %v961
      %v1021 = vadd.f32 %v788, %v964
      %v1022 = vadd.f32 %v789, %v966
      %v1023 = vadd.f32 %v790, %v969
      %v1024 = vadd.f32 %v791, %v971
      %v1025 = vadd.f32 %v792, %v974
      %v1026 = vadd.f32 %v793, %v976
      %v1027 = vadd.f32 %v794, %v979
      %v1028 = vadd.f32 %v795, %v981
      %v1029 = vadd.f32 %v796, %v984
      %v1030 = vadd.f32 %v797, %v986
      %v1031 = vadd.f32 %v798, %v989
      %v1032 = vadd.f32 %v799, %v991
      %v1033 = vadd.f32 %v800, %v994
      %v1034 = vadd.f32 %v801, %v996
      %v1035 = vadd.f32 %v802, %v999
      %v1036 = vadd.f32 %v803, %v1001
      %v1037 = vld [vmem:[%s165 + $0x88] sm:$0xff]
      %v1038 = vld [vmem:[%s165 + $0x90] sm:$0xff]
      %v1039 = vld [vmem:[%s165 + $0x98] sm:$0xff]
      %v1040 = vld [vmem:[%s165 + $0xa0] sm:$0xff]
      %v1041 = vld [vmem:[%s165 + $0xa8] sm:$0xff]
      %v1042 = vld [vmem:[%s165 + $0xb0] sm:$0xff]
      %v1043 = vld [vmem:[%s165 + $0xb8] sm:$0xff]
      %v1044 = vld [vmem:[%s165 + $0xc0] sm:$0xff]
      %v1045 = vld [vmem:[%s165 + $0xc8] sm:$0xff]
      %v1046 = vld [vmem:[%s165 + $0xd0] sm:$0xff]
      %v1047 = vld [vmem:[%s165 + $0xd8] sm:$0xff]
      %v1048 = vld [vmem:[%s165 + $0xe0] sm:$0xff]
      %v1049 = vld [vmem:[%s165 + $0xe8] sm:$0xff]
      %v1050 = vld [vmem:[%s165 + $0xf0] sm:$0xff]
      %v1051 = vld [vmem:[%s165 + $0xf8] sm:$0xff]
      %v1052 = vld [vmem:[%s165 + $0x100] sm:$0xff]
      %v1053 = vld [vmem:[%s165 + $0x108] sm:$0xff]
      %v1054 = vld [vmem:[%s165 + $0x110] sm:$0xff]
      %v1055 = vld [vmem:[%s165 + $0x118] sm:$0xff]
      %v1056 = vld [vmem:[%s165 + $0x120] sm:$0xff]
      %v1057 = vld [vmem:[%s165 + $0x128] sm:$0xff]
      %v1058 = vld [vmem:[%s165 + $0x130] sm:$0xff]
      %v1059 = vld [vmem:[%s165 + $0x138] sm:$0xff]
      %v1060 = vld [vmem:[%s165 + $0x140] sm:$0xff]
      %v1061 = vld [vmem:[%s165 + $0x148] sm:$0xff]
      %v1062 = vld [vmem:[%s165 + $0x150] sm:$0xff]
      %v1063 = vld [vmem:[%s165 + $0x158] sm:$0xff]
      %v1064 = vld [vmem:[%s165 + $0x160] sm:$0xff]
      %v1065 = vld [vmem:[%s165 + $0x168] sm:$0xff]
      %v1066 = vld [vmem:[%s165 + $0x170] sm:$0xff]
      %v1067 = vld [vmem:[%s165 + $0x178] sm:$0xff]
      %v1068 = vld [vmem:[%s165 + $0x180] sm:$0xff]
      %v1069 = vld [vmem:[%s165 + $0x188] sm:$0xff]
      %v1070 = vld [vmem:[%s165 + $0x190] sm:$0xff]
      %v1071 = vpack.c.bf16 %v1038, %v1037
      %v1072 = vpack.c.bf16 %v1040, %v1039
      %v1073 = vpack.c.bf16 %v1042, %v1041
      %v1074 = vpack.c.bf16 %v1044, %v1043
      %v1075 = vpack.c.bf16 %v1046, %v1045
      %v1076 = vpack.c.bf16 %v1048, %v1047
      %v1077 = vpack.c.bf16 %v1050, %v1049
      %v1078 = vpack.c.bf16 %v1052, %v1051
      %v1079 = vpack.c.bf16 %v1054, %v1053
      %v1080 = vpack.c.bf16 %v1056, %v1055
      %v1081 = vpack.c.bf16 %v1058, %v1057
      %v1082 = vpack.c.bf16 %v1060, %v1059
      %v1083 = vpack.c.bf16 %v1062, %v1061
      %v1084 = vpack.c.bf16 %v1064, %v1063
      %v1085 = vpack.c.bf16 %v1066, %v1065
      %v1086 = vpack.c.bf16 %v1068, %v1067
      %v1087 = vpack.c.bf16 %v1070, %v1069
      %v1088 = vld [vmem:[%s1 + $0x40] sm:$0xff]
      %v1089 = vld [vmem:[%s1 + $0x48] sm:$0xff]
      %v1090 = vpack.c.bf16 %v1089, %v1088
      %v1092 = vsel %vm280, %v1071, 0
      %v1095 = vsel %vm280, %v1072, 0
      %v1098 = vsel %vm280, %v1073, 0
      %v1101 = vsel %vm280, %v1074, 0
      %v1104 = vsel %vm280, %v1075, 0
      %v1107 = vsel %vm280, %v1076, 0
      %v1110 = vsel %vm280, %v1077, 0
      %v1113 = vsel %vm280, %v1078, 0
      %v1116 = vsel %vm280, %v1079, 0
      %v1119 = vsel %vm280, %v1080, 0
      %v1122 = vsel %vm280, %v1081, 0
      %v1125 = vsel %vm280, %v1082, 0
      %v1128 = vsel %vm280, %v1083, 0
      %v1131 = vsel %vm280, %v1084, 0
      %v1134 = vsel %vm280, %v1085, 0
      %v1137 = vsel %vm280, %v1086, 0
      %v1140 = vsel %vm280, %v1087, 0
      %1142 = vmatpush.bf16.msra.mxu0 0
      %1143 = vmatpush.bf16.msra.mxu0 0
      %1144 = vmatpush.bf16.msra.mxu0 0
      %1145 = vmatpush.bf16.msra.mxu0 0
      %1146 = vmatpush.bf16.msra.mxu0 0
      %1147 = vmatpush.bf16.msra.mxu0 0
      %1148 = vmatpush.bf16.msra.mxu0 0
      %1149 = vmatpush.bf16.msra.mxu0 %v1090
      %1150 = vmatmul.bf16.gmra.mxu0 %v1092
      %v1151 = vpop.f32.mrf.mxu0
      %v1152 = vadd.f32 0.0, %v1151
      %v1153 = vpop.f32.mrf.mxu0
      %v1154 = vadd.f32 0.0, %v1153
      %1155 = vmatmul.bf16.gmra.mxu0 %v1095
      %v1156 = vpop.f32.mrf.mxu0
      %v1157 = vadd.f32 0.0, %v1156
      %v1158 = vpop.f32.mrf.mxu0
      %v1159 = vadd.f32 0.0, %v1158
      %1160 = vmatmul.bf16.gmra.mxu0 %v1098
      %v1161 = vpop.f32.mrf.mxu0
      %v1162 = vadd.f32 0.0, %v1161
      %v1163 = vpop.f32.mrf.mxu0
      %v1164 = vadd.f32 0.0, %v1163
      %1165 = vmatmul.bf16.gmra.mxu0 %v1101
      %v1166 = vpop.f32.mrf.mxu0
      %v1167 = vadd.f32 0.0, %v1166
      %v1168 = vpop.f32.mrf.mxu0
      %v1169 = vadd.f32 0.0, %v1168
      %1170 = vmatmul.bf16.gmra.mxu0 %v1104
      %v1171 = vpop.f32.mrf.mxu0
      %v1172 = vadd.f32 0.0, %v1171
      %v1173 = vpop.f32.mrf.mxu0
      %v1174 = vadd.f32 0.0, %v1173
      %1175 = vmatmul.bf16.gmra.mxu0 %v1107
      %v1176 = vpop.f32.mrf.mxu0
      %v1177 = vadd.f32 0.0, %v1176
      %v1178 = vpop.f32.mrf.mxu0
      %v1179 = vadd.f32 0.0, %v1178
      %1180 = vmatmul.bf16.gmra.mxu0 %v1110
      %v1181 = vpop.f32.mrf.mxu0
      %v1182 = vadd.f32 0.0, %v1181
      %v1183 = vpop.f32.mrf.mxu0
      %v1184 = vadd.f32 0.0, %v1183
      %1185 = vmatmul.bf16.gmra.mxu0 %v1113
      %v1186 = vpop.f32.mrf.mxu0
      %v1187 = vadd.f32 0.0, %v1186
      %v1188 = vpop.f32.mrf.mxu0
      %v1189 = vadd.f32 0.0, %v1188
      %1190 = vmatmul.bf16.gmra.mxu0 %v1116
      %v1191 = vpop.f32.mrf.mxu0
      %v1192 = vadd.f32 0.0, %v1191
      %v1193 = vpop.f32.mrf.mxu0
      %v1194 = vadd.f32 0.0, %v1193
      %1195 = vmatmul.bf16.gmra.mxu0 %v1119
      %v1196 = vpop.f32.mrf.mxu0
      %v1197 = vadd.f32 0.0, %v1196
      %v1198 = vpop.f32.mrf.mxu0
      %v1199 = vadd.f32 0.0, %v1198
      %1200 = vmatmul.bf16.gmra.mxu0 %v1122
      %v1201 = vpop.f32.mrf.mxu0
      %v1202 = vadd.f32 0.0, %v1201
      %v1203 = vpop.f32.mrf.mxu0
      %v1204 = vadd.f32 0.0, %v1203
      %1205 = vmatmul.bf16.gmra.mxu0 %v1125
      %v1206 = vpop.f32.mrf.mxu0
      %v1207 = vadd.f32 0.0, %v1206
      %v1208 = vpop.f32.mrf.mxu0
      %v1209 = vadd.f32 0.0, %v1208
      %1210 = vmatmul.bf16.gmra.mxu0 %v1128
      %v1211 = vpop.f32.mrf.mxu0
      %v1212 = vadd.f32 0.0, %v1211
      %v1213 = vpop.f32.mrf.mxu0
      %v1214 = vadd.f32 0.0, %v1213
      %1215 = vmatmul.bf16.gmra.mxu0 %v1131
      %v1216 = vpop.f32.mrf.mxu0
      %v1217 = vadd.f32 0.0, %v1216
      %v1218 = vpop.f32.mrf.mxu0
      %v1219 = vadd.f32 0.0, %v1218
      %1220 = vmatmul.bf16.gmra.mxu0 %v1134
      %v1221 = vpop.f32.mrf.mxu0
      %v1222 = vadd.f32 0.0, %v1221
      %v1223 = vpop.f32.mrf.mxu0
      %v1224 = vadd.f32 0.0, %v1223
      %1225 = vmatmul.bf16.gmra.mxu0 %v1137
      %v1226 = vpop.f32.mrf.mxu0
      %v1227 = vadd.f32 0.0, %v1226
      %v1228 = vpop.f32.mrf.mxu0
      %v1229 = vadd.f32 0.0, %v1228
      %1230 = vmatmul.bf16.gmra.mxu0 %v1140
      %v1231 = vpop.f32.mrf.mxu0
      %v1232 = vadd.f32 0.0, %v1231
      %v1233 = vpop.f32.mrf.mxu0
      %v1234 = vadd.f32 0.0, %v1233
      %1235 = vdwg.mxu0
      %v1236 = vadd.f32 %v1003, %v1152
      %v1237 = vadd.f32 %v1004, %v1154
      %v1238 = vadd.f32 %v1005, %v1157
      %v1239 = vadd.f32 %v1006, %v1159
      %v1240 = vadd.f32 %v1007, %v1162
      %v1241 = vadd.f32 %v1008, %v1164
      %v1242 = vadd.f32 %v1009, %v1167
      %v1243 = vadd.f32 %v1010, %v1169
      %v1244 = vadd.f32 %v1011, %v1172
      %v1245 = vadd.f32 %v1012, %v1174
      %v1246 = vadd.f32 %v1013, %v1177
      %v1247 = vadd.f32 %v1014, %v1179
      %v1248 = vadd.f32 %v1015, %v1182
      %v1249 = vadd.f32 %v1016, %v1184
      %v1250 = vadd.f32 %v1017, %v1187
      %v1251 = vadd.f32 %v1018, %v1189
      %v1252 = vadd.f32 %v1019, %v1192
      %v1253 = vadd.f32 %v1020, %v1194
      %v1254 = vadd.f32 %v1021, %v1197
      %v1255 = vadd.f32 %v1022, %v1199
      %v1256 = vadd.f32 %v1023, %v1202
      %v1257 = vadd.f32 %v1024, %v1204
      %v1258 = vadd.f32 %v1025, %v1207
      %v1259 = vadd.f32 %v1026, %v1209
      %v1260 = vadd.f32 %v1027, %v1212
      %v1261 = vadd.f32 %v1028, %v1214
      %v1262 = vadd.f32 %v1029, %v1217
      %v1263 = vadd.f32 %v1030, %v1219
      %v1264 = vadd.f32 %v1031, %v1222
      %v1265 = vadd.f32 %v1032, %v1224
      %v1266 = vadd.f32 %v1033, %v1227
      %v1267 = vadd.f32 %v1034, %v1229
      %v1268 = vadd.f32 %v1035, %v1232
      %v1269 = vadd.f32 %v1036, %v1234
      %v1270 = vld [vmem:[%s2] sm:$0x1]
      %v1272 = vperm.slane %v1270, 0
      %v1274 = vadd.f32 %v1236, %v1272
      %v1275 = vadd.f32 %v1237, %v1272
      %v1276 = vadd.f32 %v1238, %v1272
      %v1277 = vadd.f32 %v1239, %v1272
      %v1278 = vadd.f32 %v1240, %v1272
      %v1279 = vadd.f32 %v1241, %v1272
      %v1280 = vadd.f32 %v1242, %v1272
      %v1281 = vadd.f32 %v1243, %v1272
      %v1282 = vadd.f32 %v1244, %v1272
      %v1283 = vadd.f32 %v1245, %v1272
      %v1284 = vadd.f32 %v1246, %v1272
      %v1285 = vadd.f32 %v1247, %v1272
      %v1286 = vadd.f32 %v1248, %v1272
      %v1287 = vadd.f32 %v1249, %v1272
      %v1288 = vadd.f32 %v1250, %v1272
      %v1289 = vadd.f32 %v1251, %v1272
      %v1290 = vadd.f32 %v1252, %v1272
      %v1291 = vadd.f32 %v1253, %v1272
      %v1292 = vadd.f32 %v1254, %v1272
      %v1293 = vadd.f32 %v1255, %v1272
      %v1294 = vadd.f32 %v1256, %v1272
      %v1295 = vadd.f32 %v1257, %v1272
      %v1296 = vadd.f32 %v1258, %v1272
      %v1297 = vadd.f32 %v1259, %v1272
      %v1298 = vadd.f32 %v1260, %v1272
      %v1299 = vadd.f32 %v1261, %v1272
      %v1300 = vadd.f32 %v1262, %v1272
      %v1301 = vadd.f32 %v1263, %v1272
      %v1302 = vadd.f32 %v1264, %v1272
      %v1303 = vadd.f32 %v1265, %v1272
      %v1304 = vadd.f32 %v1266, %v1272
      %v1305 = vadd.f32 %v1267, %v1272
      %v1306 = vadd.f32 %v1268, %v1272
      %v1307 = vadd.f32 %v1269, %v1272
      %1308 = vst.msk [vmem:[%s170] sm:$0xff] %vm280, %v1274
      %1309 = vst.msk [vmem:[%s170 + $0x8] sm:$0xff] %vm280, %v1275
      %1310 = vst.msk [vmem:[%s170 + $0x10] sm:$0xff] %vm280, %v1276
      %1311 = vst.msk [vmem:[%s170 + $0x18] sm:$0xff] %vm280, %v1277
      %1312 = vst.msk [vmem:[%s170 + $0x20] sm:$0xff] %vm280, %v1278
      %1313 = vst.msk [vmem:[%s170 + $0x28] sm:$0xff] %vm280, %v1279
      %1314 = vst.msk [vmem:[%s170 + $0x30] sm:$0xff] %vm280, %v1280
      %1315 = vst.msk [vmem:[%s170 + $0x38] sm:$0xff] %vm280, %v1281
      %1316 = vst.msk [vmem:[%s170 + $0x40] sm:$0xff] %vm280, %v1282
      %1317 = vst.msk [vmem:[%s170 + $0x48] sm:$0xff] %vm280, %v1283
      %1318 = vst.msk [vmem:[%s170 + $0x50] sm:$0xff] %vm280, %v1284
      %1319 = vst.msk [vmem:[%s170 + $0x58] sm:$0xff] %vm280, %v1285
      %1320 = vst.msk [vmem:[%s170 + $0x60] sm:$0xff] %vm280, %v1286
      %1321 = vst.msk [vmem:[%s170 + $0x68] sm:$0xff] %vm280, %v1287
      %1322 = vst.msk [vmem:[%s170 + $0x70] sm:$0xff] %vm280, %v1288
      %1323 = vst.msk [vmem:[%s170 + $0x78] sm:$0xff] %vm280, %v1289
      %1324 = vst.msk [vmem:[%s170 + $0x80] sm:$0xff] %vm280, %v1290
      %1325 = vst.msk [vmem:[%s170 + $0x88] sm:$0xff] %vm280, %v1291
      %1326 = vst.msk [vmem:[%s170 + $0x90] sm:$0xff] %vm280, %v1292
      %1327 = vst.msk [vmem:[%s170 + $0x98] sm:$0xff] %vm280, %v1293
      %1328 = vst.msk [vmem:[%s170 + $0xa0] sm:$0xff] %vm280, %v1294
      %1329 = vst.msk [vmem:[%s170 + $0xa8] sm:$0xff] %vm280, %v1295
      %1330 = vst.msk [vmem:[%s170 + $0xb0] sm:$0xff] %vm280, %v1296
      %1331 = vst.msk [vmem:[%s170 + $0xb8] sm:$0xff] %vm280, %v1297
      %1332 = vst.msk [vmem:[%s170 + $0xc0] sm:$0xff] %vm280, %v1298
      %1333 = vst.msk [vmem:[%s170 + $0xc8] sm:$0xff] %vm280, %v1299
      %1334 = vst.msk [vmem:[%s170 + $0xd0] sm:$0xff] %vm280, %v1300
      %1335 = vst.msk [vmem:[%s170 + $0xd8] sm:$0xff] %vm280, %v1301
      %1336 = vst.msk [vmem:[%s170 + $0xe0] sm:$0xff] %vm280, %v1302
      %1337 = vst.msk [vmem:[%s170 + $0xe8] sm:$0xff] %vm280, %v1303
      %1338 = vst.msk [vmem:[%s170 + $0xf0] sm:$0xff] %vm280, %v1304
      %1339 = vst.msk [vmem:[%s170 + $0xf8] sm:$0xff] %vm280, %v1305
      %1340 = vst.msk [vmem:[%s170 + $0x100] sm:$0xff] %vm280, %v1306
      %1341 = vst.msk [vmem:[%s170 + $0x108] sm:$0xff] %vm280, %v1307
      %p1342 = scmp.lt.s32.totalorder %s14, 1
      %s1343 = scalar_select %p1342, %s14, 1
      %s1344 = smul.addr %s1343, 34
      %s1345 = smul.addr %s1344, 8
      %s1346 = scalar_lea.vmem %s3, %s1345
      // Predicated region
      $region33: #{_lambda_.16} parent=31 // pred_check
        %p1347 = pneg %p100
      $region34: #{_lambda_.16} parent=31 // pred_check_branch
        %1349 = sbr.rel (%p1347) target = $region36
      $region35: #{_lambda_.16} parent=31 // pred_region
        _
      $region36: #{_lambda_.16} parent=31 // pred_fallthru
        _
    $region32: #{_lambda_.16} parent=5 // pred_fallthru
      _
    %p1350 = scmp.le.s32.totalorder 2, %s9
    // Predicated region
    $region37: #{_lambda_.16} parent=5 // pred_check
      %p1351 = pneg %p1350
    $region38: #{_lambda_.16} parent=5 // pred_check_branch
      %1353 = sbr.rel (%p1351) target = $region40
    $region39: #{_lambda_.16} parent=5 // pred_region
      %s1354 = ssub.s32 %s9, 2
      // Predicated region
      $region41: #{_lambda_.16} parent=39 // pred_check
        %p1355 = pneg %p106
      $region42: #{_lambda_.16} parent=39 // pred_check_branch
        %1357 = sbr.rel (%p1355) target = $region44
      $region43: #{_lambda_.16} parent=39 // pred_region
        %p1358 = scmp.lt.s32.totalorder %s15, 1
        %s1359 = scalar_select %p1358, %s15, 1
        %s1360 = smul.addr %s1359, 34
        %s1361 = smul.addr %s1360, 8
        %s1362 = scalar_lea.vmem %s3, %s1361
      $region44: #{_lambda_.16} parent=39 // pred_fallthru
        _
    $region40: #{_lambda_.16} parent=5 // pred_fallthru
      _
  $region6: #{_lambda_.16} parent=0 // loop_footer
    %s13 = sadd.s32 1, %s9
  $region7: #{_lambda_.16} parent=0 // loop_footer_branch
    %8 = sbr.rel target = $region3
  $region8: #{_lambda_.16} parent=0 // loop_exit
    _

</llo_original>
